<compile_context>
chip_gen: v7x
topology: tpu7x:2x2x1
jax: 0.10.0
libtpu: 0.0.40
codegen_flags: <defaults>
</compile_context>

<pallas_src>
from functools import partial

import jax
import jax.numpy as jnp
from jax.experimental import pallas as pl
from jax.experimental.pallas import tpu as pltpu


def _resblock_kernel(mask_ref, x_ref, w1_ref, b1_ref, w2_ref, b2_ref, o_ref,
                     *, tH, W, Wp, Cp, K, Mmid, res_scale, mxu_dtype):
    """One H-tile of one image.

    mask_ref : (1, Mmid, 1)   f32 {0,1}; zeroes conv1 outputs outside the
                              image (this realizes conv2's zero padding).
    x_ref    : (1, R, Cp)     f32; padded tile, rows flattened with pitch Wp.
    w*_ref   : (K*K, Cp, Cp)  conv weights (tap-major), MXU dtype.
    b*_ref   : (1, Cp)        f32 biases.
    o_ref    : (1, tH, W, Cp) output tile.
    """
    p = K // 2
    x = x_ref[0]                                   # (R, Cp) f32
    xm = x.astype(mxu_dtype)

    # ---- conv1 (+ bias + ReLU + mask) over the region conv2 needs ----------
    acc1 = jnp.zeros((Mmid, Cp), jnp.float32)
    for kh in range(K):
        for kw in range(K):
            off = kh * Wp + kw                     # static flat offset
            acc1 += jnp.dot(xm[off:off + Mmid], w1_ref[kh * K + kw],
                            preferred_element_type=jnp.float32)
    mid = jnp.maximum(acc1 + b1_ref[...], 0.0) * mask_ref[0]
    midm = mid.astype(mxu_dtype)

    # ---- conv2 (+ bias); valid region == the output tile --------------------
    Mout = tH * Wp
    acc2 = jnp.zeros((Mout, Cp), jnp.float32)
    for kh in range(K):
        for kw in range(K):
            off = kh * Wp + kw
            acc2 += jnp.dot(midm[off:off + Mout], w2_ref[kh * K + kw],
                            preferred_element_type=jnp.float32)

    # ---- scale + residual (residual sliced from the same input block) ------
    res_off = 2 * p * Wp + 2 * p
    out = (acc2 + b2_ref[...]) * res_scale + x[res_off:res_off + Mout]
    out = out.reshape(tH, Wp, Cp)[:, :W, :]        # drop pitch-padding columns
    o_ref[...] = out[None].astype(o_ref.dtype)


def resblock_forward(x_nchw, w1, b1, w2, b2, res_scale=1.0,
                     mxu_dtype=jnp.bfloat16, tile_rows_target=32):
    """x_nchw: (N, C, H, W). w*: (K, K, Cin, Cout) (HWIO). b*: (Cout,)."""
    N, C, H, W = x_nchw.shape
    K = int(w1.shape[0])
    p = K // 2
    LANE = 128
    Cp = ((C + LANE - 1) // LANE) * LANE

    # H-tiling with a 2*p halo.  Pad H up to a multiple of the tile so any
    # height keeps large tiles (no divisor hunting / 1-row degenerate tiles).
    # TODO(synk): tune tile_rows_target per TPU generation (v7x has 64 MiB VMEM).
    tH = min(H, tile_rows_target)
    nT = -(-H // tH)                     # ceil-div
    Hp = nT * tH

    # Padded width; rounded up so the flattened row pitch is sublane-aligned.
    Wp = W + 4 * p
    Wp += (-Wp) % 8
    R = (tH + 4 * p + 2) * Wp            # flattened rows per input tile
    Mmid = (tH + 2 * p + 1) * Wp         # flattened rows of conv1's output

    # ---- layout glue (plain JAX): NCHW -> padded NHWC -> flattened tiles ----
    x = jnp.transpose(x_nchw, (0, 2, 3, 1))                       # (N,H,W,C)
    x = jnp.pad(x, ((0, 0),
                    (2 * p, Hp - H + 2 * p + 2),
                    (2 * p, Wp - W - 2 * p),
                    (0, Cp - C)))                      # (N, Hp+4p+2, Wp, Cp)
    tiles = [x[:, t * tH: t * tH + tH + 4 * p + 2].reshape(N, R, Cp)
             for t in range(nT)]
    x_tiles = jnp.stack(tiles, axis=1).reshape(N * nT, R, Cp)
    # TODO(synk): the overlapping-halo stack re-reads ~(4p+2)/tH of the input
    # from HBM; a manual-DMA (memory_space=pl.ANY) variant would fetch halos once.

    # {0,1} mask implementing conv2's zero padding on conv1's output.
    # mid row i', col j' of tile t == global image row t*tH + i' - p, col j' - p.
    ii = jnp.arange(tH + 2 * p + 1)[:, None]
    jj = jnp.arange(Wp)[None, :]
    col_ok = (jj >= p) & (jj < W + p)
    masks = []
    for t in range(nT):
        rg = t * tH + ii - p
        masks.append((rg >= 0) & (rg < H) & col_ok)
    mask = jnp.stack(masks, 0).astype(jnp.float32).reshape(nT, Mmid, 1)

    # Weights / biases: channel-pad to Cp, tap-major, MXU dtype.
    wpad = ((0, 0), (0, 0), (0, Cp - C), (0, Cp - C))
    w1p = jnp.pad(w1, wpad).reshape(K * K, Cp, Cp).astype(mxu_dtype)
    w2p = jnp.pad(w2, wpad).reshape(K * K, Cp, Cp).astype(mxu_dtype)
    b1p = jnp.pad(b1, (0, Cp - C)).reshape(1, Cp).astype(jnp.float32)
    b2p = jnp.pad(b2, (0, Cp - C)).reshape(1, Cp).astype(jnp.float32)

    kern = partial(_resblock_kernel, tH=tH, W=W, Wp=Wp, Cp=Cp, K=K, Mmid=Mmid,
                   res_scale=float(res_scale), mxu_dtype=mxu_dtype)

    flops = 2 * 2 * N * Hp * W * K * K * Cp * Cp
    bytes_accessed = (x_tiles.size * 4 + mask.size * 4
                      + N * nT * tH * W * Cp * 4
                      + (w1p.size + w2p.size) * w1p.dtype.itemsize
                      + (b1p.size + b2p.size) * 4)

    out_tiles = pl.pallas_call(
        kern,
        out_shape=jax.ShapeDtypeStruct((N * nT, tH, W, Cp), x_nchw.dtype),
        grid_spec=pltpu.PrefetchScalarGridSpec(
            num_scalar_prefetch=0,
            grid=(N * nT,),
            in_specs=[
                pl.BlockSpec((1, Mmid, 1), lambda g: (g % nT, 0, 0)),
                pl.BlockSpec((1, R, Cp), lambda g: (g, 0, 0)),
                pl.BlockSpec((K * K, Cp, Cp), lambda g: (0, 0, 0)),
                pl.BlockSpec((1, Cp), lambda g: (0, 0)),
                pl.BlockSpec((K * K, Cp, Cp), lambda g: (0, 0, 0)),
                pl.BlockSpec((1, Cp), lambda g: (0, 0)),
            ],
            out_specs=pl.BlockSpec((1, tH, W, Cp), lambda g: (g, 0, 0, 0)),
        ),
        compiler_params=pltpu.CompilerParams(
            dimension_semantics=("parallel",),
            vmem_limit_bytes=48 * 1024 * 1024),   # headroom even on v7x (64 MiB)
        cost_estimate=pl.CostEstimate(flops=flops, transcendentals=0,
                                      bytes_accessed=bytes_accessed),
    )(mask, x_tiles, w1p, b1p, w2p, b2p)

    out = out_tiles.reshape(N, Hp, W, Cp)[:, :H, :, :C]
    return jnp.transpose(out, (0, 3, 1, 2))


def ref_forward(x_nchw, w1, b1, w2, b2, res_scale=1.0):
    """Pure-JAX reference using lax.conv (NCHW, OIHW)."""
    K = w1.shape[0]
    p = K // 2
    w1_oihw = jnp.transpose(w1, (3, 2, 0, 1))
    w2_oihw = jnp.transpose(w2, (3, 2, 0, 1))
    dn = ('NCHW', 'OIHW', 'NCHW')
    y = jax.lax.conv_general_dilated(x_nchw, w1_oihw, (1, 1),
                                     [(p, p), (p, p)], dimension_numbers=dn)
    y = jnp.maximum(y + b1[None, :, None, None], 0.0)
    y = jax.lax.conv_general_dilated(y, w2_oihw, (1, 1),
                                     [(p, p), (p, p)], dimension_numbers=dn)
    y = y + b2[None, :, None, None]
    return y * res_scale + x_nchw


if __name__ == "__main__":
    N, C, H, W, K = 2, 4, 16, 16, 3
    res_scale = 1.0

    key = jax.random.PRNGKey(0)
    kx, kw1, kb1, kw2, kb2 = jax.random.split(key, 5)

    x = jax.random.normal(kx, (N, C, H, W), jnp.float32)

    # Deterministic (kaiming-like) init; weights stored as (K, K, Cin, Cout).
    fan_in = C * K * K
    std = (2.0 / fan_in) ** 0.5
    w1 = jax.random.normal(kw1, (K, K, C, C), jnp.float32) * std
    w2 = jax.random.normal(kw2, (K, K, C, C), jnp.float32) * std
    bound = 1.0 / (fan_in ** 0.5)
    b1 = jax.random.uniform(kb1, (C,), jnp.float32, -bound, bound)
    b2 = jax.random.uniform(kb2, (C,), jnp.float32, -bound, bound)

    ref = jax.block_until_ready(ref_forward(x, w1, b1, w2, b2, res_scale))

    # f32-MXU path: tight check of indexing / structure.
    out_f32 = jax.block_until_ready(
        resblock_forward(x, w1, b1, w2, b2, res_scale, mxu_dtype=jnp.float32))
    assert out_f32.shape == (N, C, H, W)
    assert jnp.allclose(out_f32, ref, rtol=1e-3, atol=1e-3), \
        f"f32 max abs err {jnp.max(jnp.abs(out_f32 - ref))}"

    # bf16-MXU path (default; what v6e/v7x want): looser numeric check.
    out_bf16 = jax.block_until_ready(
        resblock_forward(x, w1, b1, w2, b2, res_scale, mxu_dtype=jnp.bfloat16))
    assert out_bf16.shape == (N, C, H, W)
    assert jnp.allclose(out_bf16, ref, rtol=1e-1, atol=1e-1), \
        f"bf16 max abs err {jnp.max(jnp.abs(out_bf16 - ref))}"

    # Exercise a non-divisible / multi-tile height to cover the generic mask path.
    x2 = jax.random.normal(kx, (1, C, 13, 11), jnp.float32)
    ref2 = jax.block_until_ready(ref_forward(x2, w1, b1, w2, b2, res_scale))
    out2 = jax.block_until_ready(
        resblock_forward(x2, w1, b1, w2, b2, res_scale,
                         mxu_dtype=jnp.float32, tile_rows_target=5))
    assert jnp.allclose(out2, ref2, rtol=1e-3, atol=1e-3), \
        f"tiled max abs err {jnp.max(jnp.abs(out2 - ref2))}"

    print("KERNEL_OK")
</pallas_src>

<mosaic_0001>
module attributes {stable_mosaic.version = 11 : i64} {
  func.func @_resblock_kernel(%arg0: i32, %arg1: memref<1x456x1xf32, #tpu.memory_space<vmem>>, %arg2: memref<1x528x128xf32, #tpu.memory_space<vmem>>, %arg3: memref<9x128x128xf32, #tpu.memory_space<vmem>>, %arg4: memref<1x128xf32, #tpu.memory_space<vmem>>, %arg5: memref<9x128x128xf32, #tpu.memory_space<vmem>>, %arg6: memref<1x128xf32, #tpu.memory_space<vmem>>, %arg7: memref<1x16x16x128xf32, #tpu.memory_space<vmem>>) attributes {dimension_semantics = [#tpu.dimension_semantics<parallel>], iteration_bounds = array<i64: 2>, scalar_prefetch = 0 : i64, scratch_operands = 0 : i64, tpu.core_type = #tpu.core_type<tc>, window_params = [{transform_indices = @transform_0, window_bounds = array<i64: 1, 456, 1>}, {transform_indices = @transform_1, window_bounds = array<i64: 1, 528, 128>}, {pipeline_mode = #tpu.pipeline_mode<synchronous>, transform_indices = @transform_2, window_bounds = array<i64: 9, 128, 128>}, {pipeline_mode = #tpu.pipeline_mode<synchronous>, transform_indices = @transform_3, window_bounds = array<i64: 1, 128>}, {pipeline_mode = #tpu.pipeline_mode<synchronous>, transform_indices = @transform_4, window_bounds = array<i64: 9, 128, 128>}, {pipeline_mode = #tpu.pipeline_mode<synchronous>, transform_indices = @transform_5, window_bounds = array<i64: 1, 128>}, {transform_indices = @transform_6, window_bounds = array<i64: 1, 16, 16, 128>}]} {
    %c0 = arith.constant 0 : index
    %c0_0 = arith.constant 0 : index
    %c0_1 = arith.constant 0 : index
    %0 = vector.load %arg2[%c0, %c0_0, %c0_1] : memref<1x528x128xf32, #tpu.memory_space<vmem>>, vector<1x528x128xf32>
    %1 = vector.shape_cast %0 : vector<1x528x128xf32> to vector<528x128xf32>
    %cst = arith.constant 0.000000e+00 : f32
    %2 = vector.broadcast %cst : f32 to vector<456x128xf32>
    %3 = vector.extract_strided_slice %1 {offsets = [0, 0], sizes = [456, 128], strides = [1, 1]} : vector<528x128xf32> to vector<456x128xf32>
    %c0_2 = arith.constant 0 : index
    %c0_3 = arith.constant 0 : index
    %c0_4 = arith.constant 0 : index
    %4 = vector.load %arg3[%c0_2, %c0_3, %c0_4] : memref<9x128x128xf32, #tpu.memory_space<vmem>>, vector<1x128x128xf32>
    %5 = vector.shape_cast %4 : vector<1x128x128xf32> to vector<128x128xf32>
    %cst_5 = arith.constant dense<0.000000e+00> : vector<456x128xf32>
    %6 = tpu.matmul %3, %5, %cst_5 {dimension_numbers = #tpu.dot_dimension_numbers<[1], [0], [0], [1], [0, 0, 1, 1], [], []>} : vector<456x128xf32>, vector<128x128xf32>, vector<456x128xf32> -> vector<456x128xf32>
    %7 = arith.addf %2, %6 : vector<456x128xf32>
    %8 = vector.extract_strided_slice %1 {offsets = [1, 0], sizes = [456, 128], strides = [1, 1]} : vector<528x128xf32> to vector<456x128xf32>
    %c1 = arith.constant 1 : index
    %c0_6 = arith.constant 0 : index
    %c0_7 = arith.constant 0 : index
    %9 = vector.load %arg3[%c1, %c0_6, %c0_7] : memref<9x128x128xf32, #tpu.memory_space<vmem>>, vector<1x128x128xf32>
    %10 = vector.shape_cast %9 : vector<1x128x128xf32> to vector<128x128xf32>
    %cst_8 = arith.constant dense<0.000000e+00> : vector<456x128xf32>
    %11 = tpu.matmul %8, %10, %cst_8 {dimension_numbers = #tpu.dot_dimension_numbers<[1], [0], [0], [1], [0, 0, 1, 1], [], []>} : vector<456x128xf32>, vector<128x128xf32>, vector<456x128xf32> -> vector<456x128xf32>
    %12 = arith.addf %7, %11 : vector<456x128xf32>
    %13 = vector.extract_strided_slice %1 {offsets = [2, 0], sizes = [456, 128], strides = [1, 1]} : vector<528x128xf32> to vector<456x128xf32>
    %c2 = arith.constant 2 : index
    %c0_9 = arith.constant 0 : index
    %c0_10 = arith.constant 0 : index
    %14 = vector.load %arg3[%c2, %c0_9, %c0_10] : memref<9x128x128xf32, #tpu.memory_space<vmem>>, vector<1x128x128xf32>
    %15 = vector.shape_cast %14 : vector<1x128x128xf32> to vector<128x128xf32>
    %cst_11 = arith.constant dense<0.000000e+00> : vector<456x128xf32>
    %16 = tpu.matmul %13, %15, %cst_11 {dimension_numbers = #tpu.dot_dimension_numbers<[1], [0], [0], [1], [0, 0, 1, 1], [], []>} : vector<456x128xf32>, vector<128x128xf32>, vector<456x128xf32> -> vector<456x128xf32>
    %17 = arith.addf %12, %16 : vector<456x128xf32>
    %18 = vector.extract_strided_slice %1 {offsets = [24, 0], sizes = [456, 128], strides = [1, 1]} : vector<528x128xf32> to vector<456x128xf32>
    %c3 = arith.constant 3 : index
    %c0_12 = arith.constant 0 : index
    %c0_13 = arith.constant 0 : index
    %19 = vector.load %arg3[%c3, %c0_12, %c0_13] : memref<9x128x128xf32, #tpu.memory_space<vmem>>, vector<1x128x128xf32>
    %20 = vector.shape_cast %19 : vector<1x128x128xf32> to vector<128x128xf32>
    %cst_14 = arith.constant dense<0.000000e+00> : vector<456x128xf32>
    %21 = tpu.matmul %18, %20, %cst_14 {dimension_numbers = #tpu.dot_dimension_numbers<[1], [0], [0], [1], [0, 0, 1, 1], [], []>} : vector<456x128xf32>, vector<128x128xf32>, vector<456x128xf32> -> vector<456x128xf32>
    %22 = arith.addf %17, %21 : vector<456x128xf32>
    %23 = vector.extract_strided_slice %1 {offsets = [25, 0], sizes = [456, 128], strides = [1, 1]} : vector<528x128xf32> to vector<456x128xf32>
    %c4 = arith.constant 4 : index
    %c0_15 = arith.constant 0 : index
    %c0_16 = arith.constant 0 : index
    %24 = vector.load %arg3[%c4, %c0_15, %c0_16] : memref<9x128x128xf32, #tpu.memory_space<vmem>>, vector<1x128x128xf32>
    %25 = vector.shape_cast %24 : vector<1x128x128xf32> to vector<128x128xf32>
    %cst_17 = arith.constant dense<0.000000e+00> : vector<456x128xf32>
    %26 = tpu.matmul %23, %25, %cst_17 {dimension_numbers = #tpu.dot_dimension_numbers<[1], [0], [0], [1], [0, 0, 1, 1], [], []>} : vector<456x128xf32>, vector<128x128xf32>, vector<456x128xf32> -> vector<456x128xf32>
    %27 = arith.addf %22, %26 : vector<456x128xf32>
    %28 = vector.extract_strided_slice %1 {offsets = [26, 0], sizes = [456, 128], strides = [1, 1]} : vector<528x128xf32> to vector<456x128xf32>
    %c5 = arith.constant 5 : index
    %c0_18 = arith.constant 0 : index
    %c0_19 = arith.constant 0 : index
    %29 = vector.load %arg3[%c5, %c0_18, %c0_19] : memref<9x128x128xf32, #tpu.memory_space<vmem>>, vector<1x128x128xf32>
    %30 = vector.shape_cast %29 : vector<1x128x128xf32> to vector<128x128xf32>
    %cst_20 = arith.constant dense<0.000000e+00> : vector<456x128xf32>
    %31 = tpu.matmul %28, %30, %cst_20 {dimension_numbers = #tpu.dot_dimension_numbers<[1], [0], [0], [1], [0, 0, 1, 1], [], []>} : vector<456x128xf32>, vector<128x128xf32>, vector<456x128xf32> -> vector<456x128xf32>
    %32 = arith.addf %27, %31 : vector<456x128xf32>
    %33 = vector.extract_strided_slice %1 {offsets = [48, 0], sizes = [456, 128], strides = [1, 1]} : vector<528x128xf32> to vector<456x128xf32>
    %c6 = arith.constant 6 : index
    %c0_21 = arith.constant 0 : index
    %c0_22 = arith.constant 0 : index
    %34 = vector.load %arg3[%c6, %c0_21, %c0_22] : memref<9x128x128xf32, #tpu.memory_space<vmem>>, vector<1x128x128xf32>
    %35 = vector.shape_cast %34 : vector<1x128x128xf32> to vector<128x128xf32>
    %cst_23 = arith.constant dense<0.000000e+00> : vector<456x128xf32>
    %36 = tpu.matmul %33, %35, %cst_23 {dimension_numbers = #tpu.dot_dimension_numbers<[1], [0], [0], [1], [0, 0, 1, 1], [], []>} : vector<456x128xf32>, vector<128x128xf32>, vector<456x128xf32> -> vector<456x128xf32>
    %37 = arith.addf %32, %36 : vector<456x128xf32>
    %38 = vector.extract_strided_slice %1 {offsets = [49, 0], sizes = [456, 128], strides = [1, 1]} : vector<528x128xf32> to vector<456x128xf32>
    %c7 = arith.constant 7 : index
    %c0_24 = arith.constant 0 : index
    %c0_25 = arith.constant 0 : index
    %39 = vector.load %arg3[%c7, %c0_24, %c0_25] : memref<9x128x128xf32, #tpu.memory_space<vmem>>, vector<1x128x128xf32>
    %40 = vector.shape_cast %39 : vector<1x128x128xf32> to vector<128x128xf32>
    %cst_26 = arith.constant dense<0.000000e+00> : vector<456x128xf32>
    %41 = tpu.matmul %38, %40, %cst_26 {dimension_numbers = #tpu.dot_dimension_numbers<[1], [0], [0], [1], [0, 0, 1, 1], [], []>} : vector<456x128xf32>, vector<128x128xf32>, vector<456x128xf32> -> vector<456x128xf32>
    %42 = arith.addf %37, %41 : vector<456x128xf32>
    %43 = vector.extract_strided_slice %1 {offsets = [50, 0], sizes = [456, 128], strides = [1, 1]} : vector<528x128xf32> to vector<456x128xf32>
    %c8 = arith.constant 8 : index
    %c0_27 = arith.constant 0 : index
    %c0_28 = arith.constant 0 : index
    %44 = vector.load %arg3[%c8, %c0_27, %c0_28] : memref<9x128x128xf32, #tpu.memory_space<vmem>>, vector<1x128x128xf32>
    %45 = vector.shape_cast %44 : vector<1x128x128xf32> to vector<128x128xf32>
    %cst_29 = arith.constant dense<0.000000e+00> : vector<456x128xf32>
    %46 = tpu.matmul %43, %45, %cst_29 {dimension_numbers = #tpu.dot_dimension_numbers<[1], [0], [0], [1], [0, 0, 1, 1], [], []>} : vector<456x128xf32>, vector<128x128xf32>, vector<456x128xf32> -> vector<456x128xf32>
    %47 = arith.addf %42, %46 : vector<456x128xf32>
    %c0_30 = arith.constant 0 : index
    %c0_31 = arith.constant 0 : index
    %48 = vector.load %arg4[%c0_30, %c0_31] : memref<1x128xf32, #tpu.memory_space<vmem>>, vector<1x128xf32>
    %49 = vector.broadcast %48 : vector<1x128xf32> to vector<456x128xf32>
    %50 = arith.addf %47, %49 : vector<456x128xf32>
    %cst_32 = arith.constant 0.000000e+00 : f32
    %51 = vector.broadcast %cst_32 : f32 to vector<456x128xf32>
    %52 = arith.maximumf %50, %51 : vector<456x128xf32>
    %c0_33 = arith.constant 0 : index
    %c0_34 = arith.constant 0 : index
    %c0_35 = arith.constant 0 : index
    %53 = vector.load %arg1[%c0_33, %c0_34, %c0_35] : memref<1x456x1xf32, #tpu.memory_space<vmem>>, vector<1x456x1xf32>
    %54 = vector.shape_cast %53 : vector<1x456x1xf32> to vector<456x1xf32>
    %55 = vector.broadcast %54 : vector<456x1xf32> to vector<456x128xf32>
    %56 = arith.mulf %52, %55 : vector<456x128xf32>
    %cst_36 = arith.constant 0.000000e+00 : f32
    %57 = vector.broadcast %cst_36 : f32 to vector<384x128xf32>
    %58 = vector.extract_strided_slice %56 {offsets = [0, 0], sizes = [384, 128], strides = [1, 1]} : vector<456x128xf32> to vector<384x128xf32>
    %c0_37 = arith.constant 0 : index
    %c0_38 = arith.constant 0 : index
    %c0_39 = arith.constant 0 : index
    %59 = vector.load %arg5[%c0_37, %c0_38, %c0_39] : memref<9x128x128xf32, #tpu.memory_space<vmem>>, vector<1x128x128xf32>
    %60 = vector.shape_cast %59 : vector<1x128x128xf32> to vector<128x128xf32>
    %cst_40 = arith.constant dense<0.000000e+00> : vector<384x128xf32>
    %61 = tpu.matmul %58, %60, %cst_40 {dimension_numbers = #tpu.dot_dimension_numbers<[1], [0], [0], [1], [0, 0, 1, 1], [], []>} : vector<384x128xf32>, vector<128x128xf32>, vector<384x128xf32> -> vector<384x128xf32>
    %62 = arith.addf %57, %61 : vector<384x128xf32>
    %63 = vector.extract_strided_slice %56 {offsets = [1, 0], sizes = [384, 128], strides = [1, 1]} : vector<456x128xf32> to vector<384x128xf32>
    %c1_41 = arith.constant 1 : index
    %c0_42 = arith.constant 0 : index
    %c0_43 = arith.constant 0 : index
    %64 = vector.load %arg5[%c1_41, %c0_42, %c0_43] : memref<9x128x128xf32, #tpu.memory_space<vmem>>, vector<1x128x128xf32>
    %65 = vector.shape_cast %64 : vector<1x128x128xf32> to vector<128x128xf32>
    %cst_44 = arith.constant dense<0.000000e+00> : vector<384x128xf32>
    %66 = tpu.matmul %63, %65, %cst_44 {dimension_numbers = #tpu.dot_dimension_numbers<[1], [0], [0], [1], [0, 0, 1, 1], [], []>} : vector<384x128xf32>, vector<128x128xf32>, vector<384x128xf32> -> vector<384x128xf32>
    %67 = arith.addf %62, %66 : vector<384x128xf32>
    %68 = vector.extract_strided_slice %56 {offsets = [2, 0], sizes = [384, 128], strides = [1, 1]} : vector<456x128xf32> to vector<384x128xf32>
    %c2_45 = arith.constant 2 : index
    %c0_46 = arith.constant 0 : index
    %c0_47 = arith.constant 0 : index
    %69 = vector.load %arg5[%c2_45, %c0_46, %c0_47] : memref<9x128x128xf32, #tpu.memory_space<vmem>>, vector<1x128x128xf32>
    %70 = vector.shape_cast %69 : vector<1x128x128xf32> to vector<128x128xf32>
    %cst_48 = arith.constant dense<0.000000e+00> : vector<384x128xf32>
    %71 = tpu.matmul %68, %70, %cst_48 {dimension_numbers = #tpu.dot_dimension_numbers<[1], [0], [0], [1], [0, 0, 1, 1], [], []>} : vector<384x128xf32>, vector<128x128xf32>, vector<384x128xf32> -> vector<384x128xf32>
    %72 = arith.addf %67, %71 : vector<384x128xf32>
    %73 = vector.extract_strided_slice %56 {offsets = [24, 0], sizes = [384, 128], strides = [1, 1]} : vector<456x128xf32> to vector<384x128xf32>
    %c3_49 = arith.constant 3 : index
    %c0_50 = arith.constant 0 : index
    %c0_51 = arith.constant 0 : index
    %74 = vector.load %arg5[%c3_49, %c0_50, %c0_51] : memref<9x128x128xf32, #tpu.memory_space<vmem>>, vector<1x128x128xf32>
    %75 = vector.shape_cast %74 : vector<1x128x128xf32> to vector<128x128xf32>
    %cst_52 = arith.constant dense<0.000000e+00> : vector<384x128xf32>
    %76 = tpu.matmul %73, %75, %cst_52 {dimension_numbers = #tpu.dot_dimension_numbers<[1], [0], [0], [1], [0, 0, 1, 1], [], []>} : vector<384x128xf32>, vector<128x128xf32>, vector<384x128xf32> -> vector<384x128xf32>
    %77 = arith.addf %72, %76 : vector<384x128xf32>
    %78 = vector.extract_strided_slice %56 {offsets = [25, 0], sizes = [384, 128], strides = [1, 1]} : vector<456x128xf32> to vector<384x128xf32>
    %c4_53 = arith.constant 4 : index
    %c0_54 = arith.constant 0 : index
    %c0_55 = arith.constant 0 : index
    %79 = vector.load %arg5[%c4_53, %c0_54, %c0_55] : memref<9x128x128xf32, #tpu.memory_space<vmem>>, vector<1x128x128xf32>
    %80 = vector.shape_cast %79 : vector<1x128x128xf32> to vector<128x128xf32>
    %cst_56 = arith.constant dense<0.000000e+00> : vector<384x128xf32>
    %81 = tpu.matmul %78, %80, %cst_56 {dimension_numbers = #tpu.dot_dimension_numbers<[1], [0], [0], [1], [0, 0, 1, 1], [], []>} : vector<384x128xf32>, vector<128x128xf32>, vector<384x128xf32> -> vector<384x128xf32>
    %82 = arith.addf %77, %81 : vector<384x128xf32>
    %83 = vector.extract_strided_slice %56 {offsets = [26, 0], sizes = [384, 128], strides = [1, 1]} : vector<456x128xf32> to vector<384x128xf32>
    %c5_57 = arith.constant 5 : index
    %c0_58 = arith.constant 0 : index
    %c0_59 = arith.constant 0 : index
    %84 = vector.load %arg5[%c5_57, %c0_58, %c0_59] : memref<9x128x128xf32, #tpu.memory_space<vmem>>, vector<1x128x128xf32>
    %85 = vector.shape_cast %84 : vector<1x128x128xf32> to vector<128x128xf32>
    %cst_60 = arith.constant dense<0.000000e+00> : vector<384x128xf32>
    %86 = tpu.matmul %83, %85, %cst_60 {dimension_numbers = #tpu.dot_dimension_numbers<[1], [0], [0], [1], [0, 0, 1, 1], [], []>} : vector<384x128xf32>, vector<128x128xf32>, vector<384x128xf32> -> vector<384x128xf32>
    %87 = arith.addf %82, %86 : vector<384x128xf32>
    %88 = vector.extract_strided_slice %56 {offsets = [48, 0], sizes = [384, 128], strides = [1, 1]} : vector<456x128xf32> to vector<384x128xf32>
    %c6_61 = arith.constant 6 : index
    %c0_62 = arith.constant 0 : index
    %c0_63 = arith.constant 0 : index
    %89 = vector.load %arg5[%c6_61, %c0_62, %c0_63] : memref<9x128x128xf32, #tpu.memory_space<vmem>>, vector<1x128x128xf32>
    %90 = vector.shape_cast %89 : vector<1x128x128xf32> to vector<128x128xf32>
    %cst_64 = arith.constant dense<0.000000e+00> : vector<384x128xf32>
    %91 = tpu.matmul %88, %90, %cst_64 {dimension_numbers = #tpu.dot_dimension_numbers<[1], [0], [0], [1], [0, 0, 1, 1], [], []>} : vector<384x128xf32>, vector<128x128xf32>, vector<384x128xf32> -> vector<384x128xf32>
    %92 = arith.addf %87, %91 : vector<384x128xf32>
    %93 = vector.extract_strided_slice %56 {offsets = [49, 0], sizes = [384, 128], strides = [1, 1]} : vector<456x128xf32> to vector<384x128xf32>
    %c7_65 = arith.constant 7 : index
    %c0_66 = arith.constant 0 : index
    %c0_67 = arith.constant 0 : index
    %94 = vector.load %arg5[%c7_65, %c0_66, %c0_67] : memref<9x128x128xf32, #tpu.memory_space<vmem>>, vector<1x128x128xf32>
    %95 = vector.shape_cast %94 : vector<1x128x128xf32> to vector<128x128xf32>
    %cst_68 = arith.constant dense<0.000000e+00> : vector<384x128xf32>
    %96 = tpu.matmul %93, %95, %cst_68 {dimension_numbers = #tpu.dot_dimension_numbers<[1], [0], [0], [1], [0, 0, 1, 1], [], []>} : vector<384x128xf32>, vector<128x128xf32>, vector<384x128xf32> -> vector<384x128xf32>
    %97 = arith.addf %92, %96 : vector<384x128xf32>
    %98 = vector.extract_strided_slice %56 {offsets = [50, 0], sizes = [384, 128], strides = [1, 1]} : vector<456x128xf32> to vector<384x128xf32>
    %c8_69 = arith.constant 8 : index
    %c0_70 = arith.constant 0 : index
    %c0_71 = arith.constant 0 : index
    %99 = vector.load %arg5[%c8_69, %c0_70, %c0_71] : memref<9x128x128xf32, #tpu.memory_space<vmem>>, vector<1x128x128xf32>
    %100 = vector.shape_cast %99 : vector<1x128x128xf32> to vector<128x128xf32>
    %cst_72 = arith.constant dense<0.000000e+00> : vector<384x128xf32>
    %101 = tpu.matmul %98, %100, %cst_72 {dimension_numbers = #tpu.dot_dimension_numbers<[1], [0], [0], [1], [0, 0, 1, 1], [], []>} : vector<384x128xf32>, vector<128x128xf32>, vector<384x128xf32> -> vector<384x128xf32>
    %102 = arith.addf %97, %101 : vector<384x128xf32>
    %c0_73 = arith.constant 0 : index
    %c0_74 = arith.constant 0 : index
    %103 = vector.load %arg6[%c0_73, %c0_74] : memref<1x128xf32, #tpu.memory_space<vmem>>, vector<1x128xf32>
    %104 = vector.broadcast %103 : vector<1x128xf32> to vector<384x128xf32>
    %105 = arith.addf %102, %104 : vector<384x128xf32>
    %cst_75 = arith.constant 1.000000e+00 : f32
    %106 = vector.broadcast %cst_75 : f32 to vector<384x128xf32>
    %107 = arith.mulf %105, %106 : vector<384x128xf32>
    %108 = vector.extract_strided_slice %1 {offsets = [50, 0], sizes = [384, 128], strides = [1, 1]} : vector<528x128xf32> to vector<384x128xf32>
    %109 = arith.addf %107, %108 : vector<384x128xf32>
    %110 = vector.shape_cast %109 : vector<384x128xf32> to vector<16x24x128xf32>
    %111 = vector.extract_strided_slice %110 {offsets = [0, 0, 0], sizes = [16, 16, 128], strides = [1, 1, 1]} : vector<16x24x128xf32> to vector<16x16x128xf32>
    %112 = vector.shape_cast %111 : vector<16x16x128xf32> to vector<1x16x16x128xf32>
    %c0_76 = arith.constant 0 : index
    %c0_77 = arith.constant 0 : index
    %c0_78 = arith.constant 0 : index
    %c0_79 = arith.constant 0 : index
    %113 = vector.load %arg7[%c0_76, %c0_77, %c0_78, %c0_79] : memref<1x16x16x128xf32, #tpu.memory_space<vmem>>, vector<1x16x16x128xf32>
    tpu.vector_store %arg7[%c0_76, %c0_77, %c0_78, %c0_79], %112 {strides = array<i32>} : memref<1x16x16x128xf32, #tpu.memory_space<vmem>>, vector<1x16x16x128xf32>,
    return
  }
  func.func @transform_0(%arg0: i32) -> (i32, i32, i32) {
    %c1_i32 = arith.constant 1 : i32
    %c0_i32 = arith.constant 0 : i32
    %0 = arith.cmpi eq, %c1_i32, %c0_i32 : i32
    %c1_i32_0 = arith.constant 1 : i32
    %1 = arith.select %0, %c1_i32_0, %c1_i32 : i32
    %2 = arith.remsi %arg0, %1 : i32
    %c0_i32_1 = arith.constant 0 : i32
    %3 = arith.cmpi ne, %2, %c0_i32_1 : i32
    %c0_i32_2 = arith.constant 0 : i32
    %4 = arith.cmpi slt, %2, %c0_i32_2 : i32
    %c0_i32_3 = arith.constant 0 : i32
    %5 = arith.cmpi slt, %1, %c0_i32_3 : i32
    %6 = arith.xori %4, %5 : i1
    %7 = arith.andi %6, %3 : i1
    %8 = arith.addi %2, %1 : i32
    %9 = arith.select %7, %8, %2 : i32
    %c0_i32_4 = arith.constant 0 : i32
    %c0_i32_5 = arith.constant 0 : i32
    %c0_i32_6 = arith.constant 0 : i32
    return %9, %c0_i32_4, %c0_i32_5 : i32, i32, i32
  }
  func.func @transform_1(%arg0: i32) -> (i32, i32, i32) {
    %c0_i32 = arith.constant 0 : i32
    %c0_i32_0 = arith.constant 0 : i32
    %c0_i32_1 = arith.constant 0 : i32
    return %arg0, %c0_i32, %c0_i32_0 : i32, i32, i32
  }
  func.func @transform_2(%arg0: i32) -> (i32, i32, i32) {
    %c0_i32 = arith.constant 0 : i32
    %c0_i32_0 = arith.constant 0 : i32
    %c0_i32_1 = arith.constant 0 : i32
    %c0_i32_2 = arith.constant 0 : i32
    return %c0_i32, %c0_i32_0, %c0_i32_1 : i32, i32, i32
  }
  func.func @transform_3(%arg0: i32) -> (i32, i32) {
    %c0_i32 = arith.constant 0 : i32
    %c0_i32_0 = arith.constant 0 : i32
    %c0_i32_1 = arith.constant 0 : i32
    return %c0_i32, %c0_i32_0 : i32, i32
  }
  func.func @transform_4(%arg0: i32) -> (i32, i32, i32) {
    %c0_i32 = arith.constant 0 : i32
    %c0_i32_0 = arith.constant 0 : i32
    %c0_i32_1 = arith.constant 0 : i32
    %c0_i32_2 = arith.constant 0 : i32
    return %c0_i32, %c0_i32_0, %c0_i32_1 : i32, i32, i32
  }
  func.func @transform_5(%arg0: i32) -> (i32, i32) {
    %c0_i32 = arith.constant 0 : i32
    %c0_i32_0 = arith.constant 0 : i32
    %c0_i32_1 = arith.constant 0 : i32
    return %c0_i32, %c0_i32_0 : i32, i32
  }
  func.func @transform_6(%arg0: i32) -> (i32, i32, i32, i32) {
    %c0_i32 = arith.constant 0 : i32
    %c0_i32_0 = arith.constant 0 : i32
    %c0_i32_1 = arith.constant 0 : i32
    %c0_i32_2 = arith.constant 0 : i32
    return %arg0, %c0_i32, %c0_i32_0, %c0_i32_1 : i32, i32, i32, i32
  }
}

</mosaic_0001>

<llo_original>
// kernel: tpu_custom_call.1
$region0: #{tpu_custom_call.1}
  #allocation0 [shape = 'u32[]', space=smem, size = 0x4, offset = 0x4, fixed_abs, tag = 'smem constant byte address 0x4 - core index']
  #allocation1 [shape = 'u32[144,128]{1,0:T(1,128)}', space=vmem, size = 0x12000, scoped, tag = 'internal scratch']
  %s0 = inlined_call_operand.vmem [shape: f32[1,456,1], index: 0, kind: input, shape index: {}]
  %s1 = inlined_call_operand.hbm [shape: f32[2,528,128], index: 1, kind: input, shape index: {}]
  %s2 = inlined_call_operand.hbm [shape: f32[9,128,128], index: 2, kind: input, shape index: {}]
  %s3 = inlined_call_operand.vmem [shape: f32[1,128], index: 3, kind: input, shape index: {}]
  %s4 = inlined_call_operand.hbm [shape: f32[9,128,128], index: 4, kind: input, shape index: {}]
  %s5 = inlined_call_operand.vmem [shape: f32[1,128], index: 5, kind: input, shape index: {}]
  %s6 = inlined_call_operand.hbm [shape: f32[2,16,16,128], index: 6, kind: output, shape index: {}]
  %s7 = sld [smem:[#allocation0]]
  $region69: #{tpu_custom_call.1} parent=0
    _
  %s9 = ssub.s32 1, %s7
  %s10 = scalar_select 0, %s9, %s7
  $region1: #{tpu_custom_call.1} parent=0
    #allocation2 [shape = 'u8[540672]{0}', space=vmem, size = 0x84000, scoped, tag = 'input window, operand 1']
    #allocation3 [shape = 's32[2]{0}', space=sflag, size = 0x8, scoped, tag = 'scoped memory for tpu_custom_call.1']
    #allocation4 [shape = 's32[2]{0}', space=sflag, size = 0x8, scoped, tag = 'scoped memory for tpu_custom_call.1']
    #allocation5 [shape = 'u8[589824]{0}', space=vmem, size = 0x90000, scoped, tag = 'input window, operand 2, single buffered']
    #allocation6 [shape = 's32[1]{0}', space=sflag, size = 0x4, scoped, tag = 'scoped memory for tpu_custom_call.1']
    #allocation7 [shape = 'u8[589824]{0}', space=vmem, size = 0x90000, scoped, tag = 'input window, operand 4, single buffered']
    #allocation8 [shape = 'u8[262144]{0}', space=vmem, size = 0x40000, scoped, tag = 'output window, operand 0']
    %11 = vsyncpa [#allocation3], 0
    %s12 = scalar_lea.sflag [#allocation3], 1
    %13 = vsyncpa %s12, 0
    %14 = vsyncpa [#allocation6], 0
    %15 = vsyncpa [#allocation4], 0
    %s16 = scalar_lea.sflag [#allocation4], 1
    %17 = vsyncpa %s16, 0
    loop: start=0, step=1, limit=4
    $region2: #{tpu_custom_call.1} parent=1 // loop_pre_header
      _
    $region3: #{tpu_custom_call.1} parent=1 // loop_header
      %s19 = sphi 0, %s23
      %p20 = scmp.ge.s32.totalorder %s19, 4
      %s27 = sphi 0, %s27
      %s29 = sphi 0, %s27
      %s30 = sphi 0, %s29
      %s44 = sphi 0, %s30
      %s50 = sphi 0, %s52
      %s53 = sphi 0, %s50
      %s54 = sphi 0, %s53
      %s70 = sphi 0, %s54
      %s74 = sphi 0, %s74
      %s76 = sphi 0, %s74
      %s77 = sphi 0, %s76
      %s91 = sphi 0, %s77
      %s95 = sphi 0, %s95
      %s97 = sphi 0, %s95
      %s98 = sphi 0, %s97
      %s112 = sphi 0, %s98
      %s116 = sphi 0, %s116
      %s118 = sphi 0, %s116
      %s119 = sphi 0, %s118
      %s133 = sphi 0, %s119
      %s137 = sphi 0, %s137
      %s139 = sphi 0, %s137
      %s140 = sphi 0, %s139
      %s154 = sphi 0, %s140
      %s160 = sphi 0, %s162
      %s163 = sphi 0, %s160
      %s164 = sphi 0, %s163
      %s180 = sphi 0, %s164
    $region4: #{tpu_custom_call.1} parent=1 // loop_header_branch
      %22 = sbr.rel (%p20) target = $region8
    $region5: #{tpu_custom_call.1} parent=1 // loop_body
      %s24 = ssub.s32 %s19, 1
      %s25 = ssub.s32 %s19, 2
      %s26 = sadd.s32 %s19, 1
      %s28 = sadd.s32 %s27, 1
      %p31 = scmp.eq.s32.totalorder %s19, 1
      %p32 = scmp.ne.s32.totalorder %s27, %s29
      %p33 = scmp.eq.s32.totalorder %s19, 0
      %p34 = por %p32, %p33
      %p35 = scmp.ne.s32.totalorder %s27, %s29
      %p36 = scmp.eq.s32.totalorder %s24, 1
      %p37 = por %p35, %p36
      %p38 = scmp.ne.s32.totalorder %s29, %s30
      %p39 = scmp.eq.s32.totalorder %s24, 0
      %p40 = por %p38, %p39
      %p41 = scmp.ne.s32.totalorder %s29, %s30
      %p42 = scmp.eq.s32.totalorder %s25, 1
      %p43 = por %p41, %p42
      %p45 = scmp.ne.s32.totalorder %s30, %s44
      %p46 = scmp.eq.s32.totalorder %s25, 0
      %p47 = por %p45, %p46
      %s48 = ssub.s32 %s19, %s26
      %p49 = scmp.eq.s32.totalorder %s48, 0
      %s51 = sadd.s32 %s50, 1
      %s52 = scalar_select %p49, %s50, %s51
      %p55 = pneg %p49
      %p56 = scmp.eq.s32.totalorder %s19, 1
      %p57 = por %p55, %p56
      %p58 = scmp.ne.s32.totalorder %s50, %s53
      %p59 = scmp.eq.s32.totalorder %s19, 0
      %p60 = por %p58, %p59
      %p61 = scmp.ne.s32.totalorder %s50, %s53
      %p62 = scmp.eq.s32.totalorder %s24, 1
      %p63 = por %p61, %p62
      %p64 = scmp.ne.s32.totalorder %s53, %s54
      %p65 = scmp.eq.s32.totalorder %s24, 0
      %p66 = por %p64, %p65
      %p67 = scmp.ne.s32.totalorder %s53, %s54
      %p68 = scmp.eq.s32.totalorder %s25, 1
      %p69 = por %p67, %p68
      %p71 = scmp.ne.s32.totalorder %s54, %s70
      %p72 = scmp.eq.s32.totalorder %s25, 0
      %p73 = por %p71, %p72
      %s75 = sadd.s32 %s74, 1
      %p78 = scmp.eq.s32.totalorder %s19, 1
      %p79 = scmp.ne.s32.totalorder %s74, %s76
      %p80 = scmp.eq.s32.totalorder %s19, 0
      %p81 = por %p79, %p80
      %p82 = scmp.ne.s32.totalorder %s74, %s76
      %p83 = scmp.eq.s32.totalorder %s24, 1
      %p84 = por %p82, %p83
      %p85 = scmp.ne.s32.totalorder %s76, %s77
      %p86 = scmp.eq.s32.totalorder %s24, 0
      %p87 = por %p85, %p86
      %p88 = scmp.ne.s32.totalorder %s76, %s77
      %p89 = scmp.eq.s32.totalorder %s25, 1
      %p90 = por %p88, %p89
      %p92 = scmp.ne.s32.totalorder %s77, %s91
      %p93 = scmp.eq.s32.totalorder %s25, 0
      %p94 = por %p92, %p93
      %s96 = sadd.s32 %s95, 1
      %p99 = scmp.eq.s32.totalorder %s19, 1
      %p100 = scmp.ne.s32.totalorder %s95, %s97
      %p101 = scmp.eq.s32.totalorder %s19, 0
      %p102 = por %p100, %p101
      %p103 = scmp.ne.s32.totalorder %s95, %s97
      %p104 = scmp.eq.s32.totalorder %s24, 1
      %p105 = por %p103, %p104
      %p106 = scmp.ne.s32.totalorder %s97, %s98
      %p107 = scmp.eq.s32.totalorder %s24, 0
      %p108 = por %p106, %p107
      %p109 = scmp.ne.s32.totalorder %s97, %s98
      %p110 = scmp.eq.s32.totalorder %s25, 1
      %p111 = por %p109, %p110
      %p113 = scmp.ne.s32.totalorder %s98, %s112
      %p114 = scmp.eq.s32.totalorder %s25, 0
      %p115 = por %p113, %p114
      %s117 = sadd.s32 %s116, 1
      %p120 = scmp.eq.s32.totalorder %s19, 1
      %p121 = scmp.ne.s32.totalorder %s116, %s118
      %p122 = scmp.eq.s32.totalorder %s19, 0
      %p123 = por %p121, %p122
      %p124 = scmp.ne.s32.totalorder %s116, %s118
      %p125 = scmp.eq.s32.totalorder %s24, 1
      %p126 = por %p124, %p125
      %p127 = scmp.ne.s32.totalorder %s118, %s119
      %p128 = scmp.eq.s32.totalorder %s24, 0
      %p129 = por %p127, %p128
      %p130 = scmp.ne.s32.totalorder %s118, %s119
      %p131 = scmp.eq.s32.totalorder %s25, 1
      %p132 = por %p130, %p131
      %p134 = scmp.ne.s32.totalorder %s119, %s133
      %p135 = scmp.eq.s32.totalorder %s25, 0
      %p136 = por %p134, %p135
      %s138 = sadd.s32 %s137, 1
      %p141 = scmp.eq.s32.totalorder %s19, 1
      %p142 = scmp.ne.s32.totalorder %s137, %s139
      %p143 = scmp.eq.s32.totalorder %s19, 0
      %p144 = por %p142, %p143
      %p145 = scmp.ne.s32.totalorder %s137, %s139
      %p146 = scmp.eq.s32.totalorder %s24, 1
      %p147 = por %p145, %p146
      %p148 = scmp.ne.s32.totalorder %s139, %s140
      %p149 = scmp.eq.s32.totalorder %s24, 0
      %p150 = por %p148, %p149
      %p151 = scmp.ne.s32.totalorder %s139, %s140
      %p152 = scmp.eq.s32.totalorder %s25, 1
      %p153 = por %p151, %p152
      %p155 = scmp.ne.s32.totalorder %s140, %s154
      %p156 = scmp.eq.s32.totalorder %s25, 0
      %p157 = por %p155, %p156
      %s158 = ssub.s32 %s19, %s26
      %p159 = scmp.eq.s32.totalorder %s158, 0
      %s161 = sadd.s32 %s160, 1
      %s162 = scalar_select %p159, %s160, %s161
      %p165 = pneg %p159
      %p166 = scmp.eq.s32.totalorder %s19, 1
      %p167 = por %p165, %p166
      %p168 = scmp.ne.s32.totalorder %s160, %s163
      %p169 = scmp.eq.s32.totalorder %s19, 0
      %p170 = por %p168, %p169
      %p171 = scmp.ne.s32.totalorder %s160, %s163
      %p172 = scmp.eq.s32.totalorder %s24, 1
      %p173 = por %p171, %p172
      %p174 = scmp.ne.s32.totalorder %s163, %s164
      %p175 = scmp.eq.s32.totalorder %s24, 0
      %p176 = por %p174, %p175
      %p177 = scmp.ne.s32.totalorder %s163, %s164
      %p178 = scmp.eq.s32.totalorder %s25, 1
      %p179 = por %p177, %p178
      %p181 = scmp.ne.s32.totalorder %s164, %s180
      %p182 = scmp.eq.s32.totalorder %s25, 0
      %p183 = por %p181, %p182
      %p184 = scmp.le.s32.totalorder 1, %s19
      %p185 = scmp.lt.s32.totalorder %s19, 3
      %p186 = pnand %p184, %p185
      %p187 = pneg %p186
      // Predicated region
      $region9: #{tpu_custom_call.1} parent=5 // pred_check
        _
      $region10: #{tpu_custom_call.1} parent=5 // pred_check_branch
        %189 = sbr.rel (%p186) target = $region12
      $region11: #{tpu_custom_call.1} parent=5 // pred_region
        %s190 = ssub.s32 %s19, 1
        // Predicated region
        $region13: #{tpu_custom_call.1} parent=11 // pred_check
          %p191 = pneg %p40
        $region14: #{tpu_custom_call.1} parent=11 // pred_check_branch
          %193 = sbr.rel (%p191) target = $region16
        $region15: #{tpu_custom_call.1} parent=11 // pred_region
          _
        $region16: #{tpu_custom_call.1} parent=11 // pred_fallthru
          _
        // Predicated region
        $region17: #{tpu_custom_call.1} parent=11 // pred_check
          %p194 = pneg %p87
        $region18: #{tpu_custom_call.1} parent=11 // pred_check_branch
          %196 = sbr.rel (%p194) target = $region20
        $region19: #{tpu_custom_call.1} parent=11 // pred_region
          %s198 = ssub.s32 18432, 18432
          %199 = vsyncadd [#allocation6], %s198
          %s200 = sshll.u32 [#allocation5], 4
          %s201 = int_to_ptr.vmem [resolvable:$true] %s200
          %206 = dma.hbm_to_vmem [thread:$0]  %s2, 18432, %s201, [#allocation6], 128, 128, 8
        $region20: #{tpu_custom_call.1} parent=11 // pred_fallthru
          _
        // Predicated region
        $region21: #{tpu_custom_call.1} parent=11 // pred_check
          %p207 = pneg %p108
        $region22: #{tpu_custom_call.1} parent=11 // pred_check_branch
          %209 = sbr.rel (%p207) target = $region24
        $region23: #{tpu_custom_call.1} parent=11 // pred_region
          _
        $region24: #{tpu_custom_call.1} parent=11 // pred_fallthru
          _
        // Predicated region
        $region25: #{tpu_custom_call.1} parent=11 // pred_check
          %p210 = pneg %p129
        $region26: #{tpu_custom_call.1} parent=11 // pred_check_branch
          %212 = sbr.rel (%p210) target = $region28
        $region27: #{tpu_custom_call.1} parent=11 // pred_region
          %s214 = ssub.s32 18432, 18432
          %215 = vsyncadd [#allocation6], %s214
          %s216 = sshll.u32 [#allocation7], 4
          %s217 = int_to_ptr.vmem [resolvable:$true] %s216
          %222 = dma.hbm_to_vmem [thread:$0]  %s4, 18432, %s217, [#allocation6], 128, 128, 8
        $region28: #{tpu_custom_call.1} parent=11 // pred_fallthru
          _
        // Predicated region
        $region29: #{tpu_custom_call.1} parent=11 // pred_check
          %p223 = pneg %p150
        $region30: #{tpu_custom_call.1} parent=11 // pred_check_branch
          %225 = sbr.rel (%p223) target = $region32
        $region31: #{tpu_custom_call.1} parent=11 // pred_region
          _
        $region32: #{tpu_custom_call.1} parent=11 // pred_fallthru
          _
      $region12: #{tpu_custom_call.1} parent=5 // pred_fallthru
        _
      %p226 = scmp.lt.s32.totalorder %s19, 2
      // Predicated region
      $region33: #{tpu_custom_call.1} parent=5 // pred_check
        %p227 = pneg %p226
      $region34: #{tpu_custom_call.1} parent=5 // pred_check_branch
        %229 = sbr.rel (%p227) target = $region36
      $region35: #{tpu_custom_call.1} parent=5 // pred_region
        // Predicated region
        $region37: #{tpu_custom_call.1} parent=35 // pred_check
          %p230 = pneg %p60
        $region38: #{tpu_custom_call.1} parent=35 // pred_check_branch
          %232 = sbr.rel (%p230) target = $region40
        $region39: #{tpu_custom_call.1} parent=35 // pred_region
          %s233 = sand.u32 %s50, 1
          %s234 = scalar_lea.sflag [#allocation3], %s233
          %s235 = sand.u32 %s50, 1
          %s236 = smul.addr %s235, 528
          %s237 = scalar_lea.vmem [#allocation2], %s236
          %s239 = ssub.s32 8448, 8448
          %240 = vsyncadd %s234, %s239
          %s241 = smul.addr %s19, 66
          %s242 = smul.addr %s241, 128
          %s243 = scalar_lea.hbm %s1, %s242
          %s244 = sshll.u32 %s237, 4
          %s245 = int_to_ptr.vmem [resolvable:$true] %s244
          %250 = dma.hbm_to_vmem [thread:$0]  %s243, 8448, %s245, %s234, 128, 128, 8
        $region40: #{tpu_custom_call.1} parent=35 // pred_fallthru
          _
      $region36: #{tpu_custom_call.1} parent=5 // pred_fallthru
        _
      %p251 = scmp.le.s32.totalorder 1, %s19
      %p252 = scmp.lt.s32.totalorder %s19, 3
      %p253 = pnand %p251, %p252
      %p254 = pneg %p253
      // Predicated region
      $region41: #{tpu_custom_call.1} parent=5 // pred_check
        _
      $region42: #{tpu_custom_call.1} parent=5 // pred_check_branch
        %256 = sbr.rel (%p253) target = $region44
      $region43: #{tpu_custom_call.1} parent=5 // pred_region
        %s257 = ssub.s32 %s19, 1
        %s258 = sand.u32 %s53, 1
        %s259 = scalar_lea.sflag [#allocation3], %s258
        %s260 = sand.u32 %s53, 1
        %s261 = smul.addr %s260, 528
        %s262 = scalar_lea.vmem [#allocation2], %s261
        // Predicated region
        $region45: #{tpu_custom_call.1} parent=43 // pred_check
          %p263 = pneg %p66
        $region46: #{tpu_custom_call.1} parent=43 // pred_check_branch
          %265 = sbr.rel (%p263) target = $region48
        $region47: #{tpu_custom_call.1} parent=43 // pred_region
          %266 = dma.done %s259, 8448
        $region48: #{tpu_custom_call.1} parent=43 // pred_fallthru
          _
        // Predicated region
        $region49: #{tpu_custom_call.1} parent=43 // pred_check
          %p267 = pneg %p87
        $region50: #{tpu_custom_call.1} parent=43 // pred_check_branch
          %269 = sbr.rel (%p267) target = $region52
        $region51: #{tpu_custom_call.1} parent=43 // pred_region
          %270 = dma.done [#allocation6], 18432
        $region52: #{tpu_custom_call.1} parent=43 // pred_fallthru
          _
        // Predicated region
        $region53: #{tpu_custom_call.1} parent=43 // pred_check
          %p271 = pneg %p129
        $region54: #{tpu_custom_call.1} parent=43 // pred_check_branch
          %273 = sbr.rel (%p271) target = $region56
        $region55: #{tpu_custom_call.1} parent=43 // pred_region
          %274 = dma.done [#allocation6], 18432
        $region56: #{tpu_custom_call.1} parent=43 // pred_fallthru
          _
        %p275 = pneg %p40
        %p276 = pneg %p37
        %s277 = sand.u32 %s53, 1
        %s278 = scalar_lea.sflag [#allocation3], %s277
        %s279 = sand.u32 %s53, 1
        %s280 = smul.addr %s279, 528
        %s281 = scalar_lea.vmem [#allocation2], %s280
        %p282 = pneg %p66
        %p283 = pneg %p63
        %p284 = pneg %p87
        %p285 = pneg %p84
        %p286 = pneg %p108
        %p287 = pneg %p105
        %p288 = pneg %p129
        %p289 = pneg %p126
        %p290 = pneg %p150
        %p291 = pneg %p147
        %p292 = pneg %p176
        %p293 = pneg %p173
        %s294 = sand.u32 %s163, 1
        %s295 = scalar_lea.sflag [#allocation4], %s294
        %s296 = sand.u32 %s163, 1
        %s297 = smul.addr %s296, 256
        %s298 = scalar_lea.vmem [#allocation8], %s297
        %v299 = vld [vmem:[%s262] sm:$0xff]
        %v300 = vld [vmem:[%s262 + $0x8] sm:$0xff]
        %v301 = vld [vmem:[%s262 + $0x10] sm:$0xff]
        %v302 = vld [vmem:[%s262 + $0x18] sm:$0xff]
        %v303 = vld [vmem:[%s262 + $0x20] sm:$0xff]
        %v304 = vld [vmem:[%s262 + $0x28] sm:$0xff]
        %v305 = vld [vmem:[%s262 + $0x30] sm:$0xff]
        %v306 = vld [vmem:[%s262 + $0x38] sm:$0xff]
        %v307 = vld [vmem:[%s262 + $0x40] sm:$0xff]
        %v308 = vld [vmem:[%s262 + $0x48] sm:$0xff]
        %v309 = vld [vmem:[%s262 + $0x50] sm:$0xff]
        %v310 = vld [vmem:[%s262 + $0x58] sm:$0xff]
        %v311 = vld [vmem:[%s262 + $0x60] sm:$0xff]
        %v312 = vld [vmem:[%s262 + $0x68] sm:$0xff]
        %v313 = vld [vmem:[%s262 + $0x70] sm:$0xff]
        %v314 = vld [vmem:[%s262 + $0x78] sm:$0xff]
        %v315 = vld [vmem:[%s262 + $0x80] sm:$0xff]
        %v316 = vld [vmem:[%s262 + $0x88] sm:$0xff]
        %v317 = vld [vmem:[%s262 + $0x90] sm:$0xff]
        %v318 = vld [vmem:[%s262 + $0x98] sm:$0xff]
        %v319 = vld [vmem:[%s262 + $0xa0] sm:$0xff]
        %v320 = vld [vmem:[%s262 + $0xa8] sm:$0xff]
        %v321 = vld [vmem:[%s262 + $0xb0] sm:$0xff]
        %v322 = vld [vmem:[%s262 + $0xb8] sm:$0xff]
        %v323 = vld [vmem:[%s262 + $0xc0] sm:$0xff]
        %v324 = vld [vmem:[%s262 + $0xc8] sm:$0xff]
        %v325 = vld [vmem:[%s262 + $0xd0] sm:$0xff]
        %v326 = vld [vmem:[%s262 + $0xd8] sm:$0xff]
        %v327 = vld [vmem:[%s262 + $0xe0] sm:$0xff]
        %v328 = vld [vmem:[%s262 + $0xe8] sm:$0xff]
        %v329 = vld [vmem:[%s262 + $0xf0] sm:$0xff]
        %v330 = vld [vmem:[%s262 + $0xf8] sm:$0xff]
        %v331 = vld [vmem:[%s262 + $0x100] sm:$0xff]
        %v332 = vld [vmem:[%s262 + $0x108] sm:$0xff]
        %v333 = vld [vmem:[%s262 + $0x110] sm:$0xff]
        %v334 = vld [vmem:[%s262 + $0x118] sm:$0xff]
        %v335 = vld [vmem:[%s262 + $0x120] sm:$0xff]
        %v336 = vld [vmem:[%s262 + $0x128] sm:$0xff]
        %v337 = vld [vmem:[%s262 + $0x130] sm:$0xff]
        %v338 = vld [vmem:[%s262 + $0x138] sm:$0xff]
        %v339 = vld [vmem:[%s262 + $0x140] sm:$0xff]
        %v340 = vld [vmem:[%s262 + $0x148] sm:$0xff]
        %v341 = vld [vmem:[%s262 + $0x150] sm:$0xff]
        %v342 = vld [vmem:[%s262 + $0x158] sm:$0xff]
        %v343 = vld [vmem:[%s262 + $0x160] sm:$0xff]
        %v344 = vld [vmem:[%s262 + $0x168] sm:$0xff]
        %v345 = vld [vmem:[%s262 + $0x170] sm:$0xff]
        %v346 = vld [vmem:[%s262 + $0x178] sm:$0xff]
        %v347 = vld [vmem:[%s262 + $0x180] sm:$0xff]
        %v348 = vld [vmem:[%s262 + $0x188] sm:$0xff]
        %v349 = vld [vmem:[%s262 + $0x190] sm:$0xff]
        %v350 = vld [vmem:[%s262 + $0x198] sm:$0xff]
        %v351 = vld [vmem:[%s262 + $0x1a0] sm:$0xff]
        %v352 = vld [vmem:[%s262 + $0x1a8] sm:$0xff]
        %v353 = vld [vmem:[%s262 + $0x1b0] sm:$0xff]
        %v354 = vld [vmem:[%s262 + $0x1b8] sm:$0xff]
        %v355 = vld [vmem:[%s262 + $0x1c0] sm:$0xff]
        %v356 = vld [vmem:[%s262 + $0x1c8] sm:$0xff]
        %v357 = vld [vmem:[%s262 + $0x1d0] sm:$0xff]
        %v358 = vld [vmem:[%s262 + $0x1d8] sm:$0xff]
        %v359 = vld [vmem:[%s262 + $0x1e0] sm:$0xff]
        %v360 = vld [vmem:[%s262 + $0x1e8] sm:$0xff]
        %v361 = vld [vmem:[%s262 + $0x1f0] sm:$0xff]
        %v362 = vld [vmem:[%s262 + $0x1f8] sm:$0xff]
        %v363 = vld [vmem:[#allocation5] sm:$0xff]
        %v364 = vld [vmem:[#allocation5 + $0x8] sm:$0xff]
        %v365 = vld [vmem:[#allocation5 + $0x10] sm:$0xff]
        %v366 = vld [vmem:[#allocation5 + $0x18] sm:$0xff]
        %v367 = vld [vmem:[#allocation5 + $0x20] sm:$0xff]
        %v368 = vld [vmem:[#allocation5 + $0x28] sm:$0xff]
        %v369 = vld [vmem:[#allocation5 + $0x30] sm:$0xff]
        %v370 = vld [vmem:[#allocation5 + $0x38] sm:$0xff]
        %v371 = vld [vmem:[#allocation5 + $0x40] sm:$0xff]
        %v372 = vld [vmem:[#allocation5 + $0x48] sm:$0xff]
        %v373 = vld [vmem:[#allocation5 + $0x50] sm:$0xff]
        %v374 = vld [vmem:[#allocation5 + $0x58] sm:$0xff]
        %v375 = vld [vmem:[#allocation5 + $0x60] sm:$0xff]
        %v376 = vld [vmem:[#allocation5 + $0x68] sm:$0xff]
        %v377 = vld [vmem:[#allocation5 + $0x70] sm:$0xff]
        %v378 = vld [vmem:[#allocation5 + $0x78] sm:$0xff]
        %s379 = scalar_lea.vmem [#allocation5], 128
        %v380 = vld [vmem:[%s379] sm:$0xff]
        %v381 = vld [vmem:[%s379 + $0x8] sm:$0xff]
        %v382 = vld [vmem:[%s379 + $0x10] sm:$0xff]
        %v383 = vld [vmem:[%s379 + $0x18] sm:$0xff]
        %v384 = vld [vmem:[%s379 + $0x20] sm:$0xff]
        %v385 = vld [vmem:[%s379 + $0x28] sm:$0xff]
        %v386 = vld [vmem:[%s379 + $0x30] sm:$0xff]
        %v387 = vld [vmem:[%s379 + $0x38] sm:$0xff]
        %v388 = vld [vmem:[%s379 + $0x40] sm:$0xff]
        %v389 = vld [vmem:[%s379 + $0x48] sm:$0xff]
        %v390 = vld [vmem:[%s379 + $0x50] sm:$0xff]
        %v391 = vld [vmem:[%s379 + $0x58] sm:$0xff]
        %v392 = vld [vmem:[%s379 + $0x60] sm:$0xff]
        %v393 = vld [vmem:[%s379 + $0x68] sm:$0xff]
        %v394 = vld [vmem:[%s379 + $0x70] sm:$0xff]
        %v395 = vld [vmem:[%s379 + $0x78] sm:$0xff]
        %vm454 = vcmask 1046528
        %v455 = vrot.slane %v299, 1
        %v456 = vrot.slane %v300, 1
        %v457 = vsel %vm454, %v455, %v456
        %v458 = vrot.slane %v301, 1
        %v459 = vsel %vm454, %v456, %v458
        %v460 = vrot.slane %v302, 1
        %v461 = vsel %vm454, %v458, %v460
        %v462 = vrot.slane %v303, 1
        %v463 = vsel %vm454, %v460, %v462
        %v464 = vrot.slane %v304, 1
        %v465 = vsel %vm454, %v462, %v464
        %v466 = vrot.slane %v305, 1
        %v467 = vsel %vm454, %v464, %v466
        %v468 = vrot.slane %v306, 1
        %v469 = vsel %vm454, %v466, %v468
        %v470 = vrot.slane %v307, 1
        %v471 = vsel %vm454, %v468, %v470
        %v472 = vrot.slane %v308, 1
        %v473 = vsel %vm454, %v470, %v472
        %v474 = vrot.slane %v309, 1
        %v475 = vsel %vm454, %v472, %v474
        %v476 = vrot.slane %v310, 1
        %v477 = vsel %vm454, %v474, %v476
        %v478 = vrot.slane %v311, 1
        %v479 = vsel %vm454, %v476, %v478
        %v480 = vrot.slane %v312, 1
        %v481 = vsel %vm454, %v478, %v480
        %v482 = vrot.slane %v313, 1
        %v483 = vsel %vm454, %v480, %v482
        %v484 = vrot.slane %v314, 1
        %v485 = vsel %vm454, %v482, %v484
        %v486 = vrot.slane %v315, 1
        %v487 = vsel %vm454, %v484, %v486
        %v488 = vrot.slane %v316, 1
        %v489 = vsel %vm454, %v486, %v488
        %v490 = vrot.slane %v317, 1
        %v491 = vsel %vm454, %v488, %v490
        %v492 = vrot.slane %v318, 1
        %v493 = vsel %vm454, %v490, %v492
        %v494 = vrot.slane %v319, 1
        %v495 = vsel %vm454, %v492, %v494
        %v496 = vrot.slane %v320, 1
        %v497 = vsel %vm454, %v494, %v496
        %v498 = vrot.slane %v321, 1
        %v499 = vsel %vm454, %v496, %v498
        %v500 = vrot.slane %v322, 1
        %v501 = vsel %vm454, %v498, %v500
        %v502 = vrot.slane %v323, 1
        %v503 = vsel %vm454, %v500, %v502
        %v504 = vrot.slane %v324, 1
        %v505 = vsel %vm454, %v502, %v504
        %v506 = vrot.slane %v325, 1
        %v507 = vsel %vm454, %v504, %v506
        %v508 = vrot.slane %v326, 1
        %v509 = vsel %vm454, %v506, %v508
        %v510 = vrot.slane %v327, 1
        %v511 = vsel %vm454, %v508, %v510
        %v512 = vrot.slane %v328, 1
        %v513 = vsel %vm454, %v510, %v512
        %v514 = vrot.slane %v329, 1
        %v515 = vsel %vm454, %v512, %v514
        %v516 = vrot.slane %v330, 1
        %v517 = vsel %vm454, %v514, %v516
        %v518 = vrot.slane %v331, 1
        %v519 = vsel %vm454, %v516, %v518
        %v520 = vrot.slane %v332, 1
        %v521 = vsel %vm454, %v518, %v520
        %v522 = vrot.slane %v333, 1
        %v523 = vsel %vm454, %v520, %v522
        %v524 = vrot.slane %v334, 1
        %v525 = vsel %vm454, %v522, %v524
        %v526 = vrot.slane %v335, 1
        %v527 = vsel %vm454, %v524, %v526
        %v528 = vrot.slane %v336, 1
        %v529 = vsel %vm454, %v526, %v528
        %v530 = vrot.slane %v337, 1
        %v531 = vsel %vm454, %v528, %v530
        %v532 = vrot.slane %v338, 1
        %v533 = vsel %vm454, %v530, %v532
        %v534 = vrot.slane %v339, 1
        %v535 = vsel %vm454, %v532, %v534
        %v536 = vrot.slane %v340, 1
        %v537 = vsel %vm454, %v534, %v536
        %v538 = vrot.slane %v341, 1
        %v539 = vsel %vm454, %v536, %v538
        %v540 = vrot.slane %v342, 1
        %v541 = vsel %vm454, %v538, %v540
        %v542 = vrot.slane %v343, 1
        %v543 = vsel %vm454, %v540, %v542
        %v544 = vrot.slane %v344, 1
        %v545 = vsel %vm454, %v542, %v544
        %v546 = vrot.slane %v345, 1
        %v547 = vsel %vm454, %v544, %v546
        %v548 = vrot.slane %v346, 1
        %v549 = vsel %vm454, %v546, %v548
        %v550 = vrot.slane %v347, 1
        %v551 = vsel %vm454, %v548, %v550
        %v552 = vrot.slane %v348, 1
        %v553 = vsel %vm454, %v550, %v552
        %v554 = vrot.slane %v349, 1
        %v555 = vsel %vm454, %v552, %v554
        %v556 = vrot.slane %v350, 1
        %v557 = vsel %vm454, %v554, %v556
        %v558 = vrot.slane %v351, 1
        %v559 = vsel %vm454, %v556, %v558
        %v560 = vrot.slane %v352, 1
        %v561 = vsel %vm454, %v558, %v560
        %v562 = vrot.slane %v353, 1
        %v563 = vsel %vm454, %v560, %v562
        %v564 = vrot.slane %v354, 1
        %v565 = vsel %vm454, %v562, %v564
        %v566 = vrot.slane %v355, 1
        %v567 = vsel %vm454, %v564, %v566
        %v568 = vrot.slane %v356, 1
        %v569 = vsel %vm454, %v566, %v568
        %627 = vmatprep.subr.mxu0 0.0
        %628 = vmatpush1.msra.mxu0 %v380
        %629 = vmatprep.subr.mxu0 0.0
        %630 = vmatpush1.msra.mxu0 %v381
        %631 = vmatprep.subr.mxu0 0.0
        %632 = vmatpush1.msra.mxu0 %v382
        %633 = vmatprep.subr.mxu0 0.0
        %634 = vmatpush1.msra.mxu0 %v383
        %635 = vmatprep.subr.mxu0 0.0
        %636 = vmatpush1.msra.mxu0 %v384
        %637 = vmatprep.subr.mxu0 0.0
        %638 = vmatpush1.msra.mxu0 %v385
        %639 = vmatprep.subr.mxu0 0.0
        %640 = vmatpush1.msra.mxu0 %v386
        %641 = vmatprep.subr.mxu0 0.0
        %642 = vmatpush1.msra.mxu0 %v387
        %643 = vmatprep.subr.mxu0 0.0
        %644 = vmatpush1.msra.mxu0 %v388
        %645 = vmatprep.subr.mxu0 0.0
        %646 = vmatpush1.msra.mxu0 %v389
        %647 = vmatprep.subr.mxu0 0.0
        %648 = vmatpush1.msra.mxu0 %v390
        %649 = vmatprep.subr.mxu0 0.0
        %650 = vmatpush1.msra.mxu0 %v391
        %651 = vmatprep.subr.mxu0 0.0
        %652 = vmatpush1.msra.mxu0 %v392
        %653 = vmatprep.subr.mxu0 0.0
        %654 = vmatpush1.msra.mxu0 %v393
        %655 = vmatprep.subr.mxu0 0.0
        %656 = vmatpush1.msra.mxu0 %v394
        %657 = vmatprep.subr.mxu0 0.0
        %658 = vmatpush1.msra.mxu0 %v395
        %659 = vmatprep.subr.mxu0 0.0
        %660 = vmatpush1.msra.mxu0 0.0
        %661 = vmatprep.subr.mxu0 0.0
        %662 = vmatpush1.msra.mxu0 0.0
        %663 = vmatprep.subr.mxu0 0.0
        %664 = vmatpush1.msra.mxu0 0.0
        %665 = vmatprep.subr.mxu0 0.0
        %666 = vmatpush1.msra.mxu0 0.0
        %667 = vmatprep.subr.mxu0 0.0
        %668 = vmatpush1.msra.mxu0 0.0
        %669 = vmatprep.subr.mxu0 0.0
        %670 = vmatpush1.msra.mxu0 0.0
        %671 = vmatprep.subr.mxu0 0.0
        %672 = vmatpush1.msra.mxu0 0.0
        %673 = vmatprep.subr.mxu0 0.0
        %674 = vmatpush1.msra.mxu0 0.0
        %675 = vmatprep.subr.mxu0 0.0
        %676 = vmatpush1.msra.mxu0 0.0
        %677 = vmatprep.subr.mxu0 0.0
        %678 = vmatpush1.msra.mxu0 0.0
        %679 = vmatprep.subr.mxu0 0.0
        %680 = vmatpush1.msra.mxu0 0.0
        %681 = vmatprep.subr.mxu0 0.0
        %682 = vmatpush1.msra.mxu0 0.0
        %683 = vmatprep.subr.mxu0 0.0
        %684 = vmatpush1.msra.mxu0 0.0
        %685 = vmatprep.subr.mxu0 0.0
        %686 = vmatpush1.msra.mxu0 0.0
        %687 = vmatprep.subr.mxu0 0.0
        %688 = vmatpush1.msra.mxu0 0.0
        %689 = vmatprep.subr.mxu0 0.0
        %690 = vmatpush1.msra.mxu0 0.0
        %691 = vmatprep.mubr.f32.mxu0 0.0
        %692 = vmatmul.mubr.f32.gmra.mrb[0].mxu0 %v457
        %v693 = vpop.f32.mrb[0].mxu0
        %v694 = vadd.f32 0.0, %v693
        %v695 = vpop.f32.mrb[0].mxu0
        %696 = vmatprep.mubr.f32.mxu0 0.0
        %697 = vmatmul.mubr.f32.gmra.mrb[0].mxu0 %v459
        %v698 = vpop.f32.mrb[0].mxu0
        %v699 = vadd.f32 0.0, %v698
        %v700 = vpop.f32.mrb[0].mxu0
        %701 = vmatprep.mubr.f32.mxu0 0.0
        %702 = vmatmul.mubr.f32.gmra.mrb[0].mxu0 %v461
        %v703 = vpop.f32.mrb[0].mxu0
        %v704 = vadd.f32 0.0, %v703
        %v705 = vpop.f32.mrb[0].mxu0
        %706 = vmatprep.mubr.f32.mxu0 0.0
        %707 = vmatmul.mubr.f32.gmra.mrb[0].mxu0 %v463
        %v708 = vpop.f32.mrb[0].mxu0
        %v709 = vadd.f32 0.0, %v708
        %v710 = vpop.f32.mrb[0].mxu0
        %711 = vmatprep.mubr.f32.mxu0 0.0
        %712 = vmatmul.mubr.f32.gmra.mrb[0].mxu0 %v465
        %v713 = vpop.f32.mrb[0].mxu0
        %v714 = vadd.f32 0.0, %v713
        %v715 = vpop.f32.mrb[0].mxu0
        %716 = vmatprep.mubr.f32.mxu0 0.0
        %717 = vmatmul.mubr.f32.gmra.mrb[0].mxu0 %v467
        %v718 = vpop.f32.mrb[0].mxu0
        %v719 = vadd.f32 0.0, %v718
        %v720 = vpop.f32.mrb[0].mxu0
        %721 = vmatprep.mubr.f32.mxu0 0.0
        %722 = vmatmul.mubr.f32.gmra.mrb[0].mxu0 %v469
        %v723 = vpop.f32.mrb[0].mxu0
        %v724 = vadd.f32 0.0, %v723
        %v725 = vpop.f32.mrb[0].mxu0
        %726 = vmatprep.mubr.f32.mxu0 0.0
        %727 = vmatmul.mubr.f32.gmra.mrb[0].mxu0 %v471
        %v728 = vpop.f32.mrb[0].mxu0
        %v729 = vadd.f32 0.0, %v728
        %v730 = vpop.f32.mrb[0].mxu0
        %731 = vmatprep.mubr.f32.mxu0 0.0
        %732 = vmatmul.mubr.f32.gmra.mrb[0].mxu0 %v473
        %v733 = vpop.f32.mrb[0].mxu0
        %v734 = vadd.f32 0.0, %v733
        %v735 = vpop.f32.mrb[0].mxu0
        %736 = vmatprep.mubr.f32.mxu0 0.0
        %737 = vmatmul.mubr.f32.gmra.mrb[0].mxu0 %v475
        %v738 = vpop.f32.mrb[0].mxu0
        %v739 = vadd.f32 0.0, %v738
        %v740 = vpop.f32.mrb[0].mxu0
        %741 = vmatprep.mubr.f32.mxu0 0.0
        %742 = vmatmul.mubr.f32.gmra.mrb[0].mxu0 %v477
        %v743 = vpop.f32.mrb[0].mxu0
        %v744 = vadd.f32 0.0, %v743
        %v745 = vpop.f32.mrb[0].mxu0
        %746 = vmatprep.mubr.f32.mxu0 0.0
        %747 = vmatmul.mubr.f32.gmra.mrb[0].mxu0 %v479
        %v748 = vpop.f32.mrb[0].mxu0
        %v749 = vadd.f32 0.0, %v748
        %v750 = vpop.f32.mrb[0].mxu0
        %751 = vmatprep.mubr.f32.mxu0 0.0
        %752 = vmatmul.mubr.f32.gmra.mrb[0].mxu0 %v481
        %v753 = vpop.f32.mrb[0].mxu0
        %v754 = vadd.f32 0.0, %v753
        %v755 = vpop.f32.mrb[0].mxu0
        %756 = vmatprep.mubr.f32.mxu0 0.0
        %757 = vmatmul.mubr.f32.gmra.mrb[0].mxu0 %v483
        %v758 = vpop.f32.mrb[0].mxu0
        %v759 = vadd.f32 0.0, %v758
        %v760 = vpop.f32.mrb[0].mxu0
        %761 = vmatprep.mubr.f32.mxu0 0.0
        %762 = vmatmul.mubr.f32.gmra.mrb[0].mxu0 %v485
        %v763 = vpop.f32.mrb[0].mxu0
        %v764 = vadd.f32 0.0, %v763
        %v765 = vpop.f32.mrb[0].mxu0
        %766 = vmatprep.mubr.f32.mxu0 0.0
        %767 = vmatmul.mubr.f32.gmra.mrb[0].mxu0 %v487
        %v768 = vpop.f32.mrb[0].mxu0
        %v769 = vadd.f32 0.0, %v768
        %v770 = vpop.f32.mrb[0].mxu0
        %771 = vmatprep.mubr.f32.mxu0 0.0
        %772 = vmatmul.mubr.f32.gmra.mrb[0].mxu0 %v489
        %v773 = vpop.f32.mrb[0].mxu0
        %v774 = vadd.f32 0.0, %v773
        %v775 = vpop.f32.mrb[0].mxu0
        %776 = vmatprep.mubr.f32.mxu0 0.0
        %777 = vmatmul.mubr.f32.gmra.mrb[0].mxu0 %v491
        %v778 = vpop.f32.mrb[0].mxu0
        %v779 = vadd.f32 0.0, %v778
        %v780 = vpop.f32.mrb[0].mxu0
        %781 = vmatprep.mubr.f32.mxu0 0.0
        %782 = vmatmul.mubr.f32.gmra.mrb[0].mxu0 %v493
        %v783 = vpop.f32.mrb[0].mxu0
        %v784 = vadd.f32 0.0, %v783
        %v785 = vpop.f32.mrb[0].mxu0
        %786 = vmatprep.mubr.f32.mxu0 0.0
        %787 = vmatmul.mubr.f32.gmra.mrb[0].mxu0 %v495
        %v788 = vpop.f32.mrb[0].mxu0
        %v789 = vadd.f32 0.0, %v788
        %v790 = vpop.f32.mrb[0].mxu0
        %791 = vmatprep.mubr.f32.mxu0 0.0
        %792 = vmatmul.mubr.f32.gmra.mrb[0].mxu0 %v497
        %v793 = vpop.f32.mrb[0].mxu0
        %v794 = vadd.f32 0.0, %v793
        %v795 = vpop.f32.mrb[0].mxu0
        %796 = vmatprep.mubr.f32.mxu0 0.0
        %797 = vmatmul.mubr.f32.gmra.mrb[0].mxu0 %v499
        %v798 = vpop.f32.mrb[0].mxu0
        %v799 = vadd.f32 0.0, %v798
        %v800 = vpop.f32.mrb[0].mxu0
        %801 = vmatprep.mubr.f32.mxu0 0.0
        %802 = vmatmul.mubr.f32.gmra.mrb[0].mxu0 %v501
        %v803 = vpop.f32.mrb[0].mxu0
        %v804 = vadd.f32 0.0, %v803
        %v805 = vpop.f32.mrb[0].mxu0
        %806 = vmatprep.mubr.f32.mxu0 0.0
        %807 = vmatmul.mubr.f32.gmra.mrb[0].mxu0 %v503
        %v808 = vpop.f32.mrb[0].mxu0
        %v809 = vadd.f32 0.0, %v808
        %v810 = vpop.f32.mrb[0].mxu0
        %811 = vmatprep.mubr.f32.mxu0 0.0
        %812 = vmatmul.mubr.f32.gmra.mrb[0].mxu0 %v505
        %v813 = vpop.f32.mrb[0].mxu0
        %v814 = vadd.f32 0.0, %v813
        %v815 = vpop.f32.mrb[0].mxu0
        %816 = vmatprep.mubr.f32.mxu0 0.0
        %817 = vmatmul.mubr.f32.gmra.mrb[0].mxu0 %v507
        %v818 = vpop.f32.mrb[0].mxu0
        %v819 = vadd.f32 0.0, %v818
        %v820 = vpop.f32.mrb[0].mxu0
        %821 = vmatprep.mubr.f32.mxu0 0.0
        %822 = vmatmul.mubr.f32.gmra.mrb[0].mxu0 %v509
        %v823 = vpop.f32.mrb[0].mxu0
        %v824 = vadd.f32 0.0, %v823
        %v825 = vpop.f32.mrb[0].mxu0
        %826 = vmatprep.mubr.f32.mxu0 0.0
        %827 = vmatmul.mubr.f32.gmra.mrb[0].mxu0 %v511
        %v828 = vpop.f32.mrb[0].mxu0
        %v829 = vadd.f32 0.0, %v828
        %v830 = vpop.f32.mrb[0].mxu0
        %831 = vmatprep.mubr.f32.mxu0 0.0
        %832 = vmatmul.mubr.f32.gmra.mrb[0].mxu0 %v513
        %v833 = vpop.f32.mrb[0].mxu0
        %v834 = vadd.f32 0.0, %v833
        %v835 = vpop.f32.mrb[0].mxu0
        %836 = vmatprep.mubr.f32.mxu0 0.0
        %837 = vmatmul.mubr.f32.gmra.mrb[0].mxu0 %v515
        %v838 = vpop.f32.mrb[0].mxu0
        %v839 = vadd.f32 0.0, %v838
        %v840 = vpop.f32.mrb[0].mxu0
        %841 = vmatprep.mubr.f32.mxu0 0.0
        %842 = vmatmul.mubr.f32.gmra.mrb[0].mxu0 %v517
        %v843 = vpop.f32.mrb[0].mxu0
        %v844 = vadd.f32 0.0, %v843
        %v845 = vpop.f32.mrb[0].mxu0
        %846 = vmatprep.mubr.f32.mxu0 0.0
        %847 = vmatmul.mubr.f32.gmra.mrb[0].mxu0 %v519
        %v848 = vpop.f32.mrb[0].mxu0
        %v849 = vadd.f32 0.0, %v848
        %v850 = vpop.f32.mrb[0].mxu0
        %851 = vmatprep.mubr.f32.mxu0 0.0
        %852 = vmatmul.mubr.f32.gmra.mrb[0].mxu0 %v521
        %v853 = vpop.f32.mrb[0].mxu0
        %v854 = vadd.f32 0.0, %v853
        %v855 = vpop.f32.mrb[0].mxu0
        %856 = vmatprep.mubr.f32.mxu0 0.0
        %857 = vmatmul.mubr.f32.gmra.mrb[0].mxu0 %v523
        %v858 = vpop.f32.mrb[0].mxu0
        %v859 = vadd.f32 0.0, %v858
        %v860 = vpop.f32.mrb[0].mxu0
        %861 = vmatprep.mubr.f32.mxu0 0.0
        %862 = vmatmul.mubr.f32.gmra.mrb[0].mxu0 %v525
        %v863 = vpop.f32.mrb[0].mxu0
        %v864 = vadd.f32 0.0, %v863
        %v865 = vpop.f32.mrb[0].mxu0
        %866 = vmatprep.mubr.f32.mxu0 0.0
        %867 = vmatmul.mubr.f32.gmra.mrb[0].mxu0 %v527
        %v868 = vpop.f32.mrb[0].mxu0
        %v869 = vadd.f32 0.0, %v868
        %v870 = vpop.f32.mrb[0].mxu0
        %871 = vmatprep.mubr.f32.mxu0 0.0
        %872 = vmatmul.mubr.f32.gmra.mrb[0].mxu0 %v529
        %v873 = vpop.f32.mrb[0].mxu0
        %v874 = vadd.f32 0.0, %v873
        %v875 = vpop.f32.mrb[0].mxu0
        %876 = vmatprep.mubr.f32.mxu0 0.0
        %877 = vmatmul.mubr.f32.gmra.mrb[0].mxu0 %v531
        %v878 = vpop.f32.mrb[0].mxu0
        %v879 = vadd.f32 0.0, %v878
        %v880 = vpop.f32.mrb[0].mxu0
        %881 = vmatprep.mubr.f32.mxu0 0.0
        %882 = vmatmul.mubr.f32.gmra.mrb[0].mxu0 %v533
        %v883 = vpop.f32.mrb[0].mxu0
        %v884 = vadd.f32 0.0, %v883
        %v885 = vpop.f32.mrb[0].mxu0
        %886 = vmatprep.mubr.f32.mxu0 0.0
        %887 = vmatmul.mubr.f32.gmra.mrb[0].mxu0 %v535
        %v888 = vpop.f32.mrb[0].mxu0
        %v889 = vadd.f32 0.0, %v888
        %v890 = vpop.f32.mrb[0].mxu0
        %891 = vmatprep.mubr.f32.mxu0 0.0
        %892 = vmatmul.mubr.f32.gmra.mrb[0].mxu0 %v537
        %v893 = vpop.f32.mrb[0].mxu0
        %v894 = vadd.f32 0.0, %v893
        %v895 = vpop.f32.mrb[0].mxu0
        %896 = vmatprep.mubr.f32.mxu0 0.0
        %897 = vmatmul.mubr.f32.gmra.mrb[0].mxu0 %v539
        %v898 = vpop.f32.mrb[0].mxu0
        %v899 = vadd.f32 0.0, %v898
        %v900 = vpop.f32.mrb[0].mxu0
        %901 = vmatprep.mubr.f32.mxu0 0.0
        %902 = vmatmul.mubr.f32.gmra.mrb[0].mxu0 %v541
        %v903 = vpop.f32.mrb[0].mxu0
        %v904 = vadd.f32 0.0, %v903
        %v905 = vpop.f32.mrb[0].mxu0
        %906 = vmatprep.mubr.f32.mxu0 0.0
        %907 = vmatmul.mubr.f32.gmra.mrb[0].mxu0 %v543
        %v908 = vpop.f32.mrb[0].mxu0
        %v909 = vadd.f32 0.0, %v908
        %v910 = vpop.f32.mrb[0].mxu0
        %911 = vmatprep.mubr.f32.mxu0 0.0
        %912 = vmatmul.mubr.f32.gmra.mrb[0].mxu0 %v545
        %v913 = vpop.f32.mrb[0].mxu0
        %v914 = vadd.f32 0.0, %v913
        %v915 = vpop.f32.mrb[0].mxu0
        %916 = vmatprep.mubr.f32.mxu0 0.0
        %917 = vmatmul.mubr.f32.gmra.mrb[0].mxu0 %v547
        %v918 = vpop.f32.mrb[0].mxu0
        %v919 = vadd.f32 0.0, %v918
        %v920 = vpop.f32.mrb[0].mxu0
        %921 = vmatprep.mubr.f32.mxu0 0.0
        %922 = vmatmul.mubr.f32.gmra.mrb[0].mxu0 %v549
        %v923 = vpop.f32.mrb[0].mxu0
        %v924 = vadd.f32 0.0, %v923
        %v925 = vpop.f32.mrb[0].mxu0
        %926 = vmatprep.mubr.f32.mxu0 0.0
        %927 = vmatmul.mubr.f32.gmra.mrb[0].mxu0 %v551
        %v928 = vpop.f32.mrb[0].mxu0
        %v929 = vadd.f32 0.0, %v928
        %v930 = vpop.f32.mrb[0].mxu0
        %931 = vmatprep.mubr.f32.mxu0 0.0
        %932 = vmatmul.mubr.f32.gmra.mrb[0].mxu0 %v553
        %v933 = vpop.f32.mrb[0].mxu0
        %v934 = vadd.f32 0.0, %v933
        %v935 = vpop.f32.mrb[0].mxu0
        %936 = vmatprep.mubr.f32.mxu0 0.0
        %937 = vmatmul.mubr.f32.gmra.mrb[0].mxu0 %v555
        %v938 = vpop.f32.mrb[0].mxu0
        %v939 = vadd.f32 0.0, %v938
        %v940 = vpop.f32.mrb[0].mxu0
        %941 = vmatprep.mubr.f32.mxu0 0.0
        %942 = vmatmul.mubr.f32.gmra.mrb[0].mxu0 %v557
        %v943 = vpop.f32.mrb[0].mxu0
        %v944 = vadd.f32 0.0, %v943
        %v945 = vpop.f32.mrb[0].mxu0
        %946 = vmatprep.mubr.f32.mxu0 0.0
        %947 = vmatmul.mubr.f32.gmra.mrb[0].mxu0 %v559
        %v948 = vpop.f32.mrb[0].mxu0
        %v949 = vadd.f32 0.0, %v948
        %v950 = vpop.f32.mrb[0].mxu0
        %951 = vmatprep.mubr.f32.mxu0 0.0
        %952 = vmatmul.mubr.f32.gmra.mrb[0].mxu0 %v561
        %v953 = vpop.f32.mrb[0].mxu0
        %v954 = vadd.f32 0.0, %v953
        %v955 = vpop.f32.mrb[0].mxu0
        %956 = vmatprep.mubr.f32.mxu0 0.0
        %957 = vmatmul.mubr.f32.gmra.mrb[0].mxu0 %v563
        %v958 = vpop.f32.mrb[0].mxu0
        %v959 = vadd.f32 0.0, %v958
        %v960 = vpop.f32.mrb[0].mxu0
        %961 = vmatprep.mubr.f32.mxu0 0.0
        %962 = vmatmul.mubr.f32.gmra.mrb[0].mxu0 %v565
        %v963 = vpop.f32.mrb[0].mxu0
        %v964 = vadd.f32 0.0, %v963
        %v965 = vpop.f32.mrb[0].mxu0
        %966 = vmatprep.mubr.f32.mxu0 0.0
        %967 = vmatmul.mubr.f32.gmra.mrb[0].mxu0 %v567
        %v968 = vpop.f32.mrb[0].mxu0
        %v969 = vpop.f32.mrb[0].mxu0
        %970 = vmatprep.mubr.f32.mxu0 0.0
        %971 = vmatmul.mubr.f32.gmra.mrb[0].mxu0 %v569
        %v972 = vpop.f32.mrb[0].mxu0
        %v973 = vpop.f32.mrb[0].mxu0
        %974 = vdwg.mxu0
        %975 = vmatprep.subr.mxu0 0.0
        %976 = vmatpush1.msra.mxu0 %v363
        %977 = vmatprep.subr.mxu0 0.0
        %978 = vmatpush1.msra.mxu0 %v364
        %979 = vmatprep.subr.mxu0 0.0
        %980 = vmatpush1.msra.mxu0 %v365
        %981 = vmatprep.subr.mxu0 0.0
        %982 = vmatpush1.msra.mxu0 %v366
        %983 = vmatprep.subr.mxu0 0.0
        %984 = vmatpush1.msra.mxu0 %v367
        %985 = vmatprep.subr.mxu0 0.0
        %986 = vmatpush1.msra.mxu0 %v368
        %987 = vmatprep.subr.mxu0 0.0
        %988 = vmatpush1.msra.mxu0 %v369
        %989 = vmatprep.subr.mxu0 0.0
        %990 = vmatpush1.msra.mxu0 %v370
        %991 = vmatprep.subr.mxu0 0.0
        %992 = vmatpush1.msra.mxu0 %v371
        %993 = vmatprep.subr.mxu0 0.0
        %994 = vmatpush1.msra.mxu0 %v372
        %995 = vmatprep.subr.mxu0 0.0
        %996 = vmatpush1.msra.mxu0 %v373
        %997 = vmatprep.subr.mxu0 0.0
        %998 = vmatpush1.msra.mxu0 %v374
        %999 = vmatprep.subr.mxu0 0.0
        %1000 = vmatpush1.msra.mxu0 %v375
        %1001 = vmatprep.subr.mxu0 0.0
        %1002 = vmatpush1.msra.mxu0 %v376
        %1003 = vmatprep.subr.mxu0 0.0
        %1004 = vmatpush1.msra.mxu0 %v377
        %1005 = vmatprep.subr.mxu0 0.0
        %1006 = vmatpush1.msra.mxu0 %v378
        %1007 = vmatprep.subr.mxu0 0.0
        %1008 = vmatpush1.msra.mxu0 0.0
        %1009 = vmatprep.subr.mxu0 0.0
        %1010 = vmatpush1.msra.mxu0 0.0
        %1011 = vmatprep.subr.mxu0 0.0
        %1012 = vmatpush1.msra.mxu0 0.0
        %1013 = vmatprep.subr.mxu0 0.0
        %1014 = vmatpush1.msra.mxu0 0.0
        %1015 = vmatprep.subr.mxu0 0.0
        %1016 = vmatpush1.msra.mxu0 0.0
        %1017 = vmatprep.subr.mxu0 0.0
        %1018 = vmatpush1.msra.mxu0 0.0
        %1019 = vmatprep.subr.mxu0 0.0
        %1020 = vmatpush1.msra.mxu0 0.0
        %1021 = vmatprep.subr.mxu0 0.0
        %1022 = vmatpush1.msra.mxu0 0.0
        %1023 = vmatprep.subr.mxu0 0.0
        %1024 = vmatpush1.msra.mxu0 0.0
        %1025 = vmatprep.subr.mxu0 0.0
        %1026 = vmatpush1.msra.mxu0 0.0
        %1027 = vmatprep.subr.mxu0 0.0
        %1028 = vmatpush1.msra.mxu0 0.0
        %1029 = vmatprep.subr.mxu0 0.0
        %1030 = vmatpush1.msra.mxu0 0.0
        %1031 = vmatprep.subr.mxu0 0.0
        %1032 = vmatpush1.msra.mxu0 0.0
        %1033 = vmatprep.subr.mxu0 0.0
        %1034 = vmatpush1.msra.mxu0 0.0
        %1035 = vmatprep.subr.mxu0 0.0
        %1036 = vmatpush1.msra.mxu0 0.0
        %1037 = vmatprep.subr.mxu0 0.0
        %1038 = vmatpush1.msra.mxu0 0.0
        %1039 = vmatprep.mubr.f32.mxu0 0.0
        %1040 = vmatmul.mubr.f32.gmra.mrb[0].mxu0 %v299
        %v1041 = vpop.f32.mrb[0].mxu0
        %v1042 = vadd.f32 %v694, %v1041
        %v1043 = vpop.f32.mrb[0].mxu0
        %1044 = vmatprep.mubr.f32.mxu0 0.0
        %1045 = vmatmul.mubr.f32.gmra.mrb[0].mxu0 %v300
        %v1046 = vpop.f32.mrb[0].mxu0
        %v1047 = vadd.f32 %v699, %v1046
        %v1048 = vpop.f32.mrb[0].mxu0
        %1049 = vmatprep.mubr.f32.mxu0 0.0
        %1050 = vmatmul.mubr.f32.gmra.mrb[0].mxu0 %v301
        %v1051 = vpop.f32.mrb[0].mxu0
        %v1052 = vadd.f32 %v704, %v1051
        %v1053 = vpop.f32.mrb[0].mxu0
        %1054 = vmatprep.mubr.f32.mxu0 0.0
        %1055 = vmatmul.mubr.f32.gmra.mrb[0].mxu0 %v302
        %v1056 = vpop.f32.mrb[0].mxu0
        %v1057 = vadd.f32 %v709, %v1056
        %v1058 = vpop.f32.mrb[0].mxu0
        %1059 = vmatprep.mubr.f32.mxu0 0.0
        %1060 = vmatmul.mubr.f32.gmra.mrb[0].mxu0 %v303
        %v1061 = vpop.f32.mrb[0].mxu0
        %v1062 = vadd.f32 %v714, %v1061
        %v1063 = vpop.f32.mrb[0].mxu0
        %1064 = vmatprep.mubr.f32.mxu0 0.0
        %1065 = vmatmul.mubr.f32.gmra.mrb[0].mxu0 %v304
        %v1066 = vpop.f32.mrb[0].mxu0
        %v1067 = vadd.f32 %v719, %v1066
        %v1068 = vpop.f32.mrb[0].mxu0
        %1069 = vmatprep.mubr.f32.mxu0 0.0
        %1070 = vmatmul.mubr.f32.gmra.mrb[0].mxu0 %v305
        %v1071 = vpop.f32.mrb[0].mxu0
        %v1072 = vadd.f32 %v724, %v1071
        %v1073 = vpop.f32.mrb[0].mxu0
        %1074 = vmatprep.mubr.f32.mxu0 0.0
        %1075 = vmatmul.mubr.f32.gmra.mrb[0].mxu0 %v306
        %v1076 = vpop.f32.mrb[0].mxu0
        %v1077 = vadd.f32 %v729, %v1076
        %v1078 = vpop.f32.mrb[0].mxu0
        %1079 = vmatprep.mubr.f32.mxu0 0.0
        %1080 = vmatmul.mubr.f32.gmra.mrb[0].mxu0 %v307
        %v1081 = vpop.f32.mrb[0].mxu0
        %v1082 = vadd.f32 %v734, %v1081
        %v1083 = vpop.f32.mrb[0].mxu0
        %1084 = vmatprep.mubr.f32.mxu0 0.0
        %1085 = vmatmul.mubr.f32.gmra.mrb[0].mxu0 %v308
        %v1086 = vpop.f32.mrb[0].mxu0
        %v1087 = vadd.f32 %v739, %v1086
        %v1088 = vpop.f32.mrb[0].mxu0
        %1089 = vmatprep.mubr.f32.mxu0 0.0
        %1090 = vmatmul.mubr.f32.gmra.mrb[0].mxu0 %v309
        %v1091 = vpop.f32.mrb[0].mxu0
        %v1092 = vadd.f32 %v744, %v1091
        %v1093 = vpop.f32.mrb[0].mxu0
        %1094 = vmatprep.mubr.f32.mxu0 0.0
        %1095 = vmatmul.mubr.f32.gmra.mrb[0].mxu0 %v310
        %v1096 = vpop.f32.mrb[0].mxu0
        %v1097 = vadd.f32 %v749, %v1096
        %v1098 = vpop.f32.mrb[0].mxu0
        %1099 = vmatprep.mubr.f32.mxu0 0.0
        %1100 = vmatmul.mubr.f32.gmra.mrb[0].mxu0 %v311
        %v1101 = vpop.f32.mrb[0].mxu0
        %v1102 = vadd.f32 %v754, %v1101
        %v1103 = vpop.f32.mrb[0].mxu0
        %1104 = vmatprep.mubr.f32.mxu0 0.0
        %1105 = vmatmul.mubr.f32.gmra.mrb[0].mxu0 %v312
        %v1106 = vpop.f32.mrb[0].mxu0
        %v1107 = vadd.f32 %v759, %v1106
        %v1108 = vpop.f32.mrb[0].mxu0
        %1109 = vmatprep.mubr.f32.mxu0 0.0
        %1110 = vmatmul.mubr.f32.gmra.mrb[0].mxu0 %v313
        %v1111 = vpop.f32.mrb[0].mxu0
        %v1112 = vadd.f32 %v764, %v1111
        %v1113 = vpop.f32.mrb[0].mxu0
        %1114 = vmatprep.mubr.f32.mxu0 0.0
        %1115 = vmatmul.mubr.f32.gmra.mrb[0].mxu0 %v314
        %v1116 = vpop.f32.mrb[0].mxu0
        %v1117 = vadd.f32 %v769, %v1116
        %v1118 = vpop.f32.mrb[0].mxu0
        %1119 = vmatprep.mubr.f32.mxu0 0.0
        %1120 = vmatmul.mubr.f32.gmra.mrb[0].mxu0 %v315
        %v1121 = vpop.f32.mrb[0].mxu0
        %v1122 = vadd.f32 %v774, %v1121
        %v1123 = vpop.f32.mrb[0].mxu0
        %1124 = vmatprep.mubr.f32.mxu0 0.0
        %1125 = vmatmul.mubr.f32.gmra.mrb[0].mxu0 %v316
        %v1126 = vpop.f32.mrb[0].mxu0
        %v1127 = vadd.f32 %v779, %v1126
        %v1128 = vpop.f32.mrb[0].mxu0
        %1129 = vmatprep.mubr.f32.mxu0 0.0
        %1130 = vmatmul.mubr.f32.gmra.mrb[0].mxu0 %v317
        %v1131 = vpop.f32.mrb[0].mxu0
        %v1132 = vadd.f32 %v784, %v1131
        %v1133 = vpop.f32.mrb[0].mxu0
        %1134 = vmatprep.mubr.f32.mxu0 0.0
        %1135 = vmatmul.mubr.f32.gmra.mrb[0].mxu0 %v318
        %v1136 = vpop.f32.mrb[0].mxu0
        %v1137 = vadd.f32 %v789, %v1136
        %v1138 = vpop.f32.mrb[0].mxu0
        %1139 = vmatprep.mubr.f32.mxu0 0.0
        %1140 = vmatmul.mubr.f32.gmra.mrb[0].mxu0 %v319
        %v1141 = vpop.f32.mrb[0].mxu0
        %v1142 = vadd.f32 %v794, %v1141
        %v1143 = vpop.f32.mrb[0].mxu0
        %1144 = vmatprep.mubr.f32.mxu0 0.0
        %1145 = vmatmul.mubr.f32.gmra.mrb[0].mxu0 %v320
        %v1146 = vpop.f32.mrb[0].mxu0
        %v1147 = vadd.f32 %v799, %v1146
        %v1148 = vpop.f32.mrb[0].mxu0
        %1149 = vmatprep.mubr.f32.mxu0 0.0
        %1150 = vmatmul.mubr.f32.gmra.mrb[0].mxu0 %v321
        %v1151 = vpop.f32.mrb[0].mxu0
        %v1152 = vadd.f32 %v804, %v1151
        %v1153 = vpop.f32.mrb[0].mxu0
        %1154 = vmatprep.mubr.f32.mxu0 0.0
        %1155 = vmatmul.mubr.f32.gmra.mrb[0].mxu0 %v322
        %v1156 = vpop.f32.mrb[0].mxu0
        %v1157 = vadd.f32 %v809, %v1156
        %v1158 = vpop.f32.mrb[0].mxu0
        %1159 = vmatprep.mubr.f32.mxu0 0.0
        %1160 = vmatmul.mubr.f32.gmra.mrb[0].mxu0 %v323
        %v1161 = vpop.f32.mrb[0].mxu0
        %v1162 = vadd.f32 %v814, %v1161
        %v1163 = vpop.f32.mrb[0].mxu0
        %1164 = vmatprep.mubr.f32.mxu0 0.0
        %1165 = vmatmul.mubr.f32.gmra.mrb[0].mxu0 %v324
        %v1166 = vpop.f32.mrb[0].mxu0
        %v1167 = vadd.f32 %v819, %v1166
        %v1168 = vpop.f32.mrb[0].mxu0
        %1169 = vmatprep.mubr.f32.mxu0 0.0
        %1170 = vmatmul.mubr.f32.gmra.mrb[0].mxu0 %v325
        %v1171 = vpop.f32.mrb[0].mxu0
        %v1172 = vadd.f32 %v824, %v1171
        %v1173 = vpop.f32.mrb[0].mxu0
        %1174 = vmatprep.mubr.f32.mxu0 0.0
        %1175 = vmatmul.mubr.f32.gmra.mrb[0].mxu0 %v326
        %v1176 = vpop.f32.mrb[0].mxu0
        %v1177 = vadd.f32 %v829, %v1176
        %v1178 = vpop.f32.mrb[0].mxu0
        %1179 = vmatprep.mubr.f32.mxu0 0.0
        %1180 = vmatmul.mubr.f32.gmra.mrb[0].mxu0 %v327
        %v1181 = vpop.f32.mrb[0].mxu0
        %v1182 = vadd.f32 %v834, %v1181
        %v1183 = vpop.f32.mrb[0].mxu0
        %1184 = vmatprep.mubr.f32.mxu0 0.0
        %1185 = vmatmul.mubr.f32.gmra.mrb[0].mxu0 %v328
        %v1186 = vpop.f32.mrb[0].mxu0
        %v1187 = vadd.f32 %v839, %v1186
        %v1188 = vpop.f32.mrb[0].mxu0
        %1189 = vmatprep.mubr.f32.mxu0 0.0
        %1190 = vmatmul.mubr.f32.gmra.mrb[0].mxu0 %v329
        %v1191 = vpop.f32.mrb[0].mxu0
        %v1192 = vadd.f32 %v844, %v1191
        %v1193 = vpop.f32.mrb[0].mxu0
        %1194 = vmatprep.mubr.f32.mxu0 0.0
        %1195 = vmatmul.mubr.f32.gmra.mrb[0].mxu0 %v330
        %v1196 = vpop.f32.mrb[0].mxu0
        %v1197 = vadd.f32 %v849, %v1196
        %v1198 = vpop.f32.mrb[0].mxu0
        %1199 = vmatprep.mubr.f32.mxu0 0.0
        %1200 = vmatmul.mubr.f32.gmra.mrb[0].mxu0 %v331
        %v1201 = vpop.f32.mrb[0].mxu0
        %v1202 = vadd.f32 %v854, %v1201
        %v1203 = vpop.f32.mrb[0].mxu0
        %1204 = vmatprep.mubr.f32.mxu0 0.0
        %1205 = vmatmul.mubr.f32.gmra.mrb[0].mxu0 %v332
        %v1206 = vpop.f32.mrb[0].mxu0
        %v1207 = vadd.f32 %v859, %v1206
        %v1208 = vpop.f32.mrb[0].mxu0
        %1209 = vmatprep.mubr.f32.mxu0 0.0
        %1210 = vmatmul.mubr.f32.gmra.mrb[0].mxu0 %v333
        %v1211 = vpop.f32.mrb[0].mxu0
        %v1212 = vadd.f32 %v864, %v1211
        %v1213 = vpop.f32.mrb[0].mxu0
        %1214 = vmatprep.mubr.f32.mxu0 0.0
        %1215 = vmatmul.mubr.f32.gmra.mrb[0].mxu0 %v334
        %v1216 = vpop.f32.mrb[0].mxu0
        %v1217 = vadd.f32 %v869, %v1216
        %v1218 = vpop.f32.mrb[0].mxu0
        %1219 = vmatprep.mubr.f32.mxu0 0.0
        %1220 = vmatmul.mubr.f32.gmra.mrb[0].mxu0 %v335
        %v1221 = vpop.f32.mrb[0].mxu0
        %v1222 = vadd.f32 %v874, %v1221
        %v1223 = vpop.f32.mrb[0].mxu0
        %1224 = vmatprep.mubr.f32.mxu0 0.0
        %1225 = vmatmul.mubr.f32.gmra.mrb[0].mxu0 %v336
        %v1226 = vpop.f32.mrb[0].mxu0
        %v1227 = vadd.f32 %v879, %v1226
        %v1228 = vpop.f32.mrb[0].mxu0
        %1229 = vmatprep.mubr.f32.mxu0 0.0
        %1230 = vmatmul.mubr.f32.gmra.mrb[0].mxu0 %v337
        %v1231 = vpop.f32.mrb[0].mxu0
        %v1232 = vadd.f32 %v884, %v1231
        %v1233 = vpop.f32.mrb[0].mxu0
        %1234 = vmatprep.mubr.f32.mxu0 0.0
        %1235 = vmatmul.mubr.f32.gmra.mrb[0].mxu0 %v338
        %v1236 = vpop.f32.mrb[0].mxu0
        %v1237 = vadd.f32 %v889, %v1236
        %v1238 = vpop.f32.mrb[0].mxu0
        %1239 = vmatprep.mubr.f32.mxu0 0.0
        %1240 = vmatmul.mubr.f32.gmra.mrb[0].mxu0 %v339
        %v1241 = vpop.f32.mrb[0].mxu0
        %v1242 = vadd.f32 %v894, %v1241
        %v1243 = vpop.f32.mrb[0].mxu0
        %1244 = vmatprep.mubr.f32.mxu0 0.0
        %1245 = vmatmul.mubr.f32.gmra.mrb[0].mxu0 %v340
        %v1246 = vpop.f32.mrb[0].mxu0
        %v1247 = vadd.f32 %v899, %v1246
        %v1248 = vpop.f32.mrb[0].mxu0
        %1249 = vmatprep.mubr.f32.mxu0 0.0
        %1250 = vmatmul.mubr.f32.gmra.mrb[0].mxu0 %v341
        %v1251 = vpop.f32.mrb[0].mxu0
        %v1252 = vadd.f32 %v904, %v1251
        %v1253 = vpop.f32.mrb[0].mxu0
        %1254 = vmatprep.mubr.f32.mxu0 0.0
        %1255 = vmatmul.mubr.f32.gmra.mrb[0].mxu0 %v342
        %v1256 = vpop.f32.mrb[0].mxu0
        %v1257 = vadd.f32 %v909, %v1256
        %v1258 = vpop.f32.mrb[0].mxu0
        %1259 = vmatprep.mubr.f32.mxu0 0.0
        %1260 = vmatmul.mubr.f32.gmra.mrb[0].mxu0 %v343
        %v1261 = vpop.f32.mrb[0].mxu0
        %v1262 = vadd.f32 %v914, %v1261
        %v1263 = vpop.f32.mrb[0].mxu0
        %1264 = vmatprep.mubr.f32.mxu0 0.0
        %1265 = vmatmul.mubr.f32.gmra.mrb[0].mxu0 %v344
        %v1266 = vpop.f32.mrb[0].mxu0
        %v1267 = vadd.f32 %v919, %v1266
        %v1268 = vpop.f32.mrb[0].mxu0
        %1269 = vmatprep.mubr.f32.mxu0 0.0
        %1270 = vmatmul.mubr.f32.gmra.mrb[0].mxu0 %v345
        %v1271 = vpop.f32.mrb[0].mxu0
        %v1272 = vadd.f32 %v924, %v1271
        %v1273 = vpop.f32.mrb[0].mxu0
        %1274 = vmatprep.mubr.f32.mxu0 0.0
        %1275 = vmatmul.mubr.f32.gmra.mrb[0].mxu0 %v346
        %v1276 = vpop.f32.mrb[0].mxu0
        %v1277 = vadd.f32 %v929, %v1276
        %v1278 = vpop.f32.mrb[0].mxu0
        %1279 = vmatprep.mubr.f32.mxu0 0.0
        %1280 = vmatmul.mubr.f32.gmra.mrb[0].mxu0 %v347
        %v1281 = vpop.f32.mrb[0].mxu0
        %v1282 = vadd.f32 %v934, %v1281
        %v1283 = vpop.f32.mrb[0].mxu0
        %1284 = vmatprep.mubr.f32.mxu0 0.0
        %1285 = vmatmul.mubr.f32.gmra.mrb[0].mxu0 %v348
        %v1286 = vpop.f32.mrb[0].mxu0
        %v1287 = vadd.f32 %v939, %v1286
        %v1288 = vpop.f32.mrb[0].mxu0
        %1289 = vmatprep.mubr.f32.mxu0 0.0
        %1290 = vmatmul.mubr.f32.gmra.mrb[0].mxu0 %v349
        %v1291 = vpop.f32.mrb[0].mxu0
        %v1292 = vadd.f32 %v944, %v1291
        %v1293 = vpop.f32.mrb[0].mxu0
        %1294 = vmatprep.mubr.f32.mxu0 0.0
        %1295 = vmatmul.mubr.f32.gmra.mrb[0].mxu0 %v350
        %v1296 = vpop.f32.mrb[0].mxu0
        %v1297 = vadd.f32 %v949, %v1296
        %v1298 = vpop.f32.mrb[0].mxu0
        %1299 = vmatprep.mubr.f32.mxu0 0.0
        %1300 = vmatmul.mubr.f32.gmra.mrb[0].mxu0 %v351
        %v1301 = vpop.f32.mrb[0].mxu0
        %v1302 = vadd.f32 %v954, %v1301
        %v1303 = vpop.f32.mrb[0].mxu0
        %1304 = vmatprep.mubr.f32.mxu0 0.0
        %1305 = vmatmul.mubr.f32.gmra.mrb[0].mxu0 %v352
        %v1306 = vpop.f32.mrb[0].mxu0
        %v1307 = vadd.f32 %v959, %v1306
        %v1308 = vpop.f32.mrb[0].mxu0
        %1309 = vmatprep.mubr.f32.mxu0 0.0
        %1310 = vmatmul.mubr.f32.gmra.mrb[0].mxu0 %v353
        %v1311 = vpop.f32.mrb[0].mxu0
        %v1312 = vadd.f32 %v964, %v1311
        %v1313 = vpop.f32.mrb[0].mxu0
        %1314 = vmatprep.mubr.f32.mxu0 0.0
        %1315 = vmatmul.mubr.f32.gmra.mrb[0].mxu0 %v354
        %v1316 = vpop.f32.mrb[0].mxu0
        %v1317 = vpop.f32.mrb[0].mxu0
        %1318 = vmatprep.mubr.f32.mxu0 0.0
        %1319 = vmatmul.mubr.f32.gmra.mrb[0].mxu0 %v355
        %v1320 = vpop.f32.mrb[0].mxu0
        %v1321 = vpop.f32.mrb[0].mxu0
        %1322 = vdwg.mxu0
        %s1323 = scalar_lea.vmem [#allocation5], 256
        %v1324 = vld [vmem:[%s1323] sm:$0xff]
        %v1325 = vld [vmem:[%s1323 + $0x8] sm:$0xff]
        %v1326 = vld [vmem:[%s1323 + $0x10] sm:$0xff]
        %v1327 = vld [vmem:[%s1323 + $0x18] sm:$0xff]
        %v1328 = vld [vmem:[%s1323 + $0x20] sm:$0xff]
        %v1329 = vld [vmem:[%s1323 + $0x28] sm:$0xff]
        %v1330 = vld [vmem:[%s1323 + $0x30] sm:$0xff]
        %v1331 = vld [vmem:[%s1323 + $0x38] sm:$0xff]
        %v1332 = vld [vmem:[%s1323 + $0x40] sm:$0xff]
        %v1333 = vld [vmem:[%s1323 + $0x48] sm:$0xff]
        %v1334 = vld [vmem:[%s1323 + $0x50] sm:$0xff]
        %v1335 = vld [vmem:[%s1323 + $0x58] sm:$0xff]
        %v1336 = vld [vmem:[%s1323 + $0x60] sm:$0xff]
        %v1337 = vld [vmem:[%s1323 + $0x68] sm:$0xff]
        %v1338 = vld [vmem:[%s1323 + $0x70] sm:$0xff]
        %v1339 = vld [vmem:[%s1323 + $0x78] sm:$0xff]
        %vm1340 = vcmask 1045504
        %v1341 = vrot.slane %v299, 2
        %v1342 = vrot.slane %v300, 2
        %v1343 = vsel %vm1340, %v1341, %v1342
        %v1344 = vrot.slane %v301, 2
        %v1345 = vsel %vm1340, %v1342, %v1344
        %v1346 = vrot.slane %v302, 2
        %v1347 = vsel %vm1340, %v1344, %v1346
        %v1348 = vrot.slane %v303, 2
        %v1349 = vsel %vm1340, %v1346, %v1348
        %v1350 = vrot.slane %v304, 2
        %v1351 = vsel %vm1340, %v1348, %v1350
        %v1352 = vrot.slane %v305, 2
        %v1353 = vsel %vm1340, %v1350, %v1352
        %v1354 = vrot.slane %v306, 2
        %v1355 = vsel %vm1340, %v1352, %v1354
        %v1356 = vrot.slane %v307, 2
        %v1357 = vsel %vm1340, %v1354, %v1356
        %v1358 = vrot.slane %v308, 2
        %v1359 = vsel %vm1340, %v1356, %v1358
        %v1360 = vrot.slane %v309, 2
        %v1361 = vsel %vm1340, %v1358, %v1360
        %v1362 = vrot.slane %v310, 2
        %v1363 = vsel %vm1340, %v1360, %v1362
        %v1364 = vrot.slane %v311, 2
        %v1365 = vsel %vm1340, %v1362, %v1364
        %v1366 = vrot.slane %v312, 2
        %v1367 = vsel %vm1340, %v1364, %v1366
        %v1368 = vrot.slane %v313, 2
        %v1369 = vsel %vm1340, %v1366, %v1368
        %v1370 = vrot.slane %v314, 2
        %v1371 = vsel %vm1340, %v1368, %v1370
        %v1372 = vrot.slane %v315, 2
        %v1373 = vsel %vm1340, %v1370, %v1372
        %v1374 = vrot.slane %v316, 2
        %v1375 = vsel %vm1340, %v1372, %v1374
        %v1376 = vrot.slane %v317, 2
        %v1377 = vsel %vm1340, %v1374, %v1376
        %v1378 = vrot.slane %v318, 2
        %v1379 = vsel %vm1340, %v1376, %v1378
        %v1380 = vrot.slane %v319, 2
        %v1381 = vsel %vm1340, %v1378, %v1380
        %v1382 = vrot.slane %v320, 2
        %v1383 = vsel %vm1340, %v1380, %v1382
        %v1384 = vrot.slane %v321, 2
        %v1385 = vsel %vm1340, %v1382, %v1384
        %v1386 = vrot.slane %v322, 2
        %v1387 = vsel %vm1340, %v1384, %v1386
        %v1388 = vrot.slane %v323, 2
        %v1389 = vsel %vm1340, %v1386, %v1388
        %v1390 = vrot.slane %v324, 2
        %v1391 = vsel %vm1340, %v1388, %v1390
        %v1392 = vrot.slane %v325, 2
        %v1393 = vsel %vm1340, %v1390, %v1392
        %v1394 = vrot.slane %v326, 2
        %v1395 = vsel %vm1340, %v1392, %v1394
        %v1396 = vrot.slane %v327, 2
        %v1397 = vsel %vm1340, %v1394, %v1396
        %v1398 = vrot.slane %v328, 2
        %v1399 = vsel %vm1340, %v1396, %v1398
        %v1400 = vrot.slane %v329, 2
        %v1401 = vsel %vm1340, %v1398, %v1400
        %v1402 = vrot.slane %v330, 2
        %v1403 = vsel %vm1340, %v1400, %v1402
        %v1404 = vrot.slane %v331, 2
        %v1405 = vsel %vm1340, %v1402, %v1404
        %v1406 = vrot.slane %v332, 2
        %v1407 = vsel %vm1340, %v1404, %v1406
        %v1408 = vrot.slane %v333, 2
        %v1409 = vsel %vm1340, %v1406, %v1408
        %v1410 = vrot.slane %v334, 2
        %v1411 = vsel %vm1340, %v1408, %v1410
        %v1412 = vrot.slane %v335, 2
        %v1413 = vsel %vm1340, %v1410, %v1412
        %v1414 = vrot.slane %v336, 2
        %v1415 = vsel %vm1340, %v1412, %v1414
        %v1416 = vrot.slane %v337, 2
        %v1417 = vsel %vm1340, %v1414, %v1416
        %v1418 = vrot.slane %v338, 2
        %v1419 = vsel %vm1340, %v1416, %v1418
        %v1420 = vrot.slane %v339, 2
        %v1421 = vsel %vm1340, %v1418, %v1420
        %v1422 = vrot.slane %v340, 2
        %v1423 = vsel %vm1340, %v1420, %v1422
        %v1424 = vrot.slane %v341, 2
        %v1425 = vsel %vm1340, %v1422, %v1424
        %v1426 = vrot.slane %v342, 2
        %v1427 = vsel %vm1340, %v1424, %v1426
        %v1428 = vrot.slane %v343, 2
        %v1429 = vsel %vm1340, %v1426, %v1428
        %v1430 = vrot.slane %v344, 2
        %v1431 = vsel %vm1340, %v1428, %v1430
        %v1432 = vrot.slane %v345, 2
        %v1433 = vsel %vm1340, %v1430, %v1432
        %v1434 = vrot.slane %v346, 2
        %v1435 = vsel %vm1340, %v1432, %v1434
        %v1436 = vrot.slane %v347, 2
        %v1437 = vsel %vm1340, %v1434, %v1436
        %v1438 = vrot.slane %v348, 2
        %v1439 = vsel %vm1340, %v1436, %v1438
        %v1440 = vrot.slane %v349, 2
        %v1441 = vsel %vm1340, %v1438, %v1440
        %v1442 = vrot.slane %v350, 2
        %v1443 = vsel %vm1340, %v1440, %v1442
        %v1444 = vrot.slane %v351, 2
        %v1445 = vsel %vm1340, %v1442, %v1444
        %v1446 = vrot.slane %v352, 2
        %v1447 = vsel %vm1340, %v1444, %v1446
        %v1448 = vrot.slane %v353, 2
        %v1449 = vsel %vm1340, %v1446, %v1448
        %v1450 = vrot.slane %v354, 2
        %v1451 = vsel %vm1340, %v1448, %v1450
        %v1452 = vrot.slane %v355, 2
        %v1453 = vsel %vm1340, %v1450, %v1452
        %v1454 = vrot.slane %v356, 2
        %v1455 = vsel %vm1340, %v1452, %v1454
        %1513 = vmatprep.subr.mxu0 0.0
        %1514 = vmatpush1.msra.mxu0 %v1324
        %1515 = vmatprep.subr.mxu0 0.0
        %1516 = vmatpush1.msra.mxu0 %v1325
        %1517 = vmatprep.subr.mxu0 0.0
        %1518 = vmatpush1.msra.mxu0 %v1326
        %1519 = vmatprep.subr.mxu0 0.0
        %1520 = vmatpush1.msra.mxu0 %v1327
        %1521 = vmatprep.subr.mxu0 0.0
        %1522 = vmatpush1.msra.mxu0 %v1328
        %1523 = vmatprep.subr.mxu0 0.0
        %1524 = vmatpush1.msra.mxu0 %v1329
        %1525 = vmatprep.subr.mxu0 0.0
        %1526 = vmatpush1.msra.mxu0 %v1330
        %1527 = vmatprep.subr.mxu0 0.0
        %1528 = vmatpush1.msra.mxu0 %v1331
        %1529 = vmatprep.subr.mxu0 0.0
        %1530 = vmatpush1.msra.mxu0 %v1332
        %1531 = vmatprep.subr.mxu0 0.0
        %1532 = vmatpush1.msra.mxu0 %v1333
        %1533 = vmatprep.subr.mxu0 0.0
        %1534 = vmatpush1.msra.mxu0 %v1334
        %1535 = vmatprep.subr.mxu0 0.0
        %1536 = vmatpush1.msra.mxu0 %v1335
        %1537 = vmatprep.subr.mxu0 0.0
        %1538 = vmatpush1.msra.mxu0 %v1336
        %1539 = vmatprep.subr.mxu0 0.0
        %1540 = vmatpush1.msra.mxu0 %v1337
        %1541 = vmatprep.subr.mxu0 0.0
        %1542 = vmatpush1.msra.mxu0 %v1338
        %1543 = vmatprep.subr.mxu0 0.0
        %1544 = vmatpush1.msra.mxu0 %v1339
        %1545 = vmatprep.subr.mxu0 0.0
        %1546 = vmatpush1.msra.mxu0 0.0
        %1547 = vmatprep.subr.mxu0 0.0
        %1548 = vmatpush1.msra.mxu0 0.0
        %1549 = vmatprep.subr.mxu0 0.0
        %1550 = vmatpush1.msra.mxu0 0.0
        %1551 = vmatprep.subr.mxu0 0.0
        %1552 = vmatpush1.msra.mxu0 0.0
        %1553 = vmatprep.subr.mxu0 0.0
        %1554 = vmatpush1.msra.mxu0 0.0
        %1555 = vmatprep.subr.mxu0 0.0
        %1556 = vmatpush1.msra.mxu0 0.0
        %1557 = vmatprep.subr.mxu0 0.0
        %1558 = vmatpush1.msra.mxu0 0.0
        %1559 = vmatprep.subr.mxu0 0.0
        %1560 = vmatpush1.msra.mxu0 0.0
        %1561 = vmatprep.subr.mxu0 0.0
        %1562 = vmatpush1.msra.mxu0 0.0
        %1563 = vmatprep.subr.mxu0 0.0
        %1564 = vmatpush1.msra.mxu0 0.0
        %1565 = vmatprep.subr.mxu0 0.0
        %1566 = vmatpush1.msra.mxu0 0.0
        %1567 = vmatprep.subr.mxu0 0.0
        %1568 = vmatpush1.msra.mxu0 0.0
        %1569 = vmatprep.subr.mxu0 0.0
        %1570 = vmatpush1.msra.mxu0 0.0
        %1571 = vmatprep.subr.mxu0 0.0
        %1572 = vmatpush1.msra.mxu0 0.0
        %1573 = vmatprep.subr.mxu0 0.0
        %1574 = vmatpush1.msra.mxu0 0.0
        %1575 = vmatprep.subr.mxu0 0.0
        %1576 = vmatpush1.msra.mxu0 0.0
        %1577 = vmatprep.mubr.f32.mxu0 0.0
        %1578 = vmatmul.mubr.f32.gmra.mrb[0].mxu0 %v1343
        %v1579 = vpop.f32.mrb[0].mxu0
        %v1580 = vadd.f32 0.0, %v1579
        %v1581 = vpop.f32.mrb[0].mxu0
        %1582 = vmatprep.mubr.f32.mxu0 0.0
        %1583 = vmatmul.mubr.f32.gmra.mrb[0].mxu0 %v1345
        %v1584 = vpop.f32.mrb[0].mxu0
        %v1585 = vadd.f32 0.0, %v1584
        %v1586 = vpop.f32.mrb[0].mxu0
        %1587 = vmatprep.mubr.f32.mxu0 0.0
        %1588 = vmatmul.mubr.f32.gmra.mrb[0].mxu0 %v1347
        %v1589 = vpop.f32.mrb[0].mxu0
        %v1590 = vadd.f32 0.0, %v1589
        %v1591 = vpop.f32.mrb[0].mxu0
        %1592 = vmatprep.mubr.f32.mxu0 0.0
        %1593 = vmatmul.mubr.f32.gmra.mrb[0].mxu0 %v1349
        %v1594 = vpop.f32.mrb[0].mxu0
        %v1595 = vadd.f32 0.0, %v1594
        %v1596 = vpop.f32.mrb[0].mxu0
        %1597 = vmatprep.mubr.f32.mxu0 0.0
        %1598 = vmatmul.mubr.f32.gmra.mrb[0].mxu0 %v1351
        %v1599 = vpop.f32.mrb[0].mxu0
        %v1600 = vadd.f32 0.0, %v1599
        %v1601 = vpop.f32.mrb[0].mxu0
        %1602 = vmatprep.mubr.f32.mxu0 0.0
        %1603 = vmatmul.mubr.f32.gmra.mrb[0].mxu0 %v1353
        %v1604 = vpop.f32.mrb[0].mxu0
        %v1605 = vadd.f32 0.0, %v1604
        %v1606 = vpop.f32.mrb[0].mxu0
        %1607 = vmatprep.mubr.f32.mxu0 0.0
        %1608 = vmatmul.mubr.f32.gmra.mrb[0].mxu0 %v1355
        %v1609 = vpop.f32.mrb[0].mxu0
        %v1610 = vadd.f32 0.0, %v1609
        %v1611 = vpop.f32.mrb[0].mxu0
        %1612 = vmatprep.mubr.f32.mxu0 0.0
        %1613 = vmatmul.mubr.f32.gmra.mrb[0].mxu0 %v1357
        %v1614 = vpop.f32.mrb[0].mxu0
        %v1615 = vadd.f32 0.0, %v1614
        %v1616 = vpop.f32.mrb[0].mxu0
        %1617 = vmatprep.mubr.f32.mxu0 0.0
        %1618 = vmatmul.mubr.f32.gmra.mrb[0].mxu0 %v1359
        %v1619 = vpop.f32.mrb[0].mxu0
        %v1620 = vadd.f32 0.0, %v1619
        %v1621 = vpop.f32.mrb[0].mxu0
        %1622 = vmatprep.mubr.f32.mxu0 0.0
        %1623 = vmatmul.mubr.f32.gmra.mrb[0].mxu0 %v1361
        %v1624 = vpop.f32.mrb[0].mxu0
        %v1625 = vadd.f32 0.0, %v1624
        %v1626 = vpop.f32.mrb[0].mxu0
        %1627 = vmatprep.mubr.f32.mxu0 0.0
        %1628 = vmatmul.mubr.f32.gmra.mrb[0].mxu0 %v1363
        %v1629 = vpop.f32.mrb[0].mxu0
        %v1630 = vadd.f32 0.0, %v1629
        %v1631 = vpop.f32.mrb[0].mxu0
        %1632 = vmatprep.mubr.f32.mxu0 0.0
        %1633 = vmatmul.mubr.f32.gmra.mrb[0].mxu0 %v1365
        %v1634 = vpop.f32.mrb[0].mxu0
        %v1635 = vadd.f32 0.0, %v1634
        %v1636 = vpop.f32.mrb[0].mxu0
        %1637 = vmatprep.mubr.f32.mxu0 0.0
        %1638 = vmatmul.mubr.f32.gmra.mrb[0].mxu0 %v1367
        %v1639 = vpop.f32.mrb[0].mxu0
        %v1640 = vadd.f32 0.0, %v1639
        %v1641 = vpop.f32.mrb[0].mxu0
        %1642 = vmatprep.mubr.f32.mxu0 0.0
        %1643 = vmatmul.mubr.f32.gmra.mrb[0].mxu0 %v1369
        %v1644 = vpop.f32.mrb[0].mxu0
        %v1645 = vadd.f32 0.0, %v1644
        %v1646 = vpop.f32.mrb[0].mxu0
        %1647 = vmatprep.mubr.f32.mxu0 0.0
        %1648 = vmatmul.mubr.f32.gmra.mrb[0].mxu0 %v1371
        %v1649 = vpop.f32.mrb[0].mxu0
        %v1650 = vadd.f32 0.0, %v1649
        %v1651 = vpop.f32.mrb[0].mxu0
        %1652 = vmatprep.mubr.f32.mxu0 0.0
        %1653 = vmatmul.mubr.f32.gmra.mrb[0].mxu0 %v1373
        %v1654 = vpop.f32.mrb[0].mxu0
        %v1655 = vadd.f32 0.0, %v1654
        %v1656 = vpop.f32.mrb[0].mxu0
        %1657 = vmatprep.mubr.f32.mxu0 0.0
        %1658 = vmatmul.mubr.f32.gmra.mrb[0].mxu0 %v1375
        %v1659 = vpop.f32.mrb[0].mxu0
        %v1660 = vadd.f32 0.0, %v1659
        %v1661 = vpop.f32.mrb[0].mxu0
        %1662 = vmatprep.mubr.f32.mxu0 0.0
        %1663 = vmatmul.mubr.f32.gmra.mrb[0].mxu0 %v1377
        %v1664 = vpop.f32.mrb[0].mxu0
        %v1665 = vadd.f32 0.0, %v1664
        %v1666 = vpop.f32.mrb[0].mxu0
        %1667 = vmatprep.mubr.f32.mxu0 0.0
        %1668 = vmatmul.mubr.f32.gmra.mrb[0].mxu0 %v1379
        %v1669 = vpop.f32.mrb[0].mxu0
        %v1670 = vadd.f32 0.0, %v1669
        %v1671 = vpop.f32.mrb[0].mxu0
        %1672 = vmatprep.mubr.f32.mxu0 0.0
        %1673 = vmatmul.mubr.f32.gmra.mrb[0].mxu0 %v1381
        %v1674 = vpop.f32.mrb[0].mxu0
        %v1675 = vadd.f32 0.0, %v1674
        %v1676 = vpop.f32.mrb[0].mxu0
        %1677 = vmatprep.mubr.f32.mxu0 0.0
        %1678 = vmatmul.mubr.f32.gmra.mrb[0].mxu0 %v1383
        %v1679 = vpop.f32.mrb[0].mxu0
        %v1680 = vadd.f32 0.0, %v1679
        %v1681 = vpop.f32.mrb[0].mxu0
        %1682 = vmatprep.mubr.f32.mxu0 0.0
        %1683 = vmatmul.mubr.f32.gmra.mrb[0].mxu0 %v1385
        %v1684 = vpop.f32.mrb[0].mxu0
        %v1685 = vadd.f32 0.0, %v1684
        %v1686 = vpop.f32.mrb[0].mxu0
        %1687 = vmatprep.mubr.f32.mxu0 0.0
        %1688 = vmatmul.mubr.f32.gmra.mrb[0].mxu0 %v1387
        %v1689 = vpop.f32.mrb[0].mxu0
        %v1690 = vadd.f32 0.0, %v1689
        %v1691 = vpop.f32.mrb[0].mxu0
        %1692 = vmatprep.mubr.f32.mxu0 0.0
        %1693 = vmatmul.mubr.f32.gmra.mrb[0].mxu0 %v1389
        %v1694 = vpop.f32.mrb[0].mxu0
        %v1695 = vadd.f32 0.0, %v1694
        %v1696 = vpop.f32.mrb[0].mxu0
        %1697 = vmatprep.mubr.f32.mxu0 0.0
        %1698 = vmatmul.mubr.f32.gmra.mrb[0].mxu0 %v1391
        %v1699 = vpop.f32.mrb[0].mxu0
        %v1700 = vadd.f32 0.0, %v1699
        %v1701 = vpop.f32.mrb[0].mxu0
        %1702 = vmatprep.mubr.f32.mxu0 0.0
        %1703 = vmatmul.mubr.f32.gmra.mrb[0].mxu0 %v1393
        %v1704 = vpop.f32.mrb[0].mxu0
        %v1705 = vadd.f32 0.0, %v1704
        %v1706 = vpop.f32.mrb[0].mxu0
        %1707 = vmatprep.mubr.f32.mxu0 0.0
        %1708 = vmatmul.mubr.f32.gmra.mrb[0].mxu0 %v1395
        %v1709 = vpop.f32.mrb[0].mxu0
        %v1710 = vadd.f32 0.0, %v1709
        %v1711 = vpop.f32.mrb[0].mxu0
        %1712 = vmatprep.mubr.f32.mxu0 0.0
        %1713 = vmatmul.mubr.f32.gmra.mrb[0].mxu0 %v1397
        %v1714 = vpop.f32.mrb[0].mxu0
        %v1715 = vadd.f32 0.0, %v1714
        %v1716 = vpop.f32.mrb[0].mxu0
        %1717 = vmatprep.mubr.f32.mxu0 0.0
        %1718 = vmatmul.mubr.f32.gmra.mrb[0].mxu0 %v1399
        %v1719 = vpop.f32.mrb[0].mxu0
        %v1720 = vadd.f32 0.0, %v1719
        %v1721 = vpop.f32.mrb[0].mxu0
        %1722 = vmatprep.mubr.f32.mxu0 0.0
        %1723 = vmatmul.mubr.f32.gmra.mrb[0].mxu0 %v1401
        %v1724 = vpop.f32.mrb[0].mxu0
        %v1725 = vadd.f32 0.0, %v1724
        %v1726 = vpop.f32.mrb[0].mxu0
        %1727 = vmatprep.mubr.f32.mxu0 0.0
        %1728 = vmatmul.mubr.f32.gmra.mrb[0].mxu0 %v1403
        %v1729 = vpop.f32.mrb[0].mxu0
        %v1730 = vadd.f32 0.0, %v1729
        %v1731 = vpop.f32.mrb[0].mxu0
        %1732 = vmatprep.mubr.f32.mxu0 0.0
        %1733 = vmatmul.mubr.f32.gmra.mrb[0].mxu0 %v1405
        %v1734 = vpop.f32.mrb[0].mxu0
        %v1735 = vadd.f32 0.0, %v1734
        %v1736 = vpop.f32.mrb[0].mxu0
        %1737 = vmatprep.mubr.f32.mxu0 0.0
        %1738 = vmatmul.mubr.f32.gmra.mrb[0].mxu0 %v1407
        %v1739 = vpop.f32.mrb[0].mxu0
        %v1740 = vadd.f32 0.0, %v1739
        %v1741 = vpop.f32.mrb[0].mxu0
        %1742 = vmatprep.mubr.f32.mxu0 0.0
        %1743 = vmatmul.mubr.f32.gmra.mrb[0].mxu0 %v1409
        %v1744 = vpop.f32.mrb[0].mxu0
        %v1745 = vadd.f32 0.0, %v1744
        %v1746 = vpop.f32.mrb[0].mxu0
        %1747 = vmatprep.mubr.f32.mxu0 0.0
        %1748 = vmatmul.mubr.f32.gmra.mrb[0].mxu0 %v1411
        %v1749 = vpop.f32.mrb[0].mxu0
        %v1750 = vadd.f32 0.0, %v1749
        %v1751 = vpop.f32.mrb[0].mxu0
        %1752 = vmatprep.mubr.f32.mxu0 0.0
        %1753 = vmatmul.mubr.f32.gmra.mrb[0].mxu0 %v1413
        %v1754 = vpop.f32.mrb[0].mxu0
        %v1755 = vadd.f32 0.0, %v1754
        %v1756 = vpop.f32.mrb[0].mxu0
        %1757 = vmatprep.mubr.f32.mxu0 0.0
        %1758 = vmatmul.mubr.f32.gmra.mrb[0].mxu0 %v1415
        %v1759 = vpop.f32.mrb[0].mxu0
        %v1760 = vadd.f32 0.0, %v1759
        %v1761 = vpop.f32.mrb[0].mxu0
        %1762 = vmatprep.mubr.f32.mxu0 0.0
        %1763 = vmatmul.mubr.f32.gmra.mrb[0].mxu0 %v1417
        %v1764 = vpop.f32.mrb[0].mxu0
        %v1765 = vadd.f32 0.0, %v1764
        %v1766 = vpop.f32.mrb[0].mxu0
        %1767 = vmatprep.mubr.f32.mxu0 0.0
        %1768 = vmatmul.mubr.f32.gmra.mrb[0].mxu0 %v1419
        %v1769 = vpop.f32.mrb[0].mxu0
        %v1770 = vadd.f32 0.0, %v1769
        %v1771 = vpop.f32.mrb[0].mxu0
        %1772 = vmatprep.mubr.f32.mxu0 0.0
        %1773 = vmatmul.mubr.f32.gmra.mrb[0].mxu0 %v1421
        %v1774 = vpop.f32.mrb[0].mxu0
        %v1775 = vadd.f32 0.0, %v1774
        %v1776 = vpop.f32.mrb[0].mxu0
        %1777 = vmatprep.mubr.f32.mxu0 0.0
        %1778 = vmatmul.mubr.f32.gmra.mrb[0].mxu0 %v1423
        %v1779 = vpop.f32.mrb[0].mxu0
        %v1780 = vadd.f32 0.0, %v1779
        %v1781 = vpop.f32.mrb[0].mxu0
        %1782 = vmatprep.mubr.f32.mxu0 0.0
        %1783 = vmatmul.mubr.f32.gmra.mrb[0].mxu0 %v1425
        %v1784 = vpop.f32.mrb[0].mxu0
        %v1785 = vadd.f32 0.0, %v1784
        %v1786 = vpop.f32.mrb[0].mxu0
        %1787 = vmatprep.mubr.f32.mxu0 0.0
        %1788 = vmatmul.mubr.f32.gmra.mrb[0].mxu0 %v1427
        %v1789 = vpop.f32.mrb[0].mxu0
        %v1790 = vadd.f32 0.0, %v1789
        %v1791 = vpop.f32.mrb[0].mxu0
        %1792 = vmatprep.mubr.f32.mxu0 0.0
        %1793 = vmatmul.mubr.f32.gmra.mrb[0].mxu0 %v1429
        %v1794 = vpop.f32.mrb[0].mxu0
        %v1795 = vadd.f32 0.0, %v1794
        %v1796 = vpop.f32.mrb[0].mxu0
        %1797 = vmatprep.mubr.f32.mxu0 0.0
        %1798 = vmatmul.mubr.f32.gmra.mrb[0].mxu0 %v1431
        %v1799 = vpop.f32.mrb[0].mxu0
        %v1800 = vadd.f32 0.0, %v1799
        %v1801 = vpop.f32.mrb[0].mxu0
        %1802 = vmatprep.mubr.f32.mxu0 0.0
        %1803 = vmatmul.mubr.f32.gmra.mrb[0].mxu0 %v1433
        %v1804 = vpop.f32.mrb[0].mxu0
        %v1805 = vadd.f32 0.0, %v1804
        %v1806 = vpop.f32.mrb[0].mxu0
        %1807 = vmatprep.mubr.f32.mxu0 0.0
        %1808 = vmatmul.mubr.f32.gmra.mrb[0].mxu0 %v1435
        %v1809 = vpop.f32.mrb[0].mxu0
        %v1810 = vadd.f32 0.0, %v1809
        %v1811 = vpop.f32.mrb[0].mxu0
        %1812 = vmatprep.mubr.f32.mxu0 0.0
        %1813 = vmatmul.mubr.f32.gmra.mrb[0].mxu0 %v1437
        %v1814 = vpop.f32.mrb[0].mxu0
        %v1815 = vadd.f32 0.0, %v1814
        %v1816 = vpop.f32.mrb[0].mxu0
        %1817 = vmatprep.mubr.f32.mxu0 0.0
        %1818 = vmatmul.mubr.f32.gmra.mrb[0].mxu0 %v1439
        %v1819 = vpop.f32.mrb[0].mxu0
        %v1820 = vadd.f32 0.0, %v1819
        %v1821 = vpop.f32.mrb[0].mxu0
        %1822 = vmatprep.mubr.f32.mxu0 0.0
        %1823 = vmatmul.mubr.f32.gmra.mrb[0].mxu0 %v1441
        %v1824 = vpop.f32.mrb[0].mxu0
        %v1825 = vadd.f32 0.0, %v1824
        %v1826 = vpop.f32.mrb[0].mxu0
        %1827 = vmatprep.mubr.f32.mxu0 0.0
        %1828 = vmatmul.mubr.f32.gmra.mrb[0].mxu0 %v1443
        %v1829 = vpop.f32.mrb[0].mxu0
        %v1830 = vadd.f32 0.0, %v1829
        %v1831 = vpop.f32.mrb[0].mxu0
        %1832 = vmatprep.mubr.f32.mxu0 0.0
        %1833 = vmatmul.mubr.f32.gmra.mrb[0].mxu0 %v1445
        %v1834 = vpop.f32.mrb[0].mxu0
        %v1835 = vadd.f32 0.0, %v1834
        %v1836 = vpop.f32.mrb[0].mxu0
        %1837 = vmatprep.mubr.f32.mxu0 0.0
        %1838 = vmatmul.mubr.f32.gmra.mrb[0].mxu0 %v1447
        %v1839 = vpop.f32.mrb[0].mxu0
        %v1840 = vadd.f32 0.0, %v1839
        %v1841 = vpop.f32.mrb[0].mxu0
        %1842 = vmatprep.mubr.f32.mxu0 0.0
        %1843 = vmatmul.mubr.f32.gmra.mrb[0].mxu0 %v1449
        %v1844 = vpop.f32.mrb[0].mxu0
        %v1845 = vadd.f32 0.0, %v1844
        %v1846 = vpop.f32.mrb[0].mxu0
        %1847 = vmatprep.mubr.f32.mxu0 0.0
        %1848 = vmatmul.mubr.f32.gmra.mrb[0].mxu0 %v1451
        %v1849 = vpop.f32.mrb[0].mxu0
        %v1850 = vadd.f32 0.0, %v1849
        %v1851 = vpop.f32.mrb[0].mxu0
        %1852 = vmatprep.mubr.f32.mxu0 0.0
        %1853 = vmatmul.mubr.f32.gmra.mrb[0].mxu0 %v1453
        %v1854 = vpop.f32.mrb[0].mxu0
        %v1855 = vpop.f32.mrb[0].mxu0
        %1856 = vmatprep.mubr.f32.mxu0 0.0
        %1857 = vmatmul.mubr.f32.gmra.mrb[0].mxu0 %v1455
        %v1858 = vpop.f32.mrb[0].mxu0
        %v1859 = vpop.f32.mrb[0].mxu0
        %1860 = vdwg.mxu0
        %v1861 = vadd.f32 %v1042, %v1580
        %v1862 = vadd.f32 %v1047, %v1585
        %v1863 = vadd.f32 %v1052, %v1590
        %v1864 = vadd.f32 %v1057, %v1595
        %v1865 = vadd.f32 %v1062, %v1600
        %v1866 = vadd.f32 %v1067, %v1605
        %v1867 = vadd.f32 %v1072, %v1610
        %v1868 = vadd.f32 %v1077, %v1615
        %v1869 = vadd.f32 %v1082, %v1620
        %v1870 = vadd.f32 %v1087, %v1625
        %v1871 = vadd.f32 %v1092, %v1630
        %v1872 = vadd.f32 %v1097, %v1635
        %v1873 = vadd.f32 %v1102, %v1640
        %v1874 = vadd.f32 %v1107, %v1645
        %v1875 = vadd.f32 %v1112, %v1650
        %v1876 = vadd.f32 %v1117, %v1655
        %v1877 = vadd.f32 %v1122, %v1660
        %v1878 = vadd.f32 %v1127, %v1665
        %v1879 = vadd.f32 %v1132, %v1670
        %v1880 = vadd.f32 %v1137, %v1675
        %v1881 = vadd.f32 %v1142, %v1680
        %v1882 = vadd.f32 %v1147, %v1685
        %v1883 = vadd.f32 %v1152, %v1690
        %v1884 = vadd.f32 %v1157, %v1695
        %v1885 = vadd.f32 %v1162, %v1700
        %v1886 = vadd.f32 %v1167, %v1705
        %v1887 = vadd.f32 %v1172, %v1710
        %v1888 = vadd.f32 %v1177, %v1715
        %v1889 = vadd.f32 %v1182, %v1720
        %v1890 = vadd.f32 %v1187, %v1725
        %v1891 = vadd.f32 %v1192, %v1730
        %v1892 = vadd.f32 %v1197, %v1735
        %v1893 = vadd.f32 %v1202, %v1740
        %v1894 = vadd.f32 %v1207, %v1745
        %v1895 = vadd.f32 %v1212, %v1750
        %v1896 = vadd.f32 %v1217, %v1755
        %v1897 = vadd.f32 %v1222, %v1760
        %v1898 = vadd.f32 %v1227, %v1765
        %v1899 = vadd.f32 %v1232, %v1770
        %v1900 = vadd.f32 %v1237, %v1775
        %v1901 = vadd.f32 %v1242, %v1780
        %v1902 = vadd.f32 %v1247, %v1785
        %v1903 = vadd.f32 %v1252, %v1790
        %v1904 = vadd.f32 %v1257, %v1795
        %v1905 = vadd.f32 %v1262, %v1800
        %v1906 = vadd.f32 %v1267, %v1805
        %v1907 = vadd.f32 %v1272, %v1810
        %v1908 = vadd.f32 %v1277, %v1815
        %v1909 = vadd.f32 %v1282, %v1820
        %v1910 = vadd.f32 %v1287, %v1825
        %v1911 = vadd.f32 %v1292, %v1830
        %v1912 = vadd.f32 %v1297, %v1835
        %v1913 = vadd.f32 %v1302, %v1840
        %v1914 = vadd.f32 %v1307, %v1845
        %v1915 = vadd.f32 %v1312, %v1850
        %s1916 = scalar_lea.vmem [#allocation5], 384
        %v1917 = vld [vmem:[%s1916] sm:$0xff]
        %v1918 = vld [vmem:[%s1916 + $0x8] sm:$0xff]
        %v1919 = vld [vmem:[%s1916 + $0x10] sm:$0xff]
        %v1920 = vld [vmem:[%s1916 + $0x18] sm:$0xff]
        %v1921 = vld [vmem:[%s1916 + $0x20] sm:$0xff]
        %v1922 = vld [vmem:[%s1916 + $0x28] sm:$0xff]
        %v1923 = vld [vmem:[%s1916 + $0x30] sm:$0xff]
        %v1924 = vld [vmem:[%s1916 + $0x38] sm:$0xff]
        %v1925 = vld [vmem:[%s1916 + $0x40] sm:$0xff]
        %v1926 = vld [vmem:[%s1916 + $0x48] sm:$0xff]
        %v1927 = vld [vmem:[%s1916 + $0x50] sm:$0xff]
        %v1928 = vld [vmem:[%s1916 + $0x58] sm:$0xff]
        %v1929 = vld [vmem:[%s1916 + $0x60] sm:$0xff]
        %v1930 = vld [vmem:[%s1916 + $0x68] sm:$0xff]
        %v1931 = vld [vmem:[%s1916 + $0x70] sm:$0xff]
        %v1932 = vld [vmem:[%s1916 + $0x78] sm:$0xff]
        %1933 = vmatprep.subr.mxu0 0.0
        %1934 = vmatpush1.msra.mxu0 %v1917
        %1935 = vmatprep.subr.mxu0 0.0
        %1936 = vmatpush1.msra.mxu0 %v1918
        %1937 = vmatprep.subr.mxu0 0.0
        %1938 = vmatpush1.msra.mxu0 %v1919
        %1939 = vmatprep.subr.mxu0 0.0
        %1940 = vmatpush1.msra.mxu0 %v1920
        %1941 = vmatprep.subr.mxu0 0.0
        %1942 = vmatpush1.msra.mxu0 %v1921
        %1943 = vmatprep.subr.mxu0 0.0
        %1944 = vmatpush1.msra.mxu0 %v1922
        %1945 = vmatprep.subr.mxu0 0.0
        %1946 = vmatpush1.msra.mxu0 %v1923
        %1947 = vmatprep.subr.mxu0 0.0
        %1948 = vmatpush1.msra.mxu0 %v1924
        %1949 = vmatprep.subr.mxu0 0.0
        %1950 = vmatpush1.msra.mxu0 %v1925
        %1951 = vmatprep.subr.mxu0 0.0
        %1952 = vmatpush1.msra.mxu0 %v1926
        %1953 = vmatprep.subr.mxu0 0.0
        %1954 = vmatpush1.msra.mxu0 %v1927
        %1955 = vmatprep.subr.mxu0 0.0
        %1956 = vmatpush1.msra.mxu0 %v1928
        %1957 = vmatprep.subr.mxu0 0.0
        %1958 = vmatpush1.msra.mxu0 %v1929
        %1959 = vmatprep.subr.mxu0 0.0
        %1960 = vmatpush1.msra.mxu0 %v1930
        %1961 = vmatprep.subr.mxu0 0.0
        %1962 = vmatpush1.msra.mxu0 %v1931
        %1963 = vmatprep.subr.mxu0 0.0
        %1964 = vmatpush1.msra.mxu0 %v1932
        %1965 = vmatprep.subr.mxu0 0.0
        %1966 = vmatpush1.msra.mxu0 0.0
        %1967 = vmatprep.subr.mxu0 0.0
        %1968 = vmatpush1.msra.mxu0 0.0
        %1969 = vmatprep.subr.mxu0 0.0
        %1970 = vmatpush1.msra.mxu0 0.0
        %1971 = vmatprep.subr.mxu0 0.0
        %1972 = vmatpush1.msra.mxu0 0.0
        %1973 = vmatprep.subr.mxu0 0.0
        %1974 = vmatpush1.msra.mxu0 0.0
        %1975 = vmatprep.subr.mxu0 0.0
        %1976 = vmatpush1.msra.mxu0 0.0
        %1977 = vmatprep.subr.mxu0 0.0
        %1978 = vmatpush1.msra.mxu0 0.0
        %1979 = vmatprep.subr.mxu0 0.0
        %1980 = vmatpush1.msra.mxu0 0.0
        %1981 = vmatprep.subr.mxu0 0.0
        %1982 = vmatpush1.msra.mxu0 0.0
        %1983 = vmatprep.subr.mxu0 0.0
        %1984 = vmatpush1.msra.mxu0 0.0
        %1985 = vmatprep.subr.mxu0 0.0
        %1986 = vmatpush1.msra.mxu0 0.0
        %1987 = vmatprep.subr.mxu0 0.0
        %1988 = vmatpush1.msra.mxu0 0.0
        %1989 = vmatprep.subr.mxu0 0.0
        %1990 = vmatpush1.msra.mxu0 0.0
        %1991 = vmatprep.subr.mxu0 0.0
        %1992 = vmatpush1.msra.mxu0 0.0
        %1993 = vmatprep.subr.mxu0 0.0
        %1994 = vmatpush1.msra.mxu0 0.0
        %1995 = vmatprep.subr.mxu0 0.0
        %1996 = vmatpush1.msra.mxu0 0.0
        %1997 = vmatprep.mubr.f32.mxu0 0.0
        %1998 = vmatmul.mubr.f32.gmra.mrb[0].mxu0 %v302
        %v1999 = vpop.f32.mrb[0].mxu0
        %v2000 = vadd.f32 0.0, %v1999
        %v2001 = vpop.f32.mrb[0].mxu0
        %2002 = vmatprep.mubr.f32.mxu0 0.0
        %2003 = vmatmul.mubr.f32.gmra.mrb[0].mxu0 %v303
        %v2004 = vpop.f32.mrb[0].mxu0
        %v2005 = vadd.f32 0.0, %v2004
        %v2006 = vpop.f32.mrb[0].mxu0
        %2007 = vmatprep.mubr.f32.mxu0 0.0
        %2008 = vmatmul.mubr.f32.gmra.mrb[0].mxu0 %v304
        %v2009 = vpop.f32.mrb[0].mxu0
        %v2010 = vadd.f32 0.0, %v2009
        %v2011 = vpop.f32.mrb[0].mxu0
        %2012 = vmatprep.mubr.f32.mxu0 0.0
        %2013 = vmatmul.mubr.f32.gmra.mrb[0].mxu0 %v305
        %v2014 = vpop.f32.mrb[0].mxu0
        %v2015 = vadd.f32 0.0, %v2014
        %v2016 = vpop.f32.mrb[0].mxu0
        %2017 = vmatprep.mubr.f32.mxu0 0.0
        %2018 = vmatmul.mubr.f32.gmra.mrb[0].mxu0 %v306
        %v2019 = vpop.f32.mrb[0].mxu0
        %v2020 = vadd.f32 0.0, %v2019
        %v2021 = vpop.f32.mrb[0].mxu0
        %2022 = vmatprep.mubr.f32.mxu0 0.0
        %2023 = vmatmul.mubr.f32.gmra.mrb[0].mxu0 %v307
        %v2024 = vpop.f32.mrb[0].mxu0
        %v2025 = vadd.f32 0.0, %v2024
        %v2026 = vpop.f32.mrb[0].mxu0
        %2027 = vmatprep.mubr.f32.mxu0 0.0
        %2028 = vmatmul.mubr.f32.gmra.mrb[0].mxu0 %v308
        %v2029 = vpop.f32.mrb[0].mxu0
        %v2030 = vadd.f32 0.0, %v2029
        %v2031 = vpop.f32.mrb[0].mxu0
        %2032 = vmatprep.mubr.f32.mxu0 0.0
        %2033 = vmatmul.mubr.f32.gmra.mrb[0].mxu0 %v309
        %v2034 = vpop.f32.mrb[0].mxu0
        %v2035 = vadd.f32 0.0, %v2034
        %v2036 = vpop.f32.mrb[0].mxu0
        %2037 = vmatprep.mubr.f32.mxu0 0.0
        %2038 = vmatmul.mubr.f32.gmra.mrb[0].mxu0 %v310
        %v2039 = vpop.f32.mrb[0].mxu0
        %v2040 = vadd.f32 0.0, %v2039
        %v2041 = vpop.f32.mrb[0].mxu0
        %2042 = vmatprep.mubr.f32.mxu0 0.0
        %2043 = vmatmul.mubr.f32.gmra.mrb[0].mxu0 %v311
        %v2044 = vpop.f32.mrb[0].mxu0
        %v2045 = vadd.f32 0.0, %v2044
        %v2046 = vpop.f32.mrb[0].mxu0
        %2047 = vmatprep.mubr.f32.mxu0 0.0
        %2048 = vmatmul.mubr.f32.gmra.mrb[0].mxu0 %v312
        %v2049 = vpop.f32.mrb[0].mxu0
        %v2050 = vadd.f32 0.0, %v2049
        %v2051 = vpop.f32.mrb[0].mxu0
        %2052 = vmatprep.mubr.f32.mxu0 0.0
        %2053 = vmatmul.mubr.f32.gmra.mrb[0].mxu0 %v313
        %v2054 = vpop.f32.mrb[0].mxu0
        %v2055 = vadd.f32 0.0, %v2054
        %v2056 = vpop.f32.mrb[0].mxu0
        %2057 = vmatprep.mubr.f32.mxu0 0.0
        %2058 = vmatmul.mubr.f32.gmra.mrb[0].mxu0 %v314
        %v2059 = vpop.f32.mrb[0].mxu0
        %v2060 = vadd.f32 0.0, %v2059
        %v2061 = vpop.f32.mrb[0].mxu0
        %2062 = vmatprep.mubr.f32.mxu0 0.0
        %2063 = vmatmul.mubr.f32.gmra.mrb[0].mxu0 %v315
        %v2064 = vpop.f32.mrb[0].mxu0
        %v2065 = vadd.f32 0.0, %v2064
        %v2066 = vpop.f32.mrb[0].mxu0
        %2067 = vmatprep.mubr.f32.mxu0 0.0
        %2068 = vmatmul.mubr.f32.gmra.mrb[0].mxu0 %v316
        %v2069 = vpop.f32.mrb[0].mxu0
        %v2070 = vadd.f32 0.0, %v2069
        %v2071 = vpop.f32.mrb[0].mxu0
        %2072 = vmatprep.mubr.f32.mxu0 0.0
        %2073 = vmatmul.mubr.f32.gmra.mrb[0].mxu0 %v317
        %v2074 = vpop.f32.mrb[0].mxu0
        %v2075 = vadd.f32 0.0, %v2074
        %v2076 = vpop.f32.mrb[0].mxu0
        %2077 = vmatprep.mubr.f32.mxu0 0.0
        %2078 = vmatmul.mubr.f32.gmra.mrb[0].mxu0 %v318
        %v2079 = vpop.f32.mrb[0].mxu0
        %v2080 = vadd.f32 0.0, %v2079
        %v2081 = vpop.f32.mrb[0].mxu0
        %2082 = vmatprep.mubr.f32.mxu0 0.0
        %2083 = vmatmul.mubr.f32.gmra.mrb[0].mxu0 %v319
        %v2084 = vpop.f32.mrb[0].mxu0
        %v2085 = vadd.f32 0.0, %v2084
        %v2086 = vpop.f32.mrb[0].mxu0
        %2087 = vmatprep.mubr.f32.mxu0 0.0
        %2088 = vmatmul.mubr.f32.gmra.mrb[0].mxu0 %v320
        %v2089 = vpop.f32.mrb[0].mxu0
        %v2090 = vadd.f32 0.0, %v2089
        %v2091 = vpop.f32.mrb[0].mxu0
        %2092 = vmatprep.mubr.f32.mxu0 0.0
        %2093 = vmatmul.mubr.f32.gmra.mrb[0].mxu0 %v321
        %v2094 = vpop.f32.mrb[0].mxu0
        %v2095 = vadd.f32 0.0, %v2094
        %v2096 = vpop.f32.mrb[0].mxu0
        %2097 = vmatprep.mubr.f32.mxu0 0.0
        %2098 = vmatmul.mubr.f32.gmra.mrb[0].mxu0 %v322
        %v2099 = vpop.f32.mrb[0].mxu0
        %v2100 = vadd.f32 0.0, %v2099
        %v2101 = vpop.f32.mrb[0].mxu0
        %2102 = vmatprep.mubr.f32.mxu0 0.0
        %2103 = vmatmul.mubr.f32.gmra.mrb[0].mxu0 %v323
        %v2104 = vpop.f32.mrb[0].mxu0
        %v2105 = vadd.f32 0.0, %v2104
        %v2106 = vpop.f32.mrb[0].mxu0
        %2107 = vmatprep.mubr.f32.mxu0 0.0
        %2108 = vmatmul.mubr.f32.gmra.mrb[0].mxu0 %v324
        %v2109 = vpop.f32.mrb[0].mxu0
        %v2110 = vadd.f32 0.0, %v2109
        %v2111 = vpop.f32.mrb[0].mxu0
        %2112 = vmatprep.mubr.f32.mxu0 0.0
        %2113 = vmatmul.mubr.f32.gmra.mrb[0].mxu0 %v325
        %v2114 = vpop.f32.mrb[0].mxu0
        %v2115 = vadd.f32 0.0, %v2114
        %v2116 = vpop.f32.mrb[0].mxu0
        %2117 = vmatprep.mubr.f32.mxu0 0.0
        %2118 = vmatmul.mubr.f32.gmra.mrb[0].mxu0 %v326
        %v2119 = vpop.f32.mrb[0].mxu0
        %v2120 = vadd.f32 0.0, %v2119
        %v2121 = vpop.f32.mrb[0].mxu0
        %2122 = vmatprep.mubr.f32.mxu0 0.0
        %2123 = vmatmul.mubr.f32.gmra.mrb[0].mxu0 %v327
        %v2124 = vpop.f32.mrb[0].mxu0
        %v2125 = vadd.f32 0.0, %v2124
        %v2126 = vpop.f32.mrb[0].mxu0
        %2127 = vmatprep.mubr.f32.mxu0 0.0
        %2128 = vmatmul.mubr.f32.gmra.mrb[0].mxu0 %v328
        %v2129 = vpop.f32.mrb[0].mxu0
        %v2130 = vadd.f32 0.0, %v2129
        %v2131 = vpop.f32.mrb[0].mxu0
        %2132 = vmatprep.mubr.f32.mxu0 0.0
        %2133 = vmatmul.mubr.f32.gmra.mrb[0].mxu0 %v329
        %v2134 = vpop.f32.mrb[0].mxu0
        %v2135 = vadd.f32 0.0, %v2134
        %v2136 = vpop.f32.mrb[0].mxu0
        %2137 = vmatprep.mubr.f32.mxu0 0.0
        %2138 = vmatmul.mubr.f32.gmra.mrb[0].mxu0 %v330
        %v2139 = vpop.f32.mrb[0].mxu0
        %v2140 = vadd.f32 0.0, %v2139
        %v2141 = vpop.f32.mrb[0].mxu0
        %2142 = vmatprep.mubr.f32.mxu0 0.0
        %2143 = vmatmul.mubr.f32.gmra.mrb[0].mxu0 %v331
        %v2144 = vpop.f32.mrb[0].mxu0
        %v2145 = vadd.f32 0.0, %v2144
        %v2146 = vpop.f32.mrb[0].mxu0
        %2147 = vmatprep.mubr.f32.mxu0 0.0
        %2148 = vmatmul.mubr.f32.gmra.mrb[0].mxu0 %v332
        %v2149 = vpop.f32.mrb[0].mxu0
        %v2150 = vadd.f32 0.0, %v2149
        %v2151 = vpop.f32.mrb[0].mxu0
        %2152 = vmatprep.mubr.f32.mxu0 0.0
        %2153 = vmatmul.mubr.f32.gmra.mrb[0].mxu0 %v333
        %v2154 = vpop.f32.mrb[0].mxu0
        %v2155 = vadd.f32 0.0, %v2154
        %v2156 = vpop.f32.mrb[0].mxu0
        %2157 = vmatprep.mubr.f32.mxu0 0.0
        %2158 = vmatmul.mubr.f32.gmra.mrb[0].mxu0 %v334
        %v2159 = vpop.f32.mrb[0].mxu0
        %v2160 = vadd.f32 0.0, %v2159
        %v2161 = vpop.f32.mrb[0].mxu0
        %2162 = vmatprep.mubr.f32.mxu0 0.0
        %2163 = vmatmul.mubr.f32.gmra.mrb[0].mxu0 %v335
        %v2164 = vpop.f32.mrb[0].mxu0
        %v2165 = vadd.f32 0.0, %v2164
        %v2166 = vpop.f32.mrb[0].mxu0
        %2167 = vmatprep.mubr.f32.mxu0 0.0
        %2168 = vmatmul.mubr.f32.gmra.mrb[0].mxu0 %v336
        %v2169 = vpop.f32.mrb[0].mxu0
        %v2170 = vadd.f32 0.0, %v2169
        %v2171 = vpop.f32.mrb[0].mxu0
        %2172 = vmatprep.mubr.f32.mxu0 0.0
        %2173 = vmatmul.mubr.f32.gmra.mrb[0].mxu0 %v337
        %v2174 = vpop.f32.mrb[0].mxu0
        %v2175 = vadd.f32 0.0, %v2174
        %v2176 = vpop.f32.mrb[0].mxu0
        %2177 = vmatprep.mubr.f32.mxu0 0.0
        %2178 = vmatmul.mubr.f32.gmra.mrb[0].mxu0 %v338
        %v2179 = vpop.f32.mrb[0].mxu0
        %v2180 = vadd.f32 0.0, %v2179
        %v2181 = vpop.f32.mrb[0].mxu0
        %2182 = vmatprep.mubr.f32.mxu0 0.0
        %2183 = vmatmul.mubr.f32.gmra.mrb[0].mxu0 %v339
        %v2184 = vpop.f32.mrb[0].mxu0
        %v2185 = vadd.f32 0.0, %v2184
        %v2186 = vpop.f32.mrb[0].mxu0
        %2187 = vmatprep.mubr.f32.mxu0 0.0
        %2188 = vmatmul.mubr.f32.gmra.mrb[0].mxu0 %v340
        %v2189 = vpop.f32.mrb[0].mxu0
        %v2190 = vadd.f32 0.0, %v2189
        %v2191 = vpop.f32.mrb[0].mxu0
        %2192 = vmatprep.mubr.f32.mxu0 0.0
        %2193 = vmatmul.mubr.f32.gmra.mrb[0].mxu0 %v341
        %v2194 = vpop.f32.mrb[0].mxu0
        %v2195 = vadd.f32 0.0, %v2194
        %v2196 = vpop.f32.mrb[0].mxu0
        %2197 = vmatprep.mubr.f32.mxu0 0.0
        %2198 = vmatmul.mubr.f32.gmra.mrb[0].mxu0 %v342
        %v2199 = vpop.f32.mrb[0].mxu0
        %v2200 = vadd.f32 0.0, %v2199
        %v2201 = vpop.f32.mrb[0].mxu0
        %2202 = vmatprep.mubr.f32.mxu0 0.0
        %2203 = vmatmul.mubr.f32.gmra.mrb[0].mxu0 %v343
        %v2204 = vpop.f32.mrb[0].mxu0
        %v2205 = vadd.f32 0.0, %v2204
        %v2206 = vpop.f32.mrb[0].mxu0
        %2207 = vmatprep.mubr.f32.mxu0 0.0
        %2208 = vmatmul.mubr.f32.gmra.mrb[0].mxu0 %v344
        %v2209 = vpop.f32.mrb[0].mxu0
        %v2210 = vadd.f32 0.0, %v2209
        %v2211 = vpop.f32.mrb[0].mxu0
        %2212 = vmatprep.mubr.f32.mxu0 0.0
        %2213 = vmatmul.mubr.f32.gmra.mrb[0].mxu0 %v345
        %v2214 = vpop.f32.mrb[0].mxu0
        %v2215 = vadd.f32 0.0, %v2214
        %v2216 = vpop.f32.mrb[0].mxu0
        %2217 = vmatprep.mubr.f32.mxu0 0.0
        %2218 = vmatmul.mubr.f32.gmra.mrb[0].mxu0 %v346
        %v2219 = vpop.f32.mrb[0].mxu0
        %v2220 = vadd.f32 0.0, %v2219
        %v2221 = vpop.f32.mrb[0].mxu0
        %2222 = vmatprep.mubr.f32.mxu0 0.0
        %2223 = vmatmul.mubr.f32.gmra.mrb[0].mxu0 %v347
        %v2224 = vpop.f32.mrb[0].mxu0
        %v2225 = vadd.f32 0.0, %v2224
        %v2226 = vpop.f32.mrb[0].mxu0
        %2227 = vmatprep.mubr.f32.mxu0 0.0
        %2228 = vmatmul.mubr.f32.gmra.mrb[0].mxu0 %v348
        %v2229 = vpop.f32.mrb[0].mxu0
        %v2230 = vadd.f32 0.0, %v2229
        %v2231 = vpop.f32.mrb[0].mxu0
        %2232 = vmatprep.mubr.f32.mxu0 0.0
        %2233 = vmatmul.mubr.f32.gmra.mrb[0].mxu0 %v349
        %v2234 = vpop.f32.mrb[0].mxu0
        %v2235 = vadd.f32 0.0, %v2234
        %v2236 = vpop.f32.mrb[0].mxu0
        %2237 = vmatprep.mubr.f32.mxu0 0.0
        %2238 = vmatmul.mubr.f32.gmra.mrb[0].mxu0 %v350
        %v2239 = vpop.f32.mrb[0].mxu0
        %v2240 = vadd.f32 0.0, %v2239
        %v2241 = vpop.f32.mrb[0].mxu0
        %2242 = vmatprep.mubr.f32.mxu0 0.0
        %2243 = vmatmul.mubr.f32.gmra.mrb[0].mxu0 %v351
        %v2244 = vpop.f32.mrb[0].mxu0
        %v2245 = vadd.f32 0.0, %v2244
        %v2246 = vpop.f32.mrb[0].mxu0
        %2247 = vmatprep.mubr.f32.mxu0 0.0
        %2248 = vmatmul.mubr.f32.gmra.mrb[0].mxu0 %v352
        %v2249 = vpop.f32.mrb[0].mxu0
        %v2250 = vadd.f32 0.0, %v2249
        %v2251 = vpop.f32.mrb[0].mxu0
        %2252 = vmatprep.mubr.f32.mxu0 0.0
        %2253 = vmatmul.mubr.f32.gmra.mrb[0].mxu0 %v353
        %v2254 = vpop.f32.mrb[0].mxu0
        %v2255 = vadd.f32 0.0, %v2254
        %v2256 = vpop.f32.mrb[0].mxu0
        %2257 = vmatprep.mubr.f32.mxu0 0.0
        %2258 = vmatmul.mubr.f32.gmra.mrb[0].mxu0 %v354
        %v2259 = vpop.f32.mrb[0].mxu0
        %v2260 = vadd.f32 0.0, %v2259
        %v2261 = vpop.f32.mrb[0].mxu0
        %2262 = vmatprep.mubr.f32.mxu0 0.0
        %2263 = vmatmul.mubr.f32.gmra.mrb[0].mxu0 %v355
        %v2264 = vpop.f32.mrb[0].mxu0
        %v2265 = vadd.f32 0.0, %v2264
        %v2266 = vpop.f32.mrb[0].mxu0
        %2267 = vmatprep.mubr.f32.mxu0 0.0
        %2268 = vmatmul.mubr.f32.gmra.mrb[0].mxu0 %v356
        %v2269 = vpop.f32.mrb[0].mxu0
        %v2270 = vadd.f32 0.0, %v2269
        %v2271 = vpop.f32.mrb[0].mxu0
        %2272 = vmatprep.mubr.f32.mxu0 0.0
        %2273 = vmatmul.mubr.f32.gmra.mrb[0].mxu0 %v357
        %v2274 = vpop.f32.mrb[0].mxu0
        %v2275 = vpop.f32.mrb[0].mxu0
        %2276 = vmatprep.mubr.f32.mxu0 0.0
        %2277 = vmatmul.mubr.f32.gmra.mrb[0].mxu0 %v358
        %v2278 = vpop.f32.mrb[0].mxu0
        %v2279 = vpop.f32.mrb[0].mxu0
        %2280 = vdwg.mxu0
        %v2281 = vadd.f32 %v1861, %v2000
        %v2282 = vadd.f32 %v1862, %v2005
        %v2283 = vadd.f32 %v1863, %v2010
        %v2284 = vadd.f32 %v1864, %v2015
        %v2285 = vadd.f32 %v1865, %v2020
        %v2286 = vadd.f32 %v1866, %v2025
        %v2287 = vadd.f32 %v1867, %v2030
        %v2288 = vadd.f32 %v1868, %v2035
        %v2289 = vadd.f32 %v1869, %v2040
        %v2290 = vadd.f32 %v1870, %v2045
        %v2291 = vadd.f32 %v1871, %v2050
        %v2292 = vadd.f32 %v1872, %v2055
        %v2293 = vadd.f32 %v1873, %v2060
        %v2294 = vadd.f32 %v1874, %v2065
        %v2295 = vadd.f32 %v1875, %v2070
        %v2296 = vadd.f32 %v1876, %v2075
        %v2297 = vadd.f32 %v1877, %v2080
        %v2298 = vadd.f32 %v1878, %v2085
        %v2299 = vadd.f32 %v1879, %v2090
        %v2300 = vadd.f32 %v1880, %v2095
        %v2301 = vadd.f32 %v1881, %v2100
        %v2302 = vadd.f32 %v1882, %v2105
        %v2303 = vadd.f32 %v1883, %v2110
        %v2304 = vadd.f32 %v1884, %v2115
        %v2305 = vadd.f32 %v1885, %v2120
        %v2306 = vadd.f32 %v1886, %v2125
        %v2307 = vadd.f32 %v1887, %v2130
        %v2308 = vadd.f32 %v1888, %v2135
        %v2309 = vadd.f32 %v1889, %v2140
        %v2310 = vadd.f32 %v1890, %v2145
        %v2311 = vadd.f32 %v1891, %v2150
        %v2312 = vadd.f32 %v1892, %v2155
        %v2313 = vadd.f32 %v1893, %v2160
        %v2314 = vadd.f32 %v1894, %v2165
        %v2315 = vadd.f32 %v1895, %v2170
        %v2316 = vadd.f32 %v1896, %v2175
        %v2317 = vadd.f32 %v1897, %v2180
        %v2318 = vadd.f32 %v1898, %v2185
        %v2319 = vadd.f32 %v1899, %v2190
        %v2320 = vadd.f32 %v1900, %v2195
        %v2321 = vadd.f32 %v1901, %v2200
        %v2322 = vadd.f32 %v1902, %v2205
        %v2323 = vadd.f32 %v1903, %v2210
        %v2324 = vadd.f32 %v1904, %v2215
        %v2325 = vadd.f32 %v1905, %v2220
        %v2326 = vadd.f32 %v1906, %v2225
        %v2327 = vadd.f32 %v1907, %v2230
        %v2328 = vadd.f32 %v1908, %v2235
        %v2329 = vadd.f32 %v1909, %v2240
        %v2330 = vadd.f32 %v1910, %v2245
        %v2331 = vadd.f32 %v1911, %v2250
        %v2332 = vadd.f32 %v1912, %v2255
        %v2333 = vadd.f32 %v1913, %v2260
        %v2334 = vadd.f32 %v1914, %v2265
        %v2335 = vadd.f32 %v1915, %v2270
        %s2336 = scalar_lea.vmem [#allocation5], 512
        %v2337 = vld [vmem:[%s2336] sm:$0xff]
        %v2338 = vld [vmem:[%s2336 + $0x8] sm:$0xff]
        %v2339 = vld [vmem:[%s2336 + $0x10] sm:$0xff]
        %v2340 = vld [vmem:[%s2336 + $0x18] sm:$0xff]
        %v2341 = vld [vmem:[%s2336 + $0x20] sm:$0xff]
        %v2342 = vld [vmem:[%s2336 + $0x28] sm:$0xff]
        %v2343 = vld [vmem:[%s2336 + $0x30] sm:$0xff]
        %v2344 = vld [vmem:[%s2336 + $0x38] sm:$0xff]
        %v2345 = vld [vmem:[%s2336 + $0x40] sm:$0xff]
        %v2346 = vld [vmem:[%s2336 + $0x48] sm:$0xff]
        %v2347 = vld [vmem:[%s2336 + $0x50] sm:$0xff]
        %v2348 = vld [vmem:[%s2336 + $0x58] sm:$0xff]
        %v2349 = vld [vmem:[%s2336 + $0x60] sm:$0xff]
        %v2350 = vld [vmem:[%s2336 + $0x68] sm:$0xff]
        %v2351 = vld [vmem:[%s2336 + $0x70] sm:$0xff]
        %v2352 = vld [vmem:[%s2336 + $0x78] sm:$0xff]
        %v2356 = vrot.slane %v357, 1
        %v2357 = vsel %vm454, %v568, %v2356
        %v2358 = vrot.slane %v358, 1
        %v2359 = vsel %vm454, %v2356, %v2358
        %v2360 = vrot.slane %v359, 1
        %v2361 = vsel %vm454, %v2358, %v2360
        %2365 = vmatprep.subr.mxu0 0.0
        %2366 = vmatpush1.msra.mxu0 %v2337
        %2367 = vmatprep.subr.mxu0 0.0
        %2368 = vmatpush1.msra.mxu0 %v2338
        %2369 = vmatprep.subr.mxu0 0.0
        %2370 = vmatpush1.msra.mxu0 %v2339
        %2371 = vmatprep.subr.mxu0 0.0
        %2372 = vmatpush1.msra.mxu0 %v2340
        %2373 = vmatprep.subr.mxu0 0.0
        %2374 = vmatpush1.msra.mxu0 %v2341
        %2375 = vmatprep.subr.mxu0 0.0
        %2376 = vmatpush1.msra.mxu0 %v2342
        %2377 = vmatprep.subr.mxu0 0.0
        %2378 = vmatpush1.msra.mxu0 %v2343
        %2379 = vmatprep.subr.mxu0 0.0
        %2380 = vmatpush1.msra.mxu0 %v2344
        %2381 = vmatprep.subr.mxu0 0.0
        %2382 = vmatpush1.msra.mxu0 %v2345
        %2383 = vmatprep.subr.mxu0 0.0
        %2384 = vmatpush1.msra.mxu0 %v2346
        %2385 = vmatprep.subr.mxu0 0.0
        %2386 = vmatpush1.msra.mxu0 %v2347
        %2387 = vmatprep.subr.mxu0 0.0
        %2388 = vmatpush1.msra.mxu0 %v2348
        %2389 = vmatprep.subr.mxu0 0.0
        %2390 = vmatpush1.msra.mxu0 %v2349
        %2391 = vmatprep.subr.mxu0 0.0
        %2392 = vmatpush1.msra.mxu0 %v2350
        %2393 = vmatprep.subr.mxu0 0.0
        %2394 = vmatpush1.msra.mxu0 %v2351
        %2395 = vmatprep.subr.mxu0 0.0
        %2396 = vmatpush1.msra.mxu0 %v2352
        %2397 = vmatprep.subr.mxu0 0.0
        %2398 = vmatpush1.msra.mxu0 0.0
        %2399 = vmatprep.subr.mxu0 0.0
        %2400 = vmatpush1.msra.mxu0 0.0
        %2401 = vmatprep.subr.mxu0 0.0
        %2402 = vmatpush1.msra.mxu0 0.0
        %2403 = vmatprep.subr.mxu0 0.0
        %2404 = vmatpush1.msra.mxu0 0.0
        %2405 = vmatprep.subr.mxu0 0.0
        %2406 = vmatpush1.msra.mxu0 0.0
        %2407 = vmatprep.subr.mxu0 0.0
        %2408 = vmatpush1.msra.mxu0 0.0
        %2409 = vmatprep.subr.mxu0 0.0
        %2410 = vmatpush1.msra.mxu0 0.0
        %2411 = vmatprep.subr.mxu0 0.0
        %2412 = vmatpush1.msra.mxu0 0.0
        %2413 = vmatprep.subr.mxu0 0.0
        %2414 = vmatpush1.msra.mxu0 0.0
        %2415 = vmatprep.subr.mxu0 0.0
        %2416 = vmatpush1.msra.mxu0 0.0
        %2417 = vmatprep.subr.mxu0 0.0
        %2418 = vmatpush1.msra.mxu0 0.0
        %2419 = vmatprep.subr.mxu0 0.0
        %2420 = vmatpush1.msra.mxu0 0.0
        %2421 = vmatprep.subr.mxu0 0.0
        %2422 = vmatpush1.msra.mxu0 0.0
        %2423 = vmatprep.subr.mxu0 0.0
        %2424 = vmatpush1.msra.mxu0 0.0
        %2425 = vmatprep.subr.mxu0 0.0
        %2426 = vmatpush1.msra.mxu0 0.0
        %2427 = vmatprep.subr.mxu0 0.0
        %2428 = vmatpush1.msra.mxu0 0.0
        %2429 = vmatprep.mubr.f32.mxu0 0.0
        %2430 = vmatmul.mubr.f32.gmra.mrb[0].mxu0 %v463
        %v2431 = vpop.f32.mrb[0].mxu0
        %v2432 = vadd.f32 0.0, %v2431
        %v2433 = vpop.f32.mrb[0].mxu0
        %2434 = vmatprep.mubr.f32.mxu0 0.0
        %2435 = vmatmul.mubr.f32.gmra.mrb[0].mxu0 %v465
        %v2436 = vpop.f32.mrb[0].mxu0
        %v2437 = vadd.f32 0.0, %v2436
        %v2438 = vpop.f32.mrb[0].mxu0
        %2439 = vmatprep.mubr.f32.mxu0 0.0
        %2440 = vmatmul.mubr.f32.gmra.mrb[0].mxu0 %v467
        %v2441 = vpop.f32.mrb[0].mxu0
        %v2442 = vadd.f32 0.0, %v2441
        %v2443 = vpop.f32.mrb[0].mxu0
        %2444 = vmatprep.mubr.f32.mxu0 0.0
        %2445 = vmatmul.mubr.f32.gmra.mrb[0].mxu0 %v469
        %v2446 = vpop.f32.mrb[0].mxu0
        %v2447 = vadd.f32 0.0, %v2446
        %v2448 = vpop.f32.mrb[0].mxu0
        %2449 = vmatprep.mubr.f32.mxu0 0.0
        %2450 = vmatmul.mubr.f32.gmra.mrb[0].mxu0 %v471
        %v2451 = vpop.f32.mrb[0].mxu0
        %v2452 = vadd.f32 0.0, %v2451
        %v2453 = vpop.f32.mrb[0].mxu0
        %2454 = vmatprep.mubr.f32.mxu0 0.0
        %2455 = vmatmul.mubr.f32.gmra.mrb[0].mxu0 %v473
        %v2456 = vpop.f32.mrb[0].mxu0
        %v2457 = vadd.f32 0.0, %v2456
        %v2458 = vpop.f32.mrb[0].mxu0
        %2459 = vmatprep.mubr.f32.mxu0 0.0
        %2460 = vmatmul.mubr.f32.gmra.mrb[0].mxu0 %v475
        %v2461 = vpop.f32.mrb[0].mxu0
        %v2462 = vadd.f32 0.0, %v2461
        %v2463 = vpop.f32.mrb[0].mxu0
        %2464 = vmatprep.mubr.f32.mxu0 0.0
        %2465 = vmatmul.mubr.f32.gmra.mrb[0].mxu0 %v477
        %v2466 = vpop.f32.mrb[0].mxu0
        %v2467 = vadd.f32 0.0, %v2466
        %v2468 = vpop.f32.mrb[0].mxu0
        %2469 = vmatprep.mubr.f32.mxu0 0.0
        %2470 = vmatmul.mubr.f32.gmra.mrb[0].mxu0 %v479
        %v2471 = vpop.f32.mrb[0].mxu0
        %v2472 = vadd.f32 0.0, %v2471
        %v2473 = vpop.f32.mrb[0].mxu0
        %2474 = vmatprep.mubr.f32.mxu0 0.0
        %2475 = vmatmul.mubr.f32.gmra.mrb[0].mxu0 %v481
        %v2476 = vpop.f32.mrb[0].mxu0
        %v2477 = vadd.f32 0.0, %v2476
        %v2478 = vpop.f32.mrb[0].mxu0
        %2479 = vmatprep.mubr.f32.mxu0 0.0
        %2480 = vmatmul.mubr.f32.gmra.mrb[0].mxu0 %v483
        %v2481 = vpop.f32.mrb[0].mxu0
        %v2482 = vadd.f32 0.0, %v2481
        %v2483 = vpop.f32.mrb[0].mxu0
        %2484 = vmatprep.mubr.f32.mxu0 0.0
        %2485 = vmatmul.mubr.f32.gmra.mrb[0].mxu0 %v485
        %v2486 = vpop.f32.mrb[0].mxu0
        %v2487 = vadd.f32 0.0, %v2486
        %v2488 = vpop.f32.mrb[0].mxu0
        %2489 = vmatprep.mubr.f32.mxu0 0.0
        %2490 = vmatmul.mubr.f32.gmra.mrb[0].mxu0 %v487
        %v2491 = vpop.f32.mrb[0].mxu0
        %v2492 = vadd.f32 0.0, %v2491
        %v2493 = vpop.f32.mrb[0].mxu0
        %2494 = vmatprep.mubr.f32.mxu0 0.0
        %2495 = vmatmul.mubr.f32.gmra.mrb[0].mxu0 %v489
        %v2496 = vpop.f32.mrb[0].mxu0
        %v2497 = vadd.f32 0.0, %v2496
        %v2498 = vpop.f32.mrb[0].mxu0
        %2499 = vmatprep.mubr.f32.mxu0 0.0
        %2500 = vmatmul.mubr.f32.gmra.mrb[0].mxu0 %v491
        %v2501 = vpop.f32.mrb[0].mxu0
        %v2502 = vadd.f32 0.0, %v2501
        %v2503 = vpop.f32.mrb[0].mxu0
        %2504 = vmatprep.mubr.f32.mxu0 0.0
        %2505 = vmatmul.mubr.f32.gmra.mrb[0].mxu0 %v493
        %v2506 = vpop.f32.mrb[0].mxu0
        %v2507 = vadd.f32 0.0, %v2506
        %v2508 = vpop.f32.mrb[0].mxu0
        %2509 = vmatprep.mubr.f32.mxu0 0.0
        %2510 = vmatmul.mubr.f32.gmra.mrb[0].mxu0 %v495
        %v2511 = vpop.f32.mrb[0].mxu0
        %v2512 = vadd.f32 0.0, %v2511
        %v2513 = vpop.f32.mrb[0].mxu0
        %2514 = vmatprep.mubr.f32.mxu0 0.0
        %2515 = vmatmul.mubr.f32.gmra.mrb[0].mxu0 %v497
        %v2516 = vpop.f32.mrb[0].mxu0
        %v2517 = vadd.f32 0.0, %v2516
        %v2518 = vpop.f32.mrb[0].mxu0
        %2519 = vmatprep.mubr.f32.mxu0 0.0
        %2520 = vmatmul.mubr.f32.gmra.mrb[0].mxu0 %v499
        %v2521 = vpop.f32.mrb[0].mxu0
        %v2522 = vadd.f32 0.0, %v2521
        %v2523 = vpop.f32.mrb[0].mxu0
        %2524 = vmatprep.mubr.f32.mxu0 0.0
        %2525 = vmatmul.mubr.f32.gmra.mrb[0].mxu0 %v501
        %v2526 = vpop.f32.mrb[0].mxu0
        %v2527 = vadd.f32 0.0, %v2526
        %v2528 = vpop.f32.mrb[0].mxu0
        %2529 = vmatprep.mubr.f32.mxu0 0.0
        %2530 = vmatmul.mubr.f32.gmra.mrb[0].mxu0 %v503
        %v2531 = vpop.f32.mrb[0].mxu0
        %v2532 = vadd.f32 0.0, %v2531
        %v2533 = vpop.f32.mrb[0].mxu0
        %2534 = vmatprep.mubr.f32.mxu0 0.0
        %2535 = vmatmul.mubr.f32.gmra.mrb[0].mxu0 %v505
        %v2536 = vpop.f32.mrb[0].mxu0
        %v2537 = vadd.f32 0.0, %v2536
        %v2538 = vpop.f32.mrb[0].mxu0
        %2539 = vmatprep.mubr.f32.mxu0 0.0
        %2540 = vmatmul.mubr.f32.gmra.mrb[0].mxu0 %v507
        %v2541 = vpop.f32.mrb[0].mxu0
        %v2542 = vadd.f32 0.0, %v2541
        %v2543 = vpop.f32.mrb[0].mxu0
        %2544 = vmatprep.mubr.f32.mxu0 0.0
        %2545 = vmatmul.mubr.f32.gmra.mrb[0].mxu0 %v509
        %v2546 = vpop.f32.mrb[0].mxu0
        %v2547 = vadd.f32 0.0, %v2546
        %v2548 = vpop.f32.mrb[0].mxu0
        %2549 = vmatprep.mubr.f32.mxu0 0.0
        %2550 = vmatmul.mubr.f32.gmra.mrb[0].mxu0 %v511
        %v2551 = vpop.f32.mrb[0].mxu0
        %v2552 = vadd.f32 0.0, %v2551
        %v2553 = vpop.f32.mrb[0].mxu0
        %2554 = vmatprep.mubr.f32.mxu0 0.0
        %2555 = vmatmul.mubr.f32.gmra.mrb[0].mxu0 %v513
        %v2556 = vpop.f32.mrb[0].mxu0
        %v2557 = vadd.f32 0.0, %v2556
        %v2558 = vpop.f32.mrb[0].mxu0
        %2559 = vmatprep.mubr.f32.mxu0 0.0
        %2560 = vmatmul.mubr.f32.gmra.mrb[0].mxu0 %v515
        %v2561 = vpop.f32.mrb[0].mxu0
        %v2562 = vadd.f32 0.0, %v2561
        %v2563 = vpop.f32.mrb[0].mxu0
        %2564 = vmatprep.mubr.f32.mxu0 0.0
        %2565 = vmatmul.mubr.f32.gmra.mrb[0].mxu0 %v517
        %v2566 = vpop.f32.mrb[0].mxu0
        %v2567 = vadd.f32 0.0, %v2566
        %v2568 = vpop.f32.mrb[0].mxu0
        %2569 = vmatprep.mubr.f32.mxu0 0.0
        %2570 = vmatmul.mubr.f32.gmra.mrb[0].mxu0 %v519
        %v2571 = vpop.f32.mrb[0].mxu0
        %v2572 = vadd.f32 0.0, %v2571
        %v2573 = vpop.f32.mrb[0].mxu0
        %2574 = vmatprep.mubr.f32.mxu0 0.0
        %2575 = vmatmul.mubr.f32.gmra.mrb[0].mxu0 %v521
        %v2576 = vpop.f32.mrb[0].mxu0
        %v2577 = vadd.f32 0.0, %v2576
        %v2578 = vpop.f32.mrb[0].mxu0
        %2579 = vmatprep.mubr.f32.mxu0 0.0
        %2580 = vmatmul.mubr.f32.gmra.mrb[0].mxu0 %v523
        %v2581 = vpop.f32.mrb[0].mxu0
        %v2582 = vadd.f32 0.0, %v2581
        %v2583 = vpop.f32.mrb[0].mxu0
        %2584 = vmatprep.mubr.f32.mxu0 0.0
        %2585 = vmatmul.mubr.f32.gmra.mrb[0].mxu0 %v525
        %v2586 = vpop.f32.mrb[0].mxu0
        %v2587 = vadd.f32 0.0, %v2586
        %v2588 = vpop.f32.mrb[0].mxu0
        %2589 = vmatprep.mubr.f32.mxu0 0.0
        %2590 = vmatmul.mubr.f32.gmra.mrb[0].mxu0 %v527
        %v2591 = vpop.f32.mrb[0].mxu0
        %v2592 = vadd.f32 0.0, %v2591
        %v2593 = vpop.f32.mrb[0].mxu0
        %2594 = vmatprep.mubr.f32.mxu0 0.0
        %2595 = vmatmul.mubr.f32.gmra.mrb[0].mxu0 %v529
        %v2596 = vpop.f32.mrb[0].mxu0
        %v2597 = vadd.f32 0.0, %v2596
        %v2598 = vpop.f32.mrb[0].mxu0
        %2599 = vmatprep.mubr.f32.mxu0 0.0
        %2600 = vmatmul.mubr.f32.gmra.mrb[0].mxu0 %v531
        %v2601 = vpop.f32.mrb[0].mxu0
        %v2602 = vadd.f32 0.0, %v2601
        %v2603 = vpop.f32.mrb[0].mxu0
        %2604 = vmatprep.mubr.f32.mxu0 0.0
        %2605 = vmatmul.mubr.f32.gmra.mrb[0].mxu0 %v533
        %v2606 = vpop.f32.mrb[0].mxu0
        %v2607 = vadd.f32 0.0, %v2606
        %v2608 = vpop.f32.mrb[0].mxu0
        %2609 = vmatprep.mubr.f32.mxu0 0.0
        %2610 = vmatmul.mubr.f32.gmra.mrb[0].mxu0 %v535
        %v2611 = vpop.f32.mrb[0].mxu0
        %v2612 = vadd.f32 0.0, %v2611
        %v2613 = vpop.f32.mrb[0].mxu0
        %2614 = vmatprep.mubr.f32.mxu0 0.0
        %2615 = vmatmul.mubr.f32.gmra.mrb[0].mxu0 %v537
        %v2616 = vpop.f32.mrb[0].mxu0
        %v2617 = vadd.f32 0.0, %v2616
        %v2618 = vpop.f32.mrb[0].mxu0
        %2619 = vmatprep.mubr.f32.mxu0 0.0
        %2620 = vmatmul.mubr.f32.gmra.mrb[0].mxu0 %v539
        %v2621 = vpop.f32.mrb[0].mxu0
        %v2622 = vadd.f32 0.0, %v2621
        %v2623 = vpop.f32.mrb[0].mxu0
        %2624 = vmatprep.mubr.f32.mxu0 0.0
        %2625 = vmatmul.mubr.f32.gmra.mrb[0].mxu0 %v541
        %v2626 = vpop.f32.mrb[0].mxu0
        %v2627 = vadd.f32 0.0, %v2626
        %v2628 = vpop.f32.mrb[0].mxu0
        %2629 = vmatprep.mubr.f32.mxu0 0.0
        %2630 = vmatmul.mubr.f32.gmra.mrb[0].mxu0 %v543
        %v2631 = vpop.f32.mrb[0].mxu0
        %v2632 = vadd.f32 0.0, %v2631
        %v2633 = vpop.f32.mrb[0].mxu0
        %2634 = vmatprep.mubr.f32.mxu0 0.0
        %2635 = vmatmul.mubr.f32.gmra.mrb[0].mxu0 %v545
        %v2636 = vpop.f32.mrb[0].mxu0
        %v2637 = vadd.f32 0.0, %v2636
        %v2638 = vpop.f32.mrb[0].mxu0
        %2639 = vmatprep.mubr.f32.mxu0 0.0
        %2640 = vmatmul.mubr.f32.gmra.mrb[0].mxu0 %v547
        %v2641 = vpop.f32.mrb[0].mxu0
        %v2642 = vadd.f32 0.0, %v2641
        %v2643 = vpop.f32.mrb[0].mxu0
        %2644 = vmatprep.mubr.f32.mxu0 0.0
        %2645 = vmatmul.mubr.f32.gmra.mrb[0].mxu0 %v549
        %v2646 = vpop.f32.mrb[0].mxu0
        %v2647 = vadd.f32 0.0, %v2646
        %v2648 = vpop.f32.mrb[0].mxu0
        %2649 = vmatprep.mubr.f32.mxu0 0.0
        %2650 = vmatmul.mubr.f32.gmra.mrb[0].mxu0 %v551
        %v2651 = vpop.f32.mrb[0].mxu0
        %v2652 = vadd.f32 0.0, %v2651
        %v2653 = vpop.f32.mrb[0].mxu0
        %2654 = vmatprep.mubr.f32.mxu0 0.0
        %2655 = vmatmul.mubr.f32.gmra.mrb[0].mxu0 %v553
        %v2656 = vpop.f32.mrb[0].mxu0
        %v2657 = vadd.f32 0.0, %v2656
        %v2658 = vpop.f32.mrb[0].mxu0
        %2659 = vmatprep.mubr.f32.mxu0 0.0
        %2660 = vmatmul.mubr.f32.gmra.mrb[0].mxu0 %v555
        %v2661 = vpop.f32.mrb[0].mxu0
        %v2662 = vadd.f32 0.0, %v2661
        %v2663 = vpop.f32.mrb[0].mxu0
        %2664 = vmatprep.mubr.f32.mxu0 0.0
        %2665 = vmatmul.mubr.f32.gmra.mrb[0].mxu0 %v557
        %v2666 = vpop.f32.mrb[0].mxu0
        %v2667 = vadd.f32 0.0, %v2666
        %v2668 = vpop.f32.mrb[0].mxu0
        %2669 = vmatprep.mubr.f32.mxu0 0.0
        %2670 = vmatmul.mubr.f32.gmra.mrb[0].mxu0 %v559
        %v2671 = vpop.f32.mrb[0].mxu0
        %v2672 = vadd.f32 0.0, %v2671
        %v2673 = vpop.f32.mrb[0].mxu0
        %2674 = vmatprep.mubr.f32.mxu0 0.0
        %2675 = vmatmul.mubr.f32.gmra.mrb[0].mxu0 %v561
        %v2676 = vpop.f32.mrb[0].mxu0
        %v2677 = vadd.f32 0.0, %v2676
        %v2678 = vpop.f32.mrb[0].mxu0
        %2679 = vmatprep.mubr.f32.mxu0 0.0
        %2680 = vmatmul.mubr.f32.gmra.mrb[0].mxu0 %v563
        %v2681 = vpop.f32.mrb[0].mxu0
        %v2682 = vadd.f32 0.0, %v2681
        %v2683 = vpop.f32.mrb[0].mxu0
        %2684 = vmatprep.mubr.f32.mxu0 0.0
        %2685 = vmatmul.mubr.f32.gmra.mrb[0].mxu0 %v565
        %v2686 = vpop.f32.mrb[0].mxu0
        %v2687 = vadd.f32 0.0, %v2686
        %v2688 = vpop.f32.mrb[0].mxu0
        %2689 = vmatprep.mubr.f32.mxu0 0.0
        %2690 = vmatmul.mubr.f32.gmra.mrb[0].mxu0 %v567
        %v2691 = vpop.f32.mrb[0].mxu0
        %v2692 = vadd.f32 0.0, %v2691
        %v2693 = vpop.f32.mrb[0].mxu0
        %2694 = vmatprep.mubr.f32.mxu0 0.0
        %2695 = vmatmul.mubr.f32.gmra.mrb[0].mxu0 %v569
        %v2696 = vpop.f32.mrb[0].mxu0
        %v2697 = vadd.f32 0.0, %v2696
        %v2698 = vpop.f32.mrb[0].mxu0
        %2699 = vmatprep.mubr.f32.mxu0 0.0
        %2700 = vmatmul.mubr.f32.gmra.mrb[0].mxu0 %v2357
        %v2701 = vpop.f32.mrb[0].mxu0
        %v2702 = vadd.f32 0.0, %v2701
        %v2703 = vpop.f32.mrb[0].mxu0
        %2704 = vmatprep.mubr.f32.mxu0 0.0
        %2705 = vmatmul.mubr.f32.gmra.mrb[0].mxu0 %v2359
        %v2706 = vpop.f32.mrb[0].mxu0
        %v2707 = vpop.f32.mrb[0].mxu0
        %2708 = vmatprep.mubr.f32.mxu0 0.0
        %2709 = vmatmul.mubr.f32.gmra.mrb[0].mxu0 %v2361
        %v2710 = vpop.f32.mrb[0].mxu0
        %v2711 = vpop.f32.mrb[0].mxu0
        %2712 = vdwg.mxu0
        %v2713 = vadd.f32 %v2281, %v2432
        %v2714 = vadd.f32 %v2282, %v2437
        %v2715 = vadd.f32 %v2283, %v2442
        %v2716 = vadd.f32 %v2284, %v2447
        %v2717 = vadd.f32 %v2285, %v2452
        %v2718 = vadd.f32 %v2286, %v2457
        %v2719 = vadd.f32 %v2287, %v2462
        %v2720 = vadd.f32 %v2288, %v2467
        %v2721 = vadd.f32 %v2289, %v2472
        %v2722 = vadd.f32 %v2290, %v2477
        %v2723 = vadd.f32 %v2291, %v2482
        %v2724 = vadd.f32 %v2292, %v2487
        %v2725 = vadd.f32 %v2293, %v2492
        %v2726 = vadd.f32 %v2294, %v2497
        %v2727 = vadd.f32 %v2295, %v2502
        %v2728 = vadd.f32 %v2296, %v2507
        %v2729 = vadd.f32 %v2297, %v2512
        %v2730 = vadd.f32 %v2298, %v2517
        %v2731 = vadd.f32 %v2299, %v2522
        %v2732 = vadd.f32 %v2300, %v2527
        %v2733 = vadd.f32 %v2301, %v2532
        %v2734 = vadd.f32 %v2302, %v2537
        %v2735 = vadd.f32 %v2303, %v2542
        %v2736 = vadd.f32 %v2304, %v2547
        %v2737 = vadd.f32 %v2305, %v2552
        %v2738 = vadd.f32 %v2306, %v2557
        %v2739 = vadd.f32 %v2307, %v2562
        %v2740 = vadd.f32 %v2308, %v2567
        %v2741 = vadd.f32 %v2309, %v2572
        %v2742 = vadd.f32 %v2310, %v2577
        %v2743 = vadd.f32 %v2311, %v2582
        %v2744 = vadd.f32 %v2312, %v2587
        %v2745 = vadd.f32 %v2313, %v2592
        %v2746 = vadd.f32 %v2314, %v2597
        %v2747 = vadd.f32 %v2315, %v2602
        %v2748 = vadd.f32 %v2316, %v2607
        %v2749 = vadd.f32 %v2317, %v2612
        %v2750 = vadd.f32 %v2318, %v2617
        %v2751 = vadd.f32 %v2319, %v2622
        %v2752 = vadd.f32 %v2320, %v2627
        %v2753 = vadd.f32 %v2321, %v2632
        %v2754 = vadd.f32 %v2322, %v2637
        %v2755 = vadd.f32 %v2323, %v2642
        %v2756 = vadd.f32 %v2324, %v2647
        %v2757 = vadd.f32 %v2325, %v2652
        %v2758 = vadd.f32 %v2326, %v2657
        %v2759 = vadd.f32 %v2327, %v2662
        %v2760 = vadd.f32 %v2328, %v2667
        %v2761 = vadd.f32 %v2329, %v2672
        %v2762 = vadd.f32 %v2330, %v2677
        %v2763 = vadd.f32 %v2331, %v2682
        %v2764 = vadd.f32 %v2332, %v2687
        %v2765 = vadd.f32 %v2333, %v2692
        %v2766 = vadd.f32 %v2334, %v2697
        %v2767 = vadd.f32 %v2335, %v2702
        %s2768 = scalar_lea.vmem [#allocation5], 640
        %v2769 = vld [vmem:[%s2768] sm:$0xff]
        %v2770 = vld [vmem:[%s2768 + $0x8] sm:$0xff]
        %v2771 = vld [vmem:[%s2768 + $0x10] sm:$0xff]
        %v2772 = vld [vmem:[%s2768 + $0x18] sm:$0xff]
        %v2773 = vld [vmem:[%s2768 + $0x20] sm:$0xff]
        %v2774 = vld [vmem:[%s2768 + $0x28] sm:$0xff]
        %v2775 = vld [vmem:[%s2768 + $0x30] sm:$0xff]
        %v2776 = vld [vmem:[%s2768 + $0x38] sm:$0xff]
        %v2777 = vld [vmem:[%s2768 + $0x40] sm:$0xff]
        %v2778 = vld [vmem:[%s2768 + $0x48] sm:$0xff]
        %v2779 = vld [vmem:[%s2768 + $0x50] sm:$0xff]
        %v2780 = vld [vmem:[%s2768 + $0x58] sm:$0xff]
        %v2781 = vld [vmem:[%s2768 + $0x60] sm:$0xff]
        %v2782 = vld [vmem:[%s2768 + $0x68] sm:$0xff]
        %v2783 = vld [vmem:[%s2768 + $0x70] sm:$0xff]
        %v2784 = vld [vmem:[%s2768 + $0x78] sm:$0xff]
        %v2785 = vrot.slane %v357, 2
        %v2786 = vsel %vm1340, %v1454, %v2785
        %v2787 = vrot.slane %v358, 2
        %v2788 = vsel %vm1340, %v2785, %v2787
        %v2789 = vrot.slane %v359, 2
        %v2790 = vsel %vm1340, %v2787, %v2789
        %2794 = vmatprep.subr.mxu0 0.0
        %2795 = vmatpush1.msra.mxu0 %v2769
        %2796 = vmatprep.subr.mxu0 0.0
        %2797 = vmatpush1.msra.mxu0 %v2770
        %2798 = vmatprep.subr.mxu0 0.0
        %2799 = vmatpush1.msra.mxu0 %v2771
        %2800 = vmatprep.subr.mxu0 0.0
        %2801 = vmatpush1.msra.mxu0 %v2772
        %2802 = vmatprep.subr.mxu0 0.0
        %2803 = vmatpush1.msra.mxu0 %v2773
        %2804 = vmatprep.subr.mxu0 0.0
        %2805 = vmatpush1.msra.mxu0 %v2774
        %2806 = vmatprep.subr.mxu0 0.0
        %2807 = vmatpush1.msra.mxu0 %v2775
        %2808 = vmatprep.subr.mxu0 0.0
        %2809 = vmatpush1.msra.mxu0 %v2776
        %2810 = vmatprep.subr.mxu0 0.0
        %2811 = vmatpush1.msra.mxu0 %v2777
        %2812 = vmatprep.subr.mxu0 0.0
        %2813 = vmatpush1.msra.mxu0 %v2778
        %2814 = vmatprep.subr.mxu0 0.0
        %2815 = vmatpush1.msra.mxu0 %v2779
        %2816 = vmatprep.subr.mxu0 0.0
        %2817 = vmatpush1.msra.mxu0 %v2780
        %2818 = vmatprep.subr.mxu0 0.0
        %2819 = vmatpush1.msra.mxu0 %v2781
        %2820 = vmatprep.subr.mxu0 0.0
        %2821 = vmatpush1.msra.mxu0 %v2782
        %2822 = vmatprep.subr.mxu0 0.0
        %2823 = vmatpush1.msra.mxu0 %v2783
        %2824 = vmatprep.subr.mxu0 0.0
        %2825 = vmatpush1.msra.mxu0 %v2784
        %2826 = vmatprep.subr.mxu0 0.0
        %2827 = vmatpush1.msra.mxu0 0.0
        %2828 = vmatprep.subr.mxu0 0.0
        %2829 = vmatpush1.msra.mxu0 0.0
        %2830 = vmatprep.subr.mxu0 0.0
        %2831 = vmatpush1.msra.mxu0 0.0
        %2832 = vmatprep.subr.mxu0 0.0
        %2833 = vmatpush1.msra.mxu0 0.0
        %2834 = vmatprep.subr.mxu0 0.0
        %2835 = vmatpush1.msra.mxu0 0.0
        %2836 = vmatprep.subr.mxu0 0.0
        %2837 = vmatpush1.msra.mxu0 0.0
        %2838 = vmatprep.subr.mxu0 0.0
        %2839 = vmatpush1.msra.mxu0 0.0
        %2840 = vmatprep.subr.mxu0 0.0
        %2841 = vmatpush1.msra.mxu0 0.0
        %2842 = vmatprep.subr.mxu0 0.0
        %2843 = vmatpush1.msra.mxu0 0.0
        %2844 = vmatprep.subr.mxu0 0.0
        %2845 = vmatpush1.msra.mxu0 0.0
        %2846 = vmatprep.subr.mxu0 0.0
        %2847 = vmatpush1.msra.mxu0 0.0
        %2848 = vmatprep.subr.mxu0 0.0
        %2849 = vmatpush1.msra.mxu0 0.0
        %2850 = vmatprep.subr.mxu0 0.0
        %2851 = vmatpush1.msra.mxu0 0.0
        %2852 = vmatprep.subr.mxu0 0.0
        %2853 = vmatpush1.msra.mxu0 0.0
        %2854 = vmatprep.subr.mxu0 0.0
        %2855 = vmatpush1.msra.mxu0 0.0
        %2856 = vmatprep.subr.mxu0 0.0
        %2857 = vmatpush1.msra.mxu0 0.0
        %2858 = vmatprep.mubr.f32.mxu0 0.0
        %2859 = vmatmul.mubr.f32.gmra.mrb[0].mxu0 %v1349
        %v2860 = vpop.f32.mrb[0].mxu0
        %v2861 = vadd.f32 0.0, %v2860
        %v2862 = vpop.f32.mrb[0].mxu0
        %2863 = vmatprep.mubr.f32.mxu0 0.0
        %2864 = vmatmul.mubr.f32.gmra.mrb[0].mxu0 %v1351
        %v2865 = vpop.f32.mrb[0].mxu0
        %v2866 = vadd.f32 0.0, %v2865
        %v2867 = vpop.f32.mrb[0].mxu0
        %2868 = vmatprep.mubr.f32.mxu0 0.0
        %2869 = vmatmul.mubr.f32.gmra.mrb[0].mxu0 %v1353
        %v2870 = vpop.f32.mrb[0].mxu0
        %v2871 = vadd.f32 0.0, %v2870
        %v2872 = vpop.f32.mrb[0].mxu0
        %2873 = vmatprep.mubr.f32.mxu0 0.0
        %2874 = vmatmul.mubr.f32.gmra.mrb[0].mxu0 %v1355
        %v2875 = vpop.f32.mrb[0].mxu0
        %v2876 = vadd.f32 0.0, %v2875
        %v2877 = vpop.f32.mrb[0].mxu0
        %2878 = vmatprep.mubr.f32.mxu0 0.0
        %2879 = vmatmul.mubr.f32.gmra.mrb[0].mxu0 %v1357
        %v2880 = vpop.f32.mrb[0].mxu0
        %v2881 = vadd.f32 0.0, %v2880
        %v2882 = vpop.f32.mrb[0].mxu0
        %2883 = vmatprep.mubr.f32.mxu0 0.0
        %2884 = vmatmul.mubr.f32.gmra.mrb[0].mxu0 %v1359
        %v2885 = vpop.f32.mrb[0].mxu0
        %v2886 = vadd.f32 0.0, %v2885
        %v2887 = vpop.f32.mrb[0].mxu0
        %2888 = vmatprep.mubr.f32.mxu0 0.0
        %2889 = vmatmul.mubr.f32.gmra.mrb[0].mxu0 %v1361
        %v2890 = vpop.f32.mrb[0].mxu0
        %v2891 = vadd.f32 0.0, %v2890
        %v2892 = vpop.f32.mrb[0].mxu0
        %2893 = vmatprep.mubr.f32.mxu0 0.0
        %2894 = vmatmul.mubr.f32.gmra.mrb[0].mxu0 %v1363
        %v2895 = vpop.f32.mrb[0].mxu0
        %v2896 = vadd.f32 0.0, %v2895
        %v2897 = vpop.f32.mrb[0].mxu0
        %2898 = vmatprep.mubr.f32.mxu0 0.0
        %2899 = vmatmul.mubr.f32.gmra.mrb[0].mxu0 %v1365
        %v2900 = vpop.f32.mrb[0].mxu0
        %v2901 = vadd.f32 0.0, %v2900
        %v2902 = vpop.f32.mrb[0].mxu0
        %2903 = vmatprep.mubr.f32.mxu0 0.0
        %2904 = vmatmul.mubr.f32.gmra.mrb[0].mxu0 %v1367
        %v2905 = vpop.f32.mrb[0].mxu0
        %v2906 = vadd.f32 0.0, %v2905
        %v2907 = vpop.f32.mrb[0].mxu0
        %2908 = vmatprep.mubr.f32.mxu0 0.0
        %2909 = vmatmul.mubr.f32.gmra.mrb[0].mxu0 %v1369
        %v2910 = vpop.f32.mrb[0].mxu0
        %v2911 = vadd.f32 0.0, %v2910
        %v2912 = vpop.f32.mrb[0].mxu0
        %2913 = vmatprep.mubr.f32.mxu0 0.0
        %2914 = vmatmul.mubr.f32.gmra.mrb[0].mxu0 %v1371
        %v2915 = vpop.f32.mrb[0].mxu0
        %v2916 = vadd.f32 0.0, %v2915
        %v2917 = vpop.f32.mrb[0].mxu0
        %2918 = vmatprep.mubr.f32.mxu0 0.0
        %2919 = vmatmul.mubr.f32.gmra.mrb[0].mxu0 %v1373
        %v2920 = vpop.f32.mrb[0].mxu0
        %v2921 = vadd.f32 0.0, %v2920
        %v2922 = vpop.f32.mrb[0].mxu0
        %2923 = vmatprep.mubr.f32.mxu0 0.0
        %2924 = vmatmul.mubr.f32.gmra.mrb[0].mxu0 %v1375
        %v2925 = vpop.f32.mrb[0].mxu0
        %v2926 = vadd.f32 0.0, %v2925
        %v2927 = vpop.f32.mrb[0].mxu0
        %2928 = vmatprep.mubr.f32.mxu0 0.0
        %2929 = vmatmul.mubr.f32.gmra.mrb[0].mxu0 %v1377
        %v2930 = vpop.f32.mrb[0].mxu0
        %v2931 = vadd.f32 0.0, %v2930
        %v2932 = vpop.f32.mrb[0].mxu0
        %2933 = vmatprep.mubr.f32.mxu0 0.0
        %2934 = vmatmul.mubr.f32.gmra.mrb[0].mxu0 %v1379
        %v2935 = vpop.f32.mrb[0].mxu0
        %v2936 = vadd.f32 0.0, %v2935
        %v2937 = vpop.f32.mrb[0].mxu0
        %2938 = vmatprep.mubr.f32.mxu0 0.0
        %2939 = vmatmul.mubr.f32.gmra.mrb[0].mxu0 %v1381
        %v2940 = vpop.f32.mrb[0].mxu0
        %v2941 = vadd.f32 0.0, %v2940
        %v2942 = vpop.f32.mrb[0].mxu0
        %2943 = vmatprep.mubr.f32.mxu0 0.0
        %2944 = vmatmul.mubr.f32.gmra.mrb[0].mxu0 %v1383
        %v2945 = vpop.f32.mrb[0].mxu0
        %v2946 = vadd.f32 0.0, %v2945
        %v2947 = vpop.f32.mrb[0].mxu0
        %2948 = vmatprep.mubr.f32.mxu0 0.0
        %2949 = vmatmul.mubr.f32.gmra.mrb[0].mxu0 %v1385
        %v2950 = vpop.f32.mrb[0].mxu0
        %v2951 = vadd.f32 0.0, %v2950
        %v2952 = vpop.f32.mrb[0].mxu0
        %2953 = vmatprep.mubr.f32.mxu0 0.0
        %2954 = vmatmul.mubr.f32.gmra.mrb[0].mxu0 %v1387
        %v2955 = vpop.f32.mrb[0].mxu0
        %v2956 = vadd.f32 0.0, %v2955
        %v2957 = vpop.f32.mrb[0].mxu0
        %2958 = vmatprep.mubr.f32.mxu0 0.0
        %2959 = vmatmul.mubr.f32.gmra.mrb[0].mxu0 %v1389
        %v2960 = vpop.f32.mrb[0].mxu0
        %v2961 = vadd.f32 0.0, %v2960
        %v2962 = vpop.f32.mrb[0].mxu0
        %2963 = vmatprep.mubr.f32.mxu0 0.0
        %2964 = vmatmul.mubr.f32.gmra.mrb[0].mxu0 %v1391
        %v2965 = vpop.f32.mrb[0].mxu0
        %v2966 = vadd.f32 0.0, %v2965
        %v2967 = vpop.f32.mrb[0].mxu0
        %2968 = vmatprep.mubr.f32.mxu0 0.0
        %2969 = vmatmul.mubr.f32.gmra.mrb[0].mxu0 %v1393
        %v2970 = vpop.f32.mrb[0].mxu0
        %v2971 = vadd.f32 0.0, %v2970
        %v2972 = vpop.f32.mrb[0].mxu0
        %2973 = vmatprep.mubr.f32.mxu0 0.0
        %2974 = vmatmul.mubr.f32.gmra.mrb[0].mxu0 %v1395
        %v2975 = vpop.f32.mrb[0].mxu0
        %v2976 = vadd.f32 0.0, %v2975
        %v2977 = vpop.f32.mrb[0].mxu0
        %2978 = vmatprep.mubr.f32.mxu0 0.0
        %2979 = vmatmul.mubr.f32.gmra.mrb[0].mxu0 %v1397
        %v2980 = vpop.f32.mrb[0].mxu0
        %v2981 = vadd.f32 0.0, %v2980
        %v2982 = vpop.f32.mrb[0].mxu0
        %2983 = vmatprep.mubr.f32.mxu0 0.0
        %2984 = vmatmul.mubr.f32.gmra.mrb[0].mxu0 %v1399
        %v2985 = vpop.f32.mrb[0].mxu0
        %v2986 = vadd.f32 0.0, %v2985
        %v2987 = vpop.f32.mrb[0].mxu0
        %2988 = vmatprep.mubr.f32.mxu0 0.0
        %2989 = vmatmul.mubr.f32.gmra.mrb[0].mxu0 %v1401
        %v2990 = vpop.f32.mrb[0].mxu0
        %v2991 = vadd.f32 0.0, %v2990
        %v2992 = vpop.f32.mrb[0].mxu0
        %2993 = vmatprep.mubr.f32.mxu0 0.0
        %2994 = vmatmul.mubr.f32.gmra.mrb[0].mxu0 %v1403
        %v2995 = vpop.f32.mrb[0].mxu0
        %v2996 = vadd.f32 0.0, %v2995
        %v2997 = vpop.f32.mrb[0].mxu0
        %2998 = vmatprep.mubr.f32.mxu0 0.0
        %2999 = vmatmul.mubr.f32.gmra.mrb[0].mxu0 %v1405
        %v3000 = vpop.f32.mrb[0].mxu0
        %v3001 = vadd.f32 0.0, %v3000
        %v3002 = vpop.f32.mrb[0].mxu0
        %3003 = vmatprep.mubr.f32.mxu0 0.0
        %3004 = vmatmul.mubr.f32.gmra.mrb[0].mxu0 %v1407
        %v3005 = vpop.f32.mrb[0].mxu0
        %v3006 = vadd.f32 0.0, %v3005
        %v3007 = vpop.f32.mrb[0].mxu0
        %3008 = vmatprep.mubr.f32.mxu0 0.0
        %3009 = vmatmul.mubr.f32.gmra.mrb[0].mxu0 %v1409
        %v3010 = vpop.f32.mrb[0].mxu0
        %v3011 = vadd.f32 0.0, %v3010
        %v3012 = vpop.f32.mrb[0].mxu0
        %3013 = vmatprep.mubr.f32.mxu0 0.0
        %3014 = vmatmul.mubr.f32.gmra.mrb[0].mxu0 %v1411
        %v3015 = vpop.f32.mrb[0].mxu0
        %v3016 = vadd.f32 0.0, %v3015
        %v3017 = vpop.f32.mrb[0].mxu0
        %3018 = vmatprep.mubr.f32.mxu0 0.0
        %3019 = vmatmul.mubr.f32.gmra.mrb[0].mxu0 %v1413
        %v3020 = vpop.f32.mrb[0].mxu0
        %v3021 = vadd.f32 0.0, %v3020
        %v3022 = vpop.f32.mrb[0].mxu0
        %3023 = vmatprep.mubr.f32.mxu0 0.0
        %3024 = vmatmul.mubr.f32.gmra.mrb[0].mxu0 %v1415
        %v3025 = vpop.f32.mrb[0].mxu0
        %v3026 = vadd.f32 0.0, %v3025
        %v3027 = vpop.f32.mrb[0].mxu0
        %3028 = vmatprep.mubr.f32.mxu0 0.0
        %3029 = vmatmul.mubr.f32.gmra.mrb[0].mxu0 %v1417
        %v3030 = vpop.f32.mrb[0].mxu0
        %v3031 = vadd.f32 0.0, %v3030
        %v3032 = vpop.f32.mrb[0].mxu0
        %3033 = vmatprep.mubr.f32.mxu0 0.0
        %3034 = vmatmul.mubr.f32.gmra.mrb[0].mxu0 %v1419
        %v3035 = vpop.f32.mrb[0].mxu0
        %v3036 = vadd.f32 0.0, %v3035
        %v3037 = vpop.f32.mrb[0].mxu0
        %3038 = vmatprep.mubr.f32.mxu0 0.0
        %3039 = vmatmul.mubr.f32.gmra.mrb[0].mxu0 %v1421
        %v3040 = vpop.f32.mrb[0].mxu0
        %v3041 = vadd.f32 0.0, %v3040
        %v3042 = vpop.f32.mrb[0].mxu0
        %3043 = vmatprep.mubr.f32.mxu0 0.0
        %3044 = vmatmul.mubr.f32.gmra.mrb[0].mxu0 %v1423
        %v3045 = vpop.f32.mrb[0].mxu0
        %v3046 = vadd.f32 0.0, %v3045
        %v3047 = vpop.f32.mrb[0].mxu0
        %3048 = vmatprep.mubr.f32.mxu0 0.0
        %3049 = vmatmul.mubr.f32.gmra.mrb[0].mxu0 %v1425
        %v3050 = vpop.f32.mrb[0].mxu0
        %v3051 = vadd.f32 0.0, %v3050
        %v3052 = vpop.f32.mrb[0].mxu0
        %3053 = vmatprep.mubr.f32.mxu0 0.0
        %3054 = vmatmul.mubr.f32.gmra.mrb[0].mxu0 %v1427
        %v3055 = vpop.f32.mrb[0].mxu0
        %v3056 = vadd.f32 0.0, %v3055
        %v3057 = vpop.f32.mrb[0].mxu0
        %3058 = vmatprep.mubr.f32.mxu0 0.0
        %3059 = vmatmul.mubr.f32.gmra.mrb[0].mxu0 %v1429
        %v3060 = vpop.f32.mrb[0].mxu0
        %v3061 = vadd.f32 0.0, %v3060
        %v3062 = vpop.f32.mrb[0].mxu0
        %3063 = vmatprep.mubr.f32.mxu0 0.0
        %3064 = vmatmul.mubr.f32.gmra.mrb[0].mxu0 %v1431
        %v3065 = vpop.f32.mrb[0].mxu0
        %v3066 = vadd.f32 0.0, %v3065
        %v3067 = vpop.f32.mrb[0].mxu0
        %3068 = vmatprep.mubr.f32.mxu0 0.0
        %3069 = vmatmul.mubr.f32.gmra.mrb[0].mxu0 %v1433
        %v3070 = vpop.f32.mrb[0].mxu0
        %v3071 = vadd.f32 0.0, %v3070
        %v3072 = vpop.f32.mrb[0].mxu0
        %3073 = vmatprep.mubr.f32.mxu0 0.0
        %3074 = vmatmul.mubr.f32.gmra.mrb[0].mxu0 %v1435
        %v3075 = vpop.f32.mrb[0].mxu0
        %v3076 = vadd.f32 0.0, %v3075
        %v3077 = vpop.f32.mrb[0].mxu0
        %3078 = vmatprep.mubr.f32.mxu0 0.0
        %3079 = vmatmul.mubr.f32.gmra.mrb[0].mxu0 %v1437
        %v3080 = vpop.f32.mrb[0].mxu0
        %v3081 = vadd.f32 0.0, %v3080
        %v3082 = vpop.f32.mrb[0].mxu0
        %3083 = vmatprep.mubr.f32.mxu0 0.0
        %3084 = vmatmul.mubr.f32.gmra.mrb[0].mxu0 %v1439
        %v3085 = vpop.f32.mrb[0].mxu0
        %v3086 = vadd.f32 0.0, %v3085
        %v3087 = vpop.f32.mrb[0].mxu0
        %3088 = vmatprep.mubr.f32.mxu0 0.0
        %3089 = vmatmul.mubr.f32.gmra.mrb[0].mxu0 %v1441
        %v3090 = vpop.f32.mrb[0].mxu0
        %v3091 = vadd.f32 0.0, %v3090
        %v3092 = vpop.f32.mrb[0].mxu0
        %3093 = vmatprep.mubr.f32.mxu0 0.0
        %3094 = vmatmul.mubr.f32.gmra.mrb[0].mxu0 %v1443
        %v3095 = vpop.f32.mrb[0].mxu0
        %v3096 = vadd.f32 0.0, %v3095
        %v3097 = vpop.f32.mrb[0].mxu0
        %3098 = vmatprep.mubr.f32.mxu0 0.0
        %3099 = vmatmul.mubr.f32.gmra.mrb[0].mxu0 %v1445
        %v3100 = vpop.f32.mrb[0].mxu0
        %v3101 = vadd.f32 0.0, %v3100
        %v3102 = vpop.f32.mrb[0].mxu0
        %3103 = vmatprep.mubr.f32.mxu0 0.0
        %3104 = vmatmul.mubr.f32.gmra.mrb[0].mxu0 %v1447
        %v3105 = vpop.f32.mrb[0].mxu0
        %v3106 = vadd.f32 0.0, %v3105
        %v3107 = vpop.f32.mrb[0].mxu0
        %3108 = vmatprep.mubr.f32.mxu0 0.0
        %3109 = vmatmul.mubr.f32.gmra.mrb[0].mxu0 %v1449
        %v3110 = vpop.f32.mrb[0].mxu0
        %v3111 = vadd.f32 0.0, %v3110
        %v3112 = vpop.f32.mrb[0].mxu0
        %3113 = vmatprep.mubr.f32.mxu0 0.0
        %3114 = vmatmul.mubr.f32.gmra.mrb[0].mxu0 %v1451
        %v3115 = vpop.f32.mrb[0].mxu0
        %v3116 = vadd.f32 0.0, %v3115
        %v3117 = vpop.f32.mrb[0].mxu0
        %3118 = vmatprep.mubr.f32.mxu0 0.0
        %3119 = vmatmul.mubr.f32.gmra.mrb[0].mxu0 %v1453
        %v3120 = vpop.f32.mrb[0].mxu0
        %v3121 = vadd.f32 0.0, %v3120
        %v3122 = vpop.f32.mrb[0].mxu0
        %3123 = vmatprep.mubr.f32.mxu0 0.0
        %3124 = vmatmul.mubr.f32.gmra.mrb[0].mxu0 %v1455
        %v3125 = vpop.f32.mrb[0].mxu0
        %v3126 = vadd.f32 0.0, %v3125
        %v3127 = vpop.f32.mrb[0].mxu0
        %3128 = vmatprep.mubr.f32.mxu0 0.0
        %3129 = vmatmul.mubr.f32.gmra.mrb[0].mxu0 %v2786
        %v3130 = vpop.f32.mrb[0].mxu0
        %v3131 = vadd.f32 0.0, %v3130
        %v3132 = vpop.f32.mrb[0].mxu0
        %3133 = vmatprep.mubr.f32.mxu0 0.0
        %3134 = vmatmul.mubr.f32.gmra.mrb[0].mxu0 %v2788
        %v3135 = vpop.f32.mrb[0].mxu0
        %v3136 = vpop.f32.mrb[0].mxu0
        %3137 = vmatprep.mubr.f32.mxu0 0.0
        %3138 = vmatmul.mubr.f32.gmra.mrb[0].mxu0 %v2790
        %v3139 = vpop.f32.mrb[0].mxu0
        %v3140 = vpop.f32.mrb[0].mxu0
        %3141 = vdwg.mxu0
        %v3142 = vadd.f32 %v2713, %v2861
        %v3143 = vadd.f32 %v2714, %v2866
        %v3144 = vadd.f32 %v2715, %v2871
        %v3145 = vadd.f32 %v2716, %v2876
        %v3146 = vadd.f32 %v2717, %v2881
        %v3147 = vadd.f32 %v2718, %v2886
        %v3148 = vadd.f32 %v2719, %v2891
        %v3149 = vadd.f32 %v2720, %v2896
        %v3150 = vadd.f32 %v2721, %v2901
        %v3151 = vadd.f32 %v2722, %v2906
        %v3152 = vadd.f32 %v2723, %v2911
        %v3153 = vadd.f32 %v2724, %v2916
        %v3154 = vadd.f32 %v2725, %v2921
        %v3155 = vadd.f32 %v2726, %v2926
        %v3156 = vadd.f32 %v2727, %v2931
        %v3157 = vadd.f32 %v2728, %v2936
        %v3158 = vadd.f32 %v2729, %v2941
        %v3159 = vadd.f32 %v2730, %v2946
        %v3160 = vadd.f32 %v2731, %v2951
        %v3161 = vadd.f32 %v2732, %v2956
        %v3162 = vadd.f32 %v2733, %v2961
        %v3163 = vadd.f32 %v2734, %v2966
        %v3164 = vadd.f32 %v2735, %v2971
        %v3165 = vadd.f32 %v2736, %v2976
        %v3166 = vadd.f32 %v2737, %v2981
        %v3167 = vadd.f32 %v2738, %v2986
        %v3168 = vadd.f32 %v2739, %v2991
        %v3169 = vadd.f32 %v2740, %v2996
        %v3170 = vadd.f32 %v2741, %v3001
        %v3171 = vadd.f32 %v2742, %v3006
        %v3172 = vadd.f32 %v2743, %v3011
        %v3173 = vadd.f32 %v2744, %v3016
        %v3174 = vadd.f32 %v2745, %v3021
        %v3175 = vadd.f32 %v2746, %v3026
        %v3176 = vadd.f32 %v2747, %v3031
        %v3177 = vadd.f32 %v2748, %v3036
        %v3178 = vadd.f32 %v2749, %v3041
        %v3179 = vadd.f32 %v2750, %v3046
        %v3180 = vadd.f32 %v2751, %v3051
        %v3181 = vadd.f32 %v2752, %v3056
        %v3182 = vadd.f32 %v2753, %v3061
        %v3183 = vadd.f32 %v2754, %v3066
        %v3184 = vadd.f32 %v2755, %v3071
        %v3185 = vadd.f32 %v2756, %v3076
        %v3186 = vadd.f32 %v2757, %v3081
        %v3187 = vadd.f32 %v2758, %v3086
        %v3188 = vadd.f32 %v2759, %v3091
        %v3189 = vadd.f32 %v2760, %v3096
        %v3190 = vadd.f32 %v2761, %v3101
        %v3191 = vadd.f32 %v2762, %v3106
        %v3192 = vadd.f32 %v2763, %v3111
        %v3193 = vadd.f32 %v2764, %v3116
        %v3194 = vadd.f32 %v2765, %v3121
        %v3195 = vadd.f32 %v2766, %v3126
        %v3196 = vadd.f32 %v2767, %v3131
        %s3197 = scalar_lea.vmem [#allocation5], 768
        %v3198 = vld [vmem:[%s3197] sm:$0xff]
        %v3199 = vld [vmem:[%s3197 + $0x8] sm:$0xff]
        %v3200 = vld [vmem:[%s3197 + $0x10] sm:$0xff]
        %v3201 = vld [vmem:[%s3197 + $0x18] sm:$0xff]
        %v3202 = vld [vmem:[%s3197 + $0x20] sm:$0xff]
        %v3203 = vld [vmem:[%s3197 + $0x28] sm:$0xff]
        %v3204 = vld [vmem:[%s3197 + $0x30] sm:$0xff]
        %v3205 = vld [vmem:[%s3197 + $0x38] sm:$0xff]
        %v3206 = vld [vmem:[%s3197 + $0x40] sm:$0xff]
        %v3207 = vld [vmem:[%s3197 + $0x48] sm:$0xff]
        %v3208 = vld [vmem:[%s3197 + $0x50] sm:$0xff]
        %v3209 = vld [vmem:[%s3197 + $0x58] sm:$0xff]
        %v3210 = vld [vmem:[%s3197 + $0x60] sm:$0xff]
        %v3211 = vld [vmem:[%s3197 + $0x68] sm:$0xff]
        %v3212 = vld [vmem:[%s3197 + $0x70] sm:$0xff]
        %v3213 = vld [vmem:[%s3197 + $0x78] sm:$0xff]
        %3214 = vmatprep.subr.mxu0 0.0
        %3215 = vmatpush1.msra.mxu0 %v3198
        %3216 = vmatprep.subr.mxu0 0.0
        %3217 = vmatpush1.msra.mxu0 %v3199
        %3218 = vmatprep.subr.mxu0 0.0
        %3219 = vmatpush1.msra.mxu0 %v3200
        %3220 = vmatprep.subr.mxu0 0.0
        %3221 = vmatpush1.msra.mxu0 %v3201
        %3222 = vmatprep.subr.mxu0 0.0
        %3223 = vmatpush1.msra.mxu0 %v3202
        %3224 = vmatprep.subr.mxu0 0.0
        %3225 = vmatpush1.msra.mxu0 %v3203
        %3226 = vmatprep.subr.mxu0 0.0
        %3227 = vmatpush1.msra.mxu0 %v3204
        %3228 = vmatprep.subr.mxu0 0.0
        %3229 = vmatpush1.msra.mxu0 %v3205
        %3230 = vmatprep.subr.mxu0 0.0
        %3231 = vmatpush1.msra.mxu0 %v3206
        %3232 = vmatprep.subr.mxu0 0.0
        %3233 = vmatpush1.msra.mxu0 %v3207
        %3234 = vmatprep.subr.mxu0 0.0
        %3235 = vmatpush1.msra.mxu0 %v3208
        %3236 = vmatprep.subr.mxu0 0.0
        %3237 = vmatpush1.msra.mxu0 %v3209
        %3238 = vmatprep.subr.mxu0 0.0
        %3239 = vmatpush1.msra.mxu0 %v3210
        %3240 = vmatprep.subr.mxu0 0.0
        %3241 = vmatpush1.msra.mxu0 %v3211
        %3242 = vmatprep.subr.mxu0 0.0
        %3243 = vmatpush1.msra.mxu0 %v3212
        %3244 = vmatprep.subr.mxu0 0.0
        %3245 = vmatpush1.msra.mxu0 %v3213
        %3246 = vmatprep.subr.mxu0 0.0
        %3247 = vmatpush1.msra.mxu0 0.0
        %3248 = vmatprep.subr.mxu0 0.0
        %3249 = vmatpush1.msra.mxu0 0.0
        %3250 = vmatprep.subr.mxu0 0.0
        %3251 = vmatpush1.msra.mxu0 0.0
        %3252 = vmatprep.subr.mxu0 0.0
        %3253 = vmatpush1.msra.mxu0 0.0
        %3254 = vmatprep.subr.mxu0 0.0
        %3255 = vmatpush1.msra.mxu0 0.0
        %3256 = vmatprep.subr.mxu0 0.0
        %3257 = vmatpush1.msra.mxu0 0.0
        %3258 = vmatprep.subr.mxu0 0.0
        %3259 = vmatpush1.msra.mxu0 0.0
        %3260 = vmatprep.subr.mxu0 0.0
        %3261 = vmatpush1.msra.mxu0 0.0
        %3262 = vmatprep.subr.mxu0 0.0
        %3263 = vmatpush1.msra.mxu0 0.0
        %3264 = vmatprep.subr.mxu0 0.0
        %3265 = vmatpush1.msra.mxu0 0.0
        %3266 = vmatprep.subr.mxu0 0.0
        %3267 = vmatpush1.msra.mxu0 0.0
        %3268 = vmatprep.subr.mxu0 0.0
        %3269 = vmatpush1.msra.mxu0 0.0
        %3270 = vmatprep.subr.mxu0 0.0
        %3271 = vmatpush1.msra.mxu0 0.0
        %3272 = vmatprep.subr.mxu0 0.0
        %3273 = vmatpush1.msra.mxu0 0.0
        %3274 = vmatprep.subr.mxu0 0.0
        %3275 = vmatpush1.msra.mxu0 0.0
        %3276 = vmatprep.subr.mxu0 0.0
        %3277 = vmatpush1.msra.mxu0 0.0
        %3278 = vmatprep.mubr.f32.mxu0 0.0
        %3279 = vmatmul.mubr.f32.gmra.mrb[0].mxu0 %v305
        %v3280 = vpop.f32.mrb[0].mxu0
        %v3281 = vadd.f32 0.0, %v3280
        %v3282 = vpop.f32.mrb[0].mxu0
        %3283 = vmatprep.mubr.f32.mxu0 0.0
        %3284 = vmatmul.mubr.f32.gmra.mrb[0].mxu0 %v306
        %v3285 = vpop.f32.mrb[0].mxu0
        %v3286 = vadd.f32 0.0, %v3285
        %v3287 = vpop.f32.mrb[0].mxu0
        %3288 = vmatprep.mubr.f32.mxu0 0.0
        %3289 = vmatmul.mubr.f32.gmra.mrb[0].mxu0 %v307
        %v3290 = vpop.f32.mrb[0].mxu0
        %v3291 = vadd.f32 0.0, %v3290
        %v3292 = vpop.f32.mrb[0].mxu0
        %3293 = vmatprep.mubr.f32.mxu0 0.0
        %3294 = vmatmul.mubr.f32.gmra.mrb[0].mxu0 %v308
        %v3295 = vpop.f32.mrb[0].mxu0
        %v3296 = vadd.f32 0.0, %v3295
        %v3297 = vpop.f32.mrb[0].mxu0
        %3298 = vmatprep.mubr.f32.mxu0 0.0
        %3299 = vmatmul.mubr.f32.gmra.mrb[0].mxu0 %v309
        %v3300 = vpop.f32.mrb[0].mxu0
        %v3301 = vadd.f32 0.0, %v3300
        %v3302 = vpop.f32.mrb[0].mxu0
        %3303 = vmatprep.mubr.f32.mxu0 0.0
        %3304 = vmatmul.mubr.f32.gmra.mrb[0].mxu0 %v310
        %v3305 = vpop.f32.mrb[0].mxu0
        %v3306 = vadd.f32 0.0, %v3305
        %v3307 = vpop.f32.mrb[0].mxu0
        %3308 = vmatprep.mubr.f32.mxu0 0.0
        %3309 = vmatmul.mubr.f32.gmra.mrb[0].mxu0 %v311
        %v3310 = vpop.f32.mrb[0].mxu0
        %v3311 = vadd.f32 0.0, %v3310
        %v3312 = vpop.f32.mrb[0].mxu0
        %3313 = vmatprep.mubr.f32.mxu0 0.0
        %3314 = vmatmul.mubr.f32.gmra.mrb[0].mxu0 %v312
        %v3315 = vpop.f32.mrb[0].mxu0
        %v3316 = vadd.f32 0.0, %v3315
        %v3317 = vpop.f32.mrb[0].mxu0
        %3318 = vmatprep.mubr.f32.mxu0 0.0
        %3319 = vmatmul.mubr.f32.gmra.mrb[0].mxu0 %v313
        %v3320 = vpop.f32.mrb[0].mxu0
        %v3321 = vadd.f32 0.0, %v3320
        %v3322 = vpop.f32.mrb[0].mxu0
        %3323 = vmatprep.mubr.f32.mxu0 0.0
        %3324 = vmatmul.mubr.f32.gmra.mrb[0].mxu0 %v314
        %v3325 = vpop.f32.mrb[0].mxu0
        %v3326 = vadd.f32 0.0, %v3325
        %v3327 = vpop.f32.mrb[0].mxu0
        %3328 = vmatprep.mubr.f32.mxu0 0.0
        %3329 = vmatmul.mubr.f32.gmra.mrb[0].mxu0 %v315
        %v3330 = vpop.f32.mrb[0].mxu0
        %v3331 = vadd.f32 0.0, %v3330
        %v3332 = vpop.f32.mrb[0].mxu0
        %3333 = vmatprep.mubr.f32.mxu0 0.0
        %3334 = vmatmul.mubr.f32.gmra.mrb[0].mxu0 %v316
        %v3335 = vpop.f32.mrb[0].mxu0
        %v3336 = vadd.f32 0.0, %v3335
        %v3337 = vpop.f32.mrb[0].mxu0
        %3338 = vmatprep.mubr.f32.mxu0 0.0
        %3339 = vmatmul.mubr.f32.gmra.mrb[0].mxu0 %v317
        %v3340 = vpop.f32.mrb[0].mxu0
        %v3341 = vadd.f32 0.0, %v3340
        %v3342 = vpop.f32.mrb[0].mxu0
        %3343 = vmatprep.mubr.f32.mxu0 0.0
        %3344 = vmatmul.mubr.f32.gmra.mrb[0].mxu0 %v318
        %v3345 = vpop.f32.mrb[0].mxu0
        %v3346 = vadd.f32 0.0, %v3345
        %v3347 = vpop.f32.mrb[0].mxu0
        %3348 = vmatprep.mubr.f32.mxu0 0.0
        %3349 = vmatmul.mubr.f32.gmra.mrb[0].mxu0 %v319
        %v3350 = vpop.f32.mrb[0].mxu0
        %v3351 = vadd.f32 0.0, %v3350
        %v3352 = vpop.f32.mrb[0].mxu0
        %3353 = vmatprep.mubr.f32.mxu0 0.0
        %3354 = vmatmul.mubr.f32.gmra.mrb[0].mxu0 %v320
        %v3355 = vpop.f32.mrb[0].mxu0
        %v3356 = vadd.f32 0.0, %v3355
        %v3357 = vpop.f32.mrb[0].mxu0
        %3358 = vmatprep.mubr.f32.mxu0 0.0
        %3359 = vmatmul.mubr.f32.gmra.mrb[0].mxu0 %v321
        %v3360 = vpop.f32.mrb[0].mxu0
        %v3361 = vadd.f32 0.0, %v3360
        %v3362 = vpop.f32.mrb[0].mxu0
        %3363 = vmatprep.mubr.f32.mxu0 0.0
        %3364 = vmatmul.mubr.f32.gmra.mrb[0].mxu0 %v322
        %v3365 = vpop.f32.mrb[0].mxu0
        %v3366 = vadd.f32 0.0, %v3365
        %v3367 = vpop.f32.mrb[0].mxu0
        %3368 = vmatprep.mubr.f32.mxu0 0.0
        %3369 = vmatmul.mubr.f32.gmra.mrb[0].mxu0 %v323
        %v3370 = vpop.f32.mrb[0].mxu0
        %v3371 = vadd.f32 0.0, %v3370
        %v3372 = vpop.f32.mrb[0].mxu0
        %3373 = vmatprep.mubr.f32.mxu0 0.0
        %3374 = vmatmul.mubr.f32.gmra.mrb[0].mxu0 %v324
        %v3375 = vpop.f32.mrb[0].mxu0
        %v3376 = vadd.f32 0.0, %v3375
        %v3377 = vpop.f32.mrb[0].mxu0
        %3378 = vmatprep.mubr.f32.mxu0 0.0
        %3379 = vmatmul.mubr.f32.gmra.mrb[0].mxu0 %v325
        %v3380 = vpop.f32.mrb[0].mxu0
        %v3381 = vadd.f32 0.0, %v3380
        %v3382 = vpop.f32.mrb[0].mxu0
        %3383 = vmatprep.mubr.f32.mxu0 0.0
        %3384 = vmatmul.mubr.f32.gmra.mrb[0].mxu0 %v326
        %v3385 = vpop.f32.mrb[0].mxu0
        %v3386 = vadd.f32 0.0, %v3385
        %v3387 = vpop.f32.mrb[0].mxu0
        %3388 = vmatprep.mubr.f32.mxu0 0.0
        %3389 = vmatmul.mubr.f32.gmra.mrb[0].mxu0 %v327
        %v3390 = vpop.f32.mrb[0].mxu0
        %v3391 = vadd.f32 0.0, %v3390
        %v3392 = vpop.f32.mrb[0].mxu0
        %3393 = vmatprep.mubr.f32.mxu0 0.0
        %3394 = vmatmul.mubr.f32.gmra.mrb[0].mxu0 %v328
        %v3395 = vpop.f32.mrb[0].mxu0
        %v3396 = vadd.f32 0.0, %v3395
        %v3397 = vpop.f32.mrb[0].mxu0
        %3398 = vmatprep.mubr.f32.mxu0 0.0
        %3399 = vmatmul.mubr.f32.gmra.mrb[0].mxu0 %v329
        %v3400 = vpop.f32.mrb[0].mxu0
        %v3401 = vadd.f32 0.0, %v3400
        %v3402 = vpop.f32.mrb[0].mxu0
        %3403 = vmatprep.mubr.f32.mxu0 0.0
        %3404 = vmatmul.mubr.f32.gmra.mrb[0].mxu0 %v330
        %v3405 = vpop.f32.mrb[0].mxu0
        %v3406 = vadd.f32 0.0, %v3405
        %v3407 = vpop.f32.mrb[0].mxu0
        %3408 = vmatprep.mubr.f32.mxu0 0.0
        %3409 = vmatmul.mubr.f32.gmra.mrb[0].mxu0 %v331
        %v3410 = vpop.f32.mrb[0].mxu0
        %v3411 = vadd.f32 0.0, %v3410
        %v3412 = vpop.f32.mrb[0].mxu0
        %3413 = vmatprep.mubr.f32.mxu0 0.0
        %3414 = vmatmul.mubr.f32.gmra.mrb[0].mxu0 %v332
        %v3415 = vpop.f32.mrb[0].mxu0
        %v3416 = vadd.f32 0.0, %v3415
        %v3417 = vpop.f32.mrb[0].mxu0
        %3418 = vmatprep.mubr.f32.mxu0 0.0
        %3419 = vmatmul.mubr.f32.gmra.mrb[0].mxu0 %v333
        %v3420 = vpop.f32.mrb[0].mxu0
        %v3421 = vadd.f32 0.0, %v3420
        %v3422 = vpop.f32.mrb[0].mxu0
        %3423 = vmatprep.mubr.f32.mxu0 0.0
        %3424 = vmatmul.mubr.f32.gmra.mrb[0].mxu0 %v334
        %v3425 = vpop.f32.mrb[0].mxu0
        %v3426 = vadd.f32 0.0, %v3425
        %v3427 = vpop.f32.mrb[0].mxu0
        %3428 = vmatprep.mubr.f32.mxu0 0.0
        %3429 = vmatmul.mubr.f32.gmra.mrb[0].mxu0 %v335
        %v3430 = vpop.f32.mrb[0].mxu0
        %v3431 = vadd.f32 0.0, %v3430
        %v3432 = vpop.f32.mrb[0].mxu0
        %3433 = vmatprep.mubr.f32.mxu0 0.0
        %3434 = vmatmul.mubr.f32.gmra.mrb[0].mxu0 %v336
        %v3435 = vpop.f32.mrb[0].mxu0
        %v3436 = vadd.f32 0.0, %v3435
        %v3437 = vpop.f32.mrb[0].mxu0
        %3438 = vmatprep.mubr.f32.mxu0 0.0
        %3439 = vmatmul.mubr.f32.gmra.mrb[0].mxu0 %v337
        %v3440 = vpop.f32.mrb[0].mxu0
        %v3441 = vadd.f32 0.0, %v3440
        %v3442 = vpop.f32.mrb[0].mxu0
        %3443 = vmatprep.mubr.f32.mxu0 0.0
        %3444 = vmatmul.mubr.f32.gmra.mrb[0].mxu0 %v338
        %v3445 = vpop.f32.mrb[0].mxu0
        %v3446 = vadd.f32 0.0, %v3445
        %v3447 = vpop.f32.mrb[0].mxu0
        %3448 = vmatprep.mubr.f32.mxu0 0.0
        %3449 = vmatmul.mubr.f32.gmra.mrb[0].mxu0 %v339
        %v3450 = vpop.f32.mrb[0].mxu0
        %v3451 = vadd.f32 0.0, %v3450
        %v3452 = vpop.f32.mrb[0].mxu0
        %3453 = vmatprep.mubr.f32.mxu0 0.0
        %3454 = vmatmul.mubr.f32.gmra.mrb[0].mxu0 %v340
        %v3455 = vpop.f32.mrb[0].mxu0
        %v3456 = vadd.f32 0.0, %v3455
        %v3457 = vpop.f32.mrb[0].mxu0
        %3458 = vmatprep.mubr.f32.mxu0 0.0
        %3459 = vmatmul.mubr.f32.gmra.mrb[0].mxu0 %v341
        %v3460 = vpop.f32.mrb[0].mxu0
        %v3461 = vadd.f32 0.0, %v3460
        %v3462 = vpop.f32.mrb[0].mxu0
        %3463 = vmatprep.mubr.f32.mxu0 0.0
        %3464 = vmatmul.mubr.f32.gmra.mrb[0].mxu0 %v342
        %v3465 = vpop.f32.mrb[0].mxu0
        %v3466 = vadd.f32 0.0, %v3465
        %v3467 = vpop.f32.mrb[0].mxu0
        %3468 = vmatprep.mubr.f32.mxu0 0.0
        %3469 = vmatmul.mubr.f32.gmra.mrb[0].mxu0 %v343
        %v3470 = vpop.f32.mrb[0].mxu0
        %v3471 = vadd.f32 0.0, %v3470
        %v3472 = vpop.f32.mrb[0].mxu0
        %3473 = vmatprep.mubr.f32.mxu0 0.0
        %3474 = vmatmul.mubr.f32.gmra.mrb[0].mxu0 %v344
        %v3475 = vpop.f32.mrb[0].mxu0
        %v3476 = vadd.f32 0.0, %v3475
        %v3477 = vpop.f32.mrb[0].mxu0
        %3478 = vmatprep.mubr.f32.mxu0 0.0
        %3479 = vmatmul.mubr.f32.gmra.mrb[0].mxu0 %v345
        %v3480 = vpop.f32.mrb[0].mxu0
        %v3481 = vadd.f32 0.0, %v3480
        %v3482 = vpop.f32.mrb[0].mxu0
        %3483 = vmatprep.mubr.f32.mxu0 0.0
        %3484 = vmatmul.mubr.f32.gmra.mrb[0].mxu0 %v346
        %v3485 = vpop.f32.mrb[0].mxu0
        %v3486 = vadd.f32 0.0, %v3485
        %v3487 = vpop.f32.mrb[0].mxu0
        %3488 = vmatprep.mubr.f32.mxu0 0.0
        %3489 = vmatmul.mubr.f32.gmra.mrb[0].mxu0 %v347
        %v3490 = vpop.f32.mrb[0].mxu0
        %v3491 = vadd.f32 0.0, %v3490
        %v3492 = vpop.f32.mrb[0].mxu0
        %3493 = vmatprep.mubr.f32.mxu0 0.0
        %3494 = vmatmul.mubr.f32.gmra.mrb[0].mxu0 %v348
        %v3495 = vpop.f32.mrb[0].mxu0
        %v3496 = vadd.f32 0.0, %v3495
        %v3497 = vpop.f32.mrb[0].mxu0
        %3498 = vmatprep.mubr.f32.mxu0 0.0
        %3499 = vmatmul.mubr.f32.gmra.mrb[0].mxu0 %v349
        %v3500 = vpop.f32.mrb[0].mxu0
        %v3501 = vadd.f32 0.0, %v3500
        %v3502 = vpop.f32.mrb[0].mxu0
        %3503 = vmatprep.mubr.f32.mxu0 0.0
        %3504 = vmatmul.mubr.f32.gmra.mrb[0].mxu0 %v350
        %v3505 = vpop.f32.mrb[0].mxu0
        %v3506 = vadd.f32 0.0, %v3505
        %v3507 = vpop.f32.mrb[0].mxu0
        %3508 = vmatprep.mubr.f32.mxu0 0.0
        %3509 = vmatmul.mubr.f32.gmra.mrb[0].mxu0 %v351
        %v3510 = vpop.f32.mrb[0].mxu0
        %v3511 = vadd.f32 0.0, %v3510
        %v3512 = vpop.f32.mrb[0].mxu0
        %3513 = vmatprep.mubr.f32.mxu0 0.0
        %3514 = vmatmul.mubr.f32.gmra.mrb[0].mxu0 %v352
        %v3515 = vpop.f32.mrb[0].mxu0
        %v3516 = vadd.f32 0.0, %v3515
        %v3517 = vpop.f32.mrb[0].mxu0
        %3518 = vmatprep.mubr.f32.mxu0 0.0
        %3519 = vmatmul.mubr.f32.gmra.mrb[0].mxu0 %v353
        %v3520 = vpop.f32.mrb[0].mxu0
        %v3521 = vadd.f32 0.0, %v3520
        %v3522 = vpop.f32.mrb[0].mxu0
        %3523 = vmatprep.mubr.f32.mxu0 0.0
        %3524 = vmatmul.mubr.f32.gmra.mrb[0].mxu0 %v354
        %v3525 = vpop.f32.mrb[0].mxu0
        %v3526 = vadd.f32 0.0, %v3525
        %v3527 = vpop.f32.mrb[0].mxu0
        %3528 = vmatprep.mubr.f32.mxu0 0.0
        %3529 = vmatmul.mubr.f32.gmra.mrb[0].mxu0 %v355
        %v3530 = vpop.f32.mrb[0].mxu0
        %v3531 = vadd.f32 0.0, %v3530
        %v3532 = vpop.f32.mrb[0].mxu0
        %3533 = vmatprep.mubr.f32.mxu0 0.0
        %3534 = vmatmul.mubr.f32.gmra.mrb[0].mxu0 %v356
        %v3535 = vpop.f32.mrb[0].mxu0
        %v3536 = vadd.f32 0.0, %v3535
        %v3537 = vpop.f32.mrb[0].mxu0
        %3538 = vmatprep.mubr.f32.mxu0 0.0
        %3539 = vmatmul.mubr.f32.gmra.mrb[0].mxu0 %v357
        %v3540 = vpop.f32.mrb[0].mxu0
        %v3541 = vadd.f32 0.0, %v3540
        %v3542 = vpop.f32.mrb[0].mxu0
        %3543 = vmatprep.mubr.f32.mxu0 0.0
        %3544 = vmatmul.mubr.f32.gmra.mrb[0].mxu0 %v358
        %v3545 = vpop.f32.mrb[0].mxu0
        %v3546 = vadd.f32 0.0, %v3545
        %v3547 = vpop.f32.mrb[0].mxu0
        %3548 = vmatprep.mubr.f32.mxu0 0.0
        %3549 = vmatmul.mubr.f32.gmra.mrb[0].mxu0 %v359
        %v3550 = vpop.f32.mrb[0].mxu0
        %v3551 = vadd.f32 0.0, %v3550
        %v3552 = vpop.f32.mrb[0].mxu0
        %3553 = vmatprep.mubr.f32.mxu0 0.0
        %3554 = vmatmul.mubr.f32.gmra.mrb[0].mxu0 %v360
        %v3555 = vpop.f32.mrb[0].mxu0
        %v3556 = vpop.f32.mrb[0].mxu0
        %3557 = vmatprep.mubr.f32.mxu0 0.0
        %3558 = vmatmul.mubr.f32.gmra.mrb[0].mxu0 %v361
        %v3559 = vpop.f32.mrb[0].mxu0
        %v3560 = vpop.f32.mrb[0].mxu0
        %3561 = vdwg.mxu0
        %v3562 = vadd.f32 %v3142, %v3281
        %v3563 = vadd.f32 %v3143, %v3286
        %v3564 = vadd.f32 %v3144, %v3291
        %v3565 = vadd.f32 %v3145, %v3296
        %v3566 = vadd.f32 %v3146, %v3301
        %v3567 = vadd.f32 %v3147, %v3306
        %v3568 = vadd.f32 %v3148, %v3311
        %v3569 = vadd.f32 %v3149, %v3316
        %v3570 = vadd.f32 %v3150, %v3321
        %v3571 = vadd.f32 %v3151, %v3326
        %v3572 = vadd.f32 %v3152, %v3331
        %v3573 = vadd.f32 %v3153, %v3336
        %v3574 = vadd.f32 %v3154, %v3341
        %v3575 = vadd.f32 %v3155, %v3346
        %v3576 = vadd.f32 %v3156, %v3351
        %v3577 = vadd.f32 %v3157, %v3356
        %v3578 = vadd.f32 %v3158, %v3361
        %v3579 = vadd.f32 %v3159, %v3366
        %v3580 = vadd.f32 %v3160, %v3371
        %v3581 = vadd.f32 %v3161, %v3376
        %v3582 = vadd.f32 %v3162, %v3381
        %v3583 = vadd.f32 %v3163, %v3386
        %v3584 = vadd.f32 %v3164, %v3391
        %v3585 = vadd.f32 %v3165, %v3396
        %v3586 = vadd.f32 %v3166, %v3401
        %v3587 = vadd.f32 %v3167, %v3406
        %v3588 = vadd.f32 %v3168, %v3411
        %v3589 = vadd.f32 %v3169, %v3416
        %v3590 = vadd.f32 %v3170, %v3421
        %v3591 = vadd.f32 %v3171, %v3426
        %v3592 = vadd.f32 %v3172, %v3431
        %v3593 = vadd.f32 %v3173, %v3436
        %v3594 = vadd.f32 %v3174, %v3441
        %v3595 = vadd.f32 %v3175, %v3446
        %v3596 = vadd.f32 %v3176, %v3451
        %v3597 = vadd.f32 %v3177, %v3456
        %v3598 = vadd.f32 %v3178, %v3461
        %v3599 = vadd.f32 %v3179, %v3466
        %v3600 = vadd.f32 %v3180, %v3471
        %v3601 = vadd.f32 %v3181, %v3476
        %v3602 = vadd.f32 %v3182, %v3481
        %v3603 = vadd.f32 %v3183, %v3486
        %v3604 = vadd.f32 %v3184, %v3491
        %v3605 = vadd.f32 %v3185, %v3496
        %v3606 = vadd.f32 %v3186, %v3501
        %v3607 = vadd.f32 %v3187, %v3506
        %v3608 = vadd.f32 %v3188, %v3511
        %v3609 = vadd.f32 %v3189, %v3516
        %v3610 = vadd.f32 %v3190, %v3521
        %v3611 = vadd.f32 %v3191, %v3526
        %v3612 = vadd.f32 %v3192, %v3531
        %v3613 = vadd.f32 %v3193, %v3536
        %v3614 = vadd.f32 %v3194, %v3541
        %v3615 = vadd.f32 %v3195, %v3546
        %v3616 = vadd.f32 %v3196, %v3551
        %s3617 = scalar_lea.vmem [#allocation5], 896
        %v3618 = vld [vmem:[%s3617] sm:$0xff]
        %v3619 = vld [vmem:[%s3617 + $0x8] sm:$0xff]
        %v3620 = vld [vmem:[%s3617 + $0x10] sm:$0xff]
        %v3621 = vld [vmem:[%s3617 + $0x18] sm:$0xff]
        %v3622 = vld [vmem:[%s3617 + $0x20] sm:$0xff]
        %v3623 = vld [vmem:[%s3617 + $0x28] sm:$0xff]
        %v3624 = vld [vmem:[%s3617 + $0x30] sm:$0xff]
        %v3625 = vld [vmem:[%s3617 + $0x38] sm:$0xff]
        %v3626 = vld [vmem:[%s3617 + $0x40] sm:$0xff]
        %v3627 = vld [vmem:[%s3617 + $0x48] sm:$0xff]
        %v3628 = vld [vmem:[%s3617 + $0x50] sm:$0xff]
        %v3629 = vld [vmem:[%s3617 + $0x58] sm:$0xff]
        %v3630 = vld [vmem:[%s3617 + $0x60] sm:$0xff]
        %v3631 = vld [vmem:[%s3617 + $0x68] sm:$0xff]
        %v3632 = vld [vmem:[%s3617 + $0x70] sm:$0xff]
        %v3633 = vld [vmem:[%s3617 + $0x78] sm:$0xff]
        %v3637 = vrot.slane %v360, 1
        %v3638 = vsel %vm454, %v2360, %v3637
        %v3639 = vrot.slane %v361, 1
        %v3640 = vsel %vm454, %v3637, %v3639
        %v3641 = vrot.slane %v362, 1
        %v3642 = vsel %vm454, %v3639, %v3641
        %3646 = vmatprep.subr.mxu0 0.0
        %3647 = vmatpush1.msra.mxu0 %v3618
        %3648 = vmatprep.subr.mxu0 0.0
        %3649 = vmatpush1.msra.mxu0 %v3619
        %3650 = vmatprep.subr.mxu0 0.0
        %3651 = vmatpush1.msra.mxu0 %v3620
        %3652 = vmatprep.subr.mxu0 0.0
        %3653 = vmatpush1.msra.mxu0 %v3621
        %3654 = vmatprep.subr.mxu0 0.0
        %3655 = vmatpush1.msra.mxu0 %v3622
        %3656 = vmatprep.subr.mxu0 0.0
        %3657 = vmatpush1.msra.mxu0 %v3623
        %3658 = vmatprep.subr.mxu0 0.0
        %3659 = vmatpush1.msra.mxu0 %v3624
        %3660 = vmatprep.subr.mxu0 0.0
        %3661 = vmatpush1.msra.mxu0 %v3625
        %3662 = vmatprep.subr.mxu0 0.0
        %3663 = vmatpush1.msra.mxu0 %v3626
        %3664 = vmatprep.subr.mxu0 0.0
        %3665 = vmatpush1.msra.mxu0 %v3627
        %3666 = vmatprep.subr.mxu0 0.0
        %3667 = vmatpush1.msra.mxu0 %v3628
        %3668 = vmatprep.subr.mxu0 0.0
        %3669 = vmatpush1.msra.mxu0 %v3629
        %3670 = vmatprep.subr.mxu0 0.0
        %3671 = vmatpush1.msra.mxu0 %v3630
        %3672 = vmatprep.subr.mxu0 0.0
        %3673 = vmatpush1.msra.mxu0 %v3631
        %3674 = vmatprep.subr.mxu0 0.0
        %3675 = vmatpush1.msra.mxu0 %v3632
        %3676 = vmatprep.subr.mxu0 0.0
        %3677 = vmatpush1.msra.mxu0 %v3633
        %3678 = vmatprep.subr.mxu0 0.0
        %3679 = vmatpush1.msra.mxu0 0.0
        %3680 = vmatprep.subr.mxu0 0.0
        %3681 = vmatpush1.msra.mxu0 0.0
        %3682 = vmatprep.subr.mxu0 0.0
        %3683 = vmatpush1.msra.mxu0 0.0
        %3684 = vmatprep.subr.mxu0 0.0
        %3685 = vmatpush1.msra.mxu0 0.0
        %3686 = vmatprep.subr.mxu0 0.0
        %3687 = vmatpush1.msra.mxu0 0.0
        %3688 = vmatprep.subr.mxu0 0.0
        %3689 = vmatpush1.msra.mxu0 0.0
        %3690 = vmatprep.subr.mxu0 0.0
        %3691 = vmatpush1.msra.mxu0 0.0
        %3692 = vmatprep.subr.mxu0 0.0
        %3693 = vmatpush1.msra.mxu0 0.0
        %3694 = vmatprep.subr.mxu0 0.0
        %3695 = vmatpush1.msra.mxu0 0.0
        %3696 = vmatprep.subr.mxu0 0.0
        %3697 = vmatpush1.msra.mxu0 0.0
        %3698 = vmatprep.subr.mxu0 0.0
        %3699 = vmatpush1.msra.mxu0 0.0
        %3700 = vmatprep.subr.mxu0 0.0
        %3701 = vmatpush1.msra.mxu0 0.0
        %3702 = vmatprep.subr.mxu0 0.0
        %3703 = vmatpush1.msra.mxu0 0.0
        %3704 = vmatprep.subr.mxu0 0.0
        %3705 = vmatpush1.msra.mxu0 0.0
        %3706 = vmatprep.subr.mxu0 0.0
        %3707 = vmatpush1.msra.mxu0 0.0
        %3708 = vmatprep.subr.mxu0 0.0
        %3709 = vmatpush1.msra.mxu0 0.0
        %3710 = vmatprep.mubr.f32.mxu0 0.0
        %3711 = vmatmul.mubr.f32.gmra.mrb[0].mxu0 %v469
        %v3712 = vpop.f32.mrb[0].mxu0
        %v3713 = vadd.f32 0.0, %v3712
        %v3714 = vpop.f32.mrb[0].mxu0
        %3715 = vmatprep.mubr.f32.mxu0 0.0
        %3716 = vmatmul.mubr.f32.gmra.mrb[0].mxu0 %v471
        %v3717 = vpop.f32.mrb[0].mxu0
        %v3718 = vadd.f32 0.0, %v3717
        %v3719 = vpop.f32.mrb[0].mxu0
        %3720 = vmatprep.mubr.f32.mxu0 0.0
        %3721 = vmatmul.mubr.f32.gmra.mrb[0].mxu0 %v473
        %v3722 = vpop.f32.mrb[0].mxu0
        %v3723 = vadd.f32 0.0, %v3722
        %v3724 = vpop.f32.mrb[0].mxu0
        %3725 = vmatprep.mubr.f32.mxu0 0.0
        %3726 = vmatmul.mubr.f32.gmra.mrb[0].mxu0 %v475
        %v3727 = vpop.f32.mrb[0].mxu0
        %v3728 = vadd.f32 0.0, %v3727
        %v3729 = vpop.f32.mrb[0].mxu0
        %3730 = vmatprep.mubr.f32.mxu0 0.0
        %3731 = vmatmul.mubr.f32.gmra.mrb[0].mxu0 %v477
        %v3732 = vpop.f32.mrb[0].mxu0
        %v3733 = vadd.f32 0.0, %v3732
        %v3734 = vpop.f32.mrb[0].mxu0
        %3735 = vmatprep.mubr.f32.mxu0 0.0
        %3736 = vmatmul.mubr.f32.gmra.mrb[0].mxu0 %v479
        %v3737 = vpop.f32.mrb[0].mxu0
        %v3738 = vadd.f32 0.0, %v3737
        %v3739 = vpop.f32.mrb[0].mxu0
        %3740 = vmatprep.mubr.f32.mxu0 0.0
        %3741 = vmatmul.mubr.f32.gmra.mrb[0].mxu0 %v481
        %v3742 = vpop.f32.mrb[0].mxu0
        %v3743 = vadd.f32 0.0, %v3742
        %v3744 = vpop.f32.mrb[0].mxu0
        %3745 = vmatprep.mubr.f32.mxu0 0.0
        %3746 = vmatmul.mubr.f32.gmra.mrb[0].mxu0 %v483
        %v3747 = vpop.f32.mrb[0].mxu0
        %v3748 = vadd.f32 0.0, %v3747
        %v3749 = vpop.f32.mrb[0].mxu0
        %3750 = vmatprep.mubr.f32.mxu0 0.0
        %3751 = vmatmul.mubr.f32.gmra.mrb[0].mxu0 %v485
        %v3752 = vpop.f32.mrb[0].mxu0
        %v3753 = vadd.f32 0.0, %v3752
        %v3754 = vpop.f32.mrb[0].mxu0
        %3755 = vmatprep.mubr.f32.mxu0 0.0
        %3756 = vmatmul.mubr.f32.gmra.mrb[0].mxu0 %v487
        %v3757 = vpop.f32.mrb[0].mxu0
        %v3758 = vadd.f32 0.0, %v3757
        %v3759 = vpop.f32.mrb[0].mxu0
        %3760 = vmatprep.mubr.f32.mxu0 0.0
        %3761 = vmatmul.mubr.f32.gmra.mrb[0].mxu0 %v489
        %v3762 = vpop.f32.mrb[0].mxu0
        %v3763 = vadd.f32 0.0, %v3762
        %v3764 = vpop.f32.mrb[0].mxu0
        %3765 = vmatprep.mubr.f32.mxu0 0.0
        %3766 = vmatmul.mubr.f32.gmra.mrb[0].mxu0 %v491
        %v3767 = vpop.f32.mrb[0].mxu0
        %v3768 = vadd.f32 0.0, %v3767
        %v3769 = vpop.f32.mrb[0].mxu0
        %3770 = vmatprep.mubr.f32.mxu0 0.0
        %3771 = vmatmul.mubr.f32.gmra.mrb[0].mxu0 %v493
        %v3772 = vpop.f32.mrb[0].mxu0
        %v3773 = vadd.f32 0.0, %v3772
        %v3774 = vpop.f32.mrb[0].mxu0
        %3775 = vmatprep.mubr.f32.mxu0 0.0
        %3776 = vmatmul.mubr.f32.gmra.mrb[0].mxu0 %v495
        %v3777 = vpop.f32.mrb[0].mxu0
        %v3778 = vadd.f32 0.0, %v3777
        %v3779 = vpop.f32.mrb[0].mxu0
        %3780 = vmatprep.mubr.f32.mxu0 0.0
        %3781 = vmatmul.mubr.f32.gmra.mrb[0].mxu0 %v497
        %v3782 = vpop.f32.mrb[0].mxu0
        %v3783 = vadd.f32 0.0, %v3782
        %v3784 = vpop.f32.mrb[0].mxu0
        %3785 = vmatprep.mubr.f32.mxu0 0.0
        %3786 = vmatmul.mubr.f32.gmra.mrb[0].mxu0 %v499
        %v3787 = vpop.f32.mrb[0].mxu0
        %v3788 = vadd.f32 0.0, %v3787
        %v3789 = vpop.f32.mrb[0].mxu0
        %3790 = vmatprep.mubr.f32.mxu0 0.0
        %3791 = vmatmul.mubr.f32.gmra.mrb[0].mxu0 %v501
        %v3792 = vpop.f32.mrb[0].mxu0
        %v3793 = vadd.f32 0.0, %v3792
        %v3794 = vpop.f32.mrb[0].mxu0
        %3795 = vmatprep.mubr.f32.mxu0 0.0
        %3796 = vmatmul.mubr.f32.gmra.mrb[0].mxu0 %v503
        %v3797 = vpop.f32.mrb[0].mxu0
        %v3798 = vadd.f32 0.0, %v3797
        %v3799 = vpop.f32.mrb[0].mxu0
        %3800 = vmatprep.mubr.f32.mxu0 0.0
        %3801 = vmatmul.mubr.f32.gmra.mrb[0].mxu0 %v505
        %v3802 = vpop.f32.mrb[0].mxu0
        %v3803 = vadd.f32 0.0, %v3802
        %v3804 = vpop.f32.mrb[0].mxu0
        %3805 = vmatprep.mubr.f32.mxu0 0.0
        %3806 = vmatmul.mubr.f32.gmra.mrb[0].mxu0 %v507
        %v3807 = vpop.f32.mrb[0].mxu0
        %v3808 = vadd.f32 0.0, %v3807
        %v3809 = vpop.f32.mrb[0].mxu0
        %3810 = vmatprep.mubr.f32.mxu0 0.0
        %3811 = vmatmul.mubr.f32.gmra.mrb[0].mxu0 %v509
        %v3812 = vpop.f32.mrb[0].mxu0
        %v3813 = vadd.f32 0.0, %v3812
        %v3814 = vpop.f32.mrb[0].mxu0
        %3815 = vmatprep.mubr.f32.mxu0 0.0
        %3816 = vmatmul.mubr.f32.gmra.mrb[0].mxu0 %v511
        %v3817 = vpop.f32.mrb[0].mxu0
        %v3818 = vadd.f32 0.0, %v3817
        %v3819 = vpop.f32.mrb[0].mxu0
        %3820 = vmatprep.mubr.f32.mxu0 0.0
        %3821 = vmatmul.mubr.f32.gmra.mrb[0].mxu0 %v513
        %v3822 = vpop.f32.mrb[0].mxu0
        %v3823 = vadd.f32 0.0, %v3822
        %v3824 = vpop.f32.mrb[0].mxu0
        %3825 = vmatprep.mubr.f32.mxu0 0.0
        %3826 = vmatmul.mubr.f32.gmra.mrb[0].mxu0 %v515
        %v3827 = vpop.f32.mrb[0].mxu0
        %v3828 = vadd.f32 0.0, %v3827
        %v3829 = vpop.f32.mrb[0].mxu0
        %3830 = vmatprep.mubr.f32.mxu0 0.0
        %3831 = vmatmul.mubr.f32.gmra.mrb[0].mxu0 %v517
        %v3832 = vpop.f32.mrb[0].mxu0
        %v3833 = vadd.f32 0.0, %v3832
        %v3834 = vpop.f32.mrb[0].mxu0
        %3835 = vmatprep.mubr.f32.mxu0 0.0
        %3836 = vmatmul.mubr.f32.gmra.mrb[0].mxu0 %v519
        %v3837 = vpop.f32.mrb[0].mxu0
        %v3838 = vadd.f32 0.0, %v3837
        %v3839 = vpop.f32.mrb[0].mxu0
        %3840 = vmatprep.mubr.f32.mxu0 0.0
        %3841 = vmatmul.mubr.f32.gmra.mrb[0].mxu0 %v521
        %v3842 = vpop.f32.mrb[0].mxu0
        %v3843 = vadd.f32 0.0, %v3842
        %v3844 = vpop.f32.mrb[0].mxu0
        %3845 = vmatprep.mubr.f32.mxu0 0.0
        %3846 = vmatmul.mubr.f32.gmra.mrb[0].mxu0 %v523
        %v3847 = vpop.f32.mrb[0].mxu0
        %v3848 = vadd.f32 0.0, %v3847
        %v3849 = vpop.f32.mrb[0].mxu0
        %3850 = vmatprep.mubr.f32.mxu0 0.0
        %3851 = vmatmul.mubr.f32.gmra.mrb[0].mxu0 %v525
        %v3852 = vpop.f32.mrb[0].mxu0
        %v3853 = vadd.f32 0.0, %v3852
        %v3854 = vpop.f32.mrb[0].mxu0
        %3855 = vmatprep.mubr.f32.mxu0 0.0
        %3856 = vmatmul.mubr.f32.gmra.mrb[0].mxu0 %v527
        %v3857 = vpop.f32.mrb[0].mxu0
        %v3858 = vadd.f32 0.0, %v3857
        %v3859 = vpop.f32.mrb[0].mxu0
        %3860 = vmatprep.mubr.f32.mxu0 0.0
        %3861 = vmatmul.mubr.f32.gmra.mrb[0].mxu0 %v529
        %v3862 = vpop.f32.mrb[0].mxu0
        %v3863 = vadd.f32 0.0, %v3862
        %v3864 = vpop.f32.mrb[0].mxu0
        %3865 = vmatprep.mubr.f32.mxu0 0.0
        %3866 = vmatmul.mubr.f32.gmra.mrb[0].mxu0 %v531
        %v3867 = vpop.f32.mrb[0].mxu0
        %v3868 = vadd.f32 0.0, %v3867
        %v3869 = vpop.f32.mrb[0].mxu0
        %3870 = vmatprep.mubr.f32.mxu0 0.0
        %3871 = vmatmul.mubr.f32.gmra.mrb[0].mxu0 %v533
        %v3872 = vpop.f32.mrb[0].mxu0
        %v3873 = vadd.f32 0.0, %v3872
        %v3874 = vpop.f32.mrb[0].mxu0
        %3875 = vmatprep.mubr.f32.mxu0 0.0
        %3876 = vmatmul.mubr.f32.gmra.mrb[0].mxu0 %v535
        %v3877 = vpop.f32.mrb[0].mxu0
        %v3878 = vadd.f32 0.0, %v3877
        %v3879 = vpop.f32.mrb[0].mxu0
        %3880 = vmatprep.mubr.f32.mxu0 0.0
        %3881 = vmatmul.mubr.f32.gmra.mrb[0].mxu0 %v537
        %v3882 = vpop.f32.mrb[0].mxu0
        %v3883 = vadd.f32 0.0, %v3882
        %v3884 = vpop.f32.mrb[0].mxu0
        %3885 = vmatprep.mubr.f32.mxu0 0.0
        %3886 = vmatmul.mubr.f32.gmra.mrb[0].mxu0 %v539
        %v3887 = vpop.f32.mrb[0].mxu0
        %v3888 = vadd.f32 0.0, %v3887
        %v3889 = vpop.f32.mrb[0].mxu0
        %3890 = vmatprep.mubr.f32.mxu0 0.0
        %3891 = vmatmul.mubr.f32.gmra.mrb[0].mxu0 %v541
        %v3892 = vpop.f32.mrb[0].mxu0
        %v3893 = vadd.f32 0.0, %v3892
        %v3894 = vpop.f32.mrb[0].mxu0
        %3895 = vmatprep.mubr.f32.mxu0 0.0
        %3896 = vmatmul.mubr.f32.gmra.mrb[0].mxu0 %v543
        %v3897 = vpop.f32.mrb[0].mxu0
        %v3898 = vadd.f32 0.0, %v3897
        %v3899 = vpop.f32.mrb[0].mxu0
        %3900 = vmatprep.mubr.f32.mxu0 0.0
        %3901 = vmatmul.mubr.f32.gmra.mrb[0].mxu0 %v545
        %v3902 = vpop.f32.mrb[0].mxu0
        %v3903 = vadd.f32 0.0, %v3902
        %v3904 = vpop.f32.mrb[0].mxu0
        %3905 = vmatprep.mubr.f32.mxu0 0.0
        %3906 = vmatmul.mubr.f32.gmra.mrb[0].mxu0 %v547
        %v3907 = vpop.f32.mrb[0].mxu0
        %v3908 = vadd.f32 0.0, %v3907
        %v3909 = vpop.f32.mrb[0].mxu0
        %3910 = vmatprep.mubr.f32.mxu0 0.0
        %3911 = vmatmul.mubr.f32.gmra.mrb[0].mxu0 %v549
        %v3912 = vpop.f32.mrb[0].mxu0
        %v3913 = vadd.f32 0.0, %v3912
        %v3914 = vpop.f32.mrb[0].mxu0
        %3915 = vmatprep.mubr.f32.mxu0 0.0
        %3916 = vmatmul.mubr.f32.gmra.mrb[0].mxu0 %v551
        %v3917 = vpop.f32.mrb[0].mxu0
        %v3918 = vadd.f32 0.0, %v3917
        %v3919 = vpop.f32.mrb[0].mxu0
        %3920 = vmatprep.mubr.f32.mxu0 0.0
        %3921 = vmatmul.mubr.f32.gmra.mrb[0].mxu0 %v553
        %v3922 = vpop.f32.mrb[0].mxu0
        %v3923 = vadd.f32 0.0, %v3922
        %v3924 = vpop.f32.mrb[0].mxu0
        %3925 = vmatprep.mubr.f32.mxu0 0.0
        %3926 = vmatmul.mubr.f32.gmra.mrb[0].mxu0 %v555
        %v3927 = vpop.f32.mrb[0].mxu0
        %v3928 = vadd.f32 0.0, %v3927
        %v3929 = vpop.f32.mrb[0].mxu0
        %3930 = vmatprep.mubr.f32.mxu0 0.0
        %3931 = vmatmul.mubr.f32.gmra.mrb[0].mxu0 %v557
        %v3932 = vpop.f32.mrb[0].mxu0
        %v3933 = vadd.f32 0.0, %v3932
        %v3934 = vpop.f32.mrb[0].mxu0
        %3935 = vmatprep.mubr.f32.mxu0 0.0
        %3936 = vmatmul.mubr.f32.gmra.mrb[0].mxu0 %v559
        %v3937 = vpop.f32.mrb[0].mxu0
        %v3938 = vadd.f32 0.0, %v3937
        %v3939 = vpop.f32.mrb[0].mxu0
        %3940 = vmatprep.mubr.f32.mxu0 0.0
        %3941 = vmatmul.mubr.f32.gmra.mrb[0].mxu0 %v561
        %v3942 = vpop.f32.mrb[0].mxu0
        %v3943 = vadd.f32 0.0, %v3942
        %v3944 = vpop.f32.mrb[0].mxu0
        %3945 = vmatprep.mubr.f32.mxu0 0.0
        %3946 = vmatmul.mubr.f32.gmra.mrb[0].mxu0 %v563
        %v3947 = vpop.f32.mrb[0].mxu0
        %v3948 = vadd.f32 0.0, %v3947
        %v3949 = vpop.f32.mrb[0].mxu0
        %3950 = vmatprep.mubr.f32.mxu0 0.0
        %3951 = vmatmul.mubr.f32.gmra.mrb[0].mxu0 %v565
        %v3952 = vpop.f32.mrb[0].mxu0
        %v3953 = vadd.f32 0.0, %v3952
        %v3954 = vpop.f32.mrb[0].mxu0
        %3955 = vmatprep.mubr.f32.mxu0 0.0
        %3956 = vmatmul.mubr.f32.gmra.mrb[0].mxu0 %v567
        %v3957 = vpop.f32.mrb[0].mxu0
        %v3958 = vadd.f32 0.0, %v3957
        %v3959 = vpop.f32.mrb[0].mxu0
        %3960 = vmatprep.mubr.f32.mxu0 0.0
        %3961 = vmatmul.mubr.f32.gmra.mrb[0].mxu0 %v569
        %v3962 = vpop.f32.mrb[0].mxu0
        %v3963 = vadd.f32 0.0, %v3962
        %v3964 = vpop.f32.mrb[0].mxu0
        %3965 = vmatprep.mubr.f32.mxu0 0.0
        %3966 = vmatmul.mubr.f32.gmra.mrb[0].mxu0 %v2357
        %v3967 = vpop.f32.mrb[0].mxu0
        %v3968 = vadd.f32 0.0, %v3967
        %v3969 = vpop.f32.mrb[0].mxu0
        %3970 = vmatprep.mubr.f32.mxu0 0.0
        %3971 = vmatmul.mubr.f32.gmra.mrb[0].mxu0 %v2359
        %v3972 = vpop.f32.mrb[0].mxu0
        %v3973 = vadd.f32 0.0, %v3972
        %v3974 = vpop.f32.mrb[0].mxu0
        %3975 = vmatprep.mubr.f32.mxu0 0.0
        %3976 = vmatmul.mubr.f32.gmra.mrb[0].mxu0 %v2361
        %v3977 = vpop.f32.mrb[0].mxu0
        %v3978 = vadd.f32 0.0, %v3977
        %v3979 = vpop.f32.mrb[0].mxu0
        %3980 = vmatprep.mubr.f32.mxu0 0.0
        %3981 = vmatmul.mubr.f32.gmra.mrb[0].mxu0 %v3638
        %v3982 = vpop.f32.mrb[0].mxu0
        %v3983 = vadd.f32 0.0, %v3982
        %v3984 = vpop.f32.mrb[0].mxu0
        %3985 = vmatprep.mubr.f32.mxu0 0.0
        %3986 = vmatmul.mubr.f32.gmra.mrb[0].mxu0 %v3640
        %v3987 = vpop.f32.mrb[0].mxu0
        %v3988 = vpop.f32.mrb[0].mxu0
        %3989 = vmatprep.mubr.f32.mxu0 0.0
        %3990 = vmatmul.mubr.f32.gmra.mrb[0].mxu0 %v3642
        %v3991 = vpop.f32.mrb[0].mxu0
        %v3992 = vpop.f32.mrb[0].mxu0
        %3993 = vdwg.mxu0
        %v3994 = vadd.f32 %v3562, %v3713
        %v3995 = vadd.f32 %v3563, %v3718
        %v3996 = vadd.f32 %v3564, %v3723
        %v3997 = vadd.f32 %v3565, %v3728
        %v3998 = vadd.f32 %v3566, %v3733
        %v3999 = vadd.f32 %v3567, %v3738
        %v4000 = vadd.f32 %v3568, %v3743
        %v4001 = vadd.f32 %v3569, %v3748
        %v4002 = vadd.f32 %v3570, %v3753
        %v4003 = vadd.f32 %v3571, %v3758
        %v4004 = vadd.f32 %v3572, %v3763
        %v4005 = vadd.f32 %v3573, %v3768
        %v4006 = vadd.f32 %v3574, %v3773
        %v4007 = vadd.f32 %v3575, %v3778
        %v4008 = vadd.f32 %v3576, %v3783
        %v4009 = vadd.f32 %v3577, %v3788
        %v4010 = vadd.f32 %v3578, %v3793
        %v4011 = vadd.f32 %v3579, %v3798
        %v4012 = vadd.f32 %v3580, %v3803
        %v4013 = vadd.f32 %v3581, %v3808
        %v4014 = vadd.f32 %v3582, %v3813
        %v4015 = vadd.f32 %v3583, %v3818
        %v4016 = vadd.f32 %v3584, %v3823
        %v4017 = vadd.f32 %v3585, %v3828
        %v4018 = vadd.f32 %v3586, %v3833
        %v4019 = vadd.f32 %v3587, %v3838
        %v4020 = vadd.f32 %v3588, %v3843
        %v4021 = vadd.f32 %v3589, %v3848
        %v4022 = vadd.f32 %v3590, %v3853
        %v4023 = vadd.f32 %v3591, %v3858
        %v4024 = vadd.f32 %v3592, %v3863
        %v4025 = vadd.f32 %v3593, %v3868
        %v4026 = vadd.f32 %v3594, %v3873
        %v4027 = vadd.f32 %v3595, %v3878
        %v4028 = vadd.f32 %v3596, %v3883
        %v4029 = vadd.f32 %v3597, %v3888
        %v4030 = vadd.f32 %v3598, %v3893
        %v4031 = vadd.f32 %v3599, %v3898
        %v4032 = vadd.f32 %v3600, %v3903
        %v4033 = vadd.f32 %v3601, %v3908
        %v4034 = vadd.f32 %v3602, %v3913
        %v4035 = vadd.f32 %v3603, %v3918
        %v4036 = vadd.f32 %v3604, %v3923
        %v4037 = vadd.f32 %v3605, %v3928
        %v4038 = vadd.f32 %v3606, %v3933
        %v4039 = vadd.f32 %v3607, %v3938
        %v4040 = vadd.f32 %v3608, %v3943
        %v4041 = vadd.f32 %v3609, %v3948
        %v4042 = vadd.f32 %v3610, %v3953
        %v4043 = vadd.f32 %v3611, %v3958
        %v4044 = vadd.f32 %v3612, %v3963
        %v4045 = vadd.f32 %v3613, %v3968
        %v4046 = vadd.f32 %v3614, %v3973
        %v4047 = vadd.f32 %v3615, %v3978
        %v4048 = vadd.f32 %v3616, %v3983
        %s4049 = scalar_lea.vmem [#allocation5], 1024
        %v4050 = vld [vmem:[%s4049] sm:$0xff]
        %v4051 = vld [vmem:[%s4049 + $0x8] sm:$0xff]
        %v4052 = vld [vmem:[%s4049 + $0x10] sm:$0xff]
        %v4053 = vld [vmem:[%s4049 + $0x18] sm:$0xff]
        %v4054 = vld [vmem:[%s4049 + $0x20] sm:$0xff]
        %v4055 = vld [vmem:[%s4049 + $0x28] sm:$0xff]
        %v4056 = vld [vmem:[%s4049 + $0x30] sm:$0xff]
        %v4057 = vld [vmem:[%s4049 + $0x38] sm:$0xff]
        %v4058 = vld [vmem:[%s4049 + $0x40] sm:$0xff]
        %v4059 = vld [vmem:[%s4049 + $0x48] sm:$0xff]
        %v4060 = vld [vmem:[%s4049 + $0x50] sm:$0xff]
        %v4061 = vld [vmem:[%s4049 + $0x58] sm:$0xff]
        %v4062 = vld [vmem:[%s4049 + $0x60] sm:$0xff]
        %v4063 = vld [vmem:[%s4049 + $0x68] sm:$0xff]
        %v4064 = vld [vmem:[%s4049 + $0x70] sm:$0xff]
        %v4065 = vld [vmem:[%s4049 + $0x78] sm:$0xff]
        %v4066 = vrot.slane %v360, 2
        %v4067 = vsel %vm1340, %v2789, %v4066
        %v4068 = vrot.slane %v361, 2
        %v4069 = vsel %vm1340, %v4066, %v4068
        %v4070 = vrot.slane %v362, 2
        %v4071 = vsel %vm1340, %v4068, %v4070
        %4075 = vmatprep.subr.mxu0 0.0
        %4076 = vmatpush1.msra.mxu0 %v4050
        %4077 = vmatprep.subr.mxu0 0.0
        %4078 = vmatpush1.msra.mxu0 %v4051
        %4079 = vmatprep.subr.mxu0 0.0
        %4080 = vmatpush1.msra.mxu0 %v4052
        %4081 = vmatprep.subr.mxu0 0.0
        %4082 = vmatpush1.msra.mxu0 %v4053
        %4083 = vmatprep.subr.mxu0 0.0
        %4084 = vmatpush1.msra.mxu0 %v4054
        %4085 = vmatprep.subr.mxu0 0.0
        %4086 = vmatpush1.msra.mxu0 %v4055
        %4087 = vmatprep.subr.mxu0 0.0
        %4088 = vmatpush1.msra.mxu0 %v4056
        %4089 = vmatprep.subr.mxu0 0.0
        %4090 = vmatpush1.msra.mxu0 %v4057
        %4091 = vmatprep.subr.mxu0 0.0
        %4092 = vmatpush1.msra.mxu0 %v4058
        %4093 = vmatprep.subr.mxu0 0.0
        %4094 = vmatpush1.msra.mxu0 %v4059
        %4095 = vmatprep.subr.mxu0 0.0
        %4096 = vmatpush1.msra.mxu0 %v4060
        %4097 = vmatprep.subr.mxu0 0.0
        %4098 = vmatpush1.msra.mxu0 %v4061
        %4099 = vmatprep.subr.mxu0 0.0
        %4100 = vmatpush1.msra.mxu0 %v4062
        %4101 = vmatprep.subr.mxu0 0.0
        %4102 = vmatpush1.msra.mxu0 %v4063
        %4103 = vmatprep.subr.mxu0 0.0
        %4104 = vmatpush1.msra.mxu0 %v4064
        %4105 = vmatprep.subr.mxu0 0.0
        %4106 = vmatpush1.msra.mxu0 %v4065
        %4107 = vmatprep.subr.mxu0 0.0
        %4108 = vmatpush1.msra.mxu0 0.0
        %4109 = vmatprep.subr.mxu0 0.0
        %4110 = vmatpush1.msra.mxu0 0.0
        %4111 = vmatprep.subr.mxu0 0.0
        %4112 = vmatpush1.msra.mxu0 0.0
        %4113 = vmatprep.subr.mxu0 0.0
        %4114 = vmatpush1.msra.mxu0 0.0
        %4115 = vmatprep.subr.mxu0 0.0
        %4116 = vmatpush1.msra.mxu0 0.0
        %4117 = vmatprep.subr.mxu0 0.0
        %4118 = vmatpush1.msra.mxu0 0.0
        %4119 = vmatprep.subr.mxu0 0.0
        %4120 = vmatpush1.msra.mxu0 0.0
        %4121 = vmatprep.subr.mxu0 0.0
        %4122 = vmatpush1.msra.mxu0 0.0
        %4123 = vmatprep.subr.mxu0 0.0
        %4124 = vmatpush1.msra.mxu0 0.0
        %4125 = vmatprep.subr.mxu0 0.0
        %4126 = vmatpush1.msra.mxu0 0.0
        %4127 = vmatprep.subr.mxu0 0.0
        %4128 = vmatpush1.msra.mxu0 0.0
        %4129 = vmatprep.subr.mxu0 0.0
        %4130 = vmatpush1.msra.mxu0 0.0
        %4131 = vmatprep.subr.mxu0 0.0
        %4132 = vmatpush1.msra.mxu0 0.0
        %4133 = vmatprep.subr.mxu0 0.0
        %4134 = vmatpush1.msra.mxu0 0.0
        %4135 = vmatprep.subr.mxu0 0.0
        %4136 = vmatpush1.msra.mxu0 0.0
        %4137 = vmatprep.subr.mxu0 0.0
        %4138 = vmatpush1.msra.mxu0 0.0
        %4139 = vmatprep.mubr.f32.mxu0 0.0
        %4140 = vmatmul.mubr.f32.gmra.mrb[0].mxu0 %v1355
        %v4141 = vpop.f32.mrb[0].mxu0
        %v4142 = vadd.f32 0.0, %v4141
        %v4143 = vpop.f32.mrb[0].mxu0
        %4144 = vmatprep.mubr.f32.mxu0 0.0
        %4145 = vmatmul.mubr.f32.gmra.mrb[0].mxu0 %v1357
        %v4146 = vpop.f32.mrb[0].mxu0
        %v4147 = vadd.f32 0.0, %v4146
        %v4148 = vpop.f32.mrb[0].mxu0
        %4149 = vmatprep.mubr.f32.mxu0 0.0
        %4150 = vmatmul.mubr.f32.gmra.mrb[0].mxu0 %v1359
        %v4151 = vpop.f32.mrb[0].mxu0
        %v4152 = vadd.f32 0.0, %v4151
        %v4153 = vpop.f32.mrb[0].mxu0
        %4154 = vmatprep.mubr.f32.mxu0 0.0
        %4155 = vmatmul.mubr.f32.gmra.mrb[0].mxu0 %v1361
        %v4156 = vpop.f32.mrb[0].mxu0
        %v4157 = vadd.f32 0.0, %v4156
        %v4158 = vpop.f32.mrb[0].mxu0
        %4159 = vmatprep.mubr.f32.mxu0 0.0
        %4160 = vmatmul.mubr.f32.gmra.mrb[0].mxu0 %v1363
        %v4161 = vpop.f32.mrb[0].mxu0
        %v4162 = vadd.f32 0.0, %v4161
        %v4163 = vpop.f32.mrb[0].mxu0
        %4164 = vmatprep.mubr.f32.mxu0 0.0
        %4165 = vmatmul.mubr.f32.gmra.mrb[0].mxu0 %v1365
        %v4166 = vpop.f32.mrb[0].mxu0
        %v4167 = vadd.f32 0.0, %v4166
        %v4168 = vpop.f32.mrb[0].mxu0
        %4169 = vmatprep.mubr.f32.mxu0 0.0
        %4170 = vmatmul.mubr.f32.gmra.mrb[0].mxu0 %v1367
        %v4171 = vpop.f32.mrb[0].mxu0
        %v4172 = vadd.f32 0.0, %v4171
        %v4173 = vpop.f32.mrb[0].mxu0
        %4174 = vmatprep.mubr.f32.mxu0 0.0
        %4175 = vmatmul.mubr.f32.gmra.mrb[0].mxu0 %v1369
        %v4176 = vpop.f32.mrb[0].mxu0
        %v4177 = vadd.f32 0.0, %v4176
        %v4178 = vpop.f32.mrb[0].mxu0
        %4179 = vmatprep.mubr.f32.mxu0 0.0
        %4180 = vmatmul.mubr.f32.gmra.mrb[0].mxu0 %v1371
        %v4181 = vpop.f32.mrb[0].mxu0
        %v4182 = vadd.f32 0.0, %v4181
        %v4183 = vpop.f32.mrb[0].mxu0
        %4184 = vmatprep.mubr.f32.mxu0 0.0
        %4185 = vmatmul.mubr.f32.gmra.mrb[0].mxu0 %v1373
        %v4186 = vpop.f32.mrb[0].mxu0
        %v4187 = vadd.f32 0.0, %v4186
        %v4188 = vpop.f32.mrb[0].mxu0
        %4189 = vmatprep.mubr.f32.mxu0 0.0
        %4190 = vmatmul.mubr.f32.gmra.mrb[0].mxu0 %v1375
        %v4191 = vpop.f32.mrb[0].mxu0
        %v4192 = vadd.f32 0.0, %v4191
        %v4193 = vpop.f32.mrb[0].mxu0
        %4194 = vmatprep.mubr.f32.mxu0 0.0
        %4195 = vmatmul.mubr.f32.gmra.mrb[0].mxu0 %v1377
        %v4196 = vpop.f32.mrb[0].mxu0
        %v4197 = vadd.f32 0.0, %v4196
        %v4198 = vpop.f32.mrb[0].mxu0
        %4199 = vmatprep.mubr.f32.mxu0 0.0
        %4200 = vmatmul.mubr.f32.gmra.mrb[0].mxu0 %v1379
        %v4201 = vpop.f32.mrb[0].mxu0
        %v4202 = vadd.f32 0.0, %v4201
        %v4203 = vpop.f32.mrb[0].mxu0
        %4204 = vmatprep.mubr.f32.mxu0 0.0
        %4205 = vmatmul.mubr.f32.gmra.mrb[0].mxu0 %v1381
        %v4206 = vpop.f32.mrb[0].mxu0
        %v4207 = vadd.f32 0.0, %v4206
        %v4208 = vpop.f32.mrb[0].mxu0
        %4209 = vmatprep.mubr.f32.mxu0 0.0
        %4210 = vmatmul.mubr.f32.gmra.mrb[0].mxu0 %v1383
        %v4211 = vpop.f32.mrb[0].mxu0
        %v4212 = vadd.f32 0.0, %v4211
        %v4213 = vpop.f32.mrb[0].mxu0
        %4214 = vmatprep.mubr.f32.mxu0 0.0
        %4215 = vmatmul.mubr.f32.gmra.mrb[0].mxu0 %v1385
        %v4216 = vpop.f32.mrb[0].mxu0
        %v4217 = vadd.f32 0.0, %v4216
        %v4218 = vpop.f32.mrb[0].mxu0
        %4219 = vmatprep.mubr.f32.mxu0 0.0
        %4220 = vmatmul.mubr.f32.gmra.mrb[0].mxu0 %v1387
        %v4221 = vpop.f32.mrb[0].mxu0
        %v4222 = vadd.f32 0.0, %v4221
        %v4223 = vpop.f32.mrb[0].mxu0
        %4224 = vmatprep.mubr.f32.mxu0 0.0
        %4225 = vmatmul.mubr.f32.gmra.mrb[0].mxu0 %v1389
        %v4226 = vpop.f32.mrb[0].mxu0
        %v4227 = vadd.f32 0.0, %v4226
        %v4228 = vpop.f32.mrb[0].mxu0
        %4229 = vmatprep.mubr.f32.mxu0 0.0
        %4230 = vmatmul.mubr.f32.gmra.mrb[0].mxu0 %v1391
        %v4231 = vpop.f32.mrb[0].mxu0
        %v4232 = vadd.f32 0.0, %v4231
        %v4233 = vpop.f32.mrb[0].mxu0
        %4234 = vmatprep.mubr.f32.mxu0 0.0
        %4235 = vmatmul.mubr.f32.gmra.mrb[0].mxu0 %v1393
        %v4236 = vpop.f32.mrb[0].mxu0
        %v4237 = vadd.f32 0.0, %v4236
        %v4238 = vpop.f32.mrb[0].mxu0
        %4239 = vmatprep.mubr.f32.mxu0 0.0
        %4240 = vmatmul.mubr.f32.gmra.mrb[0].mxu0 %v1395
        %v4241 = vpop.f32.mrb[0].mxu0
        %v4242 = vadd.f32 0.0, %v4241
        %v4243 = vpop.f32.mrb[0].mxu0
        %4244 = vmatprep.mubr.f32.mxu0 0.0
        %4245 = vmatmul.mubr.f32.gmra.mrb[0].mxu0 %v1397
        %v4246 = vpop.f32.mrb[0].mxu0
        %v4247 = vadd.f32 0.0, %v4246
        %v4248 = vpop.f32.mrb[0].mxu0
        %4249 = vmatprep.mubr.f32.mxu0 0.0
        %4250 = vmatmul.mubr.f32.gmra.mrb[0].mxu0 %v1399
        %v4251 = vpop.f32.mrb[0].mxu0
        %v4252 = vadd.f32 0.0, %v4251
        %v4253 = vpop.f32.mrb[0].mxu0
        %4254 = vmatprep.mubr.f32.mxu0 0.0
        %4255 = vmatmul.mubr.f32.gmra.mrb[0].mxu0 %v1401
        %v4256 = vpop.f32.mrb[0].mxu0
        %v4257 = vadd.f32 0.0, %v4256
        %v4258 = vpop.f32.mrb[0].mxu0
        %4259 = vmatprep.mubr.f32.mxu0 0.0
        %4260 = vmatmul.mubr.f32.gmra.mrb[0].mxu0 %v1403
        %v4261 = vpop.f32.mrb[0].mxu0
        %v4262 = vadd.f32 0.0, %v4261
        %v4263 = vpop.f32.mrb[0].mxu0
        %4264 = vmatprep.mubr.f32.mxu0 0.0
        %4265 = vmatmul.mubr.f32.gmra.mrb[0].mxu0 %v1405
        %v4266 = vpop.f32.mrb[0].mxu0
        %v4267 = vadd.f32 0.0, %v4266
        %v4268 = vpop.f32.mrb[0].mxu0
        %4269 = vmatprep.mubr.f32.mxu0 0.0
        %4270 = vmatmul.mubr.f32.gmra.mrb[0].mxu0 %v1407
        %v4271 = vpop.f32.mrb[0].mxu0
        %v4272 = vadd.f32 0.0, %v4271
        %v4273 = vpop.f32.mrb[0].mxu0
        %4274 = vmatprep.mubr.f32.mxu0 0.0
        %4275 = vmatmul.mubr.f32.gmra.mrb[0].mxu0 %v1409
        %v4276 = vpop.f32.mrb[0].mxu0
        %v4277 = vadd.f32 0.0, %v4276
        %v4278 = vpop.f32.mrb[0].mxu0
        %4279 = vmatprep.mubr.f32.mxu0 0.0
        %4280 = vmatmul.mubr.f32.gmra.mrb[0].mxu0 %v1411
        %v4281 = vpop.f32.mrb[0].mxu0
        %v4282 = vadd.f32 0.0, %v4281
        %v4283 = vpop.f32.mrb[0].mxu0
        %4284 = vmatprep.mubr.f32.mxu0 0.0
        %4285 = vmatmul.mubr.f32.gmra.mrb[0].mxu0 %v1413
        %v4286 = vpop.f32.mrb[0].mxu0
        %v4287 = vadd.f32 0.0, %v4286
        %v4288 = vpop.f32.mrb[0].mxu0
        %4289 = vmatprep.mubr.f32.mxu0 0.0
        %4290 = vmatmul.mubr.f32.gmra.mrb[0].mxu0 %v1415
        %v4291 = vpop.f32.mrb[0].mxu0
        %v4292 = vadd.f32 0.0, %v4291
        %v4293 = vpop.f32.mrb[0].mxu0
        %4294 = vmatprep.mubr.f32.mxu0 0.0
        %4295 = vmatmul.mubr.f32.gmra.mrb[0].mxu0 %v1417
        %v4296 = vpop.f32.mrb[0].mxu0
        %v4297 = vadd.f32 0.0, %v4296
        %v4298 = vpop.f32.mrb[0].mxu0
        %4299 = vmatprep.mubr.f32.mxu0 0.0
        %4300 = vmatmul.mubr.f32.gmra.mrb[0].mxu0 %v1419
        %v4301 = vpop.f32.mrb[0].mxu0
        %v4302 = vadd.f32 0.0, %v4301
        %v4303 = vpop.f32.mrb[0].mxu0
        %4304 = vmatprep.mubr.f32.mxu0 0.0
        %4305 = vmatmul.mubr.f32.gmra.mrb[0].mxu0 %v1421
        %v4306 = vpop.f32.mrb[0].mxu0
        %v4307 = vadd.f32 0.0, %v4306
        %v4308 = vpop.f32.mrb[0].mxu0
        %4309 = vmatprep.mubr.f32.mxu0 0.0
        %4310 = vmatmul.mubr.f32.gmra.mrb[0].mxu0 %v1423
        %v4311 = vpop.f32.mrb[0].mxu0
        %v4312 = vadd.f32 0.0, %v4311
        %v4313 = vpop.f32.mrb[0].mxu0
        %4314 = vmatprep.mubr.f32.mxu0 0.0
        %4315 = vmatmul.mubr.f32.gmra.mrb[0].mxu0 %v1425
        %v4316 = vpop.f32.mrb[0].mxu0
        %v4317 = vadd.f32 0.0, %v4316
        %v4318 = vpop.f32.mrb[0].mxu0
        %4319 = vmatprep.mubr.f32.mxu0 0.0
        %4320 = vmatmul.mubr.f32.gmra.mrb[0].mxu0 %v1427
        %v4321 = vpop.f32.mrb[0].mxu0
        %v4322 = vadd.f32 0.0, %v4321
        %v4323 = vpop.f32.mrb[0].mxu0
        %4324 = vmatprep.mubr.f32.mxu0 0.0
        %4325 = vmatmul.mubr.f32.gmra.mrb[0].mxu0 %v1429
        %v4326 = vpop.f32.mrb[0].mxu0
        %v4327 = vadd.f32 0.0, %v4326
        %v4328 = vpop.f32.mrb[0].mxu0
        %4329 = vmatprep.mubr.f32.mxu0 0.0
        %4330 = vmatmul.mubr.f32.gmra.mrb[0].mxu0 %v1431
        %v4331 = vpop.f32.mrb[0].mxu0
        %v4332 = vadd.f32 0.0, %v4331
        %v4333 = vpop.f32.mrb[0].mxu0
        %4334 = vmatprep.mubr.f32.mxu0 0.0
        %4335 = vmatmul.mubr.f32.gmra.mrb[0].mxu0 %v1433
        %v4336 = vpop.f32.mrb[0].mxu0
        %v4337 = vadd.f32 0.0, %v4336
        %v4338 = vpop.f32.mrb[0].mxu0
        %4339 = vmatprep.mubr.f32.mxu0 0.0
        %4340 = vmatmul.mubr.f32.gmra.mrb[0].mxu0 %v1435
        %v4341 = vpop.f32.mrb[0].mxu0
        %v4342 = vadd.f32 0.0, %v4341
        %v4343 = vpop.f32.mrb[0].mxu0
        %4344 = vmatprep.mubr.f32.mxu0 0.0
        %4345 = vmatmul.mubr.f32.gmra.mrb[0].mxu0 %v1437
        %v4346 = vpop.f32.mrb[0].mxu0
        %v4347 = vadd.f32 0.0, %v4346
        %v4348 = vpop.f32.mrb[0].mxu0
        %4349 = vmatprep.mubr.f32.mxu0 0.0
        %4350 = vmatmul.mubr.f32.gmra.mrb[0].mxu0 %v1439
        %v4351 = vpop.f32.mrb[0].mxu0
        %v4352 = vadd.f32 0.0, %v4351
        %v4353 = vpop.f32.mrb[0].mxu0
        %4354 = vmatprep.mubr.f32.mxu0 0.0
        %4355 = vmatmul.mubr.f32.gmra.mrb[0].mxu0 %v1441
        %v4356 = vpop.f32.mrb[0].mxu0
        %v4357 = vadd.f32 0.0, %v4356
        %v4358 = vpop.f32.mrb[0].mxu0
        %4359 = vmatprep.mubr.f32.mxu0 0.0
        %4360 = vmatmul.mubr.f32.gmra.mrb[0].mxu0 %v1443
        %v4361 = vpop.f32.mrb[0].mxu0
        %v4362 = vadd.f32 0.0, %v4361
        %v4363 = vpop.f32.mrb[0].mxu0
        %4364 = vmatprep.mubr.f32.mxu0 0.0
        %4365 = vmatmul.mubr.f32.gmra.mrb[0].mxu0 %v1445
        %v4366 = vpop.f32.mrb[0].mxu0
        %v4367 = vadd.f32 0.0, %v4366
        %v4368 = vpop.f32.mrb[0].mxu0
        %4369 = vmatprep.mubr.f32.mxu0 0.0
        %4370 = vmatmul.mubr.f32.gmra.mrb[0].mxu0 %v1447
        %v4371 = vpop.f32.mrb[0].mxu0
        %v4372 = vadd.f32 0.0, %v4371
        %v4373 = vpop.f32.mrb[0].mxu0
        %4374 = vmatprep.mubr.f32.mxu0 0.0
        %4375 = vmatmul.mubr.f32.gmra.mrb[0].mxu0 %v1449
        %v4376 = vpop.f32.mrb[0].mxu0
        %v4377 = vadd.f32 0.0, %v4376
        %v4378 = vpop.f32.mrb[0].mxu0
        %4379 = vmatprep.mubr.f32.mxu0 0.0
        %4380 = vmatmul.mubr.f32.gmra.mrb[0].mxu0 %v1451
        %v4381 = vpop.f32.mrb[0].mxu0
        %v4382 = vadd.f32 0.0, %v4381
        %v4383 = vpop.f32.mrb[0].mxu0
        %4384 = vmatprep.mubr.f32.mxu0 0.0
        %4385 = vmatmul.mubr.f32.gmra.mrb[0].mxu0 %v1453
        %v4386 = vpop.f32.mrb[0].mxu0
        %v4387 = vadd.f32 0.0, %v4386
        %v4388 = vpop.f32.mrb[0].mxu0
        %4389 = vmatprep.mubr.f32.mxu0 0.0
        %4390 = vmatmul.mubr.f32.gmra.mrb[0].mxu0 %v1455
        %v4391 = vpop.f32.mrb[0].mxu0
        %v4392 = vadd.f32 0.0, %v4391
        %v4393 = vpop.f32.mrb[0].mxu0
        %4394 = vmatprep.mubr.f32.mxu0 0.0
        %4395 = vmatmul.mubr.f32.gmra.mrb[0].mxu0 %v2786
        %v4396 = vpop.f32.mrb[0].mxu0
        %v4397 = vadd.f32 0.0, %v4396
        %v4398 = vpop.f32.mrb[0].mxu0
        %4399 = vmatprep.mubr.f32.mxu0 0.0
        %4400 = vmatmul.mubr.f32.gmra.mrb[0].mxu0 %v2788
        %v4401 = vpop.f32.mrb[0].mxu0
        %v4402 = vadd.f32 0.0, %v4401
        %v4403 = vpop.f32.mrb[0].mxu0
        %4404 = vmatprep.mubr.f32.mxu0 0.0
        %4405 = vmatmul.mubr.f32.gmra.mrb[0].mxu0 %v2790
        %v4406 = vpop.f32.mrb[0].mxu0
        %v4407 = vadd.f32 0.0, %v4406
        %v4408 = vpop.f32.mrb[0].mxu0
        %4409 = vmatprep.mubr.f32.mxu0 0.0
        %4410 = vmatmul.mubr.f32.gmra.mrb[0].mxu0 %v4067
        %v4411 = vpop.f32.mrb[0].mxu0
        %v4412 = vadd.f32 0.0, %v4411
        %v4413 = vpop.f32.mrb[0].mxu0
        %4414 = vmatprep.mubr.f32.mxu0 0.0
        %4415 = vmatmul.mubr.f32.gmra.mrb[0].mxu0 %v4069
        %v4416 = vpop.f32.mrb[0].mxu0
        %v4417 = vpop.f32.mrb[0].mxu0
        %4418 = vmatprep.mubr.f32.mxu0 0.0
        %4419 = vmatmul.mubr.f32.gmra.mrb[0].mxu0 %v4071
        %v4420 = vpop.f32.mrb[0].mxu0
        %v4421 = vpop.f32.mrb[0].mxu0
        %4422 = vdwg.mxu0
        %v4423 = vadd.f32 %v3994, %v4142
        %v4424 = vadd.f32 %v3995, %v4147
        %v4425 = vadd.f32 %v3996, %v4152
        %v4426 = vadd.f32 %v3997, %v4157
        %v4427 = vadd.f32 %v3998, %v4162
        %v4428 = vadd.f32 %v3999, %v4167
        %v4429 = vadd.f32 %v4000, %v4172
        %v4430 = vadd.f32 %v4001, %v4177
        %v4431 = vadd.f32 %v4002, %v4182
        %v4432 = vadd.f32 %v4003, %v4187
        %v4433 = vadd.f32 %v4004, %v4192
        %v4434 = vadd.f32 %v4005, %v4197
        %v4435 = vadd.f32 %v4006, %v4202
        %v4436 = vadd.f32 %v4007, %v4207
        %v4437 = vadd.f32 %v4008, %v4212
        %v4438 = vadd.f32 %v4009, %v4217
        %v4439 = vadd.f32 %v4010, %v4222
        %v4440 = vadd.f32 %v4011, %v4227
        %v4441 = vadd.f32 %v4012, %v4232
        %v4442 = vadd.f32 %v4013, %v4237
        %v4443 = vadd.f32 %v4014, %v4242
        %v4444 = vadd.f32 %v4015, %v4247
        %v4445 = vadd.f32 %v4016, %v4252
        %v4446 = vadd.f32 %v4017, %v4257
        %v4447 = vadd.f32 %v4018, %v4262
        %v4448 = vadd.f32 %v4019, %v4267
        %v4449 = vadd.f32 %v4020, %v4272
        %v4450 = vadd.f32 %v4021, %v4277
        %v4451 = vadd.f32 %v4022, %v4282
        %v4452 = vadd.f32 %v4023, %v4287
        %v4453 = vadd.f32 %v4024, %v4292
        %v4454 = vadd.f32 %v4025, %v4297
        %v4455 = vadd.f32 %v4026, %v4302
        %v4456 = vadd.f32 %v4027, %v4307
        %v4457 = vadd.f32 %v4028, %v4312
        %v4458 = vadd.f32 %v4029, %v4317
        %v4459 = vadd.f32 %v4030, %v4322
        %v4460 = vadd.f32 %v4031, %v4327
        %v4461 = vadd.f32 %v4032, %v4332
        %v4462 = vadd.f32 %v4033, %v4337
        %v4463 = vadd.f32 %v4034, %v4342
        %v4464 = vadd.f32 %v4035, %v4347
        %v4465 = vadd.f32 %v4036, %v4352
        %v4466 = vadd.f32 %v4037, %v4357
        %v4467 = vadd.f32 %v4038, %v4362
        %v4468 = vadd.f32 %v4039, %v4367
        %v4469 = vadd.f32 %v4040, %v4372
        %v4470 = vadd.f32 %v4041, %v4377
        %v4471 = vadd.f32 %v4042, %v4382
        %v4472 = vadd.f32 %v4043, %v4387
        %v4473 = vadd.f32 %v4044, %v4392
        %v4474 = vadd.f32 %v4045, %v4397
        %v4475 = vadd.f32 %v4046, %v4402
        %v4476 = vadd.f32 %v4047, %v4407
        %v4477 = vadd.f32 %v4048, %v4412
        %v4478 = vld [vmem:[%s3] sm:$0x1]
        %v4480 = vlaneseq
        %v4481 = vshrl.u32 %v4480, 7
        %v4482 = vsub.s32 0, %v4481
        %v4483 = vrot.slane %v4478, %v4482
        %v4485 = vadd.f32 %v4423, %v4483
        %v4486 = vadd.f32 %v4424, %v4483
        %v4487 = vadd.f32 %v4425, %v4483
        %v4488 = vadd.f32 %v4426, %v4483
        %v4489 = vadd.f32 %v4427, %v4483
        %v4490 = vadd.f32 %v4428, %v4483
        %v4491 = vadd.f32 %v4429, %v4483
        %v4492 = vadd.f32 %v4430, %v4483
        %v4493 = vadd.f32 %v4431, %v4483
        %v4494 = vadd.f32 %v4432, %v4483
        %v4495 = vadd.f32 %v4433, %v4483
        %v4496 = vadd.f32 %v4434, %v4483
        %v4497 = vadd.f32 %v4435, %v4483
        %v4498 = vadd.f32 %v4436, %v4483
        %v4499 = vadd.f32 %v4437, %v4483
        %v4500 = vadd.f32 %v4438, %v4483
        %v4501 = vadd.f32 %v4439, %v4483
        %v4502 = vadd.f32 %v4440, %v4483
        %v4503 = vadd.f32 %v4441, %v4483
        %v4504 = vadd.f32 %v4442, %v4483
        %v4505 = vadd.f32 %v4443, %v4483
        %v4506 = vadd.f32 %v4444, %v4483
        %v4507 = vadd.f32 %v4445, %v4483
        %v4508 = vadd.f32 %v4446, %v4483
        %v4509 = vadd.f32 %v4447, %v4483
        %v4510 = vadd.f32 %v4448, %v4483
        %v4511 = vadd.f32 %v4449, %v4483
        %v4512 = vadd.f32 %v4450, %v4483
        %v4513 = vadd.f32 %v4451, %v4483
        %v4514 = vadd.f32 %v4452, %v4483
        %v4515 = vadd.f32 %v4453, %v4483
        %v4516 = vadd.f32 %v4454, %v4483
        %v4517 = vadd.f32 %v4455, %v4483
        %v4518 = vadd.f32 %v4456, %v4483
        %v4519 = vadd.f32 %v4457, %v4483
        %v4520 = vadd.f32 %v4458, %v4483
        %v4521 = vadd.f32 %v4459, %v4483
        %v4522 = vadd.f32 %v4460, %v4483
        %v4523 = vadd.f32 %v4461, %v4483
        %v4524 = vadd.f32 %v4462, %v4483
        %v4525 = vadd.f32 %v4463, %v4483
        %v4526 = vadd.f32 %v4464, %v4483
        %v4527 = vadd.f32 %v4465, %v4483
        %v4528 = vadd.f32 %v4466, %v4483
        %v4529 = vadd.f32 %v4467, %v4483
        %v4530 = vadd.f32 %v4468, %v4483
        %v4531 = vadd.f32 %v4469, %v4483
        %v4532 = vadd.f32 %v4470, %v4483
        %v4533 = vadd.f32 %v4471, %v4483
        %v4534 = vadd.f32 %v4472, %v4483
        %v4535 = vadd.f32 %v4473, %v4483
        %v4536 = vadd.f32 %v4474, %v4483
        %v4537 = vadd.f32 %v4475, %v4483
        %v4538 = vadd.f32 %v4476, %v4483
        %v4539 = vadd.f32 %v4477, %v4483
        %v4540 = vmax.f32 %v4485, 0.0
        %v4541 = vmax.f32 %v4486, 0.0
        %v4542 = vmax.f32 %v4487, 0.0
        %v4543 = vmax.f32 %v4488, 0.0
        %v4544 = vmax.f32 %v4489, 0.0
        %v4545 = vmax.f32 %v4490, 0.0
        %v4546 = vmax.f32 %v4491, 0.0
        %v4547 = vmax.f32 %v4492, 0.0
        %v4548 = vmax.f32 %v4493, 0.0
        %v4549 = vmax.f32 %v4494, 0.0
        %v4550 = vmax.f32 %v4495, 0.0
        %v4551 = vmax.f32 %v4496, 0.0
        %v4552 = vmax.f32 %v4497, 0.0
        %v4553 = vmax.f32 %v4498, 0.0
        %v4554 = vmax.f32 %v4499, 0.0
        %v4555 = vmax.f32 %v4500, 0.0
        %v4556 = vmax.f32 %v4501, 0.0
        %v4557 = vmax.f32 %v4502, 0.0
        %v4558 = vmax.f32 %v4503, 0.0
        %v4559 = vmax.f32 %v4504, 0.0
        %v4560 = vmax.f32 %v4505, 0.0
        %v4561 = vmax.f32 %v4506, 0.0
        %v4562 = vmax.f32 %v4507, 0.0
        %v4563 = vmax.f32 %v4508, 0.0
        %v4564 = vmax.f32 %v4509, 0.0
        %v4565 = vmax.f32 %v4510, 0.0
        %v4566 = vmax.f32 %v4511, 0.0
        %v4567 = vmax.f32 %v4512, 0.0
        %v4568 = vmax.f32 %v4513, 0.0
        %v4569 = vmax.f32 %v4514, 0.0
        %v4570 = vmax.f32 %v4515, 0.0
        %v4571 = vmax.f32 %v4516, 0.0
        %v4572 = vmax.f32 %v4517, 0.0
        %v4573 = vmax.f32 %v4518, 0.0
        %v4574 = vmax.f32 %v4519, 0.0
        %v4575 = vmax.f32 %v4520, 0.0
        %v4576 = vmax.f32 %v4521, 0.0
        %v4577 = vmax.f32 %v4522, 0.0
        %v4578 = vmax.f32 %v4523, 0.0
        %v4579 = vmax.f32 %v4524, 0.0
        %v4580 = vmax.f32 %v4525, 0.0
        %v4581 = vmax.f32 %v4526, 0.0
        %v4582 = vmax.f32 %v4527, 0.0
        %v4583 = vmax.f32 %v4528, 0.0
        %v4584 = vmax.f32 %v4529, 0.0
        %v4585 = vmax.f32 %v4530, 0.0
        %v4586 = vmax.f32 %v4531, 0.0
        %v4587 = vmax.f32 %v4532, 0.0
        %v4588 = vmax.f32 %v4533, 0.0
        %v4589 = vmax.f32 %v4534, 0.0
        %v4590 = vmax.f32 %v4535, 0.0
        %v4591 = vmax.f32 %v4536, 0.0
        %v4592 = vmax.f32 %v4537, 0.0
        %v4593 = vmax.f32 %v4538, 0.0
        %v4594 = vmax.f32 %v4539, 0.0
        %v4595 = vld [vmem:[%s0] sm:$0xff]
        %v4596 = vld [vmem:[%s0 + $0x8] sm:$0xff]
        %v4597 = vld [vmem:[%s0 + $0x10] sm:$0xff]
        %v4598 = vld [vmem:[%s0 + $0x18] sm:$0xff]
        %v4599 = vld [vmem:[%s0 + $0x20] sm:$0xff]
        %v4600 = vld [vmem:[%s0 + $0x28] sm:$0xff]
        %v4601 = vld [vmem:[%s0 + $0x30] sm:$0xff]
        %v4602 = vld [vmem:[%s0 + $0x38] sm:$0xff]
        %v4603 = vld [vmem:[%s0 + $0x40] sm:$0xff]
        %v4604 = vld [vmem:[%s0 + $0x48] sm:$0xff]
        %v4605 = vld [vmem:[%s0 + $0x50] sm:$0xff]
        %v4606 = vld [vmem:[%s0 + $0x58] sm:$0xff]
        %v4607 = vld [vmem:[%s0 + $0x60] sm:$0xff]
        %v4608 = vld [vmem:[%s0 + $0x68] sm:$0xff]
        %v4609 = vld [vmem:[%s0 + $0x70] sm:$0xff]
        %v4610 = vld [vmem:[%s0 + $0x78] sm:$0xff]
        %v4611 = vld [vmem:[%s0 + $0x80] sm:$0xff]
        %v4612 = vld [vmem:[%s0 + $0x88] sm:$0xff]
        %v4613 = vld [vmem:[%s0 + $0x90] sm:$0xff]
        %v4614 = vld [vmem:[%s0 + $0x98] sm:$0xff]
        %v4615 = vld [vmem:[%s0 + $0xa0] sm:$0xff]
        %v4616 = vld [vmem:[%s0 + $0xa8] sm:$0xff]
        %v4617 = vld [vmem:[%s0 + $0xb0] sm:$0xff]
        %v4618 = vld [vmem:[%s0 + $0xb8] sm:$0xff]
        %v4619 = vld [vmem:[%s0 + $0xc0] sm:$0xff]
        %v4620 = vld [vmem:[%s0 + $0xc8] sm:$0xff]
        %v4621 = vld [vmem:[%s0 + $0xd0] sm:$0xff]
        %v4622 = vld [vmem:[%s0 + $0xd8] sm:$0xff]
        %v4623 = vld [vmem:[%s0 + $0xe0] sm:$0xff]
        %v4624 = vld [vmem:[%s0 + $0xe8] sm:$0xff]
        %v4625 = vld [vmem:[%s0 + $0xf0] sm:$0xff]
        %v4626 = vld [vmem:[%s0 + $0xf8] sm:$0xff]
        %v4627 = vld [vmem:[%s0 + $0x100] sm:$0xff]
        %v4628 = vld [vmem:[%s0 + $0x108] sm:$0xff]
        %v4629 = vld [vmem:[%s0 + $0x110] sm:$0xff]
        %v4630 = vld [vmem:[%s0 + $0x118] sm:$0xff]
        %v4631 = vld [vmem:[%s0 + $0x120] sm:$0xff]
        %v4632 = vld [vmem:[%s0 + $0x128] sm:$0xff]
        %v4633 = vld [vmem:[%s0 + $0x130] sm:$0xff]
        %v4634 = vld [vmem:[%s0 + $0x138] sm:$0xff]
        %v4635 = vld [vmem:[%s0 + $0x140] sm:$0xff]
        %v4636 = vld [vmem:[%s0 + $0x148] sm:$0xff]
        %v4637 = vld [vmem:[%s0 + $0x150] sm:$0xff]
        %v4638 = vld [vmem:[%s0 + $0x158] sm:$0xff]
        %v4639 = vld [vmem:[%s0 + $0x160] sm:$0xff]
        %v4640 = vld [vmem:[%s0 + $0x168] sm:$0xff]
        %v4641 = vld [vmem:[%s0 + $0x170] sm:$0xff]
        %v4642 = vld [vmem:[%s0 + $0x178] sm:$0xff]
        %v4643 = vld [vmem:[%s0 + $0x180] sm:$0xff]
        %v4644 = vld [vmem:[%s0 + $0x188] sm:$0xff]
        %v4645 = vld [vmem:[%s0 + $0x190] sm:$0xff]
        %v4646 = vld [vmem:[%s0 + $0x198] sm:$0xff]
        %v4647 = vld [vmem:[%s0 + $0x1a0] sm:$0xff]
        %v4648 = vld [vmem:[%s0 + $0x1a8] sm:$0xff]
        %v4649 = vld [vmem:[%s0 + $0x1b0] sm:$0xff]
        %4651 = vset.pattern.permute.xlu0 0
        %4652 = vperm.xlu0 %4651, %v4595
        %v4653 = vpop.permute.xlu0 %4652
        %4656 = vset.pattern.permute.xlu0 0
        %4657 = vperm.xlu0 %4656, %v4596
        %v4658 = vpop.permute.xlu0 %4657
        %4661 = vset.pattern.permute.xlu0 0
        %4662 = vperm.xlu0 %4661, %v4597
        %v4663 = vpop.permute.xlu0 %4662
        %4666 = vset.pattern.permute.xlu0 0
        %4667 = vperm.xlu0 %4666, %v4598
        %v4668 = vpop.permute.xlu0 %4667
        %4671 = vset.pattern.permute.xlu0 0
        %4672 = vperm.xlu0 %4671, %v4599
        %v4673 = vpop.permute.xlu0 %4672
        %4676 = vset.pattern.permute.xlu0 0
        %4677 = vperm.xlu0 %4676, %v4600
        %v4678 = vpop.permute.xlu0 %4677
        %4681 = vset.pattern.permute.xlu0 0
        %4682 = vperm.xlu0 %4681, %v4601
        %v4683 = vpop.permute.xlu0 %4682
        %4686 = vset.pattern.permute.xlu0 0
        %4687 = vperm.xlu0 %4686, %v4602
        %v4688 = vpop.permute.xlu0 %4687
        %4691 = vset.pattern.permute.xlu0 0
        %4692 = vperm.xlu0 %4691, %v4603
        %v4693 = vpop.permute.xlu0 %4692
        %4696 = vset.pattern.permute.xlu0 0
        %4697 = vperm.xlu0 %4696, %v4604
        %v4698 = vpop.permute.xlu0 %4697
        %4701 = vset.pattern.permute.xlu0 0
        %4702 = vperm.xlu0 %4701, %v4605
        %v4703 = vpop.permute.xlu0 %4702
        %4706 = vset.pattern.permute.xlu0 0
        %4707 = vperm.xlu0 %4706, %v4606
        %v4708 = vpop.permute.xlu0 %4707
        %4711 = vset.pattern.permute.xlu0 0
        %4712 = vperm.xlu0 %4711, %v4607
        %v4713 = vpop.permute.xlu0 %4712
        %4716 = vset.pattern.permute.xlu0 0
        %4717 = vperm.xlu0 %4716, %v4608
        %v4718 = vpop.permute.xlu0 %4717
        %4721 = vset.pattern.permute.xlu0 0
        %4722 = vperm.xlu0 %4721, %v4609
        %v4723 = vpop.permute.xlu0 %4722
        %4726 = vset.pattern.permute.xlu0 0
        %4727 = vperm.xlu0 %4726, %v4610
        %v4728 = vpop.permute.xlu0 %4727
        %4731 = vset.pattern.permute.xlu0 0
        %4732 = vperm.xlu0 %4731, %v4611
        %v4733 = vpop.permute.xlu0 %4732
        %4736 = vset.pattern.permute.xlu0 0
        %4737 = vperm.xlu0 %4736, %v4612
        %v4738 = vpop.permute.xlu0 %4737
        %4741 = vset.pattern.permute.xlu0 0
        %4742 = vperm.xlu0 %4741, %v4613
        %v4743 = vpop.permute.xlu0 %4742
        %4746 = vset.pattern.permute.xlu0 0
        %4747 = vperm.xlu0 %4746, %v4614
        %v4748 = vpop.permute.xlu0 %4747
        %4751 = vset.pattern.permute.xlu0 0
        %4752 = vperm.xlu0 %4751, %v4615
        %v4753 = vpop.permute.xlu0 %4752
        %4756 = vset.pattern.permute.xlu0 0
        %4757 = vperm.xlu0 %4756, %v4616
        %v4758 = vpop.permute.xlu0 %4757
        %4761 = vset.pattern.permute.xlu0 0
        %4762 = vperm.xlu0 %4761, %v4617
        %v4763 = vpop.permute.xlu0 %4762
        %4766 = vset.pattern.permute.xlu0 0
        %4767 = vperm.xlu0 %4766, %v4618
        %v4768 = vpop.permute.xlu0 %4767
        %4771 = vset.pattern.permute.xlu0 0
        %4772 = vperm.xlu0 %4771, %v4619
        %v4773 = vpop.permute.xlu0 %4772
        %4776 = vset.pattern.permute.xlu0 0
        %4777 = vperm.xlu0 %4776, %v4620
        %v4778 = vpop.permute.xlu0 %4777
        %4781 = vset.pattern.permute.xlu0 0
        %4782 = vperm.xlu0 %4781, %v4621
        %v4783 = vpop.permute.xlu0 %4782
        %4786 = vset.pattern.permute.xlu0 0
        %4787 = vperm.xlu0 %4786, %v4622
        %v4788 = vpop.permute.xlu0 %4787
        %4791 = vset.pattern.permute.xlu0 0
        %4792 = vperm.xlu0 %4791, %v4623
        %v4793 = vpop.permute.xlu0 %4792
        %4796 = vset.pattern.permute.xlu0 0
        %4797 = vperm.xlu0 %4796, %v4624
        %v4798 = vpop.permute.xlu0 %4797
        %4801 = vset.pattern.permute.xlu0 0
        %4802 = vperm.xlu0 %4801, %v4625
        %v4803 = vpop.permute.xlu0 %4802
        %4806 = vset.pattern.permute.xlu0 0
        %4807 = vperm.xlu0 %4806, %v4626
        %v4808 = vpop.permute.xlu0 %4807
        %4811 = vset.pattern.permute.xlu0 0
        %4812 = vperm.xlu0 %4811, %v4627
        %v4813 = vpop.permute.xlu0 %4812
        %4816 = vset.pattern.permute.xlu0 0
        %4817 = vperm.xlu0 %4816, %v4628
        %v4818 = vpop.permute.xlu0 %4817
        %4821 = vset.pattern.permute.xlu0 0
        %4822 = vperm.xlu0 %4821, %v4629
        %v4823 = vpop.permute.xlu0 %4822
        %4826 = vset.pattern.permute.xlu0 0
        %4827 = vperm.xlu0 %4826, %v4630
        %v4828 = vpop.permute.xlu0 %4827
        %4831 = vset.pattern.permute.xlu0 0
        %4832 = vperm.xlu0 %4831, %v4631
        %v4833 = vpop.permute.xlu0 %4832
        %4836 = vset.pattern.permute.xlu0 0
        %4837 = vperm.xlu0 %4836, %v4632
        %v4838 = vpop.permute.xlu0 %4837
        %4841 = vset.pattern.permute.xlu0 0
        %4842 = vperm.xlu0 %4841, %v4633
        %v4843 = vpop.permute.xlu0 %4842
        %4846 = vset.pattern.permute.xlu0 0
        %4847 = vperm.xlu0 %4846, %v4634
        %v4848 = vpop.permute.xlu0 %4847
        %4851 = vset.pattern.permute.xlu0 0
        %4852 = vperm.xlu0 %4851, %v4635
        %v4853 = vpop.permute.xlu0 %4852
        %4856 = vset.pattern.permute.xlu0 0
        %4857 = vperm.xlu0 %4856, %v4636
        %v4858 = vpop.permute.xlu0 %4857
        %4861 = vset.pattern.permute.xlu0 0
        %4862 = vperm.xlu0 %4861, %v4637
        %v4863 = vpop.permute.xlu0 %4862
        %4866 = vset.pattern.permute.xlu0 0
        %4867 = vperm.xlu0 %4866, %v4638
        %v4868 = vpop.permute.xlu0 %4867
        %4871 = vset.pattern.permute.xlu0 0
        %4872 = vperm.xlu0 %4871, %v4639
        %v4873 = vpop.permute.xlu0 %4872
        %4876 = vset.pattern.permute.xlu0 0
        %4877 = vperm.xlu0 %4876, %v4640
        %v4878 = vpop.permute.xlu0 %4877
        %4881 = vset.pattern.permute.xlu0 0
        %4882 = vperm.xlu0 %4881, %v4641
        %v4883 = vpop.permute.xlu0 %4882
        %4886 = vset.pattern.permute.xlu0 0
        %4887 = vperm.xlu0 %4886, %v4642
        %v4888 = vpop.permute.xlu0 %4887
        %4891 = vset.pattern.permute.xlu0 0
        %4892 = vperm.xlu0 %4891, %v4643
        %v4893 = vpop.permute.xlu0 %4892
        %4896 = vset.pattern.permute.xlu0 0
        %4897 = vperm.xlu0 %4896, %v4644
        %v4898 = vpop.permute.xlu0 %4897
        %4901 = vset.pattern.permute.xlu0 0
        %4902 = vperm.xlu0 %4901, %v4645
        %v4903 = vpop.permute.xlu0 %4902
        %4906 = vset.pattern.permute.xlu0 0
        %4907 = vperm.xlu0 %4906, %v4646
        %v4908 = vpop.permute.xlu0 %4907
        %4911 = vset.pattern.permute.xlu0 0
        %4912 = vperm.xlu0 %4911, %v4647
        %v4913 = vpop.permute.xlu0 %4912
        %4916 = vset.pattern.permute.xlu0 0
        %4917 = vperm.xlu0 %4916, %v4648
        %v4918 = vpop.permute.xlu0 %4917
        %4921 = vset.pattern.permute.xlu0 0
        %4922 = vperm.xlu0 %4921, %v4649
        %v4923 = vpop.permute.xlu0 %4922
        %v4925 = vmul.f32 %v4540, %v4653
        %v4926 = vmul.f32 %v4541, %v4658
        %v4927 = vmul.f32 %v4542, %v4663
        %v4928 = vmul.f32 %v4543, %v4668
        %v4929 = vmul.f32 %v4544, %v4673
        %v4930 = vmul.f32 %v4545, %v4678
        %v4931 = vmul.f32 %v4546, %v4683
        %v4932 = vmul.f32 %v4547, %v4688
        %v4933 = vmul.f32 %v4548, %v4693
        %v4934 = vmul.f32 %v4549, %v4698
        %v4935 = vmul.f32 %v4550, %v4703
        %v4936 = vmul.f32 %v4551, %v4708
        %v4937 = vmul.f32 %v4552, %v4713
        %v4938 = vmul.f32 %v4553, %v4718
        %v4939 = vmul.f32 %v4554, %v4723
        %v4940 = vmul.f32 %v4555, %v4728
        %v4941 = vmul.f32 %v4556, %v4733
        %v4942 = vmul.f32 %v4557, %v4738
        %v4943 = vmul.f32 %v4558, %v4743
        %v4944 = vmul.f32 %v4559, %v4748
        %v4945 = vmul.f32 %v4560, %v4753
        %v4946 = vmul.f32 %v4561, %v4758
        %v4947 = vmul.f32 %v4562, %v4763
        %v4948 = vmul.f32 %v4563, %v4768
        %v4949 = vmul.f32 %v4564, %v4773
        %v4950 = vmul.f32 %v4565, %v4778
        %v4951 = vmul.f32 %v4566, %v4783
        %v4952 = vmul.f32 %v4567, %v4788
        %v4953 = vmul.f32 %v4568, %v4793
        %v4954 = vmul.f32 %v4569, %v4798
        %v4955 = vmul.f32 %v4570, %v4803
        %v4956 = vmul.f32 %v4571, %v4808
        %v4957 = vmul.f32 %v4572, %v4813
        %v4958 = vmul.f32 %v4573, %v4818
        %v4959 = vmul.f32 %v4574, %v4823
        %v4960 = vmul.f32 %v4575, %v4828
        %v4961 = vmul.f32 %v4576, %v4833
        %v4962 = vmul.f32 %v4577, %v4838
        %v4963 = vmul.f32 %v4578, %v4843
        %v4964 = vmul.f32 %v4579, %v4848
        %v4965 = vmul.f32 %v4580, %v4853
        %v4966 = vmul.f32 %v4581, %v4858
        %v4967 = vmul.f32 %v4582, %v4863
        %v4968 = vmul.f32 %v4583, %v4868
        %v4969 = vmul.f32 %v4584, %v4873
        %v4970 = vmul.f32 %v4585, %v4878
        %v4971 = vmul.f32 %v4586, %v4883
        %v4972 = vmul.f32 %v4587, %v4888
        %v4973 = vmul.f32 %v4588, %v4893
        %v4974 = vmul.f32 %v4589, %v4898
        %v4975 = vmul.f32 %v4590, %v4903
        %v4976 = vmul.f32 %v4591, %v4908
        %v4977 = vmul.f32 %v4592, %v4913
        %v4978 = vmul.f32 %v4593, %v4918
        %v4979 = vmul.f32 %v4594, %v4923
        %v4980 = vld [vmem:[#allocation7] sm:$0xff]
        %v4981 = vld [vmem:[#allocation7 + $0x8] sm:$0xff]
        %v4982 = vld [vmem:[#allocation7 + $0x10] sm:$0xff]
        %v4983 = vld [vmem:[#allocation7 + $0x18] sm:$0xff]
        %v4984 = vld [vmem:[#allocation7 + $0x20] sm:$0xff]
        %v4985 = vld [vmem:[#allocation7 + $0x28] sm:$0xff]
        %v4986 = vld [vmem:[#allocation7 + $0x30] sm:$0xff]
        %v4987 = vld [vmem:[#allocation7 + $0x38] sm:$0xff]
        %v4988 = vld [vmem:[#allocation7 + $0x40] sm:$0xff]
        %v4989 = vld [vmem:[#allocation7 + $0x48] sm:$0xff]
        %v4990 = vld [vmem:[#allocation7 + $0x50] sm:$0xff]
        %v4991 = vld [vmem:[#allocation7 + $0x58] sm:$0xff]
        %v4992 = vld [vmem:[#allocation7 + $0x60] sm:$0xff]
        %v4993 = vld [vmem:[#allocation7 + $0x68] sm:$0xff]
        %v4994 = vld [vmem:[#allocation7 + $0x70] sm:$0xff]
        %v4995 = vld [vmem:[#allocation7 + $0x78] sm:$0xff]
        %s4996 = scalar_lea.vmem [#allocation7], 128
        %v4997 = vld [vmem:[%s4996] sm:$0xff]
        %v4998 = vld [vmem:[%s4996 + $0x8] sm:$0xff]
        %v4999 = vld [vmem:[%s4996 + $0x10] sm:$0xff]
        %v5000 = vld [vmem:[%s4996 + $0x18] sm:$0xff]
        %v5001 = vld [vmem:[%s4996 + $0x20] sm:$0xff]
        %v5002 = vld [vmem:[%s4996 + $0x28] sm:$0xff]
        %v5003 = vld [vmem:[%s4996 + $0x30] sm:$0xff]
        %v5004 = vld [vmem:[%s4996 + $0x38] sm:$0xff]
        %v5005 = vld [vmem:[%s4996 + $0x40] sm:$0xff]
        %v5006 = vld [vmem:[%s4996 + $0x48] sm:$0xff]
        %v5007 = vld [vmem:[%s4996 + $0x50] sm:$0xff]
        %v5008 = vld [vmem:[%s4996 + $0x58] sm:$0xff]
        %v5009 = vld [vmem:[%s4996 + $0x60] sm:$0xff]
        %v5010 = vld [vmem:[%s4996 + $0x68] sm:$0xff]
        %v5011 = vld [vmem:[%s4996 + $0x70] sm:$0xff]
        %v5012 = vld [vmem:[%s4996 + $0x78] sm:$0xff]
        %v5062 = vrot.slane %v4925, 1
        %v5063 = vrot.slane %v4926, 1
        %v5064 = vsel %vm454, %v5062, %v5063
        %v5065 = vrot.slane %v4927, 1
        %v5066 = vsel %vm454, %v5063, %v5065
        %v5067 = vrot.slane %v4928, 1
        %v5068 = vsel %vm454, %v5065, %v5067
        %v5069 = vrot.slane %v4929, 1
        %v5070 = vsel %vm454, %v5067, %v5069
        %v5071 = vrot.slane %v4930, 1
        %v5072 = vsel %vm454, %v5069, %v5071
        %v5073 = vrot.slane %v4931, 1
        %v5074 = vsel %vm454, %v5071, %v5073
        %v5075 = vrot.slane %v4932, 1
        %v5076 = vsel %vm454, %v5073, %v5075
        %v5077 = vrot.slane %v4933, 1
        %v5078 = vsel %vm454, %v5075, %v5077
        %v5079 = vrot.slane %v4934, 1
        %v5080 = vsel %vm454, %v5077, %v5079
        %v5081 = vrot.slane %v4935, 1
        %v5082 = vsel %vm454, %v5079, %v5081
        %v5083 = vrot.slane %v4936, 1
        %v5084 = vsel %vm454, %v5081, %v5083
        %v5085 = vrot.slane %v4937, 1
        %v5086 = vsel %vm454, %v5083, %v5085
        %v5087 = vrot.slane %v4938, 1
        %v5088 = vsel %vm454, %v5085, %v5087
        %v5089 = vrot.slane %v4939, 1
        %v5090 = vsel %vm454, %v5087, %v5089
        %v5091 = vrot.slane %v4940, 1
        %v5092 = vsel %vm454, %v5089, %v5091
        %v5093 = vrot.slane %v4941, 1
        %v5094 = vsel %vm454, %v5091, %v5093
        %v5095 = vrot.slane %v4942, 1
        %v5096 = vsel %vm454, %v5093, %v5095
        %v5097 = vrot.slane %v4943, 1
        %v5098 = vsel %vm454, %v5095, %v5097
        %v5099 = vrot.slane %v4944, 1
        %v5100 = vsel %vm454, %v5097, %v5099
        %v5101 = vrot.slane %v4945, 1
        %v5102 = vsel %vm454, %v5099, %v5101
        %v5103 = vrot.slane %v4946, 1
        %v5104 = vsel %vm454, %v5101, %v5103
        %v5105 = vrot.slane %v4947, 1
        %v5106 = vsel %vm454, %v5103, %v5105
        %v5107 = vrot.slane %v4948, 1
        %v5108 = vsel %vm454, %v5105, %v5107
        %v5109 = vrot.slane %v4949, 1
        %v5110 = vsel %vm454, %v5107, %v5109
        %v5111 = vrot.slane %v4950, 1
        %v5112 = vsel %vm454, %v5109, %v5111
        %v5113 = vrot.slane %v4951, 1
        %v5114 = vsel %vm454, %v5111, %v5113
        %v5115 = vrot.slane %v4952, 1
        %v5116 = vsel %vm454, %v5113, %v5115
        %v5117 = vrot.slane %v4953, 1
        %v5118 = vsel %vm454, %v5115, %v5117
        %v5119 = vrot.slane %v4954, 1
        %v5120 = vsel %vm454, %v5117, %v5119
        %v5121 = vrot.slane %v4955, 1
        %v5122 = vsel %vm454, %v5119, %v5121
        %v5123 = vrot.slane %v4956, 1
        %v5124 = vsel %vm454, %v5121, %v5123
        %v5125 = vrot.slane %v4957, 1
        %v5126 = vsel %vm454, %v5123, %v5125
        %v5127 = vrot.slane %v4958, 1
        %v5128 = vsel %vm454, %v5125, %v5127
        %v5129 = vrot.slane %v4959, 1
        %v5130 = vsel %vm454, %v5127, %v5129
        %v5131 = vrot.slane %v4960, 1
        %v5132 = vsel %vm454, %v5129, %v5131
        %v5133 = vrot.slane %v4961, 1
        %v5134 = vsel %vm454, %v5131, %v5133
        %v5135 = vrot.slane %v4962, 1
        %v5136 = vsel %vm454, %v5133, %v5135
        %v5137 = vrot.slane %v4963, 1
        %v5138 = vsel %vm454, %v5135, %v5137
        %v5139 = vrot.slane %v4964, 1
        %v5140 = vsel %vm454, %v5137, %v5139
        %v5141 = vrot.slane %v4965, 1
        %v5142 = vsel %vm454, %v5139, %v5141
        %v5143 = vrot.slane %v4966, 1
        %v5144 = vsel %vm454, %v5141, %v5143
        %v5145 = vrot.slane %v4967, 1
        %v5146 = vsel %vm454, %v5143, %v5145
        %v5147 = vrot.slane %v4968, 1
        %v5148 = vsel %vm454, %v5145, %v5147
        %v5149 = vrot.slane %v4969, 1
        %v5150 = vsel %vm454, %v5147, %v5149
        %v5151 = vrot.slane %v4970, 1
        %v5152 = vsel %vm454, %v5149, %v5151
        %v5153 = vrot.slane %v4971, 1
        %v5154 = vsel %vm454, %v5151, %v5153
        %v5155 = vrot.slane %v4972, 1
        %v5156 = vsel %vm454, %v5153, %v5155
        %v5157 = vrot.slane %v4973, 1
        %v5158 = vsel %vm454, %v5155, %v5157
        %5207 = vmatprep.subr.mxu0 0.0
        %5208 = vmatpush1.msra.mxu0 %v4997
        %5209 = vmatprep.subr.mxu0 0.0
        %5210 = vmatpush1.msra.mxu0 %v4998
        %5211 = vmatprep.subr.mxu0 0.0
        %5212 = vmatpush1.msra.mxu0 %v4999
        %5213 = vmatprep.subr.mxu0 0.0
        %5214 = vmatpush1.msra.mxu0 %v5000
        %5215 = vmatprep.subr.mxu0 0.0
        %5216 = vmatpush1.msra.mxu0 %v5001
        %5217 = vmatprep.subr.mxu0 0.0
        %5218 = vmatpush1.msra.mxu0 %v5002
        %5219 = vmatprep.subr.mxu0 0.0
        %5220 = vmatpush1.msra.mxu0 %v5003
        %5221 = vmatprep.subr.mxu0 0.0
        %5222 = vmatpush1.msra.mxu0 %v5004
        %5223 = vmatprep.subr.mxu0 0.0
        %5224 = vmatpush1.msra.mxu0 %v5005
        %5225 = vmatprep.subr.mxu0 0.0
        %5226 = vmatpush1.msra.mxu0 %v5006
        %5227 = vmatprep.subr.mxu0 0.0
        %5228 = vmatpush1.msra.mxu0 %v5007
        %5229 = vmatprep.subr.mxu0 0.0
        %5230 = vmatpush1.msra.mxu0 %v5008
        %5231 = vmatprep.subr.mxu0 0.0
        %5232 = vmatpush1.msra.mxu0 %v5009
        %5233 = vmatprep.subr.mxu0 0.0
        %5234 = vmatpush1.msra.mxu0 %v5010
        %5235 = vmatprep.subr.mxu0 0.0
        %5236 = vmatpush1.msra.mxu0 %v5011
        %5237 = vmatprep.subr.mxu0 0.0
        %5238 = vmatpush1.msra.mxu0 %v5012
        %5239 = vmatprep.subr.mxu0 0.0
        %5240 = vmatpush1.msra.mxu0 0.0
        %5241 = vmatprep.subr.mxu0 0.0
        %5242 = vmatpush1.msra.mxu0 0.0
        %5243 = vmatprep.subr.mxu0 0.0
        %5244 = vmatpush1.msra.mxu0 0.0
        %5245 = vmatprep.subr.mxu0 0.0
        %5246 = vmatpush1.msra.mxu0 0.0
        %5247 = vmatprep.subr.mxu0 0.0
        %5248 = vmatpush1.msra.mxu0 0.0
        %5249 = vmatprep.subr.mxu0 0.0
        %5250 = vmatpush1.msra.mxu0 0.0
        %5251 = vmatprep.subr.mxu0 0.0
        %5252 = vmatpush1.msra.mxu0 0.0
        %5253 = vmatprep.subr.mxu0 0.0
        %5254 = vmatpush1.msra.mxu0 0.0
        %5255 = vmatprep.subr.mxu0 0.0
        %5256 = vmatpush1.msra.mxu0 0.0
        %5257 = vmatprep.subr.mxu0 0.0
        %5258 = vmatpush1.msra.mxu0 0.0
        %5259 = vmatprep.subr.mxu0 0.0
        %5260 = vmatpush1.msra.mxu0 0.0
        %5261 = vmatprep.subr.mxu0 0.0
        %5262 = vmatpush1.msra.mxu0 0.0
        %5263 = vmatprep.subr.mxu0 0.0
        %5264 = vmatpush1.msra.mxu0 0.0
        %5265 = vmatprep.subr.mxu0 0.0
        %5266 = vmatpush1.msra.mxu0 0.0
        %5267 = vmatprep.subr.mxu0 0.0
        %5268 = vmatpush1.msra.mxu0 0.0
        %5269 = vmatprep.subr.mxu0 0.0
        %5270 = vmatpush1.msra.mxu0 0.0
        %5271 = vmatprep.mubr.f32.mxu0 0.0
        %5272 = vmatmul.mubr.f32.gmra.mrb[0].mxu0 %v5064
        %v5273 = vpop.f32.mrb[0].mxu0
        %v5274 = vadd.f32 0.0, %v5273
        %v5275 = vpop.f32.mrb[0].mxu0
        %5276 = vmatprep.mubr.f32.mxu0 0.0
        %5277 = vmatmul.mubr.f32.gmra.mrb[0].mxu0 %v5066
        %v5278 = vpop.f32.mrb[0].mxu0
        %v5279 = vadd.f32 0.0, %v5278
        %v5280 = vpop.f32.mrb[0].mxu0
        %5281 = vmatprep.mubr.f32.mxu0 0.0
        %5282 = vmatmul.mubr.f32.gmra.mrb[0].mxu0 %v5068
        %v5283 = vpop.f32.mrb[0].mxu0
        %v5284 = vpop.f32.mrb[0].mxu0
        %5285 = vmatprep.mubr.f32.mxu0 0.0
        %5286 = vmatmul.mubr.f32.gmra.mrb[0].mxu0 %v5070
        %v5287 = vpop.f32.mrb[0].mxu0
        %v5288 = vadd.f32 0.0, %v5287
        %v5289 = vpop.f32.mrb[0].mxu0
        %5290 = vmatprep.mubr.f32.mxu0 0.0
        %5291 = vmatmul.mubr.f32.gmra.mrb[0].mxu0 %v5072
        %v5292 = vpop.f32.mrb[0].mxu0
        %v5293 = vadd.f32 0.0, %v5292
        %v5294 = vpop.f32.mrb[0].mxu0
        %5295 = vmatprep.mubr.f32.mxu0 0.0
        %5296 = vmatmul.mubr.f32.gmra.mrb[0].mxu0 %v5074
        %v5297 = vpop.f32.mrb[0].mxu0
        %v5298 = vpop.f32.mrb[0].mxu0
        %5299 = vmatprep.mubr.f32.mxu0 0.0
        %5300 = vmatmul.mubr.f32.gmra.mrb[0].mxu0 %v5076
        %v5301 = vpop.f32.mrb[0].mxu0
        %v5302 = vadd.f32 0.0, %v5301
        %v5303 = vpop.f32.mrb[0].mxu0
        %5304 = vmatprep.mubr.f32.mxu0 0.0
        %5305 = vmatmul.mubr.f32.gmra.mrb[0].mxu0 %v5078
        %v5306 = vpop.f32.mrb[0].mxu0
        %v5307 = vadd.f32 0.0, %v5306
        %v5308 = vpop.f32.mrb[0].mxu0
        %5309 = vmatprep.mubr.f32.mxu0 0.0
        %5310 = vmatmul.mubr.f32.gmra.mrb[0].mxu0 %v5080
        %v5311 = vpop.f32.mrb[0].mxu0
        %v5312 = vpop.f32.mrb[0].mxu0
        %5313 = vmatprep.mubr.f32.mxu0 0.0
        %5314 = vmatmul.mubr.f32.gmra.mrb[0].mxu0 %v5082
        %v5315 = vpop.f32.mrb[0].mxu0
        %v5316 = vadd.f32 0.0, %v5315
        %v5317 = vpop.f32.mrb[0].mxu0
        %5318 = vmatprep.mubr.f32.mxu0 0.0
        %5319 = vmatmul.mubr.f32.gmra.mrb[0].mxu0 %v5084
        %v5320 = vpop.f32.mrb[0].mxu0
        %v5321 = vadd.f32 0.0, %v5320
        %v5322 = vpop.f32.mrb[0].mxu0
        %5323 = vmatprep.mubr.f32.mxu0 0.0
        %5324 = vmatmul.mubr.f32.gmra.mrb[0].mxu0 %v5086
        %v5325 = vpop.f32.mrb[0].mxu0
        %v5326 = vpop.f32.mrb[0].mxu0
        %5327 = vmatprep.mubr.f32.mxu0 0.0
        %5328 = vmatmul.mubr.f32.gmra.mrb[0].mxu0 %v5088
        %v5329 = vpop.f32.mrb[0].mxu0
        %v5330 = vadd.f32 0.0, %v5329
        %v5331 = vpop.f32.mrb[0].mxu0
        %5332 = vmatprep.mubr.f32.mxu0 0.0
        %5333 = vmatmul.mubr.f32.gmra.mrb[0].mxu0 %v5090
        %v5334 = vpop.f32.mrb[0].mxu0
        %v5335 = vadd.f32 0.0, %v5334
        %v5336 = vpop.f32.mrb[0].mxu0
        %5337 = vmatprep.mubr.f32.mxu0 0.0
        %5338 = vmatmul.mubr.f32.gmra.mrb[0].mxu0 %v5092
        %v5339 = vpop.f32.mrb[0].mxu0
        %v5340 = vpop.f32.mrb[0].mxu0
        %5341 = vmatprep.mubr.f32.mxu0 0.0
        %5342 = vmatmul.mubr.f32.gmra.mrb[0].mxu0 %v5094
        %v5343 = vpop.f32.mrb[0].mxu0
        %v5344 = vadd.f32 0.0, %v5343
        %v5345 = vpop.f32.mrb[0].mxu0
        %5346 = vmatprep.mubr.f32.mxu0 0.0
        %5347 = vmatmul.mubr.f32.gmra.mrb[0].mxu0 %v5096
        %v5348 = vpop.f32.mrb[0].mxu0
        %v5349 = vadd.f32 0.0, %v5348
        %v5350 = vpop.f32.mrb[0].mxu0
        %5351 = vmatprep.mubr.f32.mxu0 0.0
        %5352 = vmatmul.mubr.f32.gmra.mrb[0].mxu0 %v5098
        %v5353 = vpop.f32.mrb[0].mxu0
        %v5354 = vpop.f32.mrb[0].mxu0
        %5355 = vmatprep.mubr.f32.mxu0 0.0
        %5356 = vmatmul.mubr.f32.gmra.mrb[0].mxu0 %v5100
        %v5357 = vpop.f32.mrb[0].mxu0
        %v5358 = vadd.f32 0.0, %v5357
        %v5359 = vpop.f32.mrb[0].mxu0
        %5360 = vmatprep.mubr.f32.mxu0 0.0
        %5361 = vmatmul.mubr.f32.gmra.mrb[0].mxu0 %v5102
        %v5362 = vpop.f32.mrb[0].mxu0
        %v5363 = vadd.f32 0.0, %v5362
        %v5364 = vpop.f32.mrb[0].mxu0
        %5365 = vmatprep.mubr.f32.mxu0 0.0
        %5366 = vmatmul.mubr.f32.gmra.mrb[0].mxu0 %v5104
        %v5367 = vpop.f32.mrb[0].mxu0
        %v5368 = vpop.f32.mrb[0].mxu0
        %5369 = vmatprep.mubr.f32.mxu0 0.0
        %5370 = vmatmul.mubr.f32.gmra.mrb[0].mxu0 %v5106
        %v5371 = vpop.f32.mrb[0].mxu0
        %v5372 = vadd.f32 0.0, %v5371
        %v5373 = vpop.f32.mrb[0].mxu0
        %5374 = vmatprep.mubr.f32.mxu0 0.0
        %5375 = vmatmul.mubr.f32.gmra.mrb[0].mxu0 %v5108
        %v5376 = vpop.f32.mrb[0].mxu0
        %v5377 = vadd.f32 0.0, %v5376
        %v5378 = vpop.f32.mrb[0].mxu0
        %5379 = vmatprep.mubr.f32.mxu0 0.0
        %5380 = vmatmul.mubr.f32.gmra.mrb[0].mxu0 %v5110
        %v5381 = vpop.f32.mrb[0].mxu0
        %v5382 = vpop.f32.mrb[0].mxu0
        %5383 = vmatprep.mubr.f32.mxu0 0.0
        %5384 = vmatmul.mubr.f32.gmra.mrb[0].mxu0 %v5112
        %v5385 = vpop.f32.mrb[0].mxu0
        %v5386 = vadd.f32 0.0, %v5385
        %v5387 = vpop.f32.mrb[0].mxu0
        %5388 = vmatprep.mubr.f32.mxu0 0.0
        %5389 = vmatmul.mubr.f32.gmra.mrb[0].mxu0 %v5114
        %v5390 = vpop.f32.mrb[0].mxu0
        %v5391 = vadd.f32 0.0, %v5390
        %v5392 = vpop.f32.mrb[0].mxu0
        %5393 = vmatprep.mubr.f32.mxu0 0.0
        %5394 = vmatmul.mubr.f32.gmra.mrb[0].mxu0 %v5116
        %v5395 = vpop.f32.mrb[0].mxu0
        %v5396 = vpop.f32.mrb[0].mxu0
        %5397 = vmatprep.mubr.f32.mxu0 0.0
        %5398 = vmatmul.mubr.f32.gmra.mrb[0].mxu0 %v5118
        %v5399 = vpop.f32.mrb[0].mxu0
        %v5400 = vadd.f32 0.0, %v5399
        %v5401 = vpop.f32.mrb[0].mxu0
        %5402 = vmatprep.mubr.f32.mxu0 0.0
        %5403 = vmatmul.mubr.f32.gmra.mrb[0].mxu0 %v5120
        %v5404 = vpop.f32.mrb[0].mxu0
        %v5405 = vadd.f32 0.0, %v5404
        %v5406 = vpop.f32.mrb[0].mxu0
        %5407 = vmatprep.mubr.f32.mxu0 0.0
        %5408 = vmatmul.mubr.f32.gmra.mrb[0].mxu0 %v5122
        %v5409 = vpop.f32.mrb[0].mxu0
        %v5410 = vpop.f32.mrb[0].mxu0
        %5411 = vmatprep.mubr.f32.mxu0 0.0
        %5412 = vmatmul.mubr.f32.gmra.mrb[0].mxu0 %v5124
        %v5413 = vpop.f32.mrb[0].mxu0
        %v5414 = vadd.f32 0.0, %v5413
        %v5415 = vpop.f32.mrb[0].mxu0
        %5416 = vmatprep.mubr.f32.mxu0 0.0
        %5417 = vmatmul.mubr.f32.gmra.mrb[0].mxu0 %v5126
        %v5418 = vpop.f32.mrb[0].mxu0
        %v5419 = vadd.f32 0.0, %v5418
        %v5420 = vpop.f32.mrb[0].mxu0
        %5421 = vmatprep.mubr.f32.mxu0 0.0
        %5422 = vmatmul.mubr.f32.gmra.mrb[0].mxu0 %v5128
        %v5423 = vpop.f32.mrb[0].mxu0
        %v5424 = vpop.f32.mrb[0].mxu0
        %5425 = vmatprep.mubr.f32.mxu0 0.0
        %5426 = vmatmul.mubr.f32.gmra.mrb[0].mxu0 %v5130
        %v5427 = vpop.f32.mrb[0].mxu0
        %v5428 = vadd.f32 0.0, %v5427
        %v5429 = vpop.f32.mrb[0].mxu0
        %5430 = vmatprep.mubr.f32.mxu0 0.0
        %5431 = vmatmul.mubr.f32.gmra.mrb[0].mxu0 %v5132
        %v5432 = vpop.f32.mrb[0].mxu0
        %v5433 = vadd.f32 0.0, %v5432
        %v5434 = vpop.f32.mrb[0].mxu0
        %5435 = vmatprep.mubr.f32.mxu0 0.0
        %5436 = vmatmul.mubr.f32.gmra.mrb[0].mxu0 %v5134
        %v5437 = vpop.f32.mrb[0].mxu0
        %v5438 = vpop.f32.mrb[0].mxu0
        %5439 = vmatprep.mubr.f32.mxu0 0.0
        %5440 = vmatmul.mubr.f32.gmra.mrb[0].mxu0 %v5136
        %v5441 = vpop.f32.mrb[0].mxu0
        %v5442 = vadd.f32 0.0, %v5441
        %v5443 = vpop.f32.mrb[0].mxu0
        %5444 = vmatprep.mubr.f32.mxu0 0.0
        %5445 = vmatmul.mubr.f32.gmra.mrb[0].mxu0 %v5138
        %v5446 = vpop.f32.mrb[0].mxu0
        %v5447 = vadd.f32 0.0, %v5446
        %v5448 = vpop.f32.mrb[0].mxu0
        %5449 = vmatprep.mubr.f32.mxu0 0.0
        %5450 = vmatmul.mubr.f32.gmra.mrb[0].mxu0 %v5140
        %v5451 = vpop.f32.mrb[0].mxu0
        %v5452 = vpop.f32.mrb[0].mxu0
        %5453 = vmatprep.mubr.f32.mxu0 0.0
        %5454 = vmatmul.mubr.f32.gmra.mrb[0].mxu0 %v5142
        %v5455 = vpop.f32.mrb[0].mxu0
        %v5456 = vadd.f32 0.0, %v5455
        %v5457 = vpop.f32.mrb[0].mxu0
        %5458 = vmatprep.mubr.f32.mxu0 0.0
        %5459 = vmatmul.mubr.f32.gmra.mrb[0].mxu0 %v5144
        %v5460 = vpop.f32.mrb[0].mxu0
        %v5461 = vadd.f32 0.0, %v5460
        %v5462 = vpop.f32.mrb[0].mxu0
        %5463 = vmatprep.mubr.f32.mxu0 0.0
        %5464 = vmatmul.mubr.f32.gmra.mrb[0].mxu0 %v5146
        %v5465 = vpop.f32.mrb[0].mxu0
        %v5466 = vpop.f32.mrb[0].mxu0
        %5467 = vmatprep.mubr.f32.mxu0 0.0
        %5468 = vmatmul.mubr.f32.gmra.mrb[0].mxu0 %v5148
        %v5469 = vpop.f32.mrb[0].mxu0
        %v5470 = vadd.f32 0.0, %v5469
        %v5471 = vpop.f32.mrb[0].mxu0
        %5472 = vmatprep.mubr.f32.mxu0 0.0
        %5473 = vmatmul.mubr.f32.gmra.mrb[0].mxu0 %v5150
        %v5474 = vpop.f32.mrb[0].mxu0
        %v5475 = vadd.f32 0.0, %v5474
        %v5476 = vpop.f32.mrb[0].mxu0
        %5477 = vmatprep.mubr.f32.mxu0 0.0
        %5478 = vmatmul.mubr.f32.gmra.mrb[0].mxu0 %v5152
        %v5479 = vpop.f32.mrb[0].mxu0
        %v5480 = vpop.f32.mrb[0].mxu0
        %5481 = vmatprep.mubr.f32.mxu0 0.0
        %5482 = vmatmul.mubr.f32.gmra.mrb[0].mxu0 %v5154
        %v5483 = vpop.f32.mrb[0].mxu0
        %v5484 = vadd.f32 0.0, %v5483
        %v5485 = vpop.f32.mrb[0].mxu0
        %5486 = vmatprep.mubr.f32.mxu0 0.0
        %5487 = vmatmul.mubr.f32.gmra.mrb[0].mxu0 %v5156
        %v5488 = vpop.f32.mrb[0].mxu0
        %v5489 = vadd.f32 0.0, %v5488
        %v5490 = vpop.f32.mrb[0].mxu0
        %5491 = vmatprep.mubr.f32.mxu0 0.0
        %5492 = vmatmul.mubr.f32.gmra.mrb[0].mxu0 %v5158
        %v5493 = vpop.f32.mrb[0].mxu0
        %v5494 = vpop.f32.mrb[0].mxu0
        %5495 = vdwg.mxu0
        %5496 = vmatprep.subr.mxu0 0.0
        %5497 = vmatpush1.msra.mxu0 %v4980
        %5498 = vmatprep.subr.mxu0 0.0
        %5499 = vmatpush1.msra.mxu0 %v4981
        %5500 = vmatprep.subr.mxu0 0.0
        %5501 = vmatpush1.msra.mxu0 %v4982
        %5502 = vmatprep.subr.mxu0 0.0
        %5503 = vmatpush1.msra.mxu0 %v4983
        %5504 = vmatprep.subr.mxu0 0.0
        %5505 = vmatpush1.msra.mxu0 %v4984
        %5506 = vmatprep.subr.mxu0 0.0
        %5507 = vmatpush1.msra.mxu0 %v4985
        %5508 = vmatprep.subr.mxu0 0.0
        %5509 = vmatpush1.msra.mxu0 %v4986
        %5510 = vmatprep.subr.mxu0 0.0
        %5511 = vmatpush1.msra.mxu0 %v4987
        %5512 = vmatprep.subr.mxu0 0.0
        %5513 = vmatpush1.msra.mxu0 %v4988
        %5514 = vmatprep.subr.mxu0 0.0
        %5515 = vmatpush1.msra.mxu0 %v4989
        %5516 = vmatprep.subr.mxu0 0.0
        %5517 = vmatpush1.msra.mxu0 %v4990
        %5518 = vmatprep.subr.mxu0 0.0
        %5519 = vmatpush1.msra.mxu0 %v4991
        %5520 = vmatprep.subr.mxu0 0.0
        %5521 = vmatpush1.msra.mxu0 %v4992
        %5522 = vmatprep.subr.mxu0 0.0
        %5523 = vmatpush1.msra.mxu0 %v4993
        %5524 = vmatprep.subr.mxu0 0.0
        %5525 = vmatpush1.msra.mxu0 %v4994
        %5526 = vmatprep.subr.mxu0 0.0
        %5527 = vmatpush1.msra.mxu0 %v4995
        %5528 = vmatprep.subr.mxu0 0.0
        %5529 = vmatpush1.msra.mxu0 0.0
        %5530 = vmatprep.subr.mxu0 0.0
        %5531 = vmatpush1.msra.mxu0 0.0
        %5532 = vmatprep.subr.mxu0 0.0
        %5533 = vmatpush1.msra.mxu0 0.0
        %5534 = vmatprep.subr.mxu0 0.0
        %5535 = vmatpush1.msra.mxu0 0.0
        %5536 = vmatprep.subr.mxu0 0.0
        %5537 = vmatpush1.msra.mxu0 0.0
        %5538 = vmatprep.subr.mxu0 0.0
        %5539 = vmatpush1.msra.mxu0 0.0
        %5540 = vmatprep.subr.mxu0 0.0
        %5541 = vmatpush1.msra.mxu0 0.0
        %5542 = vmatprep.subr.mxu0 0.0
        %5543 = vmatpush1.msra.mxu0 0.0
        %5544 = vmatprep.subr.mxu0 0.0
        %5545 = vmatpush1.msra.mxu0 0.0
        %5546 = vmatprep.subr.mxu0 0.0
        %5547 = vmatpush1.msra.mxu0 0.0
        %5548 = vmatprep.subr.mxu0 0.0
        %5549 = vmatpush1.msra.mxu0 0.0
        %5550 = vmatprep.subr.mxu0 0.0
        %5551 = vmatpush1.msra.mxu0 0.0
        %5552 = vmatprep.subr.mxu0 0.0
        %5553 = vmatpush1.msra.mxu0 0.0
        %5554 = vmatprep.subr.mxu0 0.0
        %5555 = vmatpush1.msra.mxu0 0.0
        %5556 = vmatprep.subr.mxu0 0.0
        %5557 = vmatpush1.msra.mxu0 0.0
        %5558 = vmatprep.subr.mxu0 0.0
        %5559 = vmatpush1.msra.mxu0 0.0
        %5560 = vmatprep.mubr.f32.mxu0 0.0
        %5561 = vmatmul.mubr.f32.gmra.mrb[0].mxu0 %v4925
        %v5562 = vpop.f32.mrb[0].mxu0
        %v5563 = vadd.f32 %v5274, %v5562
        %v5564 = vpop.f32.mrb[0].mxu0
        %5565 = vmatprep.mubr.f32.mxu0 0.0
        %5566 = vmatmul.mubr.f32.gmra.mrb[0].mxu0 %v4926
        %v5567 = vpop.f32.mrb[0].mxu0
        %v5568 = vadd.f32 %v5279, %v5567
        %v5569 = vpop.f32.mrb[0].mxu0
        %5570 = vmatprep.mubr.f32.mxu0 0.0
        %5571 = vmatmul.mubr.f32.gmra.mrb[0].mxu0 %v4927
        %v5572 = vpop.f32.mrb[0].mxu0
        %v5573 = vpop.f32.mrb[0].mxu0
        %5574 = vmatprep.mubr.f32.mxu0 0.0
        %5575 = vmatmul.mubr.f32.gmra.mrb[0].mxu0 %v4928
        %v5576 = vpop.f32.mrb[0].mxu0
        %v5577 = vadd.f32 %v5288, %v5576
        %v5578 = vpop.f32.mrb[0].mxu0
        %5579 = vmatprep.mubr.f32.mxu0 0.0
        %5580 = vmatmul.mubr.f32.gmra.mrb[0].mxu0 %v4929
        %v5581 = vpop.f32.mrb[0].mxu0
        %v5582 = vadd.f32 %v5293, %v5581
        %v5583 = vpop.f32.mrb[0].mxu0
        %5584 = vmatprep.mubr.f32.mxu0 0.0
        %5585 = vmatmul.mubr.f32.gmra.mrb[0].mxu0 %v4930
        %v5586 = vpop.f32.mrb[0].mxu0
        %v5587 = vpop.f32.mrb[0].mxu0
        %5588 = vmatprep.mubr.f32.mxu0 0.0
        %5589 = vmatmul.mubr.f32.gmra.mrb[0].mxu0 %v4931
        %v5590 = vpop.f32.mrb[0].mxu0
        %v5591 = vadd.f32 %v5302, %v5590
        %v5592 = vpop.f32.mrb[0].mxu0
        %5593 = vmatprep.mubr.f32.mxu0 0.0
        %5594 = vmatmul.mubr.f32.gmra.mrb[0].mxu0 %v4932
        %v5595 = vpop.f32.mrb[0].mxu0
        %v5596 = vadd.f32 %v5307, %v5595
        %v5597 = vpop.f32.mrb[0].mxu0
        %5598 = vmatprep.mubr.f32.mxu0 0.0
        %5599 = vmatmul.mubr.f32.gmra.mrb[0].mxu0 %v4933
        %v5600 = vpop.f32.mrb[0].mxu0
        %v5601 = vpop.f32.mrb[0].mxu0
        %5602 = vmatprep.mubr.f32.mxu0 0.0
        %5603 = vmatmul.mubr.f32.gmra.mrb[0].mxu0 %v4934
        %v5604 = vpop.f32.mrb[0].mxu0
        %v5605 = vadd.f32 %v5316, %v5604
        %v5606 = vpop.f32.mrb[0].mxu0
        %5607 = vmatprep.mubr.f32.mxu0 0.0
        %5608 = vmatmul.mubr.f32.gmra.mrb[0].mxu0 %v4935
        %v5609 = vpop.f32.mrb[0].mxu0
        %v5610 = vadd.f32 %v5321, %v5609
        %v5611 = vpop.f32.mrb[0].mxu0
        %5612 = vmatprep.mubr.f32.mxu0 0.0
        %5613 = vmatmul.mubr.f32.gmra.mrb[0].mxu0 %v4936
        %v5614 = vpop.f32.mrb[0].mxu0
        %v5615 = vpop.f32.mrb[0].mxu0
        %5616 = vmatprep.mubr.f32.mxu0 0.0
        %5617 = vmatmul.mubr.f32.gmra.mrb[0].mxu0 %v4937
        %v5618 = vpop.f32.mrb[0].mxu0
        %v5619 = vadd.f32 %v5330, %v5618
        %v5620 = vpop.f32.mrb[0].mxu0
        %5621 = vmatprep.mubr.f32.mxu0 0.0
        %5622 = vmatmul.mubr.f32.gmra.mrb[0].mxu0 %v4938
        %v5623 = vpop.f32.mrb[0].mxu0
        %v5624 = vadd.f32 %v5335, %v5623
        %v5625 = vpop.f32.mrb[0].mxu0
        %5626 = vmatprep.mubr.f32.mxu0 0.0
        %5627 = vmatmul.mubr.f32.gmra.mrb[0].mxu0 %v4939
        %v5628 = vpop.f32.mrb[0].mxu0
        %v5629 = vpop.f32.mrb[0].mxu0
        %5630 = vmatprep.mubr.f32.mxu0 0.0
        %5631 = vmatmul.mubr.f32.gmra.mrb[0].mxu0 %v4940
        %v5632 = vpop.f32.mrb[0].mxu0
        %v5633 = vadd.f32 %v5344, %v5632
        %v5634 = vpop.f32.mrb[0].mxu0
        %5635 = vmatprep.mubr.f32.mxu0 0.0
        %5636 = vmatmul.mubr.f32.gmra.mrb[0].mxu0 %v4941
        %v5637 = vpop.f32.mrb[0].mxu0
        %v5638 = vadd.f32 %v5349, %v5637
        %v5639 = vpop.f32.mrb[0].mxu0
        %5640 = vmatprep.mubr.f32.mxu0 0.0
        %5641 = vmatmul.mubr.f32.gmra.mrb[0].mxu0 %v4942
        %v5642 = vpop.f32.mrb[0].mxu0
        %v5643 = vpop.f32.mrb[0].mxu0
        %5644 = vmatprep.mubr.f32.mxu0 0.0
        %5645 = vmatmul.mubr.f32.gmra.mrb[0].mxu0 %v4943
        %v5646 = vpop.f32.mrb[0].mxu0
        %v5647 = vadd.f32 %v5358, %v5646
        %v5648 = vpop.f32.mrb[0].mxu0
        %5649 = vmatprep.mubr.f32.mxu0 0.0
        %5650 = vmatmul.mubr.f32.gmra.mrb[0].mxu0 %v4944
        %v5651 = vpop.f32.mrb[0].mxu0
        %v5652 = vadd.f32 %v5363, %v5651
        %v5653 = vpop.f32.mrb[0].mxu0
        %5654 = vmatprep.mubr.f32.mxu0 0.0
        %5655 = vmatmul.mubr.f32.gmra.mrb[0].mxu0 %v4945
        %v5656 = vpop.f32.mrb[0].mxu0
        %v5657 = vpop.f32.mrb[0].mxu0
        %5658 = vmatprep.mubr.f32.mxu0 0.0
        %5659 = vmatmul.mubr.f32.gmra.mrb[0].mxu0 %v4946
        %v5660 = vpop.f32.mrb[0].mxu0
        %v5661 = vadd.f32 %v5372, %v5660
        %v5662 = vpop.f32.mrb[0].mxu0
        %5663 = vmatprep.mubr.f32.mxu0 0.0
        %5664 = vmatmul.mubr.f32.gmra.mrb[0].mxu0 %v4947
        %v5665 = vpop.f32.mrb[0].mxu0
        %v5666 = vadd.f32 %v5377, %v5665
        %v5667 = vpop.f32.mrb[0].mxu0
        %5668 = vmatprep.mubr.f32.mxu0 0.0
        %5669 = vmatmul.mubr.f32.gmra.mrb[0].mxu0 %v4948
        %v5670 = vpop.f32.mrb[0].mxu0
        %v5671 = vpop.f32.mrb[0].mxu0
        %5672 = vmatprep.mubr.f32.mxu0 0.0
        %5673 = vmatmul.mubr.f32.gmra.mrb[0].mxu0 %v4949
        %v5674 = vpop.f32.mrb[0].mxu0
        %v5675 = vadd.f32 %v5386, %v5674
        %v5676 = vpop.f32.mrb[0].mxu0
        %5677 = vmatprep.mubr.f32.mxu0 0.0
        %5678 = vmatmul.mubr.f32.gmra.mrb[0].mxu0 %v4950
        %v5679 = vpop.f32.mrb[0].mxu0
        %v5680 = vadd.f32 %v5391, %v5679
        %v5681 = vpop.f32.mrb[0].mxu0
        %5682 = vmatprep.mubr.f32.mxu0 0.0
        %5683 = vmatmul.mubr.f32.gmra.mrb[0].mxu0 %v4951
        %v5684 = vpop.f32.mrb[0].mxu0
        %v5685 = vpop.f32.mrb[0].mxu0
        %5686 = vmatprep.mubr.f32.mxu0 0.0
        %5687 = vmatmul.mubr.f32.gmra.mrb[0].mxu0 %v4952
        %v5688 = vpop.f32.mrb[0].mxu0
        %v5689 = vadd.f32 %v5400, %v5688
        %v5690 = vpop.f32.mrb[0].mxu0
        %5691 = vmatprep.mubr.f32.mxu0 0.0
        %5692 = vmatmul.mubr.f32.gmra.mrb[0].mxu0 %v4953
        %v5693 = vpop.f32.mrb[0].mxu0
        %v5694 = vadd.f32 %v5405, %v5693
        %v5695 = vpop.f32.mrb[0].mxu0
        %5696 = vmatprep.mubr.f32.mxu0 0.0
        %5697 = vmatmul.mubr.f32.gmra.mrb[0].mxu0 %v4954
        %v5698 = vpop.f32.mrb[0].mxu0
        %v5699 = vpop.f32.mrb[0].mxu0
        %5700 = vmatprep.mubr.f32.mxu0 0.0
        %5701 = vmatmul.mubr.f32.gmra.mrb[0].mxu0 %v4955
        %v5702 = vpop.f32.mrb[0].mxu0
        %v5703 = vadd.f32 %v5414, %v5702
        %v5704 = vpop.f32.mrb[0].mxu0
        %5705 = vmatprep.mubr.f32.mxu0 0.0
        %5706 = vmatmul.mubr.f32.gmra.mrb[0].mxu0 %v4956
        %v5707 = vpop.f32.mrb[0].mxu0
        %v5708 = vadd.f32 %v5419, %v5707
        %v5709 = vpop.f32.mrb[0].mxu0
        %5710 = vmatprep.mubr.f32.mxu0 0.0
        %5711 = vmatmul.mubr.f32.gmra.mrb[0].mxu0 %v4957
        %v5712 = vpop.f32.mrb[0].mxu0
        %v5713 = vpop.f32.mrb[0].mxu0
        %5714 = vmatprep.mubr.f32.mxu0 0.0
        %5715 = vmatmul.mubr.f32.gmra.mrb[0].mxu0 %v4958
        %v5716 = vpop.f32.mrb[0].mxu0
        %v5717 = vadd.f32 %v5428, %v5716
        %v5718 = vpop.f32.mrb[0].mxu0
        %5719 = vmatprep.mubr.f32.mxu0 0.0
        %5720 = vmatmul.mubr.f32.gmra.mrb[0].mxu0 %v4959
        %v5721 = vpop.f32.mrb[0].mxu0
        %v5722 = vadd.f32 %v5433, %v5721
        %v5723 = vpop.f32.mrb[0].mxu0
        %5724 = vmatprep.mubr.f32.mxu0 0.0
        %5725 = vmatmul.mubr.f32.gmra.mrb[0].mxu0 %v4960
        %v5726 = vpop.f32.mrb[0].mxu0
        %v5727 = vpop.f32.mrb[0].mxu0
        %5728 = vmatprep.mubr.f32.mxu0 0.0
        %5729 = vmatmul.mubr.f32.gmra.mrb[0].mxu0 %v4961
        %v5730 = vpop.f32.mrb[0].mxu0
        %v5731 = vadd.f32 %v5442, %v5730
        %v5732 = vpop.f32.mrb[0].mxu0
        %5733 = vmatprep.mubr.f32.mxu0 0.0
        %5734 = vmatmul.mubr.f32.gmra.mrb[0].mxu0 %v4962
        %v5735 = vpop.f32.mrb[0].mxu0
        %v5736 = vadd.f32 %v5447, %v5735
        %v5737 = vpop.f32.mrb[0].mxu0
        %5738 = vmatprep.mubr.f32.mxu0 0.0
        %5739 = vmatmul.mubr.f32.gmra.mrb[0].mxu0 %v4963
        %v5740 = vpop.f32.mrb[0].mxu0
        %v5741 = vpop.f32.mrb[0].mxu0
        %5742 = vmatprep.mubr.f32.mxu0 0.0
        %5743 = vmatmul.mubr.f32.gmra.mrb[0].mxu0 %v4964
        %v5744 = vpop.f32.mrb[0].mxu0
        %v5745 = vadd.f32 %v5456, %v5744
        %v5746 = vpop.f32.mrb[0].mxu0
        %5747 = vmatprep.mubr.f32.mxu0 0.0
        %5748 = vmatmul.mubr.f32.gmra.mrb[0].mxu0 %v4965
        %v5749 = vpop.f32.mrb[0].mxu0
        %v5750 = vadd.f32 %v5461, %v5749
        %v5751 = vpop.f32.mrb[0].mxu0
        %5752 = vmatprep.mubr.f32.mxu0 0.0
        %5753 = vmatmul.mubr.f32.gmra.mrb[0].mxu0 %v4966
        %v5754 = vpop.f32.mrb[0].mxu0
        %v5755 = vpop.f32.mrb[0].mxu0
        %5756 = vmatprep.mubr.f32.mxu0 0.0
        %5757 = vmatmul.mubr.f32.gmra.mrb[0].mxu0 %v4967
        %v5758 = vpop.f32.mrb[0].mxu0
        %v5759 = vadd.f32 %v5470, %v5758
        %v5760 = vpop.f32.mrb[0].mxu0
        %5761 = vmatprep.mubr.f32.mxu0 0.0
        %5762 = vmatmul.mubr.f32.gmra.mrb[0].mxu0 %v4968
        %v5763 = vpop.f32.mrb[0].mxu0
        %v5764 = vadd.f32 %v5475, %v5763
        %v5765 = vpop.f32.mrb[0].mxu0
        %5766 = vmatprep.mubr.f32.mxu0 0.0
        %5767 = vmatmul.mubr.f32.gmra.mrb[0].mxu0 %v4969
        %v5768 = vpop.f32.mrb[0].mxu0
        %v5769 = vpop.f32.mrb[0].mxu0
        %5770 = vmatprep.mubr.f32.mxu0 0.0
        %5771 = vmatmul.mubr.f32.gmra.mrb[0].mxu0 %v4970
        %v5772 = vpop.f32.mrb[0].mxu0
        %v5773 = vadd.f32 %v5484, %v5772
        %v5774 = vpop.f32.mrb[0].mxu0
        %5775 = vmatprep.mubr.f32.mxu0 0.0
        %5776 = vmatmul.mubr.f32.gmra.mrb[0].mxu0 %v4971
        %v5777 = vpop.f32.mrb[0].mxu0
        %v5778 = vadd.f32 %v5489, %v5777
        %v5779 = vpop.f32.mrb[0].mxu0
        %5780 = vmatprep.mubr.f32.mxu0 0.0
        %5781 = vmatmul.mubr.f32.gmra.mrb[0].mxu0 %v4972
        %v5782 = vpop.f32.mrb[0].mxu0
        %v5783 = vpop.f32.mrb[0].mxu0
        %5784 = vdwg.mxu0
        %s5785 = scalar_lea.vmem [#allocation7], 256
        %v5786 = vld [vmem:[%s5785] sm:$0xff]
        %v5787 = vld [vmem:[%s5785 + $0x8] sm:$0xff]
        %v5788 = vld [vmem:[%s5785 + $0x10] sm:$0xff]
        %v5789 = vld [vmem:[%s5785 + $0x18] sm:$0xff]
        %v5790 = vld [vmem:[%s5785 + $0x20] sm:$0xff]
        %v5791 = vld [vmem:[%s5785 + $0x28] sm:$0xff]
        %v5792 = vld [vmem:[%s5785 + $0x30] sm:$0xff]
        %v5793 = vld [vmem:[%s5785 + $0x38] sm:$0xff]
        %v5794 = vld [vmem:[%s5785 + $0x40] sm:$0xff]
        %v5795 = vld [vmem:[%s5785 + $0x48] sm:$0xff]
        %v5796 = vld [vmem:[%s5785 + $0x50] sm:$0xff]
        %v5797 = vld [vmem:[%s5785 + $0x58] sm:$0xff]
        %v5798 = vld [vmem:[%s5785 + $0x60] sm:$0xff]
        %v5799 = vld [vmem:[%s5785 + $0x68] sm:$0xff]
        %v5800 = vld [vmem:[%s5785 + $0x70] sm:$0xff]
        %v5801 = vld [vmem:[%s5785 + $0x78] sm:$0xff]
        %v5802 = vrot.slane %v4925, 2
        %v5803 = vrot.slane %v4926, 2
        %v5804 = vsel %vm1340, %v5802, %v5803
        %v5805 = vrot.slane %v4927, 2
        %v5806 = vsel %vm1340, %v5803, %v5805
        %v5807 = vrot.slane %v4928, 2
        %v5808 = vsel %vm1340, %v5805, %v5807
        %v5809 = vrot.slane %v4929, 2
        %v5810 = vsel %vm1340, %v5807, %v5809
        %v5811 = vrot.slane %v4930, 2
        %v5812 = vsel %vm1340, %v5809, %v5811
        %v5813 = vrot.slane %v4931, 2
        %v5814 = vsel %vm1340, %v5811, %v5813
        %v5815 = vrot.slane %v4932, 2
        %v5816 = vsel %vm1340, %v5813, %v5815
        %v5817 = vrot.slane %v4933, 2
        %v5818 = vsel %vm1340, %v5815, %v5817
        %v5819 = vrot.slane %v4934, 2
        %v5820 = vsel %vm1340, %v5817, %v5819
        %v5821 = vrot.slane %v4935, 2
        %v5822 = vsel %vm1340, %v5819, %v5821
        %v5823 = vrot.slane %v4936, 2
        %v5824 = vsel %vm1340, %v5821, %v5823
        %v5825 = vrot.slane %v4937, 2
        %v5826 = vsel %vm1340, %v5823, %v5825
        %v5827 = vrot.slane %v4938, 2
        %v5828 = vsel %vm1340, %v5825, %v5827
        %v5829 = vrot.slane %v4939, 2
        %v5830 = vsel %vm1340, %v5827, %v5829
        %v5831 = vrot.slane %v4940, 2
        %v5832 = vsel %vm1340, %v5829, %v5831
        %v5833 = vrot.slane %v4941, 2
        %v5834 = vsel %vm1340, %v5831, %v5833
        %v5835 = vrot.slane %v4942, 2
        %v5836 = vsel %vm1340, %v5833, %v5835
        %v5837 = vrot.slane %v4943, 2
        %v5838 = vsel %vm1340, %v5835, %v5837
        %v5839 = vrot.slane %v4944, 2
        %v5840 = vsel %vm1340, %v5837, %v5839
        %v5841 = vrot.slane %v4945, 2
        %v5842 = vsel %vm1340, %v5839, %v5841
        %v5843 = vrot.slane %v4946, 2
        %v5844 = vsel %vm1340, %v5841, %v5843
        %v5845 = vrot.slane %v4947, 2
        %v5846 = vsel %vm1340, %v5843, %v5845
        %v5847 = vrot.slane %v4948, 2
        %v5848 = vsel %vm1340, %v5845, %v5847
        %v5849 = vrot.slane %v4949, 2
        %v5850 = vsel %vm1340, %v5847, %v5849
        %v5851 = vrot.slane %v4950, 2
        %v5852 = vsel %vm1340, %v5849, %v5851
        %v5853 = vrot.slane %v4951, 2
        %v5854 = vsel %vm1340, %v5851, %v5853
        %v5855 = vrot.slane %v4952, 2
        %v5856 = vsel %vm1340, %v5853, %v5855
        %v5857 = vrot.slane %v4953, 2
        %v5858 = vsel %vm1340, %v5855, %v5857
        %v5859 = vrot.slane %v4954, 2
        %v5860 = vsel %vm1340, %v5857, %v5859
        %v5861 = vrot.slane %v4955, 2
        %v5862 = vsel %vm1340, %v5859, %v5861
        %v5863 = vrot.slane %v4956, 2
        %v5864 = vsel %vm1340, %v5861, %v5863
        %v5865 = vrot.slane %v4957, 2
        %v5866 = vsel %vm1340, %v5863, %v5865
        %v5867 = vrot.slane %v4958, 2
        %v5868 = vsel %vm1340, %v5865, %v5867
        %v5869 = vrot.slane %v4959, 2
        %v5870 = vsel %vm1340, %v5867, %v5869
        %v5871 = vrot.slane %v4960, 2
        %v5872 = vsel %vm1340, %v5869, %v5871
        %v5873 = vrot.slane %v4961, 2
        %v5874 = vsel %vm1340, %v5871, %v5873
        %v5875 = vrot.slane %v4962, 2
        %v5876 = vsel %vm1340, %v5873, %v5875
        %v5877 = vrot.slane %v4963, 2
        %v5878 = vsel %vm1340, %v5875, %v5877
        %v5879 = vrot.slane %v4964, 2
        %v5880 = vsel %vm1340, %v5877, %v5879
        %v5881 = vrot.slane %v4965, 2
        %v5882 = vsel %vm1340, %v5879, %v5881
        %v5883 = vrot.slane %v4966, 2
        %v5884 = vsel %vm1340, %v5881, %v5883
        %v5885 = vrot.slane %v4967, 2
        %v5886 = vsel %vm1340, %v5883, %v5885
        %v5887 = vrot.slane %v4968, 2
        %v5888 = vsel %vm1340, %v5885, %v5887
        %v5889 = vrot.slane %v4969, 2
        %v5890 = vsel %vm1340, %v5887, %v5889
        %v5891 = vrot.slane %v4970, 2
        %v5892 = vsel %vm1340, %v5889, %v5891
        %v5893 = vrot.slane %v4971, 2
        %v5894 = vsel %vm1340, %v5891, %v5893
        %v5895 = vrot.slane %v4972, 2
        %v5896 = vsel %vm1340, %v5893, %v5895
        %v5897 = vrot.slane %v4973, 2
        %v5898 = vsel %vm1340, %v5895, %v5897
        %5947 = vmatprep.subr.mxu0 0.0
        %5948 = vmatpush1.msra.mxu0 %v5786
        %5949 = vmatprep.subr.mxu0 0.0
        %5950 = vmatpush1.msra.mxu0 %v5787
        %5951 = vmatprep.subr.mxu0 0.0
        %5952 = vmatpush1.msra.mxu0 %v5788
        %5953 = vmatprep.subr.mxu0 0.0
        %5954 = vmatpush1.msra.mxu0 %v5789
        %5955 = vmatprep.subr.mxu0 0.0
        %5956 = vmatpush1.msra.mxu0 %v5790
        %5957 = vmatprep.subr.mxu0 0.0
        %5958 = vmatpush1.msra.mxu0 %v5791
        %5959 = vmatprep.subr.mxu0 0.0
        %5960 = vmatpush1.msra.mxu0 %v5792
        %5961 = vmatprep.subr.mxu0 0.0
        %5962 = vmatpush1.msra.mxu0 %v5793
        %5963 = vmatprep.subr.mxu0 0.0
        %5964 = vmatpush1.msra.mxu0 %v5794
        %5965 = vmatprep.subr.mxu0 0.0
        %5966 = vmatpush1.msra.mxu0 %v5795
        %5967 = vmatprep.subr.mxu0 0.0
        %5968 = vmatpush1.msra.mxu0 %v5796
        %5969 = vmatprep.subr.mxu0 0.0
        %5970 = vmatpush1.msra.mxu0 %v5797
        %5971 = vmatprep.subr.mxu0 0.0
        %5972 = vmatpush1.msra.mxu0 %v5798
        %5973 = vmatprep.subr.mxu0 0.0
        %5974 = vmatpush1.msra.mxu0 %v5799
        %5975 = vmatprep.subr.mxu0 0.0
        %5976 = vmatpush1.msra.mxu0 %v5800
        %5977 = vmatprep.subr.mxu0 0.0
        %5978 = vmatpush1.msra.mxu0 %v5801
        %5979 = vmatprep.subr.mxu0 0.0
        %5980 = vmatpush1.msra.mxu0 0.0
        %5981 = vmatprep.subr.mxu0 0.0
        %5982 = vmatpush1.msra.mxu0 0.0
        %5983 = vmatprep.subr.mxu0 0.0
        %5984 = vmatpush1.msra.mxu0 0.0
        %5985 = vmatprep.subr.mxu0 0.0
        %5986 = vmatpush1.msra.mxu0 0.0
        %5987 = vmatprep.subr.mxu0 0.0
        %5988 = vmatpush1.msra.mxu0 0.0
        %5989 = vmatprep.subr.mxu0 0.0
        %5990 = vmatpush1.msra.mxu0 0.0
        %5991 = vmatprep.subr.mxu0 0.0
        %5992 = vmatpush1.msra.mxu0 0.0
        %5993 = vmatprep.subr.mxu0 0.0
        %5994 = vmatpush1.msra.mxu0 0.0
        %5995 = vmatprep.subr.mxu0 0.0
        %5996 = vmatpush1.msra.mxu0 0.0
        %5997 = vmatprep.subr.mxu0 0.0
        %5998 = vmatpush1.msra.mxu0 0.0
        %5999 = vmatprep.subr.mxu0 0.0
        %6000 = vmatpush1.msra.mxu0 0.0
        %6001 = vmatprep.subr.mxu0 0.0
        %6002 = vmatpush1.msra.mxu0 0.0
        %6003 = vmatprep.subr.mxu0 0.0
        %6004 = vmatpush1.msra.mxu0 0.0
        %6005 = vmatprep.subr.mxu0 0.0
        %6006 = vmatpush1.msra.mxu0 0.0
        %6007 = vmatprep.subr.mxu0 0.0
        %6008 = vmatpush1.msra.mxu0 0.0
        %6009 = vmatprep.subr.mxu0 0.0
        %6010 = vmatpush1.msra.mxu0 0.0
        %6011 = vmatprep.mubr.f32.mxu0 0.0
        %6012 = vmatmul.mubr.f32.gmra.mrb[0].mxu0 %v5804
        %v6013 = vpop.f32.mrb[0].mxu0
        %v6014 = vadd.f32 0.0, %v6013
        %v6015 = vpop.f32.mrb[0].mxu0
        %6016 = vmatprep.mubr.f32.mxu0 0.0
        %6017 = vmatmul.mubr.f32.gmra.mrb[0].mxu0 %v5806
        %v6018 = vpop.f32.mrb[0].mxu0
        %v6019 = vadd.f32 0.0, %v6018
        %v6020 = vpop.f32.mrb[0].mxu0
        %6021 = vmatprep.mubr.f32.mxu0 0.0
        %6022 = vmatmul.mubr.f32.gmra.mrb[0].mxu0 %v5808
        %v6023 = vpop.f32.mrb[0].mxu0
        %v6024 = vpop.f32.mrb[0].mxu0
        %6025 = vmatprep.mubr.f32.mxu0 0.0
        %6026 = vmatmul.mubr.f32.gmra.mrb[0].mxu0 %v5810
        %v6027 = vpop.f32.mrb[0].mxu0
        %v6028 = vadd.f32 0.0, %v6027
        %v6029 = vpop.f32.mrb[0].mxu0
        %6030 = vmatprep.mubr.f32.mxu0 0.0
        %6031 = vmatmul.mubr.f32.gmra.mrb[0].mxu0 %v5812
        %v6032 = vpop.f32.mrb[0].mxu0
        %v6033 = vadd.f32 0.0, %v6032
        %v6034 = vpop.f32.mrb[0].mxu0
        %6035 = vmatprep.mubr.f32.mxu0 0.0
        %6036 = vmatmul.mubr.f32.gmra.mrb[0].mxu0 %v5814
        %v6037 = vpop.f32.mrb[0].mxu0
        %v6038 = vpop.f32.mrb[0].mxu0
        %6039 = vmatprep.mubr.f32.mxu0 0.0
        %6040 = vmatmul.mubr.f32.gmra.mrb[0].mxu0 %v5816
        %v6041 = vpop.f32.mrb[0].mxu0
        %v6042 = vadd.f32 0.0, %v6041
        %v6043 = vpop.f32.mrb[0].mxu0
        %6044 = vmatprep.mubr.f32.mxu0 0.0
        %6045 = vmatmul.mubr.f32.gmra.mrb[0].mxu0 %v5818
        %v6046 = vpop.f32.mrb[0].mxu0
        %v6047 = vadd.f32 0.0, %v6046
        %v6048 = vpop.f32.mrb[0].mxu0
        %6049 = vmatprep.mubr.f32.mxu0 0.0
        %6050 = vmatmul.mubr.f32.gmra.mrb[0].mxu0 %v5820
        %v6051 = vpop.f32.mrb[0].mxu0
        %v6052 = vpop.f32.mrb[0].mxu0
        %6053 = vmatprep.mubr.f32.mxu0 0.0
        %6054 = vmatmul.mubr.f32.gmra.mrb[0].mxu0 %v5822
        %v6055 = vpop.f32.mrb[0].mxu0
        %v6056 = vadd.f32 0.0, %v6055
        %v6057 = vpop.f32.mrb[0].mxu0
        %6058 = vmatprep.mubr.f32.mxu0 0.0
        %6059 = vmatmul.mubr.f32.gmra.mrb[0].mxu0 %v5824
        %v6060 = vpop.f32.mrb[0].mxu0
        %v6061 = vadd.f32 0.0, %v6060
        %v6062 = vpop.f32.mrb[0].mxu0
        %6063 = vmatprep.mubr.f32.mxu0 0.0
        %6064 = vmatmul.mubr.f32.gmra.mrb[0].mxu0 %v5826
        %v6065 = vpop.f32.mrb[0].mxu0
        %v6066 = vpop.f32.mrb[0].mxu0
        %6067 = vmatprep.mubr.f32.mxu0 0.0
        %6068 = vmatmul.mubr.f32.gmra.mrb[0].mxu0 %v5828
        %v6069 = vpop.f32.mrb[0].mxu0
        %v6070 = vadd.f32 0.0, %v6069
        %v6071 = vpop.f32.mrb[0].mxu0
        %6072 = vmatprep.mubr.f32.mxu0 0.0
        %6073 = vmatmul.mubr.f32.gmra.mrb[0].mxu0 %v5830
        %v6074 = vpop.f32.mrb[0].mxu0
        %v6075 = vadd.f32 0.0, %v6074
        %v6076 = vpop.f32.mrb[0].mxu0
        %6077 = vmatprep.mubr.f32.mxu0 0.0
        %6078 = vmatmul.mubr.f32.gmra.mrb[0].mxu0 %v5832
        %v6079 = vpop.f32.mrb[0].mxu0
        %v6080 = vpop.f32.mrb[0].mxu0
        %6081 = vmatprep.mubr.f32.mxu0 0.0
        %6082 = vmatmul.mubr.f32.gmra.mrb[0].mxu0 %v5834
        %v6083 = vpop.f32.mrb[0].mxu0
        %v6084 = vadd.f32 0.0, %v6083
        %v6085 = vpop.f32.mrb[0].mxu0
        %6086 = vmatprep.mubr.f32.mxu0 0.0
        %6087 = vmatmul.mubr.f32.gmra.mrb[0].mxu0 %v5836
        %v6088 = vpop.f32.mrb[0].mxu0
        %v6089 = vadd.f32 0.0, %v6088
        %v6090 = vpop.f32.mrb[0].mxu0
        %6091 = vmatprep.mubr.f32.mxu0 0.0
        %6092 = vmatmul.mubr.f32.gmra.mrb[0].mxu0 %v5838
        %v6093 = vpop.f32.mrb[0].mxu0
        %v6094 = vpop.f32.mrb[0].mxu0
        %6095 = vmatprep.mubr.f32.mxu0 0.0
        %6096 = vmatmul.mubr.f32.gmra.mrb[0].mxu0 %v5840
        %v6097 = vpop.f32.mrb[0].mxu0
        %v6098 = vadd.f32 0.0, %v6097
        %v6099 = vpop.f32.mrb[0].mxu0
        %6100 = vmatprep.mubr.f32.mxu0 0.0
        %6101 = vmatmul.mubr.f32.gmra.mrb[0].mxu0 %v5842
        %v6102 = vpop.f32.mrb[0].mxu0
        %v6103 = vadd.f32 0.0, %v6102
        %v6104 = vpop.f32.mrb[0].mxu0
        %6105 = vmatprep.mubr.f32.mxu0 0.0
        %6106 = vmatmul.mubr.f32.gmra.mrb[0].mxu0 %v5844
        %v6107 = vpop.f32.mrb[0].mxu0
        %v6108 = vpop.f32.mrb[0].mxu0
        %6109 = vmatprep.mubr.f32.mxu0 0.0
        %6110 = vmatmul.mubr.f32.gmra.mrb[0].mxu0 %v5846
        %v6111 = vpop.f32.mrb[0].mxu0
        %v6112 = vadd.f32 0.0, %v6111
        %v6113 = vpop.f32.mrb[0].mxu0
        %6114 = vmatprep.mubr.f32.mxu0 0.0
        %6115 = vmatmul.mubr.f32.gmra.mrb[0].mxu0 %v5848
        %v6116 = vpop.f32.mrb[0].mxu0
        %v6117 = vadd.f32 0.0, %v6116
        %v6118 = vpop.f32.mrb[0].mxu0
        %6119 = vmatprep.mubr.f32.mxu0 0.0
        %6120 = vmatmul.mubr.f32.gmra.mrb[0].mxu0 %v5850
        %v6121 = vpop.f32.mrb[0].mxu0
        %v6122 = vpop.f32.mrb[0].mxu0
        %6123 = vmatprep.mubr.f32.mxu0 0.0
        %6124 = vmatmul.mubr.f32.gmra.mrb[0].mxu0 %v5852
        %v6125 = vpop.f32.mrb[0].mxu0
        %v6126 = vadd.f32 0.0, %v6125
        %v6127 = vpop.f32.mrb[0].mxu0
        %6128 = vmatprep.mubr.f32.mxu0 0.0
        %6129 = vmatmul.mubr.f32.gmra.mrb[0].mxu0 %v5854
        %v6130 = vpop.f32.mrb[0].mxu0
        %v6131 = vadd.f32 0.0, %v6130
        %v6132 = vpop.f32.mrb[0].mxu0
        %6133 = vmatprep.mubr.f32.mxu0 0.0
        %6134 = vmatmul.mubr.f32.gmra.mrb[0].mxu0 %v5856
        %v6135 = vpop.f32.mrb[0].mxu0
        %v6136 = vpop.f32.mrb[0].mxu0
        %6137 = vmatprep.mubr.f32.mxu0 0.0
        %6138 = vmatmul.mubr.f32.gmra.mrb[0].mxu0 %v5858
        %v6139 = vpop.f32.mrb[0].mxu0
        %v6140 = vadd.f32 0.0, %v6139
        %v6141 = vpop.f32.mrb[0].mxu0
        %6142 = vmatprep.mubr.f32.mxu0 0.0
        %6143 = vmatmul.mubr.f32.gmra.mrb[0].mxu0 %v5860
        %v6144 = vpop.f32.mrb[0].mxu0
        %v6145 = vadd.f32 0.0, %v6144
        %v6146 = vpop.f32.mrb[0].mxu0
        %6147 = vmatprep.mubr.f32.mxu0 0.0
        %6148 = vmatmul.mubr.f32.gmra.mrb[0].mxu0 %v5862
        %v6149 = vpop.f32.mrb[0].mxu0
        %v6150 = vpop.f32.mrb[0].mxu0
        %6151 = vmatprep.mubr.f32.mxu0 0.0
        %6152 = vmatmul.mubr.f32.gmra.mrb[0].mxu0 %v5864
        %v6153 = vpop.f32.mrb[0].mxu0
        %v6154 = vadd.f32 0.0, %v6153
        %v6155 = vpop.f32.mrb[0].mxu0
        %6156 = vmatprep.mubr.f32.mxu0 0.0
        %6157 = vmatmul.mubr.f32.gmra.mrb[0].mxu0 %v5866
        %v6158 = vpop.f32.mrb[0].mxu0
        %v6159 = vadd.f32 0.0, %v6158
        %v6160 = vpop.f32.mrb[0].mxu0
        %6161 = vmatprep.mubr.f32.mxu0 0.0
        %6162 = vmatmul.mubr.f32.gmra.mrb[0].mxu0 %v5868
        %v6163 = vpop.f32.mrb[0].mxu0
        %v6164 = vpop.f32.mrb[0].mxu0
        %6165 = vmatprep.mubr.f32.mxu0 0.0
        %6166 = vmatmul.mubr.f32.gmra.mrb[0].mxu0 %v5870
        %v6167 = vpop.f32.mrb[0].mxu0
        %v6168 = vadd.f32 0.0, %v6167
        %v6169 = vpop.f32.mrb[0].mxu0
        %6170 = vmatprep.mubr.f32.mxu0 0.0
        %6171 = vmatmul.mubr.f32.gmra.mrb[0].mxu0 %v5872
        %v6172 = vpop.f32.mrb[0].mxu0
        %v6173 = vadd.f32 0.0, %v6172
        %v6174 = vpop.f32.mrb[0].mxu0
        %6175 = vmatprep.mubr.f32.mxu0 0.0
        %6176 = vmatmul.mubr.f32.gmra.mrb[0].mxu0 %v5874
        %v6177 = vpop.f32.mrb[0].mxu0
        %v6178 = vpop.f32.mrb[0].mxu0
        %6179 = vmatprep.mubr.f32.mxu0 0.0
        %6180 = vmatmul.mubr.f32.gmra.mrb[0].mxu0 %v5876
        %v6181 = vpop.f32.mrb[0].mxu0
        %v6182 = vadd.f32 0.0, %v6181
        %v6183 = vpop.f32.mrb[0].mxu0
        %6184 = vmatprep.mubr.f32.mxu0 0.0
        %6185 = vmatmul.mubr.f32.gmra.mrb[0].mxu0 %v5878
        %v6186 = vpop.f32.mrb[0].mxu0
        %v6187 = vadd.f32 0.0, %v6186
        %v6188 = vpop.f32.mrb[0].mxu0
        %6189 = vmatprep.mubr.f32.mxu0 0.0
        %6190 = vmatmul.mubr.f32.gmra.mrb[0].mxu0 %v5880
        %v6191 = vpop.f32.mrb[0].mxu0
        %v6192 = vpop.f32.mrb[0].mxu0
        %6193 = vmatprep.mubr.f32.mxu0 0.0
        %6194 = vmatmul.mubr.f32.gmra.mrb[0].mxu0 %v5882
        %v6195 = vpop.f32.mrb[0].mxu0
        %v6196 = vadd.f32 0.0, %v6195
        %v6197 = vpop.f32.mrb[0].mxu0
        %6198 = vmatprep.mubr.f32.mxu0 0.0
        %6199 = vmatmul.mubr.f32.gmra.mrb[0].mxu0 %v5884
        %v6200 = vpop.f32.mrb[0].mxu0
        %v6201 = vadd.f32 0.0, %v6200
        %v6202 = vpop.f32.mrb[0].mxu0
        %6203 = vmatprep.mubr.f32.mxu0 0.0
        %6204 = vmatmul.mubr.f32.gmra.mrb[0].mxu0 %v5886
        %v6205 = vpop.f32.mrb[0].mxu0
        %v6206 = vpop.f32.mrb[0].mxu0
        %6207 = vmatprep.mubr.f32.mxu0 0.0
        %6208 = vmatmul.mubr.f32.gmra.mrb[0].mxu0 %v5888
        %v6209 = vpop.f32.mrb[0].mxu0
        %v6210 = vadd.f32 0.0, %v6209
        %v6211 = vpop.f32.mrb[0].mxu0
        %6212 = vmatprep.mubr.f32.mxu0 0.0
        %6213 = vmatmul.mubr.f32.gmra.mrb[0].mxu0 %v5890
        %v6214 = vpop.f32.mrb[0].mxu0
        %v6215 = vadd.f32 0.0, %v6214
        %v6216 = vpop.f32.mrb[0].mxu0
        %6217 = vmatprep.mubr.f32.mxu0 0.0
        %6218 = vmatmul.mubr.f32.gmra.mrb[0].mxu0 %v5892
        %v6219 = vpop.f32.mrb[0].mxu0
        %v6220 = vpop.f32.mrb[0].mxu0
        %6221 = vmatprep.mubr.f32.mxu0 0.0
        %6222 = vmatmul.mubr.f32.gmra.mrb[0].mxu0 %v5894
        %v6223 = vpop.f32.mrb[0].mxu0
        %v6224 = vadd.f32 0.0, %v6223
        %v6225 = vpop.f32.mrb[0].mxu0
        %6226 = vmatprep.mubr.f32.mxu0 0.0
        %6227 = vmatmul.mubr.f32.gmra.mrb[0].mxu0 %v5896
        %v6228 = vpop.f32.mrb[0].mxu0
        %v6229 = vadd.f32 0.0, %v6228
        %v6230 = vpop.f32.mrb[0].mxu0
        %6231 = vmatprep.mubr.f32.mxu0 0.0
        %6232 = vmatmul.mubr.f32.gmra.mrb[0].mxu0 %v5898
        %v6233 = vpop.f32.mrb[0].mxu0
        %v6234 = vpop.f32.mrb[0].mxu0
        %6235 = vdwg.mxu0
        %v6236 = vadd.f32 %v5563, %v6014
        %v6237 = vadd.f32 %v5568, %v6019
        %v6238 = vadd.f32 %v5577, %v6028
        %v6239 = vadd.f32 %v5582, %v6033
        %v6240 = vadd.f32 %v5591, %v6042
        %v6241 = vadd.f32 %v5596, %v6047
        %v6242 = vadd.f32 %v5605, %v6056
        %v6243 = vadd.f32 %v5610, %v6061
        %v6244 = vadd.f32 %v5619, %v6070
        %v6245 = vadd.f32 %v5624, %v6075
        %v6246 = vadd.f32 %v5633, %v6084
        %v6247 = vadd.f32 %v5638, %v6089
        %v6248 = vadd.f32 %v5647, %v6098
        %v6249 = vadd.f32 %v5652, %v6103
        %v6250 = vadd.f32 %v5661, %v6112
        %v6251 = vadd.f32 %v5666, %v6117
        %v6252 = vadd.f32 %v5675, %v6126
        %v6253 = vadd.f32 %v5680, %v6131
        %v6254 = vadd.f32 %v5689, %v6140
        %v6255 = vadd.f32 %v5694, %v6145
        %v6256 = vadd.f32 %v5703, %v6154
        %v6257 = vadd.f32 %v5708, %v6159
        %v6258 = vadd.f32 %v5717, %v6168
        %v6259 = vadd.f32 %v5722, %v6173
        %v6260 = vadd.f32 %v5731, %v6182
        %v6261 = vadd.f32 %v5736, %v6187
        %v6262 = vadd.f32 %v5745, %v6196
        %v6263 = vadd.f32 %v5750, %v6201
        %v6264 = vadd.f32 %v5759, %v6210
        %v6265 = vadd.f32 %v5764, %v6215
        %v6266 = vadd.f32 %v5773, %v6224
        %v6267 = vadd.f32 %v5778, %v6229
        %s6268 = scalar_lea.vmem [#allocation7], 384
        %v6269 = vld [vmem:[%s6268] sm:$0xff]
        %v6270 = vld [vmem:[%s6268 + $0x8] sm:$0xff]
        %v6271 = vld [vmem:[%s6268 + $0x10] sm:$0xff]
        %v6272 = vld [vmem:[%s6268 + $0x18] sm:$0xff]
        %v6273 = vld [vmem:[%s6268 + $0x20] sm:$0xff]
        %v6274 = vld [vmem:[%s6268 + $0x28] sm:$0xff]
        %v6275 = vld [vmem:[%s6268 + $0x30] sm:$0xff]
        %v6276 = vld [vmem:[%s6268 + $0x38] sm:$0xff]
        %v6277 = vld [vmem:[%s6268 + $0x40] sm:$0xff]
        %v6278 = vld [vmem:[%s6268 + $0x48] sm:$0xff]
        %v6279 = vld [vmem:[%s6268 + $0x50] sm:$0xff]
        %v6280 = vld [vmem:[%s6268 + $0x58] sm:$0xff]
        %v6281 = vld [vmem:[%s6268 + $0x60] sm:$0xff]
        %v6282 = vld [vmem:[%s6268 + $0x68] sm:$0xff]
        %v6283 = vld [vmem:[%s6268 + $0x70] sm:$0xff]
        %v6284 = vld [vmem:[%s6268 + $0x78] sm:$0xff]
        %6285 = vmatprep.subr.mxu0 0.0
        %6286 = vmatpush1.msra.mxu0 %v6269
        %6287 = vmatprep.subr.mxu0 0.0
        %6288 = vmatpush1.msra.mxu0 %v6270
        %6289 = vmatprep.subr.mxu0 0.0
        %6290 = vmatpush1.msra.mxu0 %v6271
        %6291 = vmatprep.subr.mxu0 0.0
        %6292 = vmatpush1.msra.mxu0 %v6272
        %6293 = vmatprep.subr.mxu0 0.0
        %6294 = vmatpush1.msra.mxu0 %v6273
        %6295 = vmatprep.subr.mxu0 0.0
        %6296 = vmatpush1.msra.mxu0 %v6274
        %6297 = vmatprep.subr.mxu0 0.0
        %6298 = vmatpush1.msra.mxu0 %v6275
        %6299 = vmatprep.subr.mxu0 0.0
        %6300 = vmatpush1.msra.mxu0 %v6276
        %6301 = vmatprep.subr.mxu0 0.0
        %6302 = vmatpush1.msra.mxu0 %v6277
        %6303 = vmatprep.subr.mxu0 0.0
        %6304 = vmatpush1.msra.mxu0 %v6278
        %6305 = vmatprep.subr.mxu0 0.0
        %6306 = vmatpush1.msra.mxu0 %v6279
        %6307 = vmatprep.subr.mxu0 0.0
        %6308 = vmatpush1.msra.mxu0 %v6280
        %6309 = vmatprep.subr.mxu0 0.0
        %6310 = vmatpush1.msra.mxu0 %v6281
        %6311 = vmatprep.subr.mxu0 0.0
        %6312 = vmatpush1.msra.mxu0 %v6282
        %6313 = vmatprep.subr.mxu0 0.0
        %6314 = vmatpush1.msra.mxu0 %v6283
        %6315 = vmatprep.subr.mxu0 0.0
        %6316 = vmatpush1.msra.mxu0 %v6284
        %6317 = vmatprep.subr.mxu0 0.0
        %6318 = vmatpush1.msra.mxu0 0.0
        %6319 = vmatprep.subr.mxu0 0.0
        %6320 = vmatpush1.msra.mxu0 0.0
        %6321 = vmatprep.subr.mxu0 0.0
        %6322 = vmatpush1.msra.mxu0 0.0
        %6323 = vmatprep.subr.mxu0 0.0
        %6324 = vmatpush1.msra.mxu0 0.0
        %6325 = vmatprep.subr.mxu0 0.0
        %6326 = vmatpush1.msra.mxu0 0.0
        %6327 = vmatprep.subr.mxu0 0.0
        %6328 = vmatpush1.msra.mxu0 0.0
        %6329 = vmatprep.subr.mxu0 0.0
        %6330 = vmatpush1.msra.mxu0 0.0
        %6331 = vmatprep.subr.mxu0 0.0
        %6332 = vmatpush1.msra.mxu0 0.0
        %6333 = vmatprep.subr.mxu0 0.0
        %6334 = vmatpush1.msra.mxu0 0.0
        %6335 = vmatprep.subr.mxu0 0.0
        %6336 = vmatpush1.msra.mxu0 0.0
        %6337 = vmatprep.subr.mxu0 0.0
        %6338 = vmatpush1.msra.mxu0 0.0
        %6339 = vmatprep.subr.mxu0 0.0
        %6340 = vmatpush1.msra.mxu0 0.0
        %6341 = vmatprep.subr.mxu0 0.0
        %6342 = vmatpush1.msra.mxu0 0.0
        %6343 = vmatprep.subr.mxu0 0.0
        %6344 = vmatpush1.msra.mxu0 0.0
        %6345 = vmatprep.subr.mxu0 0.0
        %6346 = vmatpush1.msra.mxu0 0.0
        %6347 = vmatprep.subr.mxu0 0.0
        %6348 = vmatpush1.msra.mxu0 0.0
        %6349 = vmatprep.mubr.f32.mxu0 0.0
        %6350 = vmatmul.mubr.f32.gmra.mrb[0].mxu0 %v4928
        %v6351 = vpop.f32.mrb[0].mxu0
        %v6352 = vadd.f32 0.0, %v6351
        %v6353 = vpop.f32.mrb[0].mxu0
        %6354 = vmatprep.mubr.f32.mxu0 0.0
        %6355 = vmatmul.mubr.f32.gmra.mrb[0].mxu0 %v4929
        %v6356 = vpop.f32.mrb[0].mxu0
        %v6357 = vadd.f32 0.0, %v6356
        %v6358 = vpop.f32.mrb[0].mxu0
        %6359 = vmatprep.mubr.f32.mxu0 0.0
        %6360 = vmatmul.mubr.f32.gmra.mrb[0].mxu0 %v4930
        %v6361 = vpop.f32.mrb[0].mxu0
        %v6362 = vpop.f32.mrb[0].mxu0
        %6363 = vmatprep.mubr.f32.mxu0 0.0
        %6364 = vmatmul.mubr.f32.gmra.mrb[0].mxu0 %v4931
        %v6365 = vpop.f32.mrb[0].mxu0
        %v6366 = vadd.f32 0.0, %v6365
        %v6367 = vpop.f32.mrb[0].mxu0
        %6368 = vmatprep.mubr.f32.mxu0 0.0
        %6369 = vmatmul.mubr.f32.gmra.mrb[0].mxu0 %v4932
        %v6370 = vpop.f32.mrb[0].mxu0
        %v6371 = vadd.f32 0.0, %v6370
        %v6372 = vpop.f32.mrb[0].mxu0
        %6373 = vmatprep.mubr.f32.mxu0 0.0
        %6374 = vmatmul.mubr.f32.gmra.mrb[0].mxu0 %v4933
        %v6375 = vpop.f32.mrb[0].mxu0
        %v6376 = vpop.f32.mrb[0].mxu0
        %6377 = vmatprep.mubr.f32.mxu0 0.0
        %6378 = vmatmul.mubr.f32.gmra.mrb[0].mxu0 %v4934
        %v6379 = vpop.f32.mrb[0].mxu0
        %v6380 = vadd.f32 0.0, %v6379
        %v6381 = vpop.f32.mrb[0].mxu0
        %6382 = vmatprep.mubr.f32.mxu0 0.0
        %6383 = vmatmul.mubr.f32.gmra.mrb[0].mxu0 %v4935
        %v6384 = vpop.f32.mrb[0].mxu0
        %v6385 = vadd.f32 0.0, %v6384
        %v6386 = vpop.f32.mrb[0].mxu0
        %6387 = vmatprep.mubr.f32.mxu0 0.0
        %6388 = vmatmul.mubr.f32.gmra.mrb[0].mxu0 %v4936
        %v6389 = vpop.f32.mrb[0].mxu0
        %v6390 = vpop.f32.mrb[0].mxu0
        %6391 = vmatprep.mubr.f32.mxu0 0.0
        %6392 = vmatmul.mubr.f32.gmra.mrb[0].mxu0 %v4937
        %v6393 = vpop.f32.mrb[0].mxu0
        %v6394 = vadd.f32 0.0, %v6393
        %v6395 = vpop.f32.mrb[0].mxu0
        %6396 = vmatprep.mubr.f32.mxu0 0.0
        %6397 = vmatmul.mubr.f32.gmra.mrb[0].mxu0 %v4938
        %v6398 = vpop.f32.mrb[0].mxu0
        %v6399 = vadd.f32 0.0, %v6398
        %v6400 = vpop.f32.mrb[0].mxu0
        %6401 = vmatprep.mubr.f32.mxu0 0.0
        %6402 = vmatmul.mubr.f32.gmra.mrb[0].mxu0 %v4939
        %v6403 = vpop.f32.mrb[0].mxu0
        %v6404 = vpop.f32.mrb[0].mxu0
        %6405 = vmatprep.mubr.f32.mxu0 0.0
        %6406 = vmatmul.mubr.f32.gmra.mrb[0].mxu0 %v4940
        %v6407 = vpop.f32.mrb[0].mxu0
        %v6408 = vadd.f32 0.0, %v6407
        %v6409 = vpop.f32.mrb[0].mxu0
        %6410 = vmatprep.mubr.f32.mxu0 0.0
        %6411 = vmatmul.mubr.f32.gmra.mrb[0].mxu0 %v4941
        %v6412 = vpop.f32.mrb[0].mxu0
        %v6413 = vadd.f32 0.0, %v6412
        %v6414 = vpop.f32.mrb[0].mxu0
        %6415 = vmatprep.mubr.f32.mxu0 0.0
        %6416 = vmatmul.mubr.f32.gmra.mrb[0].mxu0 %v4942
        %v6417 = vpop.f32.mrb[0].mxu0
        %v6418 = vpop.f32.mrb[0].mxu0
        %6419 = vmatprep.mubr.f32.mxu0 0.0
        %6420 = vmatmul.mubr.f32.gmra.mrb[0].mxu0 %v4943
        %v6421 = vpop.f32.mrb[0].mxu0
        %v6422 = vadd.f32 0.0, %v6421
        %v6423 = vpop.f32.mrb[0].mxu0
        %6424 = vmatprep.mubr.f32.mxu0 0.0
        %6425 = vmatmul.mubr.f32.gmra.mrb[0].mxu0 %v4944
        %v6426 = vpop.f32.mrb[0].mxu0
        %v6427 = vadd.f32 0.0, %v6426
        %v6428 = vpop.f32.mrb[0].mxu0
        %6429 = vmatprep.mubr.f32.mxu0 0.0
        %6430 = vmatmul.mubr.f32.gmra.mrb[0].mxu0 %v4945
        %v6431 = vpop.f32.mrb[0].mxu0
        %v6432 = vpop.f32.mrb[0].mxu0
        %6433 = vmatprep.mubr.f32.mxu0 0.0
        %6434 = vmatmul.mubr.f32.gmra.mrb[0].mxu0 %v4946
        %v6435 = vpop.f32.mrb[0].mxu0
        %v6436 = vadd.f32 0.0, %v6435
        %v6437 = vpop.f32.mrb[0].mxu0
        %6438 = vmatprep.mubr.f32.mxu0 0.0
        %6439 = vmatmul.mubr.f32.gmra.mrb[0].mxu0 %v4947
        %v6440 = vpop.f32.mrb[0].mxu0
        %v6441 = vadd.f32 0.0, %v6440
        %v6442 = vpop.f32.mrb[0].mxu0
        %6443 = vmatprep.mubr.f32.mxu0 0.0
        %6444 = vmatmul.mubr.f32.gmra.mrb[0].mxu0 %v4948
        %v6445 = vpop.f32.mrb[0].mxu0
        %v6446 = vpop.f32.mrb[0].mxu0
        %6447 = vmatprep.mubr.f32.mxu0 0.0
        %6448 = vmatmul.mubr.f32.gmra.mrb[0].mxu0 %v4949
        %v6449 = vpop.f32.mrb[0].mxu0
        %v6450 = vadd.f32 0.0, %v6449
        %v6451 = vpop.f32.mrb[0].mxu0
        %6452 = vmatprep.mubr.f32.mxu0 0.0
        %6453 = vmatmul.mubr.f32.gmra.mrb[0].mxu0 %v4950
        %v6454 = vpop.f32.mrb[0].mxu0
        %v6455 = vadd.f32 0.0, %v6454
        %v6456 = vpop.f32.mrb[0].mxu0
        %6457 = vmatprep.mubr.f32.mxu0 0.0
        %6458 = vmatmul.mubr.f32.gmra.mrb[0].mxu0 %v4951
        %v6459 = vpop.f32.mrb[0].mxu0
        %v6460 = vpop.f32.mrb[0].mxu0
        %6461 = vmatprep.mubr.f32.mxu0 0.0
        %6462 = vmatmul.mubr.f32.gmra.mrb[0].mxu0 %v4952
        %v6463 = vpop.f32.mrb[0].mxu0
        %v6464 = vadd.f32 0.0, %v6463
        %v6465 = vpop.f32.mrb[0].mxu0
        %6466 = vmatprep.mubr.f32.mxu0 0.0
        %6467 = vmatmul.mubr.f32.gmra.mrb[0].mxu0 %v4953
        %v6468 = vpop.f32.mrb[0].mxu0
        %v6469 = vadd.f32 0.0, %v6468
        %v6470 = vpop.f32.mrb[0].mxu0
        %6471 = vmatprep.mubr.f32.mxu0 0.0
        %6472 = vmatmul.mubr.f32.gmra.mrb[0].mxu0 %v4954
        %v6473 = vpop.f32.mrb[0].mxu0
        %v6474 = vpop.f32.mrb[0].mxu0
        %6475 = vmatprep.mubr.f32.mxu0 0.0
        %6476 = vmatmul.mubr.f32.gmra.mrb[0].mxu0 %v4955
        %v6477 = vpop.f32.mrb[0].mxu0
        %v6478 = vadd.f32 0.0, %v6477
        %v6479 = vpop.f32.mrb[0].mxu0
        %6480 = vmatprep.mubr.f32.mxu0 0.0
        %6481 = vmatmul.mubr.f32.gmra.mrb[0].mxu0 %v4956
        %v6482 = vpop.f32.mrb[0].mxu0
        %v6483 = vadd.f32 0.0, %v6482
        %v6484 = vpop.f32.mrb[0].mxu0
        %6485 = vmatprep.mubr.f32.mxu0 0.0
        %6486 = vmatmul.mubr.f32.gmra.mrb[0].mxu0 %v4957
        %v6487 = vpop.f32.mrb[0].mxu0
        %v6488 = vpop.f32.mrb[0].mxu0
        %6489 = vmatprep.mubr.f32.mxu0 0.0
        %6490 = vmatmul.mubr.f32.gmra.mrb[0].mxu0 %v4958
        %v6491 = vpop.f32.mrb[0].mxu0
        %v6492 = vadd.f32 0.0, %v6491
        %v6493 = vpop.f32.mrb[0].mxu0
        %6494 = vmatprep.mubr.f32.mxu0 0.0
        %6495 = vmatmul.mubr.f32.gmra.mrb[0].mxu0 %v4959
        %v6496 = vpop.f32.mrb[0].mxu0
        %v6497 = vadd.f32 0.0, %v6496
        %v6498 = vpop.f32.mrb[0].mxu0
        %6499 = vmatprep.mubr.f32.mxu0 0.0
        %6500 = vmatmul.mubr.f32.gmra.mrb[0].mxu0 %v4960
        %v6501 = vpop.f32.mrb[0].mxu0
        %v6502 = vpop.f32.mrb[0].mxu0
        %6503 = vmatprep.mubr.f32.mxu0 0.0
        %6504 = vmatmul.mubr.f32.gmra.mrb[0].mxu0 %v4961
        %v6505 = vpop.f32.mrb[0].mxu0
        %v6506 = vadd.f32 0.0, %v6505
        %v6507 = vpop.f32.mrb[0].mxu0
        %6508 = vmatprep.mubr.f32.mxu0 0.0
        %6509 = vmatmul.mubr.f32.gmra.mrb[0].mxu0 %v4962
        %v6510 = vpop.f32.mrb[0].mxu0
        %v6511 = vadd.f32 0.0, %v6510
        %v6512 = vpop.f32.mrb[0].mxu0
        %6513 = vmatprep.mubr.f32.mxu0 0.0
        %6514 = vmatmul.mubr.f32.gmra.mrb[0].mxu0 %v4963
        %v6515 = vpop.f32.mrb[0].mxu0
        %v6516 = vpop.f32.mrb[0].mxu0
        %6517 = vmatprep.mubr.f32.mxu0 0.0
        %6518 = vmatmul.mubr.f32.gmra.mrb[0].mxu0 %v4964
        %v6519 = vpop.f32.mrb[0].mxu0
        %v6520 = vadd.f32 0.0, %v6519
        %v6521 = vpop.f32.mrb[0].mxu0
        %6522 = vmatprep.mubr.f32.mxu0 0.0
        %6523 = vmatmul.mubr.f32.gmra.mrb[0].mxu0 %v4965
        %v6524 = vpop.f32.mrb[0].mxu0
        %v6525 = vadd.f32 0.0, %v6524
        %v6526 = vpop.f32.mrb[0].mxu0
        %6527 = vmatprep.mubr.f32.mxu0 0.0
        %6528 = vmatmul.mubr.f32.gmra.mrb[0].mxu0 %v4966
        %v6529 = vpop.f32.mrb[0].mxu0
        %v6530 = vpop.f32.mrb[0].mxu0
        %6531 = vmatprep.mubr.f32.mxu0 0.0
        %6532 = vmatmul.mubr.f32.gmra.mrb[0].mxu0 %v4967
        %v6533 = vpop.f32.mrb[0].mxu0
        %v6534 = vadd.f32 0.0, %v6533
        %v6535 = vpop.f32.mrb[0].mxu0
        %6536 = vmatprep.mubr.f32.mxu0 0.0
        %6537 = vmatmul.mubr.f32.gmra.mrb[0].mxu0 %v4968
        %v6538 = vpop.f32.mrb[0].mxu0
        %v6539 = vadd.f32 0.0, %v6538
        %v6540 = vpop.f32.mrb[0].mxu0
        %6541 = vmatprep.mubr.f32.mxu0 0.0
        %6542 = vmatmul.mubr.f32.gmra.mrb[0].mxu0 %v4969
        %v6543 = vpop.f32.mrb[0].mxu0
        %v6544 = vpop.f32.mrb[0].mxu0
        %6545 = vmatprep.mubr.f32.mxu0 0.0
        %6546 = vmatmul.mubr.f32.gmra.mrb[0].mxu0 %v4970
        %v6547 = vpop.f32.mrb[0].mxu0
        %v6548 = vadd.f32 0.0, %v6547
        %v6549 = vpop.f32.mrb[0].mxu0
        %6550 = vmatprep.mubr.f32.mxu0 0.0
        %6551 = vmatmul.mubr.f32.gmra.mrb[0].mxu0 %v4971
        %v6552 = vpop.f32.mrb[0].mxu0
        %v6553 = vadd.f32 0.0, %v6552
        %v6554 = vpop.f32.mrb[0].mxu0
        %6555 = vmatprep.mubr.f32.mxu0 0.0
        %6556 = vmatmul.mubr.f32.gmra.mrb[0].mxu0 %v4972
        %v6557 = vpop.f32.mrb[0].mxu0
        %v6558 = vpop.f32.mrb[0].mxu0
        %6559 = vmatprep.mubr.f32.mxu0 0.0
        %6560 = vmatmul.mubr.f32.gmra.mrb[0].mxu0 %v4973
        %v6561 = vpop.f32.mrb[0].mxu0
        %v6562 = vadd.f32 0.0, %v6561
        %v6563 = vpop.f32.mrb[0].mxu0
        %6564 = vmatprep.mubr.f32.mxu0 0.0
        %6565 = vmatmul.mubr.f32.gmra.mrb[0].mxu0 %v4974
        %v6566 = vpop.f32.mrb[0].mxu0
        %v6567 = vadd.f32 0.0, %v6566
        %v6568 = vpop.f32.mrb[0].mxu0
        %6569 = vmatprep.mubr.f32.mxu0 0.0
        %6570 = vmatmul.mubr.f32.gmra.mrb[0].mxu0 %v4975
        %v6571 = vpop.f32.mrb[0].mxu0
        %v6572 = vpop.f32.mrb[0].mxu0
        %6573 = vdwg.mxu0
        %v6574 = vadd.f32 %v6236, %v6352
        %v6575 = vadd.f32 %v6237, %v6357
        %v6576 = vadd.f32 %v6238, %v6366
        %v6577 = vadd.f32 %v6239, %v6371
        %v6578 = vadd.f32 %v6240, %v6380
        %v6579 = vadd.f32 %v6241, %v6385
        %v6580 = vadd.f32 %v6242, %v6394
        %v6581 = vadd.f32 %v6243, %v6399
        %v6582 = vadd.f32 %v6244, %v6408
        %v6583 = vadd.f32 %v6245, %v6413
        %v6584 = vadd.f32 %v6246, %v6422
        %v6585 = vadd.f32 %v6247, %v6427
        %v6586 = vadd.f32 %v6248, %v6436
        %v6587 = vadd.f32 %v6249, %v6441
        %v6588 = vadd.f32 %v6250, %v6450
        %v6589 = vadd.f32 %v6251, %v6455
        %v6590 = vadd.f32 %v6252, %v6464
        %v6591 = vadd.f32 %v6253, %v6469
        %v6592 = vadd.f32 %v6254, %v6478
        %v6593 = vadd.f32 %v6255, %v6483
        %v6594 = vadd.f32 %v6256, %v6492
        %v6595 = vadd.f32 %v6257, %v6497
        %v6596 = vadd.f32 %v6258, %v6506
        %v6597 = vadd.f32 %v6259, %v6511
        %v6598 = vadd.f32 %v6260, %v6520
        %v6599 = vadd.f32 %v6261, %v6525
        %v6600 = vadd.f32 %v6262, %v6534
        %v6601 = vadd.f32 %v6263, %v6539
        %v6602 = vadd.f32 %v6264, %v6548
        %v6603 = vadd.f32 %v6265, %v6553
        %v6604 = vadd.f32 %v6266, %v6562
        %v6605 = vadd.f32 %v6267, %v6567
        %s6606 = scalar_lea.vmem [#allocation7], 512
        %v6607 = vld [vmem:[%s6606] sm:$0xff]
        %v6608 = vld [vmem:[%s6606 + $0x8] sm:$0xff]
        %v6609 = vld [vmem:[%s6606 + $0x10] sm:$0xff]
        %v6610 = vld [vmem:[%s6606 + $0x18] sm:$0xff]
        %v6611 = vld [vmem:[%s6606 + $0x20] sm:$0xff]
        %v6612 = vld [vmem:[%s6606 + $0x28] sm:$0xff]
        %v6613 = vld [vmem:[%s6606 + $0x30] sm:$0xff]
        %v6614 = vld [vmem:[%s6606 + $0x38] sm:$0xff]
        %v6615 = vld [vmem:[%s6606 + $0x40] sm:$0xff]
        %v6616 = vld [vmem:[%s6606 + $0x48] sm:$0xff]
        %v6617 = vld [vmem:[%s6606 + $0x50] sm:$0xff]
        %v6618 = vld [vmem:[%s6606 + $0x58] sm:$0xff]
        %v6619 = vld [vmem:[%s6606 + $0x60] sm:$0xff]
        %v6620 = vld [vmem:[%s6606 + $0x68] sm:$0xff]
        %v6621 = vld [vmem:[%s6606 + $0x70] sm:$0xff]
        %v6622 = vld [vmem:[%s6606 + $0x78] sm:$0xff]
        %v6626 = vrot.slane %v4974, 1
        %v6627 = vsel %vm454, %v5157, %v6626
        %v6628 = vrot.slane %v4975, 1
        %v6629 = vsel %vm454, %v6626, %v6628
        %v6630 = vrot.slane %v4976, 1
        %v6631 = vsel %vm454, %v6628, %v6630
        %6635 = vmatprep.subr.mxu0 0.0
        %6636 = vmatpush1.msra.mxu0 %v6607
        %6637 = vmatprep.subr.mxu0 0.0
        %6638 = vmatpush1.msra.mxu0 %v6608
        %6639 = vmatprep.subr.mxu0 0.0
        %6640 = vmatpush1.msra.mxu0 %v6609
        %6641 = vmatprep.subr.mxu0 0.0
        %6642 = vmatpush1.msra.mxu0 %v6610
        %6643 = vmatprep.subr.mxu0 0.0
        %6644 = vmatpush1.msra.mxu0 %v6611
        %6645 = vmatprep.subr.mxu0 0.0
        %6646 = vmatpush1.msra.mxu0 %v6612
        %6647 = vmatprep.subr.mxu0 0.0
        %6648 = vmatpush1.msra.mxu0 %v6613
        %6649 = vmatprep.subr.mxu0 0.0
        %6650 = vmatpush1.msra.mxu0 %v6614
        %6651 = vmatprep.subr.mxu0 0.0
        %6652 = vmatpush1.msra.mxu0 %v6615
        %6653 = vmatprep.subr.mxu0 0.0
        %6654 = vmatpush1.msra.mxu0 %v6616
        %6655 = vmatprep.subr.mxu0 0.0
        %6656 = vmatpush1.msra.mxu0 %v6617
        %6657 = vmatprep.subr.mxu0 0.0
        %6658 = vmatpush1.msra.mxu0 %v6618
        %6659 = vmatprep.subr.mxu0 0.0
        %6660 = vmatpush1.msra.mxu0 %v6619
        %6661 = vmatprep.subr.mxu0 0.0
        %6662 = vmatpush1.msra.mxu0 %v6620
        %6663 = vmatprep.subr.mxu0 0.0
        %6664 = vmatpush1.msra.mxu0 %v6621
        %6665 = vmatprep.subr.mxu0 0.0
        %6666 = vmatpush1.msra.mxu0 %v6622
        %6667 = vmatprep.subr.mxu0 0.0
        %6668 = vmatpush1.msra.mxu0 0.0
        %6669 = vmatprep.subr.mxu0 0.0
        %6670 = vmatpush1.msra.mxu0 0.0
        %6671 = vmatprep.subr.mxu0 0.0
        %6672 = vmatpush1.msra.mxu0 0.0
        %6673 = vmatprep.subr.mxu0 0.0
        %6674 = vmatpush1.msra.mxu0 0.0
        %6675 = vmatprep.subr.mxu0 0.0
        %6676 = vmatpush1.msra.mxu0 0.0
        %6677 = vmatprep.subr.mxu0 0.0
        %6678 = vmatpush1.msra.mxu0 0.0
        %6679 = vmatprep.subr.mxu0 0.0
        %6680 = vmatpush1.msra.mxu0 0.0
        %6681 = vmatprep.subr.mxu0 0.0
        %6682 = vmatpush1.msra.mxu0 0.0
        %6683 = vmatprep.subr.mxu0 0.0
        %6684 = vmatpush1.msra.mxu0 0.0
        %6685 = vmatprep.subr.mxu0 0.0
        %6686 = vmatpush1.msra.mxu0 0.0
        %6687 = vmatprep.subr.mxu0 0.0
        %6688 = vmatpush1.msra.mxu0 0.0
        %6689 = vmatprep.subr.mxu0 0.0
        %6690 = vmatpush1.msra.mxu0 0.0
        %6691 = vmatprep.subr.mxu0 0.0
        %6692 = vmatpush1.msra.mxu0 0.0
        %6693 = vmatprep.subr.mxu0 0.0
        %6694 = vmatpush1.msra.mxu0 0.0
        %6695 = vmatprep.subr.mxu0 0.0
        %6696 = vmatpush1.msra.mxu0 0.0
        %6697 = vmatprep.subr.mxu0 0.0
        %6698 = vmatpush1.msra.mxu0 0.0
        %6699 = vmatprep.mubr.f32.mxu0 0.0
        %6700 = vmatmul.mubr.f32.gmra.mrb[0].mxu0 %v5070
        %v6701 = vpop.f32.mrb[0].mxu0
        %v6702 = vadd.f32 0.0, %v6701
        %v6703 = vpop.f32.mrb[0].mxu0
        %6704 = vmatprep.mubr.f32.mxu0 0.0
        %6705 = vmatmul.mubr.f32.gmra.mrb[0].mxu0 %v5072
        %v6706 = vpop.f32.mrb[0].mxu0
        %v6707 = vadd.f32 0.0, %v6706
        %v6708 = vpop.f32.mrb[0].mxu0
        %6709 = vmatprep.mubr.f32.mxu0 0.0
        %6710 = vmatmul.mubr.f32.gmra.mrb[0].mxu0 %v5074
        %v6711 = vpop.f32.mrb[0].mxu0
        %v6712 = vpop.f32.mrb[0].mxu0
        %6713 = vmatprep.mubr.f32.mxu0 0.0
        %6714 = vmatmul.mubr.f32.gmra.mrb[0].mxu0 %v5076
        %v6715 = vpop.f32.mrb[0].mxu0
        %v6716 = vadd.f32 0.0, %v6715
        %v6717 = vpop.f32.mrb[0].mxu0
        %6718 = vmatprep.mubr.f32.mxu0 0.0
        %6719 = vmatmul.mubr.f32.gmra.mrb[0].mxu0 %v5078
        %v6720 = vpop.f32.mrb[0].mxu0
        %v6721 = vadd.f32 0.0, %v6720
        %v6722 = vpop.f32.mrb[0].mxu0
        %6723 = vmatprep.mubr.f32.mxu0 0.0
        %6724 = vmatmul.mubr.f32.gmra.mrb[0].mxu0 %v5080
        %v6725 = vpop.f32.mrb[0].mxu0
        %v6726 = vpop.f32.mrb[0].mxu0
        %6727 = vmatprep.mubr.f32.mxu0 0.0
        %6728 = vmatmul.mubr.f32.gmra.mrb[0].mxu0 %v5082
        %v6729 = vpop.f32.mrb[0].mxu0
        %v6730 = vadd.f32 0.0, %v6729
        %v6731 = vpop.f32.mrb[0].mxu0
        %6732 = vmatprep.mubr.f32.mxu0 0.0
        %6733 = vmatmul.mubr.f32.gmra.mrb[0].mxu0 %v5084
        %v6734 = vpop.f32.mrb[0].mxu0
        %v6735 = vadd.f32 0.0, %v6734
        %v6736 = vpop.f32.mrb[0].mxu0
        %6737 = vmatprep.mubr.f32.mxu0 0.0
        %6738 = vmatmul.mubr.f32.gmra.mrb[0].mxu0 %v5086
        %v6739 = vpop.f32.mrb[0].mxu0
        %v6740 = vpop.f32.mrb[0].mxu0
        %6741 = vmatprep.mubr.f32.mxu0 0.0
        %6742 = vmatmul.mubr.f32.gmra.mrb[0].mxu0 %v5088
        %v6743 = vpop.f32.mrb[0].mxu0
        %v6744 = vadd.f32 0.0, %v6743
        %v6745 = vpop.f32.mrb[0].mxu0
        %6746 = vmatprep.mubr.f32.mxu0 0.0
        %6747 = vmatmul.mubr.f32.gmra.mrb[0].mxu0 %v5090
        %v6748 = vpop.f32.mrb[0].mxu0
        %v6749 = vadd.f32 0.0, %v6748
        %v6750 = vpop.f32.mrb[0].mxu0
        %6751 = vmatprep.mubr.f32.mxu0 0.0
        %6752 = vmatmul.mubr.f32.gmra.mrb[0].mxu0 %v5092
        %v6753 = vpop.f32.mrb[0].mxu0
        %v6754 = vpop.f32.mrb[0].mxu0
        %6755 = vmatprep.mubr.f32.mxu0 0.0
        %6756 = vmatmul.mubr.f32.gmra.mrb[0].mxu0 %v5094
        %v6757 = vpop.f32.mrb[0].mxu0
        %v6758 = vadd.f32 0.0, %v6757
        %v6759 = vpop.f32.mrb[0].mxu0
        %6760 = vmatprep.mubr.f32.mxu0 0.0
        %6761 = vmatmul.mubr.f32.gmra.mrb[0].mxu0 %v5096
        %v6762 = vpop.f32.mrb[0].mxu0
        %v6763 = vadd.f32 0.0, %v6762
        %v6764 = vpop.f32.mrb[0].mxu0
        %6765 = vmatprep.mubr.f32.mxu0 0.0
        %6766 = vmatmul.mubr.f32.gmra.mrb[0].mxu0 %v5098
        %v6767 = vpop.f32.mrb[0].mxu0
        %v6768 = vpop.f32.mrb[0].mxu0
        %6769 = vmatprep.mubr.f32.mxu0 0.0
        %6770 = vmatmul.mubr.f32.gmra.mrb[0].mxu0 %v5100
        %v6771 = vpop.f32.mrb[0].mxu0
        %v6772 = vadd.f32 0.0, %v6771
        %v6773 = vpop.f32.mrb[0].mxu0
        %6774 = vmatprep.mubr.f32.mxu0 0.0
        %6775 = vmatmul.mubr.f32.gmra.mrb[0].mxu0 %v5102
        %v6776 = vpop.f32.mrb[0].mxu0
        %v6777 = vadd.f32 0.0, %v6776
        %v6778 = vpop.f32.mrb[0].mxu0
        %6779 = vmatprep.mubr.f32.mxu0 0.0
        %6780 = vmatmul.mubr.f32.gmra.mrb[0].mxu0 %v5104
        %v6781 = vpop.f32.mrb[0].mxu0
        %v6782 = vpop.f32.mrb[0].mxu0
        %6783 = vmatprep.mubr.f32.mxu0 0.0
        %6784 = vmatmul.mubr.f32.gmra.mrb[0].mxu0 %v5106
        %v6785 = vpop.f32.mrb[0].mxu0
        %v6786 = vadd.f32 0.0, %v6785
        %v6787 = vpop.f32.mrb[0].mxu0
        %6788 = vmatprep.mubr.f32.mxu0 0.0
        %6789 = vmatmul.mubr.f32.gmra.mrb[0].mxu0 %v5108
        %v6790 = vpop.f32.mrb[0].mxu0
        %v6791 = vadd.f32 0.0, %v6790
        %v6792 = vpop.f32.mrb[0].mxu0
        %6793 = vmatprep.mubr.f32.mxu0 0.0
        %6794 = vmatmul.mubr.f32.gmra.mrb[0].mxu0 %v5110
        %v6795 = vpop.f32.mrb[0].mxu0
        %v6796 = vpop.f32.mrb[0].mxu0
        %6797 = vmatprep.mubr.f32.mxu0 0.0
        %6798 = vmatmul.mubr.f32.gmra.mrb[0].mxu0 %v5112
        %v6799 = vpop.f32.mrb[0].mxu0
        %v6800 = vadd.f32 0.0, %v6799
        %v6801 = vpop.f32.mrb[0].mxu0
        %6802 = vmatprep.mubr.f32.mxu0 0.0
        %6803 = vmatmul.mubr.f32.gmra.mrb[0].mxu0 %v5114
        %v6804 = vpop.f32.mrb[0].mxu0
        %v6805 = vadd.f32 0.0, %v6804
        %v6806 = vpop.f32.mrb[0].mxu0
        %6807 = vmatprep.mubr.f32.mxu0 0.0
        %6808 = vmatmul.mubr.f32.gmra.mrb[0].mxu0 %v5116
        %v6809 = vpop.f32.mrb[0].mxu0
        %v6810 = vpop.f32.mrb[0].mxu0
        %6811 = vmatprep.mubr.f32.mxu0 0.0
        %6812 = vmatmul.mubr.f32.gmra.mrb[0].mxu0 %v5118
        %v6813 = vpop.f32.mrb[0].mxu0
        %v6814 = vadd.f32 0.0, %v6813
        %v6815 = vpop.f32.mrb[0].mxu0
        %6816 = vmatprep.mubr.f32.mxu0 0.0
        %6817 = vmatmul.mubr.f32.gmra.mrb[0].mxu0 %v5120
        %v6818 = vpop.f32.mrb[0].mxu0
        %v6819 = vadd.f32 0.0, %v6818
        %v6820 = vpop.f32.mrb[0].mxu0
        %6821 = vmatprep.mubr.f32.mxu0 0.0
        %6822 = vmatmul.mubr.f32.gmra.mrb[0].mxu0 %v5122
        %v6823 = vpop.f32.mrb[0].mxu0
        %v6824 = vpop.f32.mrb[0].mxu0
        %6825 = vmatprep.mubr.f32.mxu0 0.0
        %6826 = vmatmul.mubr.f32.gmra.mrb[0].mxu0 %v5124
        %v6827 = vpop.f32.mrb[0].mxu0
        %v6828 = vadd.f32 0.0, %v6827
        %v6829 = vpop.f32.mrb[0].mxu0
        %6830 = vmatprep.mubr.f32.mxu0 0.0
        %6831 = vmatmul.mubr.f32.gmra.mrb[0].mxu0 %v5126
        %v6832 = vpop.f32.mrb[0].mxu0
        %v6833 = vadd.f32 0.0, %v6832
        %v6834 = vpop.f32.mrb[0].mxu0
        %6835 = vmatprep.mubr.f32.mxu0 0.0
        %6836 = vmatmul.mubr.f32.gmra.mrb[0].mxu0 %v5128
        %v6837 = vpop.f32.mrb[0].mxu0
        %v6838 = vpop.f32.mrb[0].mxu0
        %6839 = vmatprep.mubr.f32.mxu0 0.0
        %6840 = vmatmul.mubr.f32.gmra.mrb[0].mxu0 %v5130
        %v6841 = vpop.f32.mrb[0].mxu0
        %v6842 = vadd.f32 0.0, %v6841
        %v6843 = vpop.f32.mrb[0].mxu0
        %6844 = vmatprep.mubr.f32.mxu0 0.0
        %6845 = vmatmul.mubr.f32.gmra.mrb[0].mxu0 %v5132
        %v6846 = vpop.f32.mrb[0].mxu0
        %v6847 = vadd.f32 0.0, %v6846
        %v6848 = vpop.f32.mrb[0].mxu0
        %6849 = vmatprep.mubr.f32.mxu0 0.0
        %6850 = vmatmul.mubr.f32.gmra.mrb[0].mxu0 %v5134
        %v6851 = vpop.f32.mrb[0].mxu0
        %v6852 = vpop.f32.mrb[0].mxu0
        %6853 = vmatprep.mubr.f32.mxu0 0.0
        %6854 = vmatmul.mubr.f32.gmra.mrb[0].mxu0 %v5136
        %v6855 = vpop.f32.mrb[0].mxu0
        %v6856 = vadd.f32 0.0, %v6855
        %v6857 = vpop.f32.mrb[0].mxu0
        %6858 = vmatprep.mubr.f32.mxu0 0.0
        %6859 = vmatmul.mubr.f32.gmra.mrb[0].mxu0 %v5138
        %v6860 = vpop.f32.mrb[0].mxu0
        %v6861 = vadd.f32 0.0, %v6860
        %v6862 = vpop.f32.mrb[0].mxu0
        %6863 = vmatprep.mubr.f32.mxu0 0.0
        %6864 = vmatmul.mubr.f32.gmra.mrb[0].mxu0 %v5140
        %v6865 = vpop.f32.mrb[0].mxu0
        %v6866 = vpop.f32.mrb[0].mxu0
        %6867 = vmatprep.mubr.f32.mxu0 0.0
        %6868 = vmatmul.mubr.f32.gmra.mrb[0].mxu0 %v5142
        %v6869 = vpop.f32.mrb[0].mxu0
        %v6870 = vadd.f32 0.0, %v6869
        %v6871 = vpop.f32.mrb[0].mxu0
        %6872 = vmatprep.mubr.f32.mxu0 0.0
        %6873 = vmatmul.mubr.f32.gmra.mrb[0].mxu0 %v5144
        %v6874 = vpop.f32.mrb[0].mxu0
        %v6875 = vadd.f32 0.0, %v6874
        %v6876 = vpop.f32.mrb[0].mxu0
        %6877 = vmatprep.mubr.f32.mxu0 0.0
        %6878 = vmatmul.mubr.f32.gmra.mrb[0].mxu0 %v5146
        %v6879 = vpop.f32.mrb[0].mxu0
        %v6880 = vpop.f32.mrb[0].mxu0
        %6881 = vmatprep.mubr.f32.mxu0 0.0
        %6882 = vmatmul.mubr.f32.gmra.mrb[0].mxu0 %v5148
        %v6883 = vpop.f32.mrb[0].mxu0
        %v6884 = vadd.f32 0.0, %v6883
        %v6885 = vpop.f32.mrb[0].mxu0
        %6886 = vmatprep.mubr.f32.mxu0 0.0
        %6887 = vmatmul.mubr.f32.gmra.mrb[0].mxu0 %v5150
        %v6888 = vpop.f32.mrb[0].mxu0
        %v6889 = vadd.f32 0.0, %v6888
        %v6890 = vpop.f32.mrb[0].mxu0
        %6891 = vmatprep.mubr.f32.mxu0 0.0
        %6892 = vmatmul.mubr.f32.gmra.mrb[0].mxu0 %v5152
        %v6893 = vpop.f32.mrb[0].mxu0
        %v6894 = vpop.f32.mrb[0].mxu0
        %6895 = vmatprep.mubr.f32.mxu0 0.0
        %6896 = vmatmul.mubr.f32.gmra.mrb[0].mxu0 %v5154
        %v6897 = vpop.f32.mrb[0].mxu0
        %v6898 = vadd.f32 0.0, %v6897
        %v6899 = vpop.f32.mrb[0].mxu0
        %6900 = vmatprep.mubr.f32.mxu0 0.0
        %6901 = vmatmul.mubr.f32.gmra.mrb[0].mxu0 %v5156
        %v6902 = vpop.f32.mrb[0].mxu0
        %v6903 = vadd.f32 0.0, %v6902
        %v6904 = vpop.f32.mrb[0].mxu0
        %6905 = vmatprep.mubr.f32.mxu0 0.0
        %6906 = vmatmul.mubr.f32.gmra.mrb[0].mxu0 %v5158
        %v6907 = vpop.f32.mrb[0].mxu0
        %v6908 = vpop.f32.mrb[0].mxu0
        %6909 = vmatprep.mubr.f32.mxu0 0.0
        %6910 = vmatmul.mubr.f32.gmra.mrb[0].mxu0 %v6627
        %v6911 = vpop.f32.mrb[0].mxu0
        %v6912 = vadd.f32 0.0, %v6911
        %v6913 = vpop.f32.mrb[0].mxu0
        %6914 = vmatprep.mubr.f32.mxu0 0.0
        %6915 = vmatmul.mubr.f32.gmra.mrb[0].mxu0 %v6629
        %v6916 = vpop.f32.mrb[0].mxu0
        %v6917 = vadd.f32 0.0, %v6916
        %v6918 = vpop.f32.mrb[0].mxu0
        %6919 = vmatprep.mubr.f32.mxu0 0.0
        %6920 = vmatmul.mubr.f32.gmra.mrb[0].mxu0 %v6631
        %v6921 = vpop.f32.mrb[0].mxu0
        %v6922 = vpop.f32.mrb[0].mxu0
        %6923 = vdwg.mxu0
        %v6924 = vadd.f32 %v6574, %v6702
        %v6925 = vadd.f32 %v6575, %v6707
        %v6926 = vadd.f32 %v6576, %v6716
        %v6927 = vadd.f32 %v6577, %v6721
        %v6928 = vadd.f32 %v6578, %v6730
        %v6929 = vadd.f32 %v6579, %v6735
        %v6930 = vadd.f32 %v6580, %v6744
        %v6931 = vadd.f32 %v6581, %v6749
        %v6932 = vadd.f32 %v6582, %v6758
        %v6933 = vadd.f32 %v6583, %v6763
        %v6934 = vadd.f32 %v6584, %v6772
        %v6935 = vadd.f32 %v6585, %v6777
        %v6936 = vadd.f32 %v6586, %v6786
        %v6937 = vadd.f32 %v6587, %v6791
        %v6938 = vadd.f32 %v6588, %v6800
        %v6939 = vadd.f32 %v6589, %v6805
        %v6940 = vadd.f32 %v6590, %v6814
        %v6941 = vadd.f32 %v6591, %v6819
        %v6942 = vadd.f32 %v6592, %v6828
        %v6943 = vadd.f32 %v6593, %v6833
        %v6944 = vadd.f32 %v6594, %v6842
        %v6945 = vadd.f32 %v6595, %v6847
        %v6946 = vadd.f32 %v6596, %v6856
        %v6947 = vadd.f32 %v6597, %v6861
        %v6948 = vadd.f32 %v6598, %v6870
        %v6949 = vadd.f32 %v6599, %v6875
        %v6950 = vadd.f32 %v6600, %v6884
        %v6951 = vadd.f32 %v6601, %v6889
        %v6952 = vadd.f32 %v6602, %v6898
        %v6953 = vadd.f32 %v6603, %v6903
        %v6954 = vadd.f32 %v6604, %v6912
        %v6955 = vadd.f32 %v6605, %v6917
        %s6956 = scalar_lea.vmem [#allocation7], 640
        %v6957 = vld [vmem:[%s6956] sm:$0xff]
        %v6958 = vld [vmem:[%s6956 + $0x8] sm:$0xff]
        %v6959 = vld [vmem:[%s6956 + $0x10] sm:$0xff]
        %v6960 = vld [vmem:[%s6956 + $0x18] sm:$0xff]
        %v6961 = vld [vmem:[%s6956 + $0x20] sm:$0xff]
        %v6962 = vld [vmem:[%s6956 + $0x28] sm:$0xff]
        %v6963 = vld [vmem:[%s6956 + $0x30] sm:$0xff]
        %v6964 = vld [vmem:[%s6956 + $0x38] sm:$0xff]
        %v6965 = vld [vmem:[%s6956 + $0x40] sm:$0xff]
        %v6966 = vld [vmem:[%s6956 + $0x48] sm:$0xff]
        %v6967 = vld [vmem:[%s6956 + $0x50] sm:$0xff]
        %v6968 = vld [vmem:[%s6956 + $0x58] sm:$0xff]
        %v6969 = vld [vmem:[%s6956 + $0x60] sm:$0xff]
        %v6970 = vld [vmem:[%s6956 + $0x68] sm:$0xff]
        %v6971 = vld [vmem:[%s6956 + $0x70] sm:$0xff]
        %v6972 = vld [vmem:[%s6956 + $0x78] sm:$0xff]
        %v6973 = vrot.slane %v4974, 2
        %v6974 = vsel %vm1340, %v5897, %v6973
        %v6975 = vrot.slane %v4975, 2
        %v6976 = vsel %vm1340, %v6973, %v6975
        %v6977 = vrot.slane %v4976, 2
        %v6978 = vsel %vm1340, %v6975, %v6977
        %6982 = vmatprep.subr.mxu0 0.0
        %6983 = vmatpush1.msra.mxu0 %v6957
        %6984 = vmatprep.subr.mxu0 0.0
        %6985 = vmatpush1.msra.mxu0 %v6958
        %6986 = vmatprep.subr.mxu0 0.0
        %6987 = vmatpush1.msra.mxu0 %v6959
        %6988 = vmatprep.subr.mxu0 0.0
        %6989 = vmatpush1.msra.mxu0 %v6960
        %6990 = vmatprep.subr.mxu0 0.0
        %6991 = vmatpush1.msra.mxu0 %v6961
        %6992 = vmatprep.subr.mxu0 0.0
        %6993 = vmatpush1.msra.mxu0 %v6962
        %6994 = vmatprep.subr.mxu0 0.0
        %6995 = vmatpush1.msra.mxu0 %v6963
        %6996 = vmatprep.subr.mxu0 0.0
        %6997 = vmatpush1.msra.mxu0 %v6964
        %6998 = vmatprep.subr.mxu0 0.0
        %6999 = vmatpush1.msra.mxu0 %v6965
        %7000 = vmatprep.subr.mxu0 0.0
        %7001 = vmatpush1.msra.mxu0 %v6966
        %7002 = vmatprep.subr.mxu0 0.0
        %7003 = vmatpush1.msra.mxu0 %v6967
        %7004 = vmatprep.subr.mxu0 0.0
        %7005 = vmatpush1.msra.mxu0 %v6968
        %7006 = vmatprep.subr.mxu0 0.0
        %7007 = vmatpush1.msra.mxu0 %v6969
        %7008 = vmatprep.subr.mxu0 0.0
        %7009 = vmatpush1.msra.mxu0 %v6970
        %7010 = vmatprep.subr.mxu0 0.0
        %7011 = vmatpush1.msra.mxu0 %v6971
        %7012 = vmatprep.subr.mxu0 0.0
        %7013 = vmatpush1.msra.mxu0 %v6972
        %7014 = vmatprep.subr.mxu0 0.0
        %7015 = vmatpush1.msra.mxu0 0.0
        %7016 = vmatprep.subr.mxu0 0.0
        %7017 = vmatpush1.msra.mxu0 0.0
        %7018 = vmatprep.subr.mxu0 0.0
        %7019 = vmatpush1.msra.mxu0 0.0
        %7020 = vmatprep.subr.mxu0 0.0
        %7021 = vmatpush1.msra.mxu0 0.0
        %7022 = vmatprep.subr.mxu0 0.0
        %7023 = vmatpush1.msra.mxu0 0.0
        %7024 = vmatprep.subr.mxu0 0.0
        %7025 = vmatpush1.msra.mxu0 0.0
        %7026 = vmatprep.subr.mxu0 0.0
        %7027 = vmatpush1.msra.mxu0 0.0
        %7028 = vmatprep.subr.mxu0 0.0
        %7029 = vmatpush1.msra.mxu0 0.0
        %7030 = vmatprep.subr.mxu0 0.0
        %7031 = vmatpush1.msra.mxu0 0.0
        %7032 = vmatprep.subr.mxu0 0.0
        %7033 = vmatpush1.msra.mxu0 0.0
        %7034 = vmatprep.subr.mxu0 0.0
        %7035 = vmatpush1.msra.mxu0 0.0
        %7036 = vmatprep.subr.mxu0 0.0
        %7037 = vmatpush1.msra.mxu0 0.0
        %7038 = vmatprep.subr.mxu0 0.0
        %7039 = vmatpush1.msra.mxu0 0.0
        %7040 = vmatprep.subr.mxu0 0.0
        %7041 = vmatpush1.msra.mxu0 0.0
        %7042 = vmatprep.subr.mxu0 0.0
        %7043 = vmatpush1.msra.mxu0 0.0
        %7044 = vmatprep.subr.mxu0 0.0
        %7045 = vmatpush1.msra.mxu0 0.0
        %7046 = vmatprep.mubr.f32.mxu0 0.0
        %7047 = vmatmul.mubr.f32.gmra.mrb[0].mxu0 %v5810
        %v7048 = vpop.f32.mrb[0].mxu0
        %v7049 = vadd.f32 0.0, %v7048
        %v7050 = vpop.f32.mrb[0].mxu0
        %7051 = vmatprep.mubr.f32.mxu0 0.0
        %7052 = vmatmul.mubr.f32.gmra.mrb[0].mxu0 %v5812
        %v7053 = vpop.f32.mrb[0].mxu0
        %v7054 = vadd.f32 0.0, %v7053
        %v7055 = vpop.f32.mrb[0].mxu0
        %7056 = vmatprep.mubr.f32.mxu0 0.0
        %7057 = vmatmul.mubr.f32.gmra.mrb[0].mxu0 %v5814
        %v7058 = vpop.f32.mrb[0].mxu0
        %v7059 = vpop.f32.mrb[0].mxu0
        %7060 = vmatprep.mubr.f32.mxu0 0.0
        %7061 = vmatmul.mubr.f32.gmra.mrb[0].mxu0 %v5816
        %v7062 = vpop.f32.mrb[0].mxu0
        %v7063 = vadd.f32 0.0, %v7062
        %v7064 = vpop.f32.mrb[0].mxu0
        %7065 = vmatprep.mubr.f32.mxu0 0.0
        %7066 = vmatmul.mubr.f32.gmra.mrb[0].mxu0 %v5818
        %v7067 = vpop.f32.mrb[0].mxu0
        %v7068 = vadd.f32 0.0, %v7067
        %v7069 = vpop.f32.mrb[0].mxu0
        %7070 = vmatprep.mubr.f32.mxu0 0.0
        %7071 = vmatmul.mubr.f32.gmra.mrb[0].mxu0 %v5820
        %v7072 = vpop.f32.mrb[0].mxu0
        %v7073 = vpop.f32.mrb[0].mxu0
        %7074 = vmatprep.mubr.f32.mxu0 0.0
        %7075 = vmatmul.mubr.f32.gmra.mrb[0].mxu0 %v5822
        %v7076 = vpop.f32.mrb[0].mxu0
        %v7077 = vadd.f32 0.0, %v7076
        %v7078 = vpop.f32.mrb[0].mxu0
        %7079 = vmatprep.mubr.f32.mxu0 0.0
        %7080 = vmatmul.mubr.f32.gmra.mrb[0].mxu0 %v5824
        %v7081 = vpop.f32.mrb[0].mxu0
        %v7082 = vadd.f32 0.0, %v7081
        %v7083 = vpop.f32.mrb[0].mxu0
        %7084 = vmatprep.mubr.f32.mxu0 0.0
        %7085 = vmatmul.mubr.f32.gmra.mrb[0].mxu0 %v5826
        %v7086 = vpop.f32.mrb[0].mxu0
        %v7087 = vpop.f32.mrb[0].mxu0
        %7088 = vmatprep.mubr.f32.mxu0 0.0
        %7089 = vmatmul.mubr.f32.gmra.mrb[0].mxu0 %v5828
        %v7090 = vpop.f32.mrb[0].mxu0
        %v7091 = vadd.f32 0.0, %v7090
        %v7092 = vpop.f32.mrb[0].mxu0
        %7093 = vmatprep.mubr.f32.mxu0 0.0
        %7094 = vmatmul.mubr.f32.gmra.mrb[0].mxu0 %v5830
        %v7095 = vpop.f32.mrb[0].mxu0
        %v7096 = vadd.f32 0.0, %v7095
        %v7097 = vpop.f32.mrb[0].mxu0
        %7098 = vmatprep.mubr.f32.mxu0 0.0
        %7099 = vmatmul.mubr.f32.gmra.mrb[0].mxu0 %v5832
        %v7100 = vpop.f32.mrb[0].mxu0
        %v7101 = vpop.f32.mrb[0].mxu0
        %7102 = vmatprep.mubr.f32.mxu0 0.0
        %7103 = vmatmul.mubr.f32.gmra.mrb[0].mxu0 %v5834
        %v7104 = vpop.f32.mrb[0].mxu0
        %v7105 = vadd.f32 0.0, %v7104
        %v7106 = vpop.f32.mrb[0].mxu0
        %7107 = vmatprep.mubr.f32.mxu0 0.0
        %7108 = vmatmul.mubr.f32.gmra.mrb[0].mxu0 %v5836
        %v7109 = vpop.f32.mrb[0].mxu0
        %v7110 = vadd.f32 0.0, %v7109
        %v7111 = vpop.f32.mrb[0].mxu0
        %7112 = vmatprep.mubr.f32.mxu0 0.0
        %7113 = vmatmul.mubr.f32.gmra.mrb[0].mxu0 %v5838
        %v7114 = vpop.f32.mrb[0].mxu0
        %v7115 = vpop.f32.mrb[0].mxu0
        %7116 = vmatprep.mubr.f32.mxu0 0.0
        %7117 = vmatmul.mubr.f32.gmra.mrb[0].mxu0 %v5840
        %v7118 = vpop.f32.mrb[0].mxu0
        %v7119 = vadd.f32 0.0, %v7118
        %v7120 = vpop.f32.mrb[0].mxu0
        %7121 = vmatprep.mubr.f32.mxu0 0.0
        %7122 = vmatmul.mubr.f32.gmra.mrb[0].mxu0 %v5842
        %v7123 = vpop.f32.mrb[0].mxu0
        %v7124 = vadd.f32 0.0, %v7123
        %v7125 = vpop.f32.mrb[0].mxu0
        %7126 = vmatprep.mubr.f32.mxu0 0.0
        %7127 = vmatmul.mubr.f32.gmra.mrb[0].mxu0 %v5844
        %v7128 = vpop.f32.mrb[0].mxu0
        %v7129 = vpop.f32.mrb[0].mxu0
        %7130 = vmatprep.mubr.f32.mxu0 0.0
        %7131 = vmatmul.mubr.f32.gmra.mrb[0].mxu0 %v5846
        %v7132 = vpop.f32.mrb[0].mxu0
        %v7133 = vadd.f32 0.0, %v7132
        %v7134 = vpop.f32.mrb[0].mxu0
        %7135 = vmatprep.mubr.f32.mxu0 0.0
        %7136 = vmatmul.mubr.f32.gmra.mrb[0].mxu0 %v5848
        %v7137 = vpop.f32.mrb[0].mxu0
        %v7138 = vadd.f32 0.0, %v7137
        %v7139 = vpop.f32.mrb[0].mxu0
        %7140 = vmatprep.mubr.f32.mxu0 0.0
        %7141 = vmatmul.mubr.f32.gmra.mrb[0].mxu0 %v5850
        %v7142 = vpop.f32.mrb[0].mxu0
        %v7143 = vpop.f32.mrb[0].mxu0
        %7144 = vmatprep.mubr.f32.mxu0 0.0
        %7145 = vmatmul.mubr.f32.gmra.mrb[0].mxu0 %v5852
        %v7146 = vpop.f32.mrb[0].mxu0
        %v7147 = vadd.f32 0.0, %v7146
        %v7148 = vpop.f32.mrb[0].mxu0
        %7149 = vmatprep.mubr.f32.mxu0 0.0
        %7150 = vmatmul.mubr.f32.gmra.mrb[0].mxu0 %v5854
        %v7151 = vpop.f32.mrb[0].mxu0
        %v7152 = vadd.f32 0.0, %v7151
        %v7153 = vpop.f32.mrb[0].mxu0
        %7154 = vmatprep.mubr.f32.mxu0 0.0
        %7155 = vmatmul.mubr.f32.gmra.mrb[0].mxu0 %v5856
        %v7156 = vpop.f32.mrb[0].mxu0
        %v7157 = vpop.f32.mrb[0].mxu0
        %7158 = vmatprep.mubr.f32.mxu0 0.0
        %7159 = vmatmul.mubr.f32.gmra.mrb[0].mxu0 %v5858
        %v7160 = vpop.f32.mrb[0].mxu0
        %v7161 = vadd.f32 0.0, %v7160
        %v7162 = vpop.f32.mrb[0].mxu0
        %7163 = vmatprep.mubr.f32.mxu0 0.0
        %7164 = vmatmul.mubr.f32.gmra.mrb[0].mxu0 %v5860
        %v7165 = vpop.f32.mrb[0].mxu0
        %v7166 = vadd.f32 0.0, %v7165
        %v7167 = vpop.f32.mrb[0].mxu0
        %7168 = vmatprep.mubr.f32.mxu0 0.0
        %7169 = vmatmul.mubr.f32.gmra.mrb[0].mxu0 %v5862
        %v7170 = vpop.f32.mrb[0].mxu0
        %v7171 = vpop.f32.mrb[0].mxu0
        %7172 = vmatprep.mubr.f32.mxu0 0.0
        %7173 = vmatmul.mubr.f32.gmra.mrb[0].mxu0 %v5864
        %v7174 = vpop.f32.mrb[0].mxu0
        %v7175 = vadd.f32 0.0, %v7174
        %v7176 = vpop.f32.mrb[0].mxu0
        %7177 = vmatprep.mubr.f32.mxu0 0.0
        %7178 = vmatmul.mubr.f32.gmra.mrb[0].mxu0 %v5866
        %v7179 = vpop.f32.mrb[0].mxu0
        %v7180 = vadd.f32 0.0, %v7179
        %v7181 = vpop.f32.mrb[0].mxu0
        %7182 = vmatprep.mubr.f32.mxu0 0.0
        %7183 = vmatmul.mubr.f32.gmra.mrb[0].mxu0 %v5868
        %v7184 = vpop.f32.mrb[0].mxu0
        %v7185 = vpop.f32.mrb[0].mxu0
        %7186 = vmatprep.mubr.f32.mxu0 0.0
        %7187 = vmatmul.mubr.f32.gmra.mrb[0].mxu0 %v5870
        %v7188 = vpop.f32.mrb[0].mxu0
        %v7189 = vadd.f32 0.0, %v7188
        %v7190 = vpop.f32.mrb[0].mxu0
        %7191 = vmatprep.mubr.f32.mxu0 0.0
        %7192 = vmatmul.mubr.f32.gmra.mrb[0].mxu0 %v5872
        %v7193 = vpop.f32.mrb[0].mxu0
        %v7194 = vadd.f32 0.0, %v7193
        %v7195 = vpop.f32.mrb[0].mxu0
        %7196 = vmatprep.mubr.f32.mxu0 0.0
        %7197 = vmatmul.mubr.f32.gmra.mrb[0].mxu0 %v5874
        %v7198 = vpop.f32.mrb[0].mxu0
        %v7199 = vpop.f32.mrb[0].mxu0
        %7200 = vmatprep.mubr.f32.mxu0 0.0
        %7201 = vmatmul.mubr.f32.gmra.mrb[0].mxu0 %v5876
        %v7202 = vpop.f32.mrb[0].mxu0
        %v7203 = vadd.f32 0.0, %v7202
        %v7204 = vpop.f32.mrb[0].mxu0
        %7205 = vmatprep.mubr.f32.mxu0 0.0
        %7206 = vmatmul.mubr.f32.gmra.mrb[0].mxu0 %v5878
        %v7207 = vpop.f32.mrb[0].mxu0
        %v7208 = vadd.f32 0.0, %v7207
        %v7209 = vpop.f32.mrb[0].mxu0
        %7210 = vmatprep.mubr.f32.mxu0 0.0
        %7211 = vmatmul.mubr.f32.gmra.mrb[0].mxu0 %v5880
        %v7212 = vpop.f32.mrb[0].mxu0
        %v7213 = vpop.f32.mrb[0].mxu0
        %7214 = vmatprep.mubr.f32.mxu0 0.0
        %7215 = vmatmul.mubr.f32.gmra.mrb[0].mxu0 %v5882
        %v7216 = vpop.f32.mrb[0].mxu0
        %v7217 = vadd.f32 0.0, %v7216
        %v7218 = vpop.f32.mrb[0].mxu0
        %7219 = vmatprep.mubr.f32.mxu0 0.0
        %7220 = vmatmul.mubr.f32.gmra.mrb[0].mxu0 %v5884
        %v7221 = vpop.f32.mrb[0].mxu0
        %v7222 = vadd.f32 0.0, %v7221
        %v7223 = vpop.f32.mrb[0].mxu0
        %7224 = vmatprep.mubr.f32.mxu0 0.0
        %7225 = vmatmul.mubr.f32.gmra.mrb[0].mxu0 %v5886
        %v7226 = vpop.f32.mrb[0].mxu0
        %v7227 = vpop.f32.mrb[0].mxu0
        %7228 = vmatprep.mubr.f32.mxu0 0.0
        %7229 = vmatmul.mubr.f32.gmra.mrb[0].mxu0 %v5888
        %v7230 = vpop.f32.mrb[0].mxu0
        %v7231 = vadd.f32 0.0, %v7230
        %v7232 = vpop.f32.mrb[0].mxu0
        %7233 = vmatprep.mubr.f32.mxu0 0.0
        %7234 = vmatmul.mubr.f32.gmra.mrb[0].mxu0 %v5890
        %v7235 = vpop.f32.mrb[0].mxu0
        %v7236 = vadd.f32 0.0, %v7235
        %v7237 = vpop.f32.mrb[0].mxu0
        %7238 = vmatprep.mubr.f32.mxu0 0.0
        %7239 = vmatmul.mubr.f32.gmra.mrb[0].mxu0 %v5892
        %v7240 = vpop.f32.mrb[0].mxu0
        %v7241 = vpop.f32.mrb[0].mxu0
        %7242 = vmatprep.mubr.f32.mxu0 0.0
        %7243 = vmatmul.mubr.f32.gmra.mrb[0].mxu0 %v5894
        %v7244 = vpop.f32.mrb[0].mxu0
        %v7245 = vadd.f32 0.0, %v7244
        %v7246 = vpop.f32.mrb[0].mxu0
        %7247 = vmatprep.mubr.f32.mxu0 0.0
        %7248 = vmatmul.mubr.f32.gmra.mrb[0].mxu0 %v5896
        %v7249 = vpop.f32.mrb[0].mxu0
        %v7250 = vadd.f32 0.0, %v7249
        %v7251 = vpop.f32.mrb[0].mxu0
        %7252 = vmatprep.mubr.f32.mxu0 0.0
        %7253 = vmatmul.mubr.f32.gmra.mrb[0].mxu0 %v5898
        %v7254 = vpop.f32.mrb[0].mxu0
        %v7255 = vpop.f32.mrb[0].mxu0
        %7256 = vmatprep.mubr.f32.mxu0 0.0
        %7257 = vmatmul.mubr.f32.gmra.mrb[0].mxu0 %v6974
        %v7258 = vpop.f32.mrb[0].mxu0
        %v7259 = vadd.f32 0.0, %v7258
        %v7260 = vpop.f32.mrb[0].mxu0
        %7261 = vmatprep.mubr.f32.mxu0 0.0
        %7262 = vmatmul.mubr.f32.gmra.mrb[0].mxu0 %v6976
        %v7263 = vpop.f32.mrb[0].mxu0
        %v7264 = vadd.f32 0.0, %v7263
        %v7265 = vpop.f32.mrb[0].mxu0
        %7266 = vmatprep.mubr.f32.mxu0 0.0
        %7267 = vmatmul.mubr.f32.gmra.mrb[0].mxu0 %v6978
        %v7268 = vpop.f32.mrb[0].mxu0
        %v7269 = vpop.f32.mrb[0].mxu0
        %7270 = vdwg.mxu0
        %v7271 = vadd.f32 %v6924, %v7049
        %v7272 = vadd.f32 %v6925, %v7054
        %v7273 = vadd.f32 %v6926, %v7063
        %v7274 = vadd.f32 %v6927, %v7068
        %v7275 = vadd.f32 %v6928, %v7077
        %v7276 = vadd.f32 %v6929, %v7082
        %v7277 = vadd.f32 %v6930, %v7091
        %v7278 = vadd.f32 %v6931, %v7096
        %v7279 = vadd.f32 %v6932, %v7105
        %v7280 = vadd.f32 %v6933, %v7110
        %v7281 = vadd.f32 %v6934, %v7119
        %v7282 = vadd.f32 %v6935, %v7124
        %v7283 = vadd.f32 %v6936, %v7133
        %v7284 = vadd.f32 %v6937, %v7138
        %v7285 = vadd.f32 %v6938, %v7147
        %v7286 = vadd.f32 %v6939, %v7152
        %v7287 = vadd.f32 %v6940, %v7161
        %v7288 = vadd.f32 %v6941, %v7166
        %v7289 = vadd.f32 %v6942, %v7175
        %v7290 = vadd.f32 %v6943, %v7180
        %v7291 = vadd.f32 %v6944, %v7189
        %v7292 = vadd.f32 %v6945, %v7194
        %v7293 = vadd.f32 %v6946, %v7203
        %v7294 = vadd.f32 %v6947, %v7208
        %v7295 = vadd.f32 %v6948, %v7217
        %v7296 = vadd.f32 %v6949, %v7222
        %v7297 = vadd.f32 %v6950, %v7231
        %v7298 = vadd.f32 %v6951, %v7236
        %v7299 = vadd.f32 %v6952, %v7245
        %v7300 = vadd.f32 %v6953, %v7250
        %v7301 = vadd.f32 %v6954, %v7259
        %v7302 = vadd.f32 %v6955, %v7264
        %s7303 = scalar_lea.vmem [#allocation7], 768
        %v7304 = vld [vmem:[%s7303] sm:$0xff]
        %v7305 = vld [vmem:[%s7303 + $0x8] sm:$0xff]
        %v7306 = vld [vmem:[%s7303 + $0x10] sm:$0xff]
        %v7307 = vld [vmem:[%s7303 + $0x18] sm:$0xff]
        %v7308 = vld [vmem:[%s7303 + $0x20] sm:$0xff]
        %v7309 = vld [vmem:[%s7303 + $0x28] sm:$0xff]
        %v7310 = vld [vmem:[%s7303 + $0x30] sm:$0xff]
        %v7311 = vld [vmem:[%s7303 + $0x38] sm:$0xff]
        %v7312 = vld [vmem:[%s7303 + $0x40] sm:$0xff]
        %v7313 = vld [vmem:[%s7303 + $0x48] sm:$0xff]
        %v7314 = vld [vmem:[%s7303 + $0x50] sm:$0xff]
        %v7315 = vld [vmem:[%s7303 + $0x58] sm:$0xff]
        %v7316 = vld [vmem:[%s7303 + $0x60] sm:$0xff]
        %v7317 = vld [vmem:[%s7303 + $0x68] sm:$0xff]
        %v7318 = vld [vmem:[%s7303 + $0x70] sm:$0xff]
        %v7319 = vld [vmem:[%s7303 + $0x78] sm:$0xff]
        %7320 = vmatprep.subr.mxu0 0.0
        %7321 = vmatpush1.msra.mxu0 %v7304
        %7322 = vmatprep.subr.mxu0 0.0
        %7323 = vmatpush1.msra.mxu0 %v7305
        %7324 = vmatprep.subr.mxu0 0.0
        %7325 = vmatpush1.msra.mxu0 %v7306
        %7326 = vmatprep.subr.mxu0 0.0
        %7327 = vmatpush1.msra.mxu0 %v7307
        %7328 = vmatprep.subr.mxu0 0.0
        %7329 = vmatpush1.msra.mxu0 %v7308
        %7330 = vmatprep.subr.mxu0 0.0
        %7331 = vmatpush1.msra.mxu0 %v7309
        %7332 = vmatprep.subr.mxu0 0.0
        %7333 = vmatpush1.msra.mxu0 %v7310
        %7334 = vmatprep.subr.mxu0 0.0
        %7335 = vmatpush1.msra.mxu0 %v7311
        %7336 = vmatprep.subr.mxu0 0.0
        %7337 = vmatpush1.msra.mxu0 %v7312
        %7338 = vmatprep.subr.mxu0 0.0
        %7339 = vmatpush1.msra.mxu0 %v7313
        %7340 = vmatprep.subr.mxu0 0.0
        %7341 = vmatpush1.msra.mxu0 %v7314
        %7342 = vmatprep.subr.mxu0 0.0
        %7343 = vmatpush1.msra.mxu0 %v7315
        %7344 = vmatprep.subr.mxu0 0.0
        %7345 = vmatpush1.msra.mxu0 %v7316
        %7346 = vmatprep.subr.mxu0 0.0
        %7347 = vmatpush1.msra.mxu0 %v7317
        %7348 = vmatprep.subr.mxu0 0.0
        %7349 = vmatpush1.msra.mxu0 %v7318
        %7350 = vmatprep.subr.mxu0 0.0
        %7351 = vmatpush1.msra.mxu0 %v7319
        %7352 = vmatprep.subr.mxu0 0.0
        %7353 = vmatpush1.msra.mxu0 0.0
        %7354 = vmatprep.subr.mxu0 0.0
        %7355 = vmatpush1.msra.mxu0 0.0
        %7356 = vmatprep.subr.mxu0 0.0
        %7357 = vmatpush1.msra.mxu0 0.0
        %7358 = vmatprep.subr.mxu0 0.0
        %7359 = vmatpush1.msra.mxu0 0.0
        %7360 = vmatprep.subr.mxu0 0.0
        %7361 = vmatpush1.msra.mxu0 0.0
        %7362 = vmatprep.subr.mxu0 0.0
        %7363 = vmatpush1.msra.mxu0 0.0
        %7364 = vmatprep.subr.mxu0 0.0
        %7365 = vmatpush1.msra.mxu0 0.0
        %7366 = vmatprep.subr.mxu0 0.0
        %7367 = vmatpush1.msra.mxu0 0.0
        %7368 = vmatprep.subr.mxu0 0.0
        %7369 = vmatpush1.msra.mxu0 0.0
        %7370 = vmatprep.subr.mxu0 0.0
        %7371 = vmatpush1.msra.mxu0 0.0
        %7372 = vmatprep.subr.mxu0 0.0
        %7373 = vmatpush1.msra.mxu0 0.0
        %7374 = vmatprep.subr.mxu0 0.0
        %7375 = vmatpush1.msra.mxu0 0.0
        %7376 = vmatprep.subr.mxu0 0.0
        %7377 = vmatpush1.msra.mxu0 0.0
        %7378 = vmatprep.subr.mxu0 0.0
        %7379 = vmatpush1.msra.mxu0 0.0
        %7380 = vmatprep.subr.mxu0 0.0
        %7381 = vmatpush1.msra.mxu0 0.0
        %7382 = vmatprep.subr.mxu0 0.0
        %7383 = vmatpush1.msra.mxu0 0.0
        %7384 = vmatprep.mubr.f32.mxu0 0.0
        %7385 = vmatmul.mubr.f32.gmra.mrb[0].mxu0 %v4931
        %v7386 = vpop.f32.mrb[0].mxu0
        %v7387 = vadd.f32 0.0, %v7386
        %v7388 = vpop.f32.mrb[0].mxu0
        %7389 = vmatprep.mubr.f32.mxu0 0.0
        %7390 = vmatmul.mubr.f32.gmra.mrb[0].mxu0 %v4932
        %v7391 = vpop.f32.mrb[0].mxu0
        %v7392 = vadd.f32 0.0, %v7391
        %v7393 = vpop.f32.mrb[0].mxu0
        %7394 = vmatprep.mubr.f32.mxu0 0.0
        %7395 = vmatmul.mubr.f32.gmra.mrb[0].mxu0 %v4933
        %v7396 = vpop.f32.mrb[0].mxu0
        %v7397 = vpop.f32.mrb[0].mxu0
        %7398 = vmatprep.mubr.f32.mxu0 0.0
        %7399 = vmatmul.mubr.f32.gmra.mrb[0].mxu0 %v4934
        %v7400 = vpop.f32.mrb[0].mxu0
        %v7401 = vadd.f32 0.0, %v7400
        %v7402 = vpop.f32.mrb[0].mxu0
        %7403 = vmatprep.mubr.f32.mxu0 0.0
        %7404 = vmatmul.mubr.f32.gmra.mrb[0].mxu0 %v4935
        %v7405 = vpop.f32.mrb[0].mxu0
        %v7406 = vadd.f32 0.0, %v7405
        %v7407 = vpop.f32.mrb[0].mxu0
        %7408 = vmatprep.mubr.f32.mxu0 0.0
        %7409 = vmatmul.mubr.f32.gmra.mrb[0].mxu0 %v4936
        %v7410 = vpop.f32.mrb[0].mxu0
        %v7411 = vpop.f32.mrb[0].mxu0
        %7412 = vmatprep.mubr.f32.mxu0 0.0
        %7413 = vmatmul.mubr.f32.gmra.mrb[0].mxu0 %v4937
        %v7414 = vpop.f32.mrb[0].mxu0
        %v7415 = vadd.f32 0.0, %v7414
        %v7416 = vpop.f32.mrb[0].mxu0
        %7417 = vmatprep.mubr.f32.mxu0 0.0
        %7418 = vmatmul.mubr.f32.gmra.mrb[0].mxu0 %v4938
        %v7419 = vpop.f32.mrb[0].mxu0
        %v7420 = vadd.f32 0.0, %v7419
        %v7421 = vpop.f32.mrb[0].mxu0
        %7422 = vmatprep.mubr.f32.mxu0 0.0
        %7423 = vmatmul.mubr.f32.gmra.mrb[0].mxu0 %v4939
        %v7424 = vpop.f32.mrb[0].mxu0
        %v7425 = vpop.f32.mrb[0].mxu0
        %7426 = vmatprep.mubr.f32.mxu0 0.0
        %7427 = vmatmul.mubr.f32.gmra.mrb[0].mxu0 %v4940
        %v7428 = vpop.f32.mrb[0].mxu0
        %v7429 = vadd.f32 0.0, %v7428
        %v7430 = vpop.f32.mrb[0].mxu0
        %7431 = vmatprep.mubr.f32.mxu0 0.0
        %7432 = vmatmul.mubr.f32.gmra.mrb[0].mxu0 %v4941
        %v7433 = vpop.f32.mrb[0].mxu0
        %v7434 = vadd.f32 0.0, %v7433
        %v7435 = vpop.f32.mrb[0].mxu0
        %7436 = vmatprep.mubr.f32.mxu0 0.0
        %7437 = vmatmul.mubr.f32.gmra.mrb[0].mxu0 %v4942
        %v7438 = vpop.f32.mrb[0].mxu0
        %v7439 = vpop.f32.mrb[0].mxu0
        %7440 = vmatprep.mubr.f32.mxu0 0.0
        %7441 = vmatmul.mubr.f32.gmra.mrb[0].mxu0 %v4943
        %v7442 = vpop.f32.mrb[0].mxu0
        %v7443 = vadd.f32 0.0, %v7442
        %v7444 = vpop.f32.mrb[0].mxu0
        %7445 = vmatprep.mubr.f32.mxu0 0.0
        %7446 = vmatmul.mubr.f32.gmra.mrb[0].mxu0 %v4944
        %v7447 = vpop.f32.mrb[0].mxu0
        %v7448 = vadd.f32 0.0, %v7447
        %v7449 = vpop.f32.mrb[0].mxu0
        %7450 = vmatprep.mubr.f32.mxu0 0.0
        %7451 = vmatmul.mubr.f32.gmra.mrb[0].mxu0 %v4945
        %v7452 = vpop.f32.mrb[0].mxu0
        %v7453 = vpop.f32.mrb[0].mxu0
        %7454 = vmatprep.mubr.f32.mxu0 0.0
        %7455 = vmatmul.mubr.f32.gmra.mrb[0].mxu0 %v4946
        %v7456 = vpop.f32.mrb[0].mxu0
        %v7457 = vadd.f32 0.0, %v7456
        %v7458 = vpop.f32.mrb[0].mxu0
        %7459 = vmatprep.mubr.f32.mxu0 0.0
        %7460 = vmatmul.mubr.f32.gmra.mrb[0].mxu0 %v4947
        %v7461 = vpop.f32.mrb[0].mxu0
        %v7462 = vadd.f32 0.0, %v7461
        %v7463 = vpop.f32.mrb[0].mxu0
        %7464 = vmatprep.mubr.f32.mxu0 0.0
        %7465 = vmatmul.mubr.f32.gmra.mrb[0].mxu0 %v4948
        %v7466 = vpop.f32.mrb[0].mxu0
        %v7467 = vpop.f32.mrb[0].mxu0
        %7468 = vmatprep.mubr.f32.mxu0 0.0
        %7469 = vmatmul.mubr.f32.gmra.mrb[0].mxu0 %v4949
        %v7470 = vpop.f32.mrb[0].mxu0
        %v7471 = vadd.f32 0.0, %v7470
        %v7472 = vpop.f32.mrb[0].mxu0
        %7473 = vmatprep.mubr.f32.mxu0 0.0
        %7474 = vmatmul.mubr.f32.gmra.mrb[0].mxu0 %v4950
        %v7475 = vpop.f32.mrb[0].mxu0
        %v7476 = vadd.f32 0.0, %v7475
        %v7477 = vpop.f32.mrb[0].mxu0
        %7478 = vmatprep.mubr.f32.mxu0 0.0
        %7479 = vmatmul.mubr.f32.gmra.mrb[0].mxu0 %v4951
        %v7480 = vpop.f32.mrb[0].mxu0
        %v7481 = vpop.f32.mrb[0].mxu0
        %7482 = vmatprep.mubr.f32.mxu0 0.0
        %7483 = vmatmul.mubr.f32.gmra.mrb[0].mxu0 %v4952
        %v7484 = vpop.f32.mrb[0].mxu0
        %v7485 = vadd.f32 0.0, %v7484
        %v7486 = vpop.f32.mrb[0].mxu0
        %7487 = vmatprep.mubr.f32.mxu0 0.0
        %7488 = vmatmul.mubr.f32.gmra.mrb[0].mxu0 %v4953
        %v7489 = vpop.f32.mrb[0].mxu0
        %v7490 = vadd.f32 0.0, %v7489
        %v7491 = vpop.f32.mrb[0].mxu0
        %7492 = vmatprep.mubr.f32.mxu0 0.0
        %7493 = vmatmul.mubr.f32.gmra.mrb[0].mxu0 %v4954
        %v7494 = vpop.f32.mrb[0].mxu0
        %v7495 = vpop.f32.mrb[0].mxu0
        %7496 = vmatprep.mubr.f32.mxu0 0.0
        %7497 = vmatmul.mubr.f32.gmra.mrb[0].mxu0 %v4955
        %v7498 = vpop.f32.mrb[0].mxu0
        %v7499 = vadd.f32 0.0, %v7498
        %v7500 = vpop.f32.mrb[0].mxu0
        %7501 = vmatprep.mubr.f32.mxu0 0.0
        %7502 = vmatmul.mubr.f32.gmra.mrb[0].mxu0 %v4956
        %v7503 = vpop.f32.mrb[0].mxu0
        %v7504 = vadd.f32 0.0, %v7503
        %v7505 = vpop.f32.mrb[0].mxu0
        %7506 = vmatprep.mubr.f32.mxu0 0.0
        %7507 = vmatmul.mubr.f32.gmra.mrb[0].mxu0 %v4957
        %v7508 = vpop.f32.mrb[0].mxu0
        %v7509 = vpop.f32.mrb[0].mxu0
        %7510 = vmatprep.mubr.f32.mxu0 0.0
        %7511 = vmatmul.mubr.f32.gmra.mrb[0].mxu0 %v4958
        %v7512 = vpop.f32.mrb[0].mxu0
        %v7513 = vadd.f32 0.0, %v7512
        %v7514 = vpop.f32.mrb[0].mxu0
        %7515 = vmatprep.mubr.f32.mxu0 0.0
        %7516 = vmatmul.mubr.f32.gmra.mrb[0].mxu0 %v4959
        %v7517 = vpop.f32.mrb[0].mxu0
        %v7518 = vadd.f32 0.0, %v7517
        %v7519 = vpop.f32.mrb[0].mxu0
        %7520 = vmatprep.mubr.f32.mxu0 0.0
        %7521 = vmatmul.mubr.f32.gmra.mrb[0].mxu0 %v4960
        %v7522 = vpop.f32.mrb[0].mxu0
        %v7523 = vpop.f32.mrb[0].mxu0
        %7524 = vmatprep.mubr.f32.mxu0 0.0
        %7525 = vmatmul.mubr.f32.gmra.mrb[0].mxu0 %v4961
        %v7526 = vpop.f32.mrb[0].mxu0
        %v7527 = vadd.f32 0.0, %v7526
        %v7528 = vpop.f32.mrb[0].mxu0
        %7529 = vmatprep.mubr.f32.mxu0 0.0
        %7530 = vmatmul.mubr.f32.gmra.mrb[0].mxu0 %v4962
        %v7531 = vpop.f32.mrb[0].mxu0
        %v7532 = vadd.f32 0.0, %v7531
        %v7533 = vpop.f32.mrb[0].mxu0
        %7534 = vmatprep.mubr.f32.mxu0 0.0
        %7535 = vmatmul.mubr.f32.gmra.mrb[0].mxu0 %v4963
        %v7536 = vpop.f32.mrb[0].mxu0
        %v7537 = vpop.f32.mrb[0].mxu0
        %7538 = vmatprep.mubr.f32.mxu0 0.0
        %7539 = vmatmul.mubr.f32.gmra.mrb[0].mxu0 %v4964
        %v7540 = vpop.f32.mrb[0].mxu0
        %v7541 = vadd.f32 0.0, %v7540
        %v7542 = vpop.f32.mrb[0].mxu0
        %7543 = vmatprep.mubr.f32.mxu0 0.0
        %7544 = vmatmul.mubr.f32.gmra.mrb[0].mxu0 %v4965
        %v7545 = vpop.f32.mrb[0].mxu0
        %v7546 = vadd.f32 0.0, %v7545
        %v7547 = vpop.f32.mrb[0].mxu0
        %7548 = vmatprep.mubr.f32.mxu0 0.0
        %7549 = vmatmul.mubr.f32.gmra.mrb[0].mxu0 %v4966
        %v7550 = vpop.f32.mrb[0].mxu0
        %v7551 = vpop.f32.mrb[0].mxu0
        %7552 = vmatprep.mubr.f32.mxu0 0.0
        %7553 = vmatmul.mubr.f32.gmra.mrb[0].mxu0 %v4967
        %v7554 = vpop.f32.mrb[0].mxu0
        %v7555 = vadd.f32 0.0, %v7554
        %v7556 = vpop.f32.mrb[0].mxu0
        %7557 = vmatprep.mubr.f32.mxu0 0.0
        %7558 = vmatmul.mubr.f32.gmra.mrb[0].mxu0 %v4968
        %v7559 = vpop.f32.mrb[0].mxu0
        %v7560 = vadd.f32 0.0, %v7559
        %v7561 = vpop.f32.mrb[0].mxu0
        %7562 = vmatprep.mubr.f32.mxu0 0.0
        %7563 = vmatmul.mubr.f32.gmra.mrb[0].mxu0 %v4969
        %v7564 = vpop.f32.mrb[0].mxu0
        %v7565 = vpop.f32.mrb[0].mxu0
        %7566 = vmatprep.mubr.f32.mxu0 0.0
        %7567 = vmatmul.mubr.f32.gmra.mrb[0].mxu0 %v4970
        %v7568 = vpop.f32.mrb[0].mxu0
        %v7569 = vadd.f32 0.0, %v7568
        %v7570 = vpop.f32.mrb[0].mxu0
        %7571 = vmatprep.mubr.f32.mxu0 0.0
        %7572 = vmatmul.mubr.f32.gmra.mrb[0].mxu0 %v4971
        %v7573 = vpop.f32.mrb[0].mxu0
        %v7574 = vadd.f32 0.0, %v7573
        %v7575 = vpop.f32.mrb[0].mxu0
        %7576 = vmatprep.mubr.f32.mxu0 0.0
        %7577 = vmatmul.mubr.f32.gmra.mrb[0].mxu0 %v4972
        %v7578 = vpop.f32.mrb[0].mxu0
        %v7579 = vpop.f32.mrb[0].mxu0
        %7580 = vmatprep.mubr.f32.mxu0 0.0
        %7581 = vmatmul.mubr.f32.gmra.mrb[0].mxu0 %v4973
        %v7582 = vpop.f32.mrb[0].mxu0
        %v7583 = vadd.f32 0.0, %v7582
        %v7584 = vpop.f32.mrb[0].mxu0
        %7585 = vmatprep.mubr.f32.mxu0 0.0
        %7586 = vmatmul.mubr.f32.gmra.mrb[0].mxu0 %v4974
        %v7587 = vpop.f32.mrb[0].mxu0
        %v7588 = vadd.f32 0.0, %v7587
        %v7589 = vpop.f32.mrb[0].mxu0
        %7590 = vmatprep.mubr.f32.mxu0 0.0
        %7591 = vmatmul.mubr.f32.gmra.mrb[0].mxu0 %v4975
        %v7592 = vpop.f32.mrb[0].mxu0
        %v7593 = vpop.f32.mrb[0].mxu0
        %7594 = vmatprep.mubr.f32.mxu0 0.0
        %7595 = vmatmul.mubr.f32.gmra.mrb[0].mxu0 %v4976
        %v7596 = vpop.f32.mrb[0].mxu0
        %v7597 = vadd.f32 0.0, %v7596
        %v7598 = vpop.f32.mrb[0].mxu0
        %7599 = vmatprep.mubr.f32.mxu0 0.0
        %7600 = vmatmul.mubr.f32.gmra.mrb[0].mxu0 %v4977
        %v7601 = vpop.f32.mrb[0].mxu0
        %v7602 = vadd.f32 0.0, %v7601
        %v7603 = vpop.f32.mrb[0].mxu0
        %7604 = vmatprep.mubr.f32.mxu0 0.0
        %7605 = vmatmul.mubr.f32.gmra.mrb[0].mxu0 %v4978
        %v7606 = vpop.f32.mrb[0].mxu0
        %v7607 = vpop.f32.mrb[0].mxu0
        %7608 = vdwg.mxu0
        %v7609 = vadd.f32 %v7271, %v7387
        %v7610 = vadd.f32 %v7272, %v7392
        %v7611 = vadd.f32 %v7273, %v7401
        %v7612 = vadd.f32 %v7274, %v7406
        %v7613 = vadd.f32 %v7275, %v7415
        %v7614 = vadd.f32 %v7276, %v7420
        %v7615 = vadd.f32 %v7277, %v7429
        %v7616 = vadd.f32 %v7278, %v7434
        %v7617 = vadd.f32 %v7279, %v7443
        %v7618 = vadd.f32 %v7280, %v7448
        %v7619 = vadd.f32 %v7281, %v7457
        %v7620 = vadd.f32 %v7282, %v7462
        %v7621 = vadd.f32 %v7283, %v7471
        %v7622 = vadd.f32 %v7284, %v7476
        %v7623 = vadd.f32 %v7285, %v7485
        %v7624 = vadd.f32 %v7286, %v7490
        %v7625 = vadd.f32 %v7287, %v7499
        %v7626 = vadd.f32 %v7288, %v7504
        %v7627 = vadd.f32 %v7289, %v7513
        %v7628 = vadd.f32 %v7290, %v7518
        %v7629 = vadd.f32 %v7291, %v7527
        %v7630 = vadd.f32 %v7292, %v7532
        %v7631 = vadd.f32 %v7293, %v7541
        %v7632 = vadd.f32 %v7294, %v7546
        %v7633 = vadd.f32 %v7295, %v7555
        %v7634 = vadd.f32 %v7296, %v7560
        %v7635 = vadd.f32 %v7297, %v7569
        %v7636 = vadd.f32 %v7298, %v7574
        %v7637 = vadd.f32 %v7299, %v7583
        %v7638 = vadd.f32 %v7300, %v7588
        %v7639 = vadd.f32 %v7301, %v7597
        %v7640 = vadd.f32 %v7302, %v7602
        %s7641 = scalar_lea.vmem [#allocation7], 896
        %v7642 = vld [vmem:[%s7641] sm:$0xff]
        %v7643 = vld [vmem:[%s7641 + $0x8] sm:$0xff]
        %v7644 = vld [vmem:[%s7641 + $0x10] sm:$0xff]
        %v7645 = vld [vmem:[%s7641 + $0x18] sm:$0xff]
        %v7646 = vld [vmem:[%s7641 + $0x20] sm:$0xff]
        %v7647 = vld [vmem:[%s7641 + $0x28] sm:$0xff]
        %v7648 = vld [vmem:[%s7641 + $0x30] sm:$0xff]
        %v7649 = vld [vmem:[%s7641 + $0x38] sm:$0xff]
        %v7650 = vld [vmem:[%s7641 + $0x40] sm:$0xff]
        %v7651 = vld [vmem:[%s7641 + $0x48] sm:$0xff]
        %v7652 = vld [vmem:[%s7641 + $0x50] sm:$0xff]
        %v7653 = vld [vmem:[%s7641 + $0x58] sm:$0xff]
        %v7654 = vld [vmem:[%s7641 + $0x60] sm:$0xff]
        %v7655 = vld [vmem:[%s7641 + $0x68] sm:$0xff]
        %v7656 = vld [vmem:[%s7641 + $0x70] sm:$0xff]
        %v7657 = vld [vmem:[%s7641 + $0x78] sm:$0xff]
        %v7661 = vrot.slane %v4977, 1
        %v7662 = vsel %vm454, %v6630, %v7661
        %v7663 = vrot.slane %v4978, 1
        %v7664 = vsel %vm454, %v7661, %v7663
        %v7665 = vrot.slane %v4979, 1
        %v7666 = vsel %vm454, %v7663, %v7665
        %7670 = vmatprep.subr.mxu0 0.0
        %7671 = vmatpush1.msra.mxu0 %v7642
        %7672 = vmatprep.subr.mxu0 0.0
        %7673 = vmatpush1.msra.mxu0 %v7643
        %7674 = vmatprep.subr.mxu0 0.0
        %7675 = vmatpush1.msra.mxu0 %v7644
        %7676 = vmatprep.subr.mxu0 0.0
        %7677 = vmatpush1.msra.mxu0 %v7645
        %7678 = vmatprep.subr.mxu0 0.0
        %7679 = vmatpush1.msra.mxu0 %v7646
        %7680 = vmatprep.subr.mxu0 0.0
        %7681 = vmatpush1.msra.mxu0 %v7647
        %7682 = vmatprep.subr.mxu0 0.0
        %7683 = vmatpush1.msra.mxu0 %v7648
        %7684 = vmatprep.subr.mxu0 0.0
        %7685 = vmatpush1.msra.mxu0 %v7649
        %7686 = vmatprep.subr.mxu0 0.0
        %7687 = vmatpush1.msra.mxu0 %v7650
        %7688 = vmatprep.subr.mxu0 0.0
        %7689 = vmatpush1.msra.mxu0 %v7651
        %7690 = vmatprep.subr.mxu0 0.0
        %7691 = vmatpush1.msra.mxu0 %v7652
        %7692 = vmatprep.subr.mxu0 0.0
        %7693 = vmatpush1.msra.mxu0 %v7653
        %7694 = vmatprep.subr.mxu0 0.0
        %7695 = vmatpush1.msra.mxu0 %v7654
        %7696 = vmatprep.subr.mxu0 0.0
        %7697 = vmatpush1.msra.mxu0 %v7655
        %7698 = vmatprep.subr.mxu0 0.0
        %7699 = vmatpush1.msra.mxu0 %v7656
        %7700 = vmatprep.subr.mxu0 0.0
        %7701 = vmatpush1.msra.mxu0 %v7657
        %7702 = vmatprep.subr.mxu0 0.0
        %7703 = vmatpush1.msra.mxu0 0.0
        %7704 = vmatprep.subr.mxu0 0.0
        %7705 = vmatpush1.msra.mxu0 0.0
        %7706 = vmatprep.subr.mxu0 0.0
        %7707 = vmatpush1.msra.mxu0 0.0
        %7708 = vmatprep.subr.mxu0 0.0
        %7709 = vmatpush1.msra.mxu0 0.0
        %7710 = vmatprep.subr.mxu0 0.0
        %7711 = vmatpush1.msra.mxu0 0.0
        %7712 = vmatprep.subr.mxu0 0.0
        %7713 = vmatpush1.msra.mxu0 0.0
        %7714 = vmatprep.subr.mxu0 0.0
        %7715 = vmatpush1.msra.mxu0 0.0
        %7716 = vmatprep.subr.mxu0 0.0
        %7717 = vmatpush1.msra.mxu0 0.0
        %7718 = vmatprep.subr.mxu0 0.0
        %7719 = vmatpush1.msra.mxu0 0.0
        %7720 = vmatprep.subr.mxu0 0.0
        %7721 = vmatpush1.msra.mxu0 0.0
        %7722 = vmatprep.subr.mxu0 0.0
        %7723 = vmatpush1.msra.mxu0 0.0
        %7724 = vmatprep.subr.mxu0 0.0
        %7725 = vmatpush1.msra.mxu0 0.0
        %7726 = vmatprep.subr.mxu0 0.0
        %7727 = vmatpush1.msra.mxu0 0.0
        %7728 = vmatprep.subr.mxu0 0.0
        %7729 = vmatpush1.msra.mxu0 0.0
        %7730 = vmatprep.subr.mxu0 0.0
        %7731 = vmatpush1.msra.mxu0 0.0
        %7732 = vmatprep.subr.mxu0 0.0
        %7733 = vmatpush1.msra.mxu0 0.0
        %7734 = vmatprep.mubr.f32.mxu0 0.0
        %7735 = vmatmul.mubr.f32.gmra.mrb[0].mxu0 %v5076
        %v7736 = vpop.f32.mrb[0].mxu0
        %v7737 = vadd.f32 0.0, %v7736
        %v7738 = vpop.f32.mrb[0].mxu0
        %7739 = vmatprep.mubr.f32.mxu0 0.0
        %7740 = vmatmul.mubr.f32.gmra.mrb[0].mxu0 %v5078
        %v7741 = vpop.f32.mrb[0].mxu0
        %v7742 = vadd.f32 0.0, %v7741
        %v7743 = vpop.f32.mrb[0].mxu0
        %7744 = vmatprep.mubr.f32.mxu0 0.0
        %7745 = vmatmul.mubr.f32.gmra.mrb[0].mxu0 %v5080
        %v7746 = vpop.f32.mrb[0].mxu0
        %v7747 = vpop.f32.mrb[0].mxu0
        %7748 = vmatprep.mubr.f32.mxu0 0.0
        %7749 = vmatmul.mubr.f32.gmra.mrb[0].mxu0 %v5082
        %v7750 = vpop.f32.mrb[0].mxu0
        %v7751 = vadd.f32 0.0, %v7750
        %v7752 = vpop.f32.mrb[0].mxu0
        %7753 = vmatprep.mubr.f32.mxu0 0.0
        %7754 = vmatmul.mubr.f32.gmra.mrb[0].mxu0 %v5084
        %v7755 = vpop.f32.mrb[0].mxu0
        %v7756 = vadd.f32 0.0, %v7755
        %v7757 = vpop.f32.mrb[0].mxu0
        %7758 = vmatprep.mubr.f32.mxu0 0.0
        %7759 = vmatmul.mubr.f32.gmra.mrb[0].mxu0 %v5086
        %v7760 = vpop.f32.mrb[0].mxu0
        %v7761 = vpop.f32.mrb[0].mxu0
        %7762 = vmatprep.mubr.f32.mxu0 0.0
        %7763 = vmatmul.mubr.f32.gmra.mrb[0].mxu0 %v5088
        %v7764 = vpop.f32.mrb[0].mxu0
        %v7765 = vadd.f32 0.0, %v7764
        %v7766 = vpop.f32.mrb[0].mxu0
        %7767 = vmatprep.mubr.f32.mxu0 0.0
        %7768 = vmatmul.mubr.f32.gmra.mrb[0].mxu0 %v5090
        %v7769 = vpop.f32.mrb[0].mxu0
        %v7770 = vadd.f32 0.0, %v7769
        %v7771 = vpop.f32.mrb[0].mxu0
        %7772 = vmatprep.mubr.f32.mxu0 0.0
        %7773 = vmatmul.mubr.f32.gmra.mrb[0].mxu0 %v5092
        %v7774 = vpop.f32.mrb[0].mxu0
        %v7775 = vpop.f32.mrb[0].mxu0
        %7776 = vmatprep.mubr.f32.mxu0 0.0
        %7777 = vmatmul.mubr.f32.gmra.mrb[0].mxu0 %v5094
        %v7778 = vpop.f32.mrb[0].mxu0
        %v7779 = vadd.f32 0.0, %v7778
        %v7780 = vpop.f32.mrb[0].mxu0
        %7781 = vmatprep.mubr.f32.mxu0 0.0
        %7782 = vmatmul.mubr.f32.gmra.mrb[0].mxu0 %v5096
        %v7783 = vpop.f32.mrb[0].mxu0
        %v7784 = vadd.f32 0.0, %v7783
        %v7785 = vpop.f32.mrb[0].mxu0
        %7786 = vmatprep.mubr.f32.mxu0 0.0
        %7787 = vmatmul.mubr.f32.gmra.mrb[0].mxu0 %v5098
        %v7788 = vpop.f32.mrb[0].mxu0
        %v7789 = vpop.f32.mrb[0].mxu0
        %7790 = vmatprep.mubr.f32.mxu0 0.0
        %7791 = vmatmul.mubr.f32.gmra.mrb[0].mxu0 %v5100
        %v7792 = vpop.f32.mrb[0].mxu0
        %v7793 = vadd.f32 0.0, %v7792
        %v7794 = vpop.f32.mrb[0].mxu0
        %7795 = vmatprep.mubr.f32.mxu0 0.0
        %7796 = vmatmul.mubr.f32.gmra.mrb[0].mxu0 %v5102
        %v7797 = vpop.f32.mrb[0].mxu0
        %v7798 = vadd.f32 0.0, %v7797
        %v7799 = vpop.f32.mrb[0].mxu0
        %7800 = vmatprep.mubr.f32.mxu0 0.0
        %7801 = vmatmul.mubr.f32.gmra.mrb[0].mxu0 %v5104
        %v7802 = vpop.f32.mrb[0].mxu0
        %v7803 = vpop.f32.mrb[0].mxu0
        %7804 = vmatprep.mubr.f32.mxu0 0.0
        %7805 = vmatmul.mubr.f32.gmra.mrb[0].mxu0 %v5106
        %v7806 = vpop.f32.mrb[0].mxu0
        %v7807 = vadd.f32 0.0, %v7806
        %v7808 = vpop.f32.mrb[0].mxu0
        %7809 = vmatprep.mubr.f32.mxu0 0.0
        %7810 = vmatmul.mubr.f32.gmra.mrb[0].mxu0 %v5108
        %v7811 = vpop.f32.mrb[0].mxu0
        %v7812 = vadd.f32 0.0, %v7811
        %v7813 = vpop.f32.mrb[0].mxu0
        %7814 = vmatprep.mubr.f32.mxu0 0.0
        %7815 = vmatmul.mubr.f32.gmra.mrb[0].mxu0 %v5110
        %v7816 = vpop.f32.mrb[0].mxu0
        %v7817 = vpop.f32.mrb[0].mxu0
        %7818 = vmatprep.mubr.f32.mxu0 0.0
        %7819 = vmatmul.mubr.f32.gmra.mrb[0].mxu0 %v5112
        %v7820 = vpop.f32.mrb[0].mxu0
        %v7821 = vadd.f32 0.0, %v7820
        %v7822 = vpop.f32.mrb[0].mxu0
        %7823 = vmatprep.mubr.f32.mxu0 0.0
        %7824 = vmatmul.mubr.f32.gmra.mrb[0].mxu0 %v5114
        %v7825 = vpop.f32.mrb[0].mxu0
        %v7826 = vadd.f32 0.0, %v7825
        %v7827 = vpop.f32.mrb[0].mxu0
        %7828 = vmatprep.mubr.f32.mxu0 0.0
        %7829 = vmatmul.mubr.f32.gmra.mrb[0].mxu0 %v5116
        %v7830 = vpop.f32.mrb[0].mxu0
        %v7831 = vpop.f32.mrb[0].mxu0
        %7832 = vmatprep.mubr.f32.mxu0 0.0
        %7833 = vmatmul.mubr.f32.gmra.mrb[0].mxu0 %v5118
        %v7834 = vpop.f32.mrb[0].mxu0
        %v7835 = vadd.f32 0.0, %v7834
        %v7836 = vpop.f32.mrb[0].mxu0
        %7837 = vmatprep.mubr.f32.mxu0 0.0
        %7838 = vmatmul.mubr.f32.gmra.mrb[0].mxu0 %v5120
        %v7839 = vpop.f32.mrb[0].mxu0
        %v7840 = vadd.f32 0.0, %v7839
        %v7841 = vpop.f32.mrb[0].mxu0
        %7842 = vmatprep.mubr.f32.mxu0 0.0
        %7843 = vmatmul.mubr.f32.gmra.mrb[0].mxu0 %v5122
        %v7844 = vpop.f32.mrb[0].mxu0
        %v7845 = vpop.f32.mrb[0].mxu0
        %7846 = vmatprep.mubr.f32.mxu0 0.0
        %7847 = vmatmul.mubr.f32.gmra.mrb[0].mxu0 %v5124
        %v7848 = vpop.f32.mrb[0].mxu0
        %v7849 = vadd.f32 0.0, %v7848
        %v7850 = vpop.f32.mrb[0].mxu0
        %7851 = vmatprep.mubr.f32.mxu0 0.0
        %7852 = vmatmul.mubr.f32.gmra.mrb[0].mxu0 %v5126
        %v7853 = vpop.f32.mrb[0].mxu0
        %v7854 = vadd.f32 0.0, %v7853
        %v7855 = vpop.f32.mrb[0].mxu0
        %7856 = vmatprep.mubr.f32.mxu0 0.0
        %7857 = vmatmul.mubr.f32.gmra.mrb[0].mxu0 %v5128
        %v7858 = vpop.f32.mrb[0].mxu0
        %v7859 = vpop.f32.mrb[0].mxu0
        %7860 = vmatprep.mubr.f32.mxu0 0.0
        %7861 = vmatmul.mubr.f32.gmra.mrb[0].mxu0 %v5130
        %v7862 = vpop.f32.mrb[0].mxu0
        %v7863 = vadd.f32 0.0, %v7862
        %v7864 = vpop.f32.mrb[0].mxu0
        %7865 = vmatprep.mubr.f32.mxu0 0.0
        %7866 = vmatmul.mubr.f32.gmra.mrb[0].mxu0 %v5132
        %v7867 = vpop.f32.mrb[0].mxu0
        %v7868 = vadd.f32 0.0, %v7867
        %v7869 = vpop.f32.mrb[0].mxu0
        %7870 = vmatprep.mubr.f32.mxu0 0.0
        %7871 = vmatmul.mubr.f32.gmra.mrb[0].mxu0 %v5134
        %v7872 = vpop.f32.mrb[0].mxu0
        %v7873 = vpop.f32.mrb[0].mxu0
        %7874 = vmatprep.mubr.f32.mxu0 0.0
        %7875 = vmatmul.mubr.f32.gmra.mrb[0].mxu0 %v5136
        %v7876 = vpop.f32.mrb[0].mxu0
        %v7877 = vadd.f32 0.0, %v7876
        %v7878 = vpop.f32.mrb[0].mxu0
        %7879 = vmatprep.mubr.f32.mxu0 0.0
        %7880 = vmatmul.mubr.f32.gmra.mrb[0].mxu0 %v5138
        %v7881 = vpop.f32.mrb[0].mxu0
        %v7882 = vadd.f32 0.0, %v7881
        %v7883 = vpop.f32.mrb[0].mxu0
        %7884 = vmatprep.mubr.f32.mxu0 0.0
        %7885 = vmatmul.mubr.f32.gmra.mrb[0].mxu0 %v5140
        %v7886 = vpop.f32.mrb[0].mxu0
        %v7887 = vpop.f32.mrb[0].mxu0
        %7888 = vmatprep.mubr.f32.mxu0 0.0
        %7889 = vmatmul.mubr.f32.gmra.mrb[0].mxu0 %v5142
        %v7890 = vpop.f32.mrb[0].mxu0
        %v7891 = vadd.f32 0.0, %v7890
        %v7892 = vpop.f32.mrb[0].mxu0
        %7893 = vmatprep.mubr.f32.mxu0 0.0
        %7894 = vmatmul.mubr.f32.gmra.mrb[0].mxu0 %v5144
        %v7895 = vpop.f32.mrb[0].mxu0
        %v7896 = vadd.f32 0.0, %v7895
        %v7897 = vpop.f32.mrb[0].mxu0
        %7898 = vmatprep.mubr.f32.mxu0 0.0
        %7899 = vmatmul.mubr.f32.gmra.mrb[0].mxu0 %v5146
        %v7900 = vpop.f32.mrb[0].mxu0
        %v7901 = vpop.f32.mrb[0].mxu0
        %7902 = vmatprep.mubr.f32.mxu0 0.0
        %7903 = vmatmul.mubr.f32.gmra.mrb[0].mxu0 %v5148
        %v7904 = vpop.f32.mrb[0].mxu0
        %v7905 = vadd.f32 0.0, %v7904
        %v7906 = vpop.f32.mrb[0].mxu0
        %7907 = vmatprep.mubr.f32.mxu0 0.0
        %7908 = vmatmul.mubr.f32.gmra.mrb[0].mxu0 %v5150
        %v7909 = vpop.f32.mrb[0].mxu0
        %v7910 = vadd.f32 0.0, %v7909
        %v7911 = vpop.f32.mrb[0].mxu0
        %7912 = vmatprep.mubr.f32.mxu0 0.0
        %7913 = vmatmul.mubr.f32.gmra.mrb[0].mxu0 %v5152
        %v7914 = vpop.f32.mrb[0].mxu0
        %v7915 = vpop.f32.mrb[0].mxu0
        %7916 = vmatprep.mubr.f32.mxu0 0.0
        %7917 = vmatmul.mubr.f32.gmra.mrb[0].mxu0 %v5154
        %v7918 = vpop.f32.mrb[0].mxu0
        %v7919 = vadd.f32 0.0, %v7918
        %v7920 = vpop.f32.mrb[0].mxu0
        %7921 = vmatprep.mubr.f32.mxu0 0.0
        %7922 = vmatmul.mubr.f32.gmra.mrb[0].mxu0 %v5156
        %v7923 = vpop.f32.mrb[0].mxu0
        %v7924 = vadd.f32 0.0, %v7923
        %v7925 = vpop.f32.mrb[0].mxu0
        %7926 = vmatprep.mubr.f32.mxu0 0.0
        %7927 = vmatmul.mubr.f32.gmra.mrb[0].mxu0 %v5158
        %v7928 = vpop.f32.mrb[0].mxu0
        %v7929 = vpop.f32.mrb[0].mxu0
        %7930 = vmatprep.mubr.f32.mxu0 0.0
        %7931 = vmatmul.mubr.f32.gmra.mrb[0].mxu0 %v6627
        %v7932 = vpop.f32.mrb[0].mxu0
        %v7933 = vadd.f32 0.0, %v7932
        %v7934 = vpop.f32.mrb[0].mxu0
        %7935 = vmatprep.mubr.f32.mxu0 0.0
        %7936 = vmatmul.mubr.f32.gmra.mrb[0].mxu0 %v6629
        %v7937 = vpop.f32.mrb[0].mxu0
        %v7938 = vadd.f32 0.0, %v7937
        %v7939 = vpop.f32.mrb[0].mxu0
        %7940 = vmatprep.mubr.f32.mxu0 0.0
        %7941 = vmatmul.mubr.f32.gmra.mrb[0].mxu0 %v6631
        %v7942 = vpop.f32.mrb[0].mxu0
        %v7943 = vpop.f32.mrb[0].mxu0
        %7944 = vmatprep.mubr.f32.mxu0 0.0
        %7945 = vmatmul.mubr.f32.gmra.mrb[0].mxu0 %v7662
        %v7946 = vpop.f32.mrb[0].mxu0
        %v7947 = vadd.f32 0.0, %v7946
        %v7948 = vpop.f32.mrb[0].mxu0
        %7949 = vmatprep.mubr.f32.mxu0 0.0
        %7950 = vmatmul.mubr.f32.gmra.mrb[0].mxu0 %v7664
        %v7951 = vpop.f32.mrb[0].mxu0
        %v7952 = vadd.f32 0.0, %v7951
        %v7953 = vpop.f32.mrb[0].mxu0
        %7954 = vmatprep.mubr.f32.mxu0 0.0
        %7955 = vmatmul.mubr.f32.gmra.mrb[0].mxu0 %v7666
        %v7956 = vpop.f32.mrb[0].mxu0
        %v7957 = vpop.f32.mrb[0].mxu0
        %7958 = vdwg.mxu0
        %v7959 = vadd.f32 %v7609, %v7737
        %v7960 = vadd.f32 %v7610, %v7742
        %v7961 = vadd.f32 %v7611, %v7751
        %v7962 = vadd.f32 %v7612, %v7756
        %v7963 = vadd.f32 %v7613, %v7765
        %v7964 = vadd.f32 %v7614, %v7770
        %v7965 = vadd.f32 %v7615, %v7779
        %v7966 = vadd.f32 %v7616, %v7784
        %v7967 = vadd.f32 %v7617, %v7793
        %v7968 = vadd.f32 %v7618, %v7798
        %v7969 = vadd.f32 %v7619, %v7807
        %v7970 = vadd.f32 %v7620, %v7812
        %v7971 = vadd.f32 %v7621, %v7821
        %v7972 = vadd.f32 %v7622, %v7826
        %v7973 = vadd.f32 %v7623, %v7835
        %v7974 = vadd.f32 %v7624, %v7840
        %v7975 = vadd.f32 %v7625, %v7849
        %v7976 = vadd.f32 %v7626, %v7854
        %v7977 = vadd.f32 %v7627, %v7863
        %v7978 = vadd.f32 %v7628, %v7868
        %v7979 = vadd.f32 %v7629, %v7877
        %v7980 = vadd.f32 %v7630, %v7882
        %v7981 = vadd.f32 %v7631, %v7891
        %v7982 = vadd.f32 %v7632, %v7896
        %v7983 = vadd.f32 %v7633, %v7905
        %v7984 = vadd.f32 %v7634, %v7910
        %v7985 = vadd.f32 %v7635, %v7919
        %v7986 = vadd.f32 %v7636, %v7924
        %v7987 = vadd.f32 %v7637, %v7933
        %v7988 = vadd.f32 %v7638, %v7938
        %v7989 = vadd.f32 %v7639, %v7947
        %v7990 = vadd.f32 %v7640, %v7952
        %s7991 = scalar_lea.vmem [#allocation7], 1024
        %v7992 = vld [vmem:[%s7991] sm:$0xff]
        %v7993 = vld [vmem:[%s7991 + $0x8] sm:$0xff]
        %v7994 = vld [vmem:[%s7991 + $0x10] sm:$0xff]
        %v7995 = vld [vmem:[%s7991 + $0x18] sm:$0xff]
        %v7996 = vld [vmem:[%s7991 + $0x20] sm:$0xff]
        %v7997 = vld [vmem:[%s7991 + $0x28] sm:$0xff]
        %v7998 = vld [vmem:[%s7991 + $0x30] sm:$0xff]
        %v7999 = vld [vmem:[%s7991 + $0x38] sm:$0xff]
        %v8000 = vld [vmem:[%s7991 + $0x40] sm:$0xff]
        %v8001 = vld [vmem:[%s7991 + $0x48] sm:$0xff]
        %v8002 = vld [vmem:[%s7991 + $0x50] sm:$0xff]
        %v8003 = vld [vmem:[%s7991 + $0x58] sm:$0xff]
        %v8004 = vld [vmem:[%s7991 + $0x60] sm:$0xff]
        %v8005 = vld [vmem:[%s7991 + $0x68] sm:$0xff]
        %v8006 = vld [vmem:[%s7991 + $0x70] sm:$0xff]
        %v8007 = vld [vmem:[%s7991 + $0x78] sm:$0xff]
        %v8008 = vrot.slane %v4977, 2
        %v8009 = vsel %vm1340, %v6977, %v8008
        %v8010 = vrot.slane %v4978, 2
        %v8011 = vsel %vm1340, %v8008, %v8010
        %v8012 = vrot.slane %v4979, 2
        %v8013 = vsel %vm1340, %v8010, %v8012
        %8017 = vmatprep.subr.mxu0 0.0
        %8018 = vmatpush1.msra.mxu0 %v7992
        %8019 = vmatprep.subr.mxu0 0.0
        %8020 = vmatpush1.msra.mxu0 %v7993
        %8021 = vmatprep.subr.mxu0 0.0
        %8022 = vmatpush1.msra.mxu0 %v7994
        %8023 = vmatprep.subr.mxu0 0.0
        %8024 = vmatpush1.msra.mxu0 %v7995
        %8025 = vmatprep.subr.mxu0 0.0
        %8026 = vmatpush1.msra.mxu0 %v7996
        %8027 = vmatprep.subr.mxu0 0.0
        %8028 = vmatpush1.msra.mxu0 %v7997
        %8029 = vmatprep.subr.mxu0 0.0
        %8030 = vmatpush1.msra.mxu0 %v7998
        %8031 = vmatprep.subr.mxu0 0.0
        %8032 = vmatpush1.msra.mxu0 %v7999
        %8033 = vmatprep.subr.mxu0 0.0
        %8034 = vmatpush1.msra.mxu0 %v8000
        %8035 = vmatprep.subr.mxu0 0.0
        %8036 = vmatpush1.msra.mxu0 %v8001
        %8037 = vmatprep.subr.mxu0 0.0
        %8038 = vmatpush1.msra.mxu0 %v8002
        %8039 = vmatprep.subr.mxu0 0.0
        %8040 = vmatpush1.msra.mxu0 %v8003
        %8041 = vmatprep.subr.mxu0 0.0
        %8042 = vmatpush1.msra.mxu0 %v8004
        %8043 = vmatprep.subr.mxu0 0.0
        %8044 = vmatpush1.msra.mxu0 %v8005
        %8045 = vmatprep.subr.mxu0 0.0
        %8046 = vmatpush1.msra.mxu0 %v8006
        %8047 = vmatprep.subr.mxu0 0.0
        %8048 = vmatpush1.msra.mxu0 %v8007
        %8049 = vmatprep.subr.mxu0 0.0
        %8050 = vmatpush1.msra.mxu0 0.0
        %8051 = vmatprep.subr.mxu0 0.0
        %8052 = vmatpush1.msra.mxu0 0.0
        %8053 = vmatprep.subr.mxu0 0.0
        %8054 = vmatpush1.msra.mxu0 0.0
        %8055 = vmatprep.subr.mxu0 0.0
        %8056 = vmatpush1.msra.mxu0 0.0
        %8057 = vmatprep.subr.mxu0 0.0
        %8058 = vmatpush1.msra.mxu0 0.0
        %8059 = vmatprep.subr.mxu0 0.0
        %8060 = vmatpush1.msra.mxu0 0.0
        %8061 = vmatprep.subr.mxu0 0.0
        %8062 = vmatpush1.msra.mxu0 0.0
        %8063 = vmatprep.subr.mxu0 0.0
        %8064 = vmatpush1.msra.mxu0 0.0
        %8065 = vmatprep.subr.mxu0 0.0
        %8066 = vmatpush1.msra.mxu0 0.0
        %8067 = vmatprep.subr.mxu0 0.0
        %8068 = vmatpush1.msra.mxu0 0.0
        %8069 = vmatprep.subr.mxu0 0.0
        %8070 = vmatpush1.msra.mxu0 0.0
        %8071 = vmatprep.subr.mxu0 0.0
        %8072 = vmatpush1.msra.mxu0 0.0
        %8073 = vmatprep.subr.mxu0 0.0
        %8074 = vmatpush1.msra.mxu0 0.0
        %8075 = vmatprep.subr.mxu0 0.0
        %8076 = vmatpush1.msra.mxu0 0.0
        %8077 = vmatprep.subr.mxu0 0.0
        %8078 = vmatpush1.msra.mxu0 0.0
        %8079 = vmatprep.subr.mxu0 0.0
        %8080 = vmatpush1.msra.mxu0 0.0
        %8081 = vmatprep.mubr.f32.mxu0 0.0
        %8082 = vmatmul.mubr.f32.gmra.mrb[0].mxu0 %v5816
        %v8083 = vpop.f32.mrb[0].mxu0
        %v8084 = vadd.f32 0.0, %v8083
        %v8085 = vpop.f32.mrb[0].mxu0
        %8086 = vmatprep.mubr.f32.mxu0 0.0
        %8087 = vmatmul.mubr.f32.gmra.mrb[0].mxu0 %v5818
        %v8088 = vpop.f32.mrb[0].mxu0
        %v8089 = vadd.f32 0.0, %v8088
        %v8090 = vpop.f32.mrb[0].mxu0
        %8091 = vmatprep.mubr.f32.mxu0 0.0
        %8092 = vmatmul.mubr.f32.gmra.mrb[0].mxu0 %v5820
        %v8093 = vpop.f32.mrb[0].mxu0
        %v8094 = vpop.f32.mrb[0].mxu0
        %8095 = vmatprep.mubr.f32.mxu0 0.0
        %8096 = vmatmul.mubr.f32.gmra.mrb[0].mxu0 %v5822
        %v8097 = vpop.f32.mrb[0].mxu0
        %v8098 = vadd.f32 0.0, %v8097
        %v8099 = vpop.f32.mrb[0].mxu0
        %8100 = vmatprep.mubr.f32.mxu0 0.0
        %8101 = vmatmul.mubr.f32.gmra.mrb[0].mxu0 %v5824
        %v8102 = vpop.f32.mrb[0].mxu0
        %v8103 = vadd.f32 0.0, %v8102
        %v8104 = vpop.f32.mrb[0].mxu0
        %8105 = vmatprep.mubr.f32.mxu0 0.0
        %8106 = vmatmul.mubr.f32.gmra.mrb[0].mxu0 %v5826
        %v8107 = vpop.f32.mrb[0].mxu0
        %v8108 = vpop.f32.mrb[0].mxu0
        %8109 = vmatprep.mubr.f32.mxu0 0.0
        %8110 = vmatmul.mubr.f32.gmra.mrb[0].mxu0 %v5828
        %v8111 = vpop.f32.mrb[0].mxu0
        %v8112 = vadd.f32 0.0, %v8111
        %v8113 = vpop.f32.mrb[0].mxu0
        %8114 = vmatprep.mubr.f32.mxu0 0.0
        %8115 = vmatmul.mubr.f32.gmra.mrb[0].mxu0 %v5830
        %v8116 = vpop.f32.mrb[0].mxu0
        %v8117 = vadd.f32 0.0, %v8116
        %v8118 = vpop.f32.mrb[0].mxu0
        %8119 = vmatprep.mubr.f32.mxu0 0.0
        %8120 = vmatmul.mubr.f32.gmra.mrb[0].mxu0 %v5832
        %v8121 = vpop.f32.mrb[0].mxu0
        %v8122 = vpop.f32.mrb[0].mxu0
        %8123 = vmatprep.mubr.f32.mxu0 0.0
        %8124 = vmatmul.mubr.f32.gmra.mrb[0].mxu0 %v5834
        %v8125 = vpop.f32.mrb[0].mxu0
        %v8126 = vadd.f32 0.0, %v8125
        %v8127 = vpop.f32.mrb[0].mxu0
        %8128 = vmatprep.mubr.f32.mxu0 0.0
        %8129 = vmatmul.mubr.f32.gmra.mrb[0].mxu0 %v5836
        %v8130 = vpop.f32.mrb[0].mxu0
        %v8131 = vadd.f32 0.0, %v8130
        %v8132 = vpop.f32.mrb[0].mxu0
        %8133 = vmatprep.mubr.f32.mxu0 0.0
        %8134 = vmatmul.mubr.f32.gmra.mrb[0].mxu0 %v5838
        %v8135 = vpop.f32.mrb[0].mxu0
        %v8136 = vpop.f32.mrb[0].mxu0
        %8137 = vmatprep.mubr.f32.mxu0 0.0
        %8138 = vmatmul.mubr.f32.gmra.mrb[0].mxu0 %v5840
        %v8139 = vpop.f32.mrb[0].mxu0
        %v8140 = vadd.f32 0.0, %v8139
        %v8141 = vpop.f32.mrb[0].mxu0
        %8142 = vmatprep.mubr.f32.mxu0 0.0
        %8143 = vmatmul.mubr.f32.gmra.mrb[0].mxu0 %v5842
        %v8144 = vpop.f32.mrb[0].mxu0
        %v8145 = vadd.f32 0.0, %v8144
        %v8146 = vpop.f32.mrb[0].mxu0
        %8147 = vmatprep.mubr.f32.mxu0 0.0
        %8148 = vmatmul.mubr.f32.gmra.mrb[0].mxu0 %v5844
        %v8149 = vpop.f32.mrb[0].mxu0
        %v8150 = vpop.f32.mrb[0].mxu0
        %8151 = vmatprep.mubr.f32.mxu0 0.0
        %8152 = vmatmul.mubr.f32.gmra.mrb[0].mxu0 %v5846
        %v8153 = vpop.f32.mrb[0].mxu0
        %v8154 = vadd.f32 0.0, %v8153
        %v8155 = vpop.f32.mrb[0].mxu0
        %8156 = vmatprep.mubr.f32.mxu0 0.0
        %8157 = vmatmul.mubr.f32.gmra.mrb[0].mxu0 %v5848
        %v8158 = vpop.f32.mrb[0].mxu0
        %v8159 = vadd.f32 0.0, %v8158
        %v8160 = vpop.f32.mrb[0].mxu0
        %8161 = vmatprep.mubr.f32.mxu0 0.0
        %8162 = vmatmul.mubr.f32.gmra.mrb[0].mxu0 %v5850
        %v8163 = vpop.f32.mrb[0].mxu0
        %v8164 = vpop.f32.mrb[0].mxu0
        %8165 = vmatprep.mubr.f32.mxu0 0.0
        %8166 = vmatmul.mubr.f32.gmra.mrb[0].mxu0 %v5852
        %v8167 = vpop.f32.mrb[0].mxu0
        %v8168 = vadd.f32 0.0, %v8167
        %v8169 = vpop.f32.mrb[0].mxu0
        %8170 = vmatprep.mubr.f32.mxu0 0.0
        %8171 = vmatmul.mubr.f32.gmra.mrb[0].mxu0 %v5854
        %v8172 = vpop.f32.mrb[0].mxu0
        %v8173 = vadd.f32 0.0, %v8172
        %v8174 = vpop.f32.mrb[0].mxu0
        %8175 = vmatprep.mubr.f32.mxu0 0.0
        %8176 = vmatmul.mubr.f32.gmra.mrb[0].mxu0 %v5856
        %v8177 = vpop.f32.mrb[0].mxu0
        %v8178 = vpop.f32.mrb[0].mxu0
        %8179 = vmatprep.mubr.f32.mxu0 0.0
        %8180 = vmatmul.mubr.f32.gmra.mrb[0].mxu0 %v5858
        %v8181 = vpop.f32.mrb[0].mxu0
        %v8182 = vadd.f32 0.0, %v8181
        %v8183 = vpop.f32.mrb[0].mxu0
        %8184 = vmatprep.mubr.f32.mxu0 0.0
        %8185 = vmatmul.mubr.f32.gmra.mrb[0].mxu0 %v5860
        %v8186 = vpop.f32.mrb[0].mxu0
        %v8187 = vadd.f32 0.0, %v8186
        %v8188 = vpop.f32.mrb[0].mxu0
        %8189 = vmatprep.mubr.f32.mxu0 0.0
        %8190 = vmatmul.mubr.f32.gmra.mrb[0].mxu0 %v5862
        %v8191 = vpop.f32.mrb[0].mxu0
        %v8192 = vpop.f32.mrb[0].mxu0
        %8193 = vmatprep.mubr.f32.mxu0 0.0
        %8194 = vmatmul.mubr.f32.gmra.mrb[0].mxu0 %v5864
        %v8195 = vpop.f32.mrb[0].mxu0
        %v8196 = vadd.f32 0.0, %v8195
        %v8197 = vpop.f32.mrb[0].mxu0
        %8198 = vmatprep.mubr.f32.mxu0 0.0
        %8199 = vmatmul.mubr.f32.gmra.mrb[0].mxu0 %v5866
        %v8200 = vpop.f32.mrb[0].mxu0
        %v8201 = vadd.f32 0.0, %v8200
        %v8202 = vpop.f32.mrb[0].mxu0
        %8203 = vmatprep.mubr.f32.mxu0 0.0
        %8204 = vmatmul.mubr.f32.gmra.mrb[0].mxu0 %v5868
        %v8205 = vpop.f32.mrb[0].mxu0
        %v8206 = vpop.f32.mrb[0].mxu0
        %8207 = vmatprep.mubr.f32.mxu0 0.0
        %8208 = vmatmul.mubr.f32.gmra.mrb[0].mxu0 %v5870
        %v8209 = vpop.f32.mrb[0].mxu0
        %v8210 = vadd.f32 0.0, %v8209
        %v8211 = vpop.f32.mrb[0].mxu0
        %8212 = vmatprep.mubr.f32.mxu0 0.0
        %8213 = vmatmul.mubr.f32.gmra.mrb[0].mxu0 %v5872
        %v8214 = vpop.f32.mrb[0].mxu0
        %v8215 = vadd.f32 0.0, %v8214
        %v8216 = vpop.f32.mrb[0].mxu0
        %8217 = vmatprep.mubr.f32.mxu0 0.0
        %8218 = vmatmul.mubr.f32.gmra.mrb[0].mxu0 %v5874
        %v8219 = vpop.f32.mrb[0].mxu0
        %v8220 = vpop.f32.mrb[0].mxu0
        %8221 = vmatprep.mubr.f32.mxu0 0.0
        %8222 = vmatmul.mubr.f32.gmra.mrb[0].mxu0 %v5876
        %v8223 = vpop.f32.mrb[0].mxu0
        %v8224 = vadd.f32 0.0, %v8223
        %v8225 = vpop.f32.mrb[0].mxu0
        %8226 = vmatprep.mubr.f32.mxu0 0.0
        %8227 = vmatmul.mubr.f32.gmra.mrb[0].mxu0 %v5878
        %v8228 = vpop.f32.mrb[0].mxu0
        %v8229 = vadd.f32 0.0, %v8228
        %v8230 = vpop.f32.mrb[0].mxu0
        %8231 = vmatprep.mubr.f32.mxu0 0.0
        %8232 = vmatmul.mubr.f32.gmra.mrb[0].mxu0 %v5880
        %v8233 = vpop.f32.mrb[0].mxu0
        %v8234 = vpop.f32.mrb[0].mxu0
        %8235 = vmatprep.mubr.f32.mxu0 0.0
        %8236 = vmatmul.mubr.f32.gmra.mrb[0].mxu0 %v5882
        %v8237 = vpop.f32.mrb[0].mxu0
        %v8238 = vadd.f32 0.0, %v8237
        %v8239 = vpop.f32.mrb[0].mxu0
        %8240 = vmatprep.mubr.f32.mxu0 0.0
        %8241 = vmatmul.mubr.f32.gmra.mrb[0].mxu0 %v5884
        %v8242 = vpop.f32.mrb[0].mxu0
        %v8243 = vadd.f32 0.0, %v8242
        %v8244 = vpop.f32.mrb[0].mxu0
        %8245 = vmatprep.mubr.f32.mxu0 0.0
        %8246 = vmatmul.mubr.f32.gmra.mrb[0].mxu0 %v5886
        %v8247 = vpop.f32.mrb[0].mxu0
        %v8248 = vpop.f32.mrb[0].mxu0
        %8249 = vmatprep.mubr.f32.mxu0 0.0
        %8250 = vmatmul.mubr.f32.gmra.mrb[0].mxu0 %v5888
        %v8251 = vpop.f32.mrb[0].mxu0
        %v8252 = vadd.f32 0.0, %v8251
        %v8253 = vpop.f32.mrb[0].mxu0
        %8254 = vmatprep.mubr.f32.mxu0 0.0
        %8255 = vmatmul.mubr.f32.gmra.mrb[0].mxu0 %v5890
        %v8256 = vpop.f32.mrb[0].mxu0
        %v8257 = vadd.f32 0.0, %v8256
        %v8258 = vpop.f32.mrb[0].mxu0
        %8259 = vmatprep.mubr.f32.mxu0 0.0
        %8260 = vmatmul.mubr.f32.gmra.mrb[0].mxu0 %v5892
        %v8261 = vpop.f32.mrb[0].mxu0
        %v8262 = vpop.f32.mrb[0].mxu0
        %8263 = vmatprep.mubr.f32.mxu0 0.0
        %8264 = vmatmul.mubr.f32.gmra.mrb[0].mxu0 %v5894
        %v8265 = vpop.f32.mrb[0].mxu0
        %v8266 = vadd.f32 0.0, %v8265
        %v8267 = vpop.f32.mrb[0].mxu0
        %8268 = vmatprep.mubr.f32.mxu0 0.0
        %8269 = vmatmul.mubr.f32.gmra.mrb[0].mxu0 %v5896
        %v8270 = vpop.f32.mrb[0].mxu0
        %v8271 = vadd.f32 0.0, %v8270
        %v8272 = vpop.f32.mrb[0].mxu0
        %8273 = vmatprep.mubr.f32.mxu0 0.0
        %8274 = vmatmul.mubr.f32.gmra.mrb[0].mxu0 %v5898
        %v8275 = vpop.f32.mrb[0].mxu0
        %v8276 = vpop.f32.mrb[0].mxu0
        %8277 = vmatprep.mubr.f32.mxu0 0.0
        %8278 = vmatmul.mubr.f32.gmra.mrb[0].mxu0 %v6974
        %v8279 = vpop.f32.mrb[0].mxu0
        %v8280 = vadd.f32 0.0, %v8279
        %v8281 = vpop.f32.mrb[0].mxu0
        %8282 = vmatprep.mubr.f32.mxu0 0.0
        %8283 = vmatmul.mubr.f32.gmra.mrb[0].mxu0 %v6976
        %v8284 = vpop.f32.mrb[0].mxu0
        %v8285 = vadd.f32 0.0, %v8284
        %v8286 = vpop.f32.mrb[0].mxu0
        %8287 = vmatprep.mubr.f32.mxu0 0.0
        %8288 = vmatmul.mubr.f32.gmra.mrb[0].mxu0 %v6978
        %v8289 = vpop.f32.mrb[0].mxu0
        %v8290 = vpop.f32.mrb[0].mxu0
        %8291 = vmatprep.mubr.f32.mxu0 0.0
        %8292 = vmatmul.mubr.f32.gmra.mrb[0].mxu0 %v8009
        %v8293 = vpop.f32.mrb[0].mxu0
        %v8294 = vadd.f32 0.0, %v8293
        %v8295 = vpop.f32.mrb[0].mxu0
        %8296 = vmatprep.mubr.f32.mxu0 0.0
        %8297 = vmatmul.mubr.f32.gmra.mrb[0].mxu0 %v8011
        %v8298 = vpop.f32.mrb[0].mxu0
        %v8299 = vadd.f32 0.0, %v8298
        %v8300 = vpop.f32.mrb[0].mxu0
        %8301 = vmatprep.mubr.f32.mxu0 0.0
        %8302 = vmatmul.mubr.f32.gmra.mrb[0].mxu0 %v8013
        %v8303 = vpop.f32.mrb[0].mxu0
        %v8304 = vpop.f32.mrb[0].mxu0
        %8305 = vdwg.mxu0
        %v8306 = vadd.f32 %v7959, %v8084
        %v8307 = vadd.f32 %v7960, %v8089
        %v8308 = vadd.f32 %v7961, %v8098
        %v8309 = vadd.f32 %v7962, %v8103
        %v8310 = vadd.f32 %v7963, %v8112
        %v8311 = vadd.f32 %v7964, %v8117
        %v8312 = vadd.f32 %v7965, %v8126
        %v8313 = vadd.f32 %v7966, %v8131
        %v8314 = vadd.f32 %v7967, %v8140
        %v8315 = vadd.f32 %v7968, %v8145
        %v8316 = vadd.f32 %v7969, %v8154
        %v8317 = vadd.f32 %v7970, %v8159
        %v8318 = vadd.f32 %v7971, %v8168
        %v8319 = vadd.f32 %v7972, %v8173
        %v8320 = vadd.f32 %v7973, %v8182
        %v8321 = vadd.f32 %v7974, %v8187
        %v8322 = vadd.f32 %v7975, %v8196
        %v8323 = vadd.f32 %v7976, %v8201
        %v8324 = vadd.f32 %v7977, %v8210
        %v8325 = vadd.f32 %v7978, %v8215
        %v8326 = vadd.f32 %v7979, %v8224
        %v8327 = vadd.f32 %v7980, %v8229
        %v8328 = vadd.f32 %v7981, %v8238
        %v8329 = vadd.f32 %v7982, %v8243
        %v8330 = vadd.f32 %v7983, %v8252
        %v8331 = vadd.f32 %v7984, %v8257
        %v8332 = vadd.f32 %v7985, %v8266
        %v8333 = vadd.f32 %v7986, %v8271
        %v8334 = vadd.f32 %v7987, %v8280
        %v8335 = vadd.f32 %v7988, %v8285
        %v8336 = vadd.f32 %v7989, %v8294
        %v8337 = vadd.f32 %v7990, %v8299
        %v8338 = vld [vmem:[%s5] sm:$0x1]
        %v8340 = vlaneseq
        %v8341 = vshrl.u32 %v8340, 7
        %v8342 = vsub.s32 0, %v8341
        %v8343 = vrot.slane %v8338, %v8342
        %v8345 = vadd.f32 %v8306, %v8343
        %v8346 = vadd.f32 %v8307, %v8343
        %v8347 = vadd.f32 %v8308, %v8343
        %v8348 = vadd.f32 %v8309, %v8343
        %v8349 = vadd.f32 %v8310, %v8343
        %v8350 = vadd.f32 %v8311, %v8343
        %v8351 = vadd.f32 %v8312, %v8343
        %v8352 = vadd.f32 %v8313, %v8343
        %v8353 = vadd.f32 %v8314, %v8343
        %v8354 = vadd.f32 %v8315, %v8343
        %v8355 = vadd.f32 %v8316, %v8343
        %v8356 = vadd.f32 %v8317, %v8343
        %v8357 = vadd.f32 %v8318, %v8343
        %v8358 = vadd.f32 %v8319, %v8343
        %v8359 = vadd.f32 %v8320, %v8343
        %v8360 = vadd.f32 %v8321, %v8343
        %v8361 = vadd.f32 %v8322, %v8343
        %v8362 = vadd.f32 %v8323, %v8343
        %v8363 = vadd.f32 %v8324, %v8343
        %v8364 = vadd.f32 %v8325, %v8343
        %v8365 = vadd.f32 %v8326, %v8343
        %v8366 = vadd.f32 %v8327, %v8343
        %v8367 = vadd.f32 %v8328, %v8343
        %v8368 = vadd.f32 %v8329, %v8343
        %v8369 = vadd.f32 %v8330, %v8343
        %v8370 = vadd.f32 %v8331, %v8343
        %v8371 = vadd.f32 %v8332, %v8343
        %v8372 = vadd.f32 %v8333, %v8343
        %v8373 = vadd.f32 %v8334, %v8343
        %v8374 = vadd.f32 %v8335, %v8343
        %v8375 = vadd.f32 %v8336, %v8343
        %v8376 = vadd.f32 %v8337, %v8343
        %v8377 = vadd.f32 %v8345, %v1355
        %v8378 = vadd.f32 %v8346, %v1357
        %v8379 = vadd.f32 %v8347, %v1361
        %v8380 = vadd.f32 %v8348, %v1363
        %v8381 = vadd.f32 %v8349, %v1367
        %v8382 = vadd.f32 %v8350, %v1369
        %v8383 = vadd.f32 %v8351, %v1373
        %v8384 = vadd.f32 %v8352, %v1375
        %v8385 = vadd.f32 %v8353, %v1379
        %v8386 = vadd.f32 %v8354, %v1381
        %v8387 = vadd.f32 %v8355, %v1385
        %v8388 = vadd.f32 %v8356, %v1387
        %v8389 = vadd.f32 %v8357, %v1391
        %v8390 = vadd.f32 %v8358, %v1393
        %v8391 = vadd.f32 %v8359, %v1397
        %v8392 = vadd.f32 %v8360, %v1399
        %v8393 = vadd.f32 %v8361, %v1403
        %v8394 = vadd.f32 %v8362, %v1405
        %v8395 = vadd.f32 %v8363, %v1409
        %v8396 = vadd.f32 %v8364, %v1411
        %v8397 = vadd.f32 %v8365, %v1415
        %v8398 = vadd.f32 %v8366, %v1417
        %v8399 = vadd.f32 %v8367, %v1421
        %v8400 = vadd.f32 %v8368, %v1423
        %v8401 = vadd.f32 %v8369, %v1427
        %v8402 = vadd.f32 %v8370, %v1429
        %v8403 = vadd.f32 %v8371, %v1433
        %v8404 = vadd.f32 %v8372, %v1435
        %v8405 = vadd.f32 %v8373, %v1439
        %v8406 = vadd.f32 %v8374, %v1441
        %v8407 = vadd.f32 %v8375, %v1445
        %v8408 = vadd.f32 %v8376, %v1447
        %8409 = vst [vmem:[%s298] sm:$0xff] %v8377
        %8410 = vst [vmem:[%s298 + $0x8] sm:$0xff] %v8378
        %8411 = vst [vmem:[%s298 + $0x10] sm:$0xff] %v8379
        %8412 = vst [vmem:[%s298 + $0x18] sm:$0xff] %v8380
        %8413 = vst [vmem:[%s298 + $0x20] sm:$0xff] %v8381
        %8414 = vst [vmem:[%s298 + $0x28] sm:$0xff] %v8382
        %8415 = vst [vmem:[%s298 + $0x30] sm:$0xff] %v8383
        %8416 = vst [vmem:[%s298 + $0x38] sm:$0xff] %v8384
        %8417 = vst [vmem:[%s298 + $0x40] sm:$0xff] %v8385
        %8418 = vst [vmem:[%s298 + $0x48] sm:$0xff] %v8386
        %8419 = vst [vmem:[%s298 + $0x50] sm:$0xff] %v8387
        %8420 = vst [vmem:[%s298 + $0x58] sm:$0xff] %v8388
        %8421 = vst [vmem:[%s298 + $0x60] sm:$0xff] %v8389
        %8422 = vst [vmem:[%s298 + $0x68] sm:$0xff] %v8390
        %8423 = vst [vmem:[%s298 + $0x70] sm:$0xff] %v8391
        %8424 = vst [vmem:[%s298 + $0x78] sm:$0xff] %v8392
        %8425 = vst [vmem:[%s298 + $0x80] sm:$0xff] %v8393
        %8426 = vst [vmem:[%s298 + $0x88] sm:$0xff] %v8394
        %8427 = vst [vmem:[%s298 + $0x90] sm:$0xff] %v8395
        %8428 = vst [vmem:[%s298 + $0x98] sm:$0xff] %v8396
        %8429 = vst [vmem:[%s298 + $0xa0] sm:$0xff] %v8397
        %8430 = vst [vmem:[%s298 + $0xa8] sm:$0xff] %v8398
        %8431 = vst [vmem:[%s298 + $0xb0] sm:$0xff] %v8399
        %8432 = vst [vmem:[%s298 + $0xb8] sm:$0xff] %v8400
        %8433 = vst [vmem:[%s298 + $0xc0] sm:$0xff] %v8401
        %8434 = vst [vmem:[%s298 + $0xc8] sm:$0xff] %v8402
        %8435 = vst [vmem:[%s298 + $0xd0] sm:$0xff] %v8403
        %8436 = vst [vmem:[%s298 + $0xd8] sm:$0xff] %v8404
        %8437 = vst [vmem:[%s298 + $0xe0] sm:$0xff] %v8405
        %8438 = vst [vmem:[%s298 + $0xe8] sm:$0xff] %v8406
        %8439 = vst [vmem:[%s298 + $0xf0] sm:$0xff] %v8407
        %8440 = vst [vmem:[%s298 + $0xf8] sm:$0xff] %v8408
        %s8441 = sand.u32 %s163, 1
        %s8442 = scalar_lea.sflag [#allocation4], %s8441
        %s8443 = sand.u32 %s163, 1
        %s8444 = smul.addr %s8443, 256
        %s8445 = scalar_lea.vmem [#allocation8], %s8444
        // Predicated region
        $region57: #{tpu_custom_call.1} parent=43 // pred_check
          %p8446 = pneg %p173
        $region58: #{tpu_custom_call.1} parent=43 // pred_check_branch
          %8448 = sbr.rel (%p8446) target = $region60
        $region59: #{tpu_custom_call.1} parent=43 // pred_region
          %s8450 = ssub.s32 4096, 4096
          %8451 = vsyncadd %s8442, %s8450
          %s8452 = smul.addr %s24, 32
          %s8453 = smul.addr %s8452, 128
          %s8454 = scalar_lea.hbm %s6, %s8453
          %s8455 = sshll.u32 %s8445, 4
          %s8456 = int_to_ptr.vmem [resolvable:$true] %s8455
          %8461 = dma.vmem_to_hbm [thread:$0]  %s8456, 4096, %s8454, %s8442, 128, 128, 8
        $region60: #{tpu_custom_call.1} parent=43 // pred_fallthru
          _
      $region44: #{tpu_custom_call.1} parent=5 // pred_fallthru
        _
      %p8462 = scmp.le.s32.totalorder 2, %s19
      // Predicated region
      $region61: #{tpu_custom_call.1} parent=5 // pred_check
        %p8463 = pneg %p8462
      $region62: #{tpu_custom_call.1} parent=5 // pred_check_branch
        %8465 = sbr.rel (%p8463) target = $region64
      $region63: #{tpu_custom_call.1} parent=5 // pred_region
        %s8466 = ssub.s32 %s19, 2
        // Predicated region
        $region65: #{tpu_custom_call.1} parent=63 // pred_check
          %p8467 = pneg %p179
        $region66: #{tpu_custom_call.1} parent=63 // pred_check_branch
          %8469 = sbr.rel (%p8467) target = $region68
        $region67: #{tpu_custom_call.1} parent=63 // pred_region
          %s8470 = sand.u32 %s164, 1
          %s8471 = scalar_lea.sflag [#allocation4], %s8470
          %s8472 = sand.u32 %s164, 1
          %s8473 = smul.addr %s8472, 256
          %s8474 = scalar_lea.vmem [#allocation8], %s8473
          %8475 = dma.done %s8471, 4096
        $region68: #{tpu_custom_call.1} parent=63 // pred_fallthru
          _
      $region64: #{tpu_custom_call.1} parent=5 // pred_fallthru
        _
    $region6: #{tpu_custom_call.1} parent=1 // loop_footer
      %s23 = sadd.s32 1, %s19
    $region7: #{tpu_custom_call.1} parent=1 // loop_footer_branch
      %18 = sbr.rel target = $region3
    $region8: #{tpu_custom_call.1} parent=1 // loop_exit
      _
    %8476 = vsyncpa [#allocation3], 1
    %s8477 = scalar_lea.sflag [#allocation3], 1
    %8478 = vsyncpa %s8477, 1
    %8479 = vsyncpa [#allocation6], 1
    %8480 = vsyncpa [#allocation4], 1
    %s8481 = scalar_lea.sflag [#allocation4], 1
    %8482 = vsyncpa %s8481, 1

</llo_original>
